<compile_context>
chip_gen: v6e
topology: v6e:2x2x1
jax: 0.10.0
libtpu: 0.0.40
codegen_flags: <defaults>
</compile_context>

<pallas_src>
import math

import jax
import jax.numpy as jnp
from jax.experimental import pallas as pl
from jax.experimental.pallas import tpu as pltpu

# ---------------- config consistent with the module ----------------
STATE_DIM = 37          # forward() hard-codes state_dim = 37 (state zeroed, unused: encode_state=False)
OBS_DIM = 16
ACTION_DIM = 5
N_AGENT = 3
N_BLOCK = 2
N_EMBD = 32
N_HEAD = 2
N_RANK_LAYER = 2
HID_DIM = 64            # ScoringBlock hid_dim
BATCH = 2
RELU_GAIN = math.sqrt(2.0)   # nn.init.calculate_gain('relu')

_GELU_C = math.sqrt(2.0 / math.pi)
_LANES = 128


def _round_up(x, n):
    return (x + n - 1) // n * n


def _vmem_spec():
    return pl.BlockSpec(memory_space=pltpu.MemorySpace.VMEM)


# ================================ static weight-slab layouts ================================

def _mat_entries():
    """(name, rows, cols) for every weight matrix, stored as [in, out] for x @ W."""
    e = [('obs_fc_w', OBS_DIM, N_EMBD)]
    for i in range(N_BLOCK):
        e += [(f'e{i}_wqkv', N_EMBD, 3 * N_EMBD), (f'e{i}_wp', N_EMBD, N_EMBD),
              (f'e{i}_fc1_w', N_EMBD, N_EMBD), (f'e{i}_fc2_w', N_EMBD, N_EMBD)]
    e += [('vhead_fc1_w', N_EMBD, N_EMBD), ('vhead_fc2_w', N_EMBD, 1),
          ('sc_fc0_w', N_EMBD, HID_DIM)]
    for i in range(N_RANK_LAYER - 1):
        e += [(f'sc_hid{i}_fc_w', HID_DIM, HID_DIM)]
    e += [('sc_out_w', HID_DIM, 1),
          ('act_fc_w', ACTION_DIM + 1, N_EMBD)]
    for i in range(N_BLOCK):
        e += [(f'd{i}_a1_wqkv', N_EMBD, 3 * N_EMBD), (f'd{i}_a1_wp', N_EMBD, N_EMBD),
              (f'd{i}_a2_wkv', N_EMBD, 2 * N_EMBD), (f'd{i}_a2_wq', N_EMBD, N_EMBD),
              (f'd{i}_a2_wp', N_EMBD, N_EMBD),
              (f'd{i}_fc1_w', N_EMBD, N_EMBD), (f'd{i}_fc2_w', N_EMBD, N_EMBD)]
    e += [('ahead_fc1_w', N_EMBD, N_EMBD), ('ahead_fc2_w', N_EMBD, ACTION_DIM)]
    return e


def _vec_entries():
    """(name, cols) for every LayerNorm gain/bias and linear bias (one slab row each)."""
    e = [('obs_ln_g', OBS_DIM), ('obs_ln_b', OBS_DIM), ('obs_fc_b', N_EMBD),
         ('enc_ln_g', N_EMBD), ('enc_ln_b', N_EMBD)]
    for i in range(N_BLOCK):
        e += [(f'e{i}_ln1_g', N_EMBD), (f'e{i}_ln1_b', N_EMBD),
              (f'e{i}_ln2_g', N_EMBD), (f'e{i}_ln2_b', N_EMBD),
              (f'e{i}_bqkv', 3 * N_EMBD), (f'e{i}_bp', N_EMBD),
              (f'e{i}_fc1_b', N_EMBD), (f'e{i}_fc2_b', N_EMBD)]
    e += [('vhead_fc1_b', N_EMBD), ('vhead_ln_g', N_EMBD), ('vhead_ln_b', N_EMBD),
          ('vhead_fc2_b', 1),
          ('sc_ln0_g', N_EMBD), ('sc_ln0_b', N_EMBD), ('sc_fc0_b', HID_DIM),
          ('sc_ln1_g', HID_DIM), ('sc_ln1_b', HID_DIM)]
    for i in range(N_RANK_LAYER - 1):
        e += [(f'sc_hid{i}_fc_b', HID_DIM),
              (f'sc_hid{i}_ln_g', HID_DIM), (f'sc_hid{i}_ln_b', HID_DIM)]
    e += [('sc_out_b', 1), ('dec_ln_g', N_EMBD), ('dec_ln_b', N_EMBD)]
    for i in range(N_BLOCK):
        e += [(f'd{i}_ln1_g', N_EMBD), (f'd{i}_ln1_b', N_EMBD),
              (f'd{i}_ln2_g', N_EMBD), (f'd{i}_ln2_b', N_EMBD),
              (f'd{i}_ln3_g', N_EMBD), (f'd{i}_ln3_b', N_EMBD),
              (f'd{i}_a1_bqkv', 3 * N_EMBD), (f'd{i}_a1_bp', N_EMBD),
              (f'd{i}_a2_bkv', 2 * N_EMBD), (f'd{i}_a2_bq', N_EMBD), (f'd{i}_a2_bp', N_EMBD),
              (f'd{i}_fc1_b', N_EMBD), (f'd{i}_fc2_b', N_EMBD)]
    e += [('ahead_fc1_b', N_EMBD), ('ahead_ln_g', N_EMBD), ('ahead_ln_b', N_EMBD),
          ('ahead_fc2_b', ACTION_DIM)]
    return e


def _build_layouts():
    mat_layout, off = {}, 0
    for name, r, c in _mat_entries():
        mat_layout[name] = (off, r, c)
        off += _round_up(r, 8)                 # keep every matrix 8-sublane aligned
    mat_rows = _round_up(off, 8)
    vec_layout, voff = {}, 0
    for name, c in _vec_entries():
        vec_layout[name] = (voff, c)
        voff += 1
    vec_rows = _round_up(voff, 8)
    return mat_layout, mat_rows, vec_layout, vec_rows


_MAT_LAYOUT, _MAT_ROWS, _VEC_LAYOUT, _VEC_ROWS = _build_layouts()


# ================================ in-kernel helpers ================================

def _gelu(x):
    # tanh-approximate GELU (EUP tanh, free alongside MXU/VALU work).
    return 0.5 * x * (1.0 + jnp.tanh(_GELU_C * (x + 0.044715 * x * x * x)))


def _linear(x, w, b=None):
    y = jnp.dot(x, w, preferred_element_type=jnp.float32)
    return y if b is None else y + b


def _layernorm(x, g, b):
    mean = jnp.mean(x, axis=-1, keepdims=True)
    xc = x - mean
    var = jnp.mean(xc * xc, axis=-1, keepdims=True)        # biased, like torch LayerNorm
    return xc * jax.lax.rsqrt(var + 1e-5) * g + b


def _mha(q_all, k_all, v_all, w_p, b_p, bias):
    """Multi-head attention over all B*A rows at once.

    `bias` is an additive [m, m] mask (-1e9 off-batch-block, and above the diagonal for
    the decoder), so every (batch, head) shares one score matmul per head.  Per-head
    outputs are projected immediately and accumulated in vregs -> no VMEM scratch, no
    concatenates, no masked partial stores.
    """
    dh = N_EMBD // N_HEAD
    scale = 1.0 / math.sqrt(dh)
    y = None
    for h in range(N_HEAD):
        c0 = h * dh
        qh = q_all[:, c0:c0 + dh]
        kh = k_all[:, c0:c0 + dh]
        vh = v_all[:, c0:c0 + dh]
        att = jax.lax.dot_general(qh, kh, (((1,), (1,)), ((), ())),
                                  preferred_element_type=jnp.float32) * scale + bias
        att = att - jnp.max(att, axis=-1, keepdims=True)
        p = jnp.exp(att)
        p = p / jnp.sum(p, axis=-1, keepdims=True)          # exact softmax (log-prob parity)
        yh = jnp.dot(p, vh, preferred_element_type=jnp.float32)          # [m, dh]
        ph = jnp.dot(yh, w_p[c0:c0 + dh, :], preferred_element_type=jnp.float32)
        y = ph if y is None else y + ph
    return y + b_p


# ================================ fused forward kernel ================================

def _make_fused_kernel(m, aux_off):
    ML, VL = _MAT_LAYOUT, _VEC_LAYOUT

    def kernel(obs_ref, aux_ref, wm_ref, wv_ref, out_ref):
        def M(name):                                    # weight matrix [din, dout]
            off, r, c = ML[name]
            return wm_ref[off:off + r, 0:c]

        def V(name):                                    # vector param [1, dim]
            off, c = VL[name]
            return wv_ref[off:off + 1, 0:c]

        seq1h = aux_ref[:, aux_off['seq']:aux_off['seq'] + N_AGENT]
        shifted = aux_ref[:, aux_off['shift']:aux_off['shift'] + ACTION_DIM + 1]
        act1h = aux_ref[:, aux_off['act']:aux_off['act'] + ACTION_DIM]
        bsum = aux_ref[:, aux_off['bsum']:aux_off['bsum'] + m]          # same-batch block-sum
        enc_bias = aux_ref[:, aux_off['encb']:aux_off['encb'] + m]      # block-diag -1e9
        dec_bias = aux_ref[:, aux_off['decb']:aux_off['decb'] + m]      # block-diag + causal

        # ---- Encoder: obs encoder -> ln -> encode blocks (unmasked, per-batch attn) ----
        x = _layernorm(obs_ref[...], V('obs_ln_g'), V('obs_ln_b'))
        x = _gelu(_linear(x, M('obs_fc_w'), V('obs_fc_b')))
        x = _layernorm(x, V('enc_ln_g'), V('enc_ln_b'))
        for i in range(N_BLOCK):
            qkv = _linear(x, M(f'e{i}_wqkv'), V(f'e{i}_bqkv'))          # one fused QKV matmul
            y = _mha(qkv[:, 0:N_EMBD], qkv[:, N_EMBD:2 * N_EMBD],
                     qkv[:, 2 * N_EMBD:3 * N_EMBD],
                     M(f'e{i}_wp'), V(f'e{i}_bp'), enc_bias)
            x = _layernorm(x + y, V(f'e{i}_ln1_g'), V(f'e{i}_ln1_b'))
            h = _gelu(_linear(x, M(f'e{i}_fc1_w'), V(f'e{i}_fc1_b')))
            h = _linear(h, M(f'e{i}_fc2_w'), V(f'e{i}_fc2_b'))
            x = _layernorm(x + h, V(f'e{i}_ln2_g'), V(f'e{i}_ln2_b'))
        rep = x                                                         # obs_rep stays in vregs

        # ---- value head ----
        h = _gelu(_linear(rep, M('vhead_fc1_w'), V('vhead_fc1_b')))
        h = _layernorm(h, V('vhead_ln_g'), V('vhead_ln_b'))
        v_loc = _linear(h, M('vhead_fc2_w'), V('vhead_fc2_b'))          # [m, 1]

        # ---- ScoringBlock MLP ----
        s = _layernorm(rep, V('sc_ln0_g'), V('sc_ln0_b'))
        s = _gelu(_linear(s, M('sc_fc0_w'), V('sc_fc0_b')))
        s = _layernorm(s, V('sc_ln1_g'), V('sc_ln1_b'))
        for i in range(N_RANK_LAYER - 1):
            s = _gelu(_linear(s, M(f'sc_hid{i}_fc_w'), V(f'sc_hid{i}_fc_b')))
            s = _layernorm(s, V(f'sc_hid{i}_ln_g'), V(f'sc_hid{i}_ln_b'))
        r = _linear(s, M('sc_out_w'), V('sc_out_b'))                    # [m, 1]
        scores = 9.0 / (1.0 + jnp.exp(-r)) + 1.0                        # in [1, 10]

        # ---- sequential ranking log-prob, vectorized over all batches ----
        remaining = jnp.ones((m, 1), jnp.float32)
        seq_lp = jnp.zeros((m, 1), jnp.float32)
        for t in range(N_AGENT):
            sel_col = seq1h[:, t:t + 1]                                 # [m, 1]
            masked = scores * remaining
            denom = jnp.dot(bsum, masked, preferred_element_type=jnp.float32)
            sel = jnp.dot(bsum, masked * sel_col, preferred_element_type=jnp.float32)
            seq_lp = seq_lp + jnp.log(sel / denom)                      # per-row = its batch's value
            remaining = remaining * (1.0 - sel_col)

        # ---- Decoder: action encoder -> ln -> decode blocks ----
        xd = _gelu(_linear(shifted, M('act_fc_w')))                     # Linear(bias=False)
        xd = _layernorm(xd, V('dec_ln_g'), V('dec_ln_b'))
        for i in range(N_BLOCK):
            qkv = _linear(xd, M(f'd{i}_a1_wqkv'), V(f'd{i}_a1_bqkv'))
            y = _mha(qkv[:, 0:N_EMBD], qkv[:, N_EMBD:2 * N_EMBD],
                     qkv[:, 2 * N_EMBD:3 * N_EMBD],
                     M(f'd{i}_a1_wp'), V(f'd{i}_a1_bp'), dec_bias)
            xd = _layernorm(xd + y, V(f'd{i}_ln1_g'), V(f'd{i}_ln1_b'))
            kv = _linear(xd, M(f'd{i}_a2_wkv'), V(f'd{i}_a2_bkv'))      # fused KV matmul
            q2 = _linear(rep, M(f'd{i}_a2_wq'), V(f'd{i}_a2_bq'))
            y = _mha(q2, kv[:, 0:N_EMBD], kv[:, N_EMBD:2 * N_EMBD],
                     M(f'd{i}_a2_wp'), V(f'd{i}_a2_bp'), dec_bias)
            xd = _layernorm(rep + y, V(f'd{i}_ln2_g'), V(f'd{i}_ln2_b'))
            h = _gelu(_linear(xd, M(f'd{i}_fc1_w'), V(f'd{i}_fc1_b')))
            h = _linear(h, M(f'd{i}_fc2_w'), V(f'd{i}_fc2_b'))
            xd = _layernorm(xd + h, V(f'd{i}_ln3_g'), V(f'd{i}_ln3_b'))

        # ---- logit head + Categorical stats (logits never leave VMEM/vregs) ----
        h = _gelu(_linear(xd, M('ahead_fc1_w'), V('ahead_fc1_b')))
        h = _layernorm(h, V('ahead_ln_g'), V('ahead_ln_b'))
        logits = _linear(h, M('ahead_fc2_w'), V('ahead_fc2_b'))         # [m, action_dim]
        mx = jnp.max(logits, axis=-1, keepdims=True)
        z = logits - mx
        lse = jnp.log(jnp.sum(jnp.exp(z), axis=-1, keepdims=True))
        logp_all = z - lse
        probs = jnp.exp(logp_all)
        act_lp = jnp.sum(act1h * logp_all, axis=-1, keepdims=True)
        ent = -jnp.sum(probs * logp_all, axis=-1, keepdims=True)

        # lane-dense packed output: one [m, 128] store
        pad = jnp.zeros((m, _LANES - 4), jnp.float32)
        out_ref[...] = jnp.concatenate([v_loc, seq_lp, act_lp, ent, pad], axis=-1)

    return kernel


# ================================ host wrapper ================================

def mat_forward(params, state, obs, action, seq, available_actions=None):
    # Reference forward zeroes `state` to (..., 37); encode_state=False so it is unused.
    del state, available_actions
    B, A, obs_dim = obs.shape
    assert A == N_AGENT and obs_dim == OBS_DIM
    m = B * A
    obs2d = obs.astype(jnp.float32).reshape(m, obs_dim)

    # ranking selection one-hots: row b*A + j, col t == 1 iff seq[b, t] == j
    seq2d = jnp.squeeze(seq, axis=0).astype(jnp.int32)                  # [B, A]
    seq1h = jnp.transpose(jax.nn.one_hot(seq2d, A, dtype=jnp.float32),
                          (0, 2, 1)).reshape(m, A)

    act = action.reshape(B, A).astype(jnp.int32)
    one_hot_action = jax.nn.one_hot(act, ACTION_DIM, dtype=jnp.float32)
    shifted = jnp.zeros((B, A, ACTION_DIM + 1), jnp.float32)
    shifted = shifted.at[:, 0, 0].set(1.0)
    shifted = shifted.at[:, 1:, 1:].set(one_hot_action[:, :-1, :])

    # static [m, m] structure matrices (constant-folded by XLA under jit)
    ri = jnp.arange(m)
    same_batch = (ri[:, None] // A) == (ri[None, :] // A)
    causal = (ri[None, :] % A) <= (ri[:, None] % A)
    bsum = same_batch.astype(jnp.float32)
    enc_bias = jnp.where(same_batch, 0.0, -1e9).astype(jnp.float32)
    dec_bias = jnp.where(same_batch & causal, 0.0, -1e9).astype(jnp.float32)

    # pack all small per-call operands into one lane-padded aux slab (one DMA)
    fields = [('seq', seq1h),
              ('shift', shifted.reshape(m, ACTION_DIM + 1)),
              ('act', one_hot_action.reshape(m, ACTION_DIM)),
              ('bsum', bsum), ('encb', enc_bias), ('decb', dec_bias)]
    aux_off, parts, off = {}, [], 0
    for name, arr in fields:
        w = arr.shape[-1]
        wpad = _round_up(w, 8)
        aux_off[name] = off
        if wpad > w:
            arr = jnp.concatenate([arr, jnp.zeros((m, wpad - w), jnp.float32)], axis=-1)
        parts.append(arr)
        off += wpad
    total = _round_up(off, _LANES)
    if total > off:
        parts.append(jnp.zeros((m, total - off), jnp.float32))
    aux = jnp.concatenate(parts, axis=-1)

    out = pl.pallas_call(
        _make_fused_kernel(m, aux_off),
        out_shape=jax.ShapeDtypeStruct((m, _LANES), jnp.float32),
        in_specs=[_vmem_spec()] * 4,
        out_specs=_vmem_spec(),
    )(obs2d, aux, params['w_mat'], params['w_vec'])

    v_loc = out[:, 0:1].reshape(B, A, 1)
    seq_logprob = out[:, 1].reshape(B, A)[:, 0:1]                       # one value per batch
    action_log = out[:, 2:3].reshape(B, A, 1)
    entropy = out[:, 3:4].reshape(B, A, 1)
    seq_entropy = jnp.zeros_like(seq_logprob)                           # reference returns zeros
    return action_log, v_loc, entropy, seq_logprob, seq_entropy


# ================================ parameter construction ================================

def _orthogonal(key, din, dout, gain):
    # Deterministic stand-in for torch orthogonal_ init (stored as [in, out] for x @ W).
    a = jax.random.normal(key, (max(din, dout), min(din, dout)), jnp.float32)
    q, r = jnp.linalg.qr(a)
    q = q * jnp.sign(jnp.diagonal(r))
    if din < dout:
        q = q.T
    return (gain * q).astype(jnp.float32)


class _KeyGen:
    def __init__(self, seed):
        self._key = jax.random.PRNGKey(seed)

    def __call__(self):
        self._key, sub = jax.random.split(self._key)
        return sub


def make_params(seed=0):
    kg = _KeyGen(seed)
    mats, vecs = {}, {}

    def lin(wname, bname, din, dout, gain, bias=True):
        mats[wname] = _orthogonal(kg(), din, dout, gain)
        if bias:
            vecs[bname] = jnp.zeros((dout,), jnp.float32)

    def lnorm(prefix, dim):
        vecs[prefix + '_g'] = jnp.ones((dim,), jnp.float32)
        vecs[prefix + '_b'] = jnp.zeros((dim,), jnp.float32)

    def attn_self(prefix):
        wq = _orthogonal(kg(), N_EMBD, N_EMBD, 0.01)
        wk = _orthogonal(kg(), N_EMBD, N_EMBD, 0.01)
        wv = _orthogonal(kg(), N_EMBD, N_EMBD, 0.01)
        mats[prefix + '_wqkv'] = jnp.concatenate([wq, wk, wv], axis=1)
        vecs[prefix + '_bqkv'] = jnp.zeros((3 * N_EMBD,), jnp.float32)
        lin(prefix + '_wp', prefix + '_bp', N_EMBD, N_EMBD, 0.01)

    def attn_cross(prefix):
        wq = _orthogonal(kg(), N_EMBD, N_EMBD, 0.01)
        wk = _orthogonal(kg(), N_EMBD, N_EMBD, 0.01)
        wv = _orthogonal(kg(), N_EMBD, N_EMBD, 0.01)
        mats[prefix + '_wkv'] = jnp.concatenate([wk, wv], axis=1)
        vecs[prefix + '_bkv'] = jnp.zeros((2 * N_EMBD,), jnp.float32)
        mats[prefix + '_wq'] = wq
        vecs[prefix + '_bq'] = jnp.zeros((N_EMBD,), jnp.float32)
        lin(prefix + '_wp', prefix + '_bp', N_EMBD, N_EMBD, 0.01)

    # ---- encoder ----
    lnorm('obs_ln', OBS_DIM)
    lin('obs_fc_w', 'obs_fc_b', OBS_DIM, N_EMBD, RELU_GAIN)
    lnorm('enc_ln', N_EMBD)
    for i in range(N_BLOCK):
        lnorm(f'e{i}_ln1', N_EMBD)
        lnorm(f'e{i}_ln2', N_EMBD)
        attn_self(f'e{i}')
        lin(f'e{i}_fc1_w', f'e{i}_fc1_b', N_EMBD, N_EMBD, RELU_GAIN)
        lin(f'e{i}_fc2_w', f'e{i}_fc2_b', N_EMBD, N_EMBD, 0.01)
    lin('vhead_fc1_w', 'vhead_fc1_b', N_EMBD, N_EMBD, RELU_GAIN)
    lnorm('vhead_ln', N_EMBD)
    lin('vhead_fc2_w', 'vhead_fc2_b', N_EMBD, 1, 0.01)
    # ---- scorer ----
    lnorm('sc_ln0', N_EMBD)
    lin('sc_fc0_w', 'sc_fc0_b', N_EMBD, HID_DIM, RELU_GAIN)
    lnorm('sc_ln1', HID_DIM)
    for i in range(N_RANK_LAYER - 1):
        lin(f'sc_hid{i}_fc_w', f'sc_hid{i}_fc_b', HID_DIM, HID_DIM, RELU_GAIN)
        lnorm(f'sc_hid{i}_ln', HID_DIM)
    lin('sc_out_w', 'sc_out_b', HID_DIM, 1, 0.01)
    # ---- decoder ----
    lin('act_fc_w', None, ACTION_DIM + 1, N_EMBD, RELU_GAIN, bias=False)
    lnorm('dec_ln', N_EMBD)
    for i in range(N_BLOCK):
        lnorm(f'd{i}_ln1', N_EMBD)
        lnorm(f'd{i}_ln2', N_EMBD)
        lnorm(f'd{i}_ln3', N_EMBD)
        attn_self(f'd{i}_a1')
        attn_cross(f'd{i}_a2')
        lin(f'd{i}_fc1_w', f'd{i}_fc1_b', N_EMBD, N_EMBD, RELU_GAIN)
        lin(f'd{i}_fc2_w', f'd{i}_fc2_b', N_EMBD, N_EMBD, 0.01)
    lin('ahead_fc1_w', 'ahead_fc1_b', N_EMBD, N_EMBD, RELU_GAIN)
    lnorm('ahead_ln', N_EMBD)
    lin('ahead_fc2_w', 'ahead_fc2_b', N_EMBD, ACTION_DIM, 0.01)

    # ---- pack into two lane-padded slabs (one DMA each at kernel launch) ----
    w_mat = jnp.zeros((_MAT_ROWS, _LANES), jnp.float32)
    for name, (off, r, c) in _MAT_LAYOUT.items():
        w_mat = w_mat.at[off:off + r, 0:c].set(mats[name])
    w_vec = jnp.zeros((_VEC_ROWS, _LANES), jnp.float32)
    for name, (off, c) in _VEC_LAYOUT.items():
        w_vec = w_vec.at[off, 0:c].set(vecs[name])
    return {'w_mat': w_mat, 'w_vec': w_vec}


# ================================ demo ================================

if __name__ == "__main__":
    params = make_params(seed=0)

    key = jax.random.PRNGKey(0)
    k_obs, k_act, k_seq = jax.random.split(key, 3)
    obs = jax.random.normal(k_obs, (BATCH, N_AGENT, OBS_DIM), jnp.float32)
    state = jnp.zeros((BATCH, N_AGENT, STATE_DIM), jnp.float32)
    action = jax.random.randint(k_act, (BATCH, N_AGENT, 1), 0, ACTION_DIM)
    seq = jnp.stack([jax.random.permutation(jax.random.fold_in(k_seq, b), N_AGENT)
                     for b in range(BATCH)], axis=0)[None]              # [1, B, n_agent]

    fwd = jax.jit(mat_forward)
    outs = fwd(params, state, obs, action, seq)
    outs = [jax.block_until_ready(o) for o in outs]

    action_log, v_loc, entropy, seq_logprob, seq_entropy = outs
    shapes_ok = (action_log.shape == (BATCH, N_AGENT, 1)
                 and v_loc.shape == (BATCH, N_AGENT, 1)
                 and entropy.shape == (BATCH, N_AGENT, 1)
                 and seq_logprob.shape == (BATCH, 1)
                 and seq_entropy.shape == (BATCH, 1))
    finite = all(bool(jnp.all(jnp.isfinite(o))) for o in outs)
    if shapes_ok and finite:
        print("KERNEL_OK")
</pallas_src>

<mosaic_0001>
module attributes {stable_mosaic.version = 11 : i64} {
  func.func @kernel(%arg0: memref<6x16xf32, #tpu.memory_space<vmem>>, %arg1: memref<6x128xf32, #tpu.memory_space<vmem>>, %arg2: memref<1016x128xf32, #tpu.memory_space<vmem>>, %arg3: memref<72x128xf32, #tpu.memory_space<vmem>>, %arg4: memref<6x128xf32, #tpu.memory_space<vmem>>) attributes {dimension_semantics = [], scalar_prefetch = 0 : i64, scratch_operands = 0 : i64, tpu.core_type = #tpu.core_type<tc>} {
    %c0 = arith.constant 0 : index
    %c0_0 = arith.constant 0 : index
    %0 = vector.load %arg1[%c0, %c0_0] : memref<6x128xf32, #tpu.memory_space<vmem>>, vector<6x3xf32>
    %c0_1 = arith.constant 0 : index
    %c8 = arith.constant 8 : index
    %1 = vector.load %arg1[%c0_1, %c8] : memref<6x128xf32, #tpu.memory_space<vmem>>, vector<6x6xf32>
    %c0_2 = arith.constant 0 : index
    %c16 = arith.constant 16 : index
    %2 = vector.load %arg1[%c0_2, %c16] : memref<6x128xf32, #tpu.memory_space<vmem>>, vector<6x5xf32>
    %c0_3 = arith.constant 0 : index
    %c24 = arith.constant 24 : index
    %3 = vector.load %arg1[%c0_3, %c24] : memref<6x128xf32, #tpu.memory_space<vmem>>, vector<6x6xf32>
    %c0_4 = arith.constant 0 : index
    %c32 = arith.constant 32 : index
    %4 = vector.load %arg1[%c0_4, %c32] : memref<6x128xf32, #tpu.memory_space<vmem>>, vector<6x6xf32>
    %c0_5 = arith.constant 0 : index
    %c40 = arith.constant 40 : index
    %5 = vector.load %arg1[%c0_5, %c40] : memref<6x128xf32, #tpu.memory_space<vmem>>, vector<6x6xf32>
    %c0_6 = arith.constant 0 : index
    %c0_7 = arith.constant 0 : index
    %6 = vector.load %arg0[%c0_6, %c0_7] : memref<6x16xf32, #tpu.memory_space<vmem>>, vector<6x16xf32>
    %c0_8 = arith.constant 0 : index
    %c0_9 = arith.constant 0 : index
    %7 = vector.load %arg3[%c0_8, %c0_9] : memref<72x128xf32, #tpu.memory_space<vmem>>, vector<1x16xf32>
    %c1 = arith.constant 1 : index
    %c0_10 = arith.constant 0 : index
    %8 = vector.load %arg3[%c1, %c0_10] : memref<72x128xf32, #tpu.memory_space<vmem>>, vector<1x16xf32>
    %cst = arith.constant dense<0.000000e+00> : vector<6xf32>
    %9 = vector.multi_reduction <add>, %6, %cst [1] : vector<6x16xf32> to vector<6xf32>
    %10 = vector.shape_cast %9 : vector<6xf32> to vector<6x1xf32>
    %cst_11 = arith.constant 1.600000e+01 : f32
    %11 = vector.broadcast %cst_11 : f32 to vector<6x1xf32>
    %12 = arith.divf %10, %11 : vector<6x1xf32>
    %13 = vector.broadcast %12 : vector<6x1xf32> to vector<6x16xf32>
    %14 = arith.subf %6, %13 : vector<6x16xf32>
    %15 = arith.mulf %14, %14 : vector<6x16xf32>
    %cst_12 = arith.constant dense<0.000000e+00> : vector<6xf32>
    %16 = vector.multi_reduction <add>, %15, %cst_12 [1] : vector<6x16xf32> to vector<6xf32>
    %17 = vector.shape_cast %16 : vector<6xf32> to vector<6x1xf32>
    %cst_13 = arith.constant 1.600000e+01 : f32
    %18 = vector.broadcast %cst_13 : f32 to vector<6x1xf32>
    %19 = arith.divf %17, %18 : vector<6x1xf32>
    %cst_14 = arith.constant 9.99999974E-6 : f32
    %20 = vector.broadcast %cst_14 : f32 to vector<6x1xf32>
    %21 = arith.addf %19, %20 : vector<6x1xf32>
    %22 = math.rsqrt %21 : vector<6x1xf32>
    %23 = vector.broadcast %22 : vector<6x1xf32> to vector<6x16xf32>
    %24 = arith.mulf %14, %23 : vector<6x16xf32>
    %25 = vector.broadcast %7 : vector<1x16xf32> to vector<6x16xf32>
    %26 = arith.mulf %24, %25 : vector<6x16xf32>
    %27 = vector.broadcast %8 : vector<1x16xf32> to vector<6x16xf32>
    %28 = arith.addf %26, %27 : vector<6x16xf32>
    %c0_15 = arith.constant 0 : index
    %c0_16 = arith.constant 0 : index
    %29 = vector.load %arg2[%c0_15, %c0_16] : memref<1016x128xf32, #tpu.memory_space<vmem>>, vector<16x32xf32>
    %c2 = arith.constant 2 : index
    %c0_17 = arith.constant 0 : index
    %30 = vector.load %arg3[%c2, %c0_17] : memref<72x128xf32, #tpu.memory_space<vmem>>, vector<1x32xf32>
    %cst_18 = arith.constant dense<0.000000e+00> : vector<6x32xf32>
    %31 = tpu.matmul %28, %29, %cst_18 {dimension_numbers = #tpu.dot_dimension_numbers<[1], [0], [0], [1], [0, 0, 1, 1], [], []>} : vector<6x16xf32>, vector<16x32xf32>, vector<6x32xf32> -> vector<6x32xf32>
    %32 = vector.broadcast %30 : vector<1x32xf32> to vector<6x32xf32>
    %33 = arith.addf %31, %32 : vector<6x32xf32>
    %cst_19 = arith.constant 5.000000e-01 : f32
    %34 = vector.broadcast %cst_19 : f32 to vector<6x32xf32>
    %35 = arith.mulf %34, %33 : vector<6x32xf32>
    %cst_20 = arith.constant 4.471500e-02 : f32
    %36 = vector.broadcast %cst_20 : f32 to vector<6x32xf32>
    %37 = arith.mulf %36, %33 : vector<6x32xf32>
    %38 = arith.mulf %37, %33 : vector<6x32xf32>
    %39 = arith.mulf %38, %33 : vector<6x32xf32>
    %40 = arith.addf %33, %39 : vector<6x32xf32>
    %cst_21 = arith.constant 0.797884583 : f32
    %41 = vector.broadcast %cst_21 : f32 to vector<6x32xf32>
    %42 = arith.mulf %41, %40 : vector<6x32xf32>
    %43 = math.tanh %42 : vector<6x32xf32>
    %cst_22 = arith.constant 1.000000e+00 : f32
    %44 = vector.broadcast %cst_22 : f32 to vector<6x32xf32>
    %45 = arith.addf %44, %43 : vector<6x32xf32>
    %46 = arith.mulf %35, %45 : vector<6x32xf32>
    %c3 = arith.constant 3 : index
    %c0_23 = arith.constant 0 : index
    %47 = vector.load %arg3[%c3, %c0_23] : memref<72x128xf32, #tpu.memory_space<vmem>>, vector<1x32xf32>
    %c4 = arith.constant 4 : index
    %c0_24 = arith.constant 0 : index
    %48 = vector.load %arg3[%c4, %c0_24] : memref<72x128xf32, #tpu.memory_space<vmem>>, vector<1x32xf32>
    %cst_25 = arith.constant dense<0.000000e+00> : vector<6xf32>
    %49 = vector.multi_reduction <add>, %46, %cst_25 [1] : vector<6x32xf32> to vector<6xf32>
    %50 = vector.shape_cast %49 : vector<6xf32> to vector<6x1xf32>
    %cst_26 = arith.constant 3.200000e+01 : f32
    %51 = vector.broadcast %cst_26 : f32 to vector<6x1xf32>
    %52 = arith.divf %50, %51 : vector<6x1xf32>
    %53 = vector.broadcast %52 : vector<6x1xf32> to vector<6x32xf32>
    %54 = arith.subf %46, %53 : vector<6x32xf32>
    %55 = arith.mulf %54, %54 : vector<6x32xf32>
    %cst_27 = arith.constant dense<0.000000e+00> : vector<6xf32>
    %56 = vector.multi_reduction <add>, %55, %cst_27 [1] : vector<6x32xf32> to vector<6xf32>
    %57 = vector.shape_cast %56 : vector<6xf32> to vector<6x1xf32>
    %cst_28 = arith.constant 3.200000e+01 : f32
    %58 = vector.broadcast %cst_28 : f32 to vector<6x1xf32>
    %59 = arith.divf %57, %58 : vector<6x1xf32>
    %cst_29 = arith.constant 9.99999974E-6 : f32
    %60 = vector.broadcast %cst_29 : f32 to vector<6x1xf32>
    %61 = arith.addf %59, %60 : vector<6x1xf32>
    %62 = math.rsqrt %61 : vector<6x1xf32>
    %63 = vector.broadcast %62 : vector<6x1xf32> to vector<6x32xf32>
    %64 = arith.mulf %54, %63 : vector<6x32xf32>
    %65 = vector.broadcast %47 : vector<1x32xf32> to vector<6x32xf32>
    %66 = arith.mulf %64, %65 : vector<6x32xf32>
    %67 = vector.broadcast %48 : vector<1x32xf32> to vector<6x32xf32>
    %68 = arith.addf %66, %67 : vector<6x32xf32>
    %c16_30 = arith.constant 16 : index
    %c0_31 = arith.constant 0 : index
    %69 = vector.load %arg2[%c16_30, %c0_31] : memref<1016x128xf32, #tpu.memory_space<vmem>>, vector<32x96xf32>
    %c9 = arith.constant 9 : index
    %c0_32 = arith.constant 0 : index
    %70 = vector.load %arg3[%c9, %c0_32] : memref<72x128xf32, #tpu.memory_space<vmem>>, vector<1x96xf32>
    %cst_33 = arith.constant dense<0.000000e+00> : vector<6x96xf32>
    %71 = tpu.matmul %68, %69, %cst_33 {dimension_numbers = #tpu.dot_dimension_numbers<[1], [0], [0], [1], [0, 0, 1, 1], [], []>} : vector<6x32xf32>, vector<32x96xf32>, vector<6x96xf32> -> vector<6x96xf32>
    %72 = vector.broadcast %70 : vector<1x96xf32> to vector<6x96xf32>
    %73 = arith.addf %71, %72 : vector<6x96xf32>
    %74 = vector.extract_strided_slice %73 {offsets = [0, 0], sizes = [6, 32], strides = [1, 1]} : vector<6x96xf32> to vector<6x32xf32>
    %75 = vector.extract_strided_slice %73 {offsets = [0, 32], sizes = [6, 32], strides = [1, 1]} : vector<6x96xf32> to vector<6x32xf32>
    %76 = vector.extract_strided_slice %73 {offsets = [0, 64], sizes = [6, 32], strides = [1, 1]} : vector<6x96xf32> to vector<6x32xf32>
    %c48 = arith.constant 48 : index
    %c0_34 = arith.constant 0 : index
    %77 = vector.load %arg2[%c48, %c0_34] : memref<1016x128xf32, #tpu.memory_space<vmem>>, vector<32x32xf32>
    %c10 = arith.constant 10 : index
    %c0_35 = arith.constant 0 : index
    %78 = vector.load %arg3[%c10, %c0_35] : memref<72x128xf32, #tpu.memory_space<vmem>>, vector<1x32xf32>
    %79 = vector.extract_strided_slice %74 {offsets = [0, 0], sizes = [6, 16], strides = [1, 1]} : vector<6x32xf32> to vector<6x16xf32>
    %80 = vector.extract_strided_slice %75 {offsets = [0, 0], sizes = [6, 16], strides = [1, 1]} : vector<6x32xf32> to vector<6x16xf32>
    %81 = vector.extract_strided_slice %76 {offsets = [0, 0], sizes = [6, 16], strides = [1, 1]} : vector<6x32xf32> to vector<6x16xf32>
    %cst_36 = arith.constant dense<0.000000e+00> : vector<6x6xf32>
    %82 = tpu.matmul %79, %80, %cst_36 {dimension_numbers = #tpu.dot_dimension_numbers<[1], [1], [0], [0], [0, 0, 1, 0], [], []>} : vector<6x16xf32>, vector<6x16xf32>, vector<6x6xf32> -> vector<6x6xf32>
    %cst_37 = arith.constant 2.500000e-01 : f32
    %83 = vector.broadcast %cst_37 : f32 to vector<6x6xf32>
    %84 = arith.mulf %82, %83 : vector<6x6xf32>
    %85 = arith.addf %84, %4 : vector<6x6xf32>
    %cst_38 = arith.constant dense<0xFF800000> : vector<6xf32>
    %86 = vector.multi_reduction <maximumf>, %85, %cst_38 [1] : vector<6x6xf32> to vector<6xf32>
    %87 = vector.shape_cast %86 : vector<6xf32> to vector<6x1xf32>
    %88 = vector.broadcast %87 : vector<6x1xf32> to vector<6x6xf32>
    %89 = arith.subf %85, %88 : vector<6x6xf32>
    %90 = math.exp %89 : vector<6x6xf32>
    %cst_39 = arith.constant dense<0.000000e+00> : vector<6xf32>
    %91 = vector.multi_reduction <add>, %90, %cst_39 [1] : vector<6x6xf32> to vector<6xf32>
    %92 = vector.shape_cast %91 : vector<6xf32> to vector<6x1xf32>
    %93 = vector.broadcast %92 : vector<6x1xf32> to vector<6x6xf32>
    %94 = arith.divf %90, %93 : vector<6x6xf32>
    %cst_40 = arith.constant dense<0.000000e+00> : vector<6x16xf32>
    %95 = tpu.matmul %94, %81, %cst_40 {dimension_numbers = #tpu.dot_dimension_numbers<[1], [0], [0], [1], [0, 0, 1, 1], [], []>} : vector<6x6xf32>, vector<6x16xf32>, vector<6x16xf32> -> vector<6x16xf32>
    %96 = vector.extract_strided_slice %77 {offsets = [0, 0], sizes = [16, 32], strides = [1, 1]} : vector<32x32xf32> to vector<16x32xf32>
    %cst_41 = arith.constant dense<0.000000e+00> : vector<6x32xf32>
    %97 = tpu.matmul %95, %96, %cst_41 {dimension_numbers = #tpu.dot_dimension_numbers<[1], [0], [0], [1], [0, 0, 1, 1], [], []>} : vector<6x16xf32>, vector<16x32xf32>, vector<6x32xf32> -> vector<6x32xf32>
    %98 = vector.extract_strided_slice %74 {offsets = [0, 16], sizes = [6, 16], strides = [1, 1]} : vector<6x32xf32> to vector<6x16xf32>
    %99 = vector.extract_strided_slice %75 {offsets = [0, 16], sizes = [6, 16], strides = [1, 1]} : vector<6x32xf32> to vector<6x16xf32>
    %100 = vector.extract_strided_slice %76 {offsets = [0, 16], sizes = [6, 16], strides = [1, 1]} : vector<6x32xf32> to vector<6x16xf32>
    %cst_42 = arith.constant dense<0.000000e+00> : vector<6x6xf32>
    %101 = tpu.matmul %98, %99, %cst_42 {dimension_numbers = #tpu.dot_dimension_numbers<[1], [1], [0], [0], [0, 0, 1, 0], [], []>} : vector<6x16xf32>, vector<6x16xf32>, vector<6x6xf32> -> vector<6x6xf32>
    %cst_43 = arith.constant 2.500000e-01 : f32
    %102 = vector.broadcast %cst_43 : f32 to vector<6x6xf32>
    %103 = arith.mulf %101, %102 : vector<6x6xf32>
    %104 = arith.addf %103, %4 : vector<6x6xf32>
    %cst_44 = arith.constant dense<0xFF800000> : vector<6xf32>
    %105 = vector.multi_reduction <maximumf>, %104, %cst_44 [1] : vector<6x6xf32> to vector<6xf32>
    %106 = vector.shape_cast %105 : vector<6xf32> to vector<6x1xf32>
    %107 = vector.broadcast %106 : vector<6x1xf32> to vector<6x6xf32>
    %108 = arith.subf %104, %107 : vector<6x6xf32>
    %109 = math.exp %108 : vector<6x6xf32>
    %cst_45 = arith.constant dense<0.000000e+00> : vector<6xf32>
    %110 = vector.multi_reduction <add>, %109, %cst_45 [1] : vector<6x6xf32> to vector<6xf32>
    %111 = vector.shape_cast %110 : vector<6xf32> to vector<6x1xf32>
    %112 = vector.broadcast %111 : vector<6x1xf32> to vector<6x6xf32>
    %113 = arith.divf %109, %112 : vector<6x6xf32>
    %cst_46 = arith.constant dense<0.000000e+00> : vector<6x16xf32>
    %114 = tpu.matmul %113, %100, %cst_46 {dimension_numbers = #tpu.dot_dimension_numbers<[1], [0], [0], [1], [0, 0, 1, 1], [], []>} : vector<6x6xf32>, vector<6x16xf32>, vector<6x16xf32> -> vector<6x16xf32>
    %115 = vector.extract_strided_slice %77 {offsets = [16, 0], sizes = [16, 32], strides = [1, 1]} : vector<32x32xf32> to vector<16x32xf32>
    %cst_47 = arith.constant dense<0.000000e+00> : vector<6x32xf32>
    %116 = tpu.matmul %114, %115, %cst_47 {dimension_numbers = #tpu.dot_dimension_numbers<[1], [0], [0], [1], [0, 0, 1, 1], [], []>} : vector<6x16xf32>, vector<16x32xf32>, vector<6x32xf32> -> vector<6x32xf32>
    %117 = arith.addf %97, %116 : vector<6x32xf32>
    %118 = vector.broadcast %78 : vector<1x32xf32> to vector<6x32xf32>
    %119 = arith.addf %117, %118 : vector<6x32xf32>
    %120 = arith.addf %68, %119 : vector<6x32xf32>
    %c5 = arith.constant 5 : index
    %c0_48 = arith.constant 0 : index
    %121 = vector.load %arg3[%c5, %c0_48] : memref<72x128xf32, #tpu.memory_space<vmem>>, vector<1x32xf32>
    %c6 = arith.constant 6 : index
    %c0_49 = arith.constant 0 : index
    %122 = vector.load %arg3[%c6, %c0_49] : memref<72x128xf32, #tpu.memory_space<vmem>>, vector<1x32xf32>
    %cst_50 = arith.constant dense<0.000000e+00> : vector<6xf32>
    %123 = vector.multi_reduction <add>, %120, %cst_50 [1] : vector<6x32xf32> to vector<6xf32>
    %124 = vector.shape_cast %123 : vector<6xf32> to vector<6x1xf32>
    %cst_51 = arith.constant 3.200000e+01 : f32
    %125 = vector.broadcast %cst_51 : f32 to vector<6x1xf32>
    %126 = arith.divf %124, %125 : vector<6x1xf32>
    %127 = vector.broadcast %126 : vector<6x1xf32> to vector<6x32xf32>
    %128 = arith.subf %120, %127 : vector<6x32xf32>
    %129 = arith.mulf %128, %128 : vector<6x32xf32>
    %cst_52 = arith.constant dense<0.000000e+00> : vector<6xf32>
    %130 = vector.multi_reduction <add>, %129, %cst_52 [1] : vector<6x32xf32> to vector<6xf32>
    %131 = vector.shape_cast %130 : vector<6xf32> to vector<6x1xf32>
    %cst_53 = arith.constant 3.200000e+01 : f32
    %132 = vector.broadcast %cst_53 : f32 to vector<6x1xf32>
    %133 = arith.divf %131, %132 : vector<6x1xf32>
    %cst_54 = arith.constant 9.99999974E-6 : f32
    %134 = vector.broadcast %cst_54 : f32 to vector<6x1xf32>
    %135 = arith.addf %133, %134 : vector<6x1xf32>
    %136 = math.rsqrt %135 : vector<6x1xf32>
    %137 = vector.broadcast %136 : vector<6x1xf32> to vector<6x32xf32>
    %138 = arith.mulf %128, %137 : vector<6x32xf32>
    %139 = vector.broadcast %121 : vector<1x32xf32> to vector<6x32xf32>
    %140 = arith.mulf %138, %139 : vector<6x32xf32>
    %141 = vector.broadcast %122 : vector<1x32xf32> to vector<6x32xf32>
    %142 = arith.addf %140, %141 : vector<6x32xf32>
    %c80 = arith.constant 80 : index
    %c0_55 = arith.constant 0 : index
    %143 = vector.load %arg2[%c80, %c0_55] : memref<1016x128xf32, #tpu.memory_space<vmem>>, vector<32x32xf32>
    %c11 = arith.constant 11 : index
    %c0_56 = arith.constant 0 : index
    %144 = vector.load %arg3[%c11, %c0_56] : memref<72x128xf32, #tpu.memory_space<vmem>>, vector<1x32xf32>
    %cst_57 = arith.constant dense<0.000000e+00> : vector<6x32xf32>
    %145 = tpu.matmul %142, %143, %cst_57 {dimension_numbers = #tpu.dot_dimension_numbers<[1], [0], [0], [1], [0, 0, 1, 1], [], []>} : vector<6x32xf32>, vector<32x32xf32>, vector<6x32xf32> -> vector<6x32xf32>
    %146 = vector.broadcast %144 : vector<1x32xf32> to vector<6x32xf32>
    %147 = arith.addf %145, %146 : vector<6x32xf32>
    %cst_58 = arith.constant 5.000000e-01 : f32
    %148 = vector.broadcast %cst_58 : f32 to vector<6x32xf32>
    %149 = arith.mulf %148, %147 : vector<6x32xf32>
    %cst_59 = arith.constant 4.471500e-02 : f32
    %150 = vector.broadcast %cst_59 : f32 to vector<6x32xf32>
    %151 = arith.mulf %150, %147 : vector<6x32xf32>
    %152 = arith.mulf %151, %147 : vector<6x32xf32>
    %153 = arith.mulf %152, %147 : vector<6x32xf32>
    %154 = arith.addf %147, %153 : vector<6x32xf32>
    %cst_60 = arith.constant 0.797884583 : f32
    %155 = vector.broadcast %cst_60 : f32 to vector<6x32xf32>
    %156 = arith.mulf %155, %154 : vector<6x32xf32>
    %157 = math.tanh %156 : vector<6x32xf32>
    %cst_61 = arith.constant 1.000000e+00 : f32
    %158 = vector.broadcast %cst_61 : f32 to vector<6x32xf32>
    %159 = arith.addf %158, %157 : vector<6x32xf32>
    %160 = arith.mulf %149, %159 : vector<6x32xf32>
    %c112 = arith.constant 112 : index
    %c0_62 = arith.constant 0 : index
    %161 = vector.load %arg2[%c112, %c0_62] : memref<1016x128xf32, #tpu.memory_space<vmem>>, vector<32x32xf32>
    %c12 = arith.constant 12 : index
    %c0_63 = arith.constant 0 : index
    %162 = vector.load %arg3[%c12, %c0_63] : memref<72x128xf32, #tpu.memory_space<vmem>>, vector<1x32xf32>
    %cst_64 = arith.constant dense<0.000000e+00> : vector<6x32xf32>
    %163 = tpu.matmul %160, %161, %cst_64 {dimension_numbers = #tpu.dot_dimension_numbers<[1], [0], [0], [1], [0, 0, 1, 1], [], []>} : vector<6x32xf32>, vector<32x32xf32>, vector<6x32xf32> -> vector<6x32xf32>
    %164 = vector.broadcast %162 : vector<1x32xf32> to vector<6x32xf32>
    %165 = arith.addf %163, %164 : vector<6x32xf32>
    %166 = arith.addf %142, %165 : vector<6x32xf32>
    %c7 = arith.constant 7 : index
    %c0_65 = arith.constant 0 : index
    %167 = vector.load %arg3[%c7, %c0_65] : memref<72x128xf32, #tpu.memory_space<vmem>>, vector<1x32xf32>
    %c8_66 = arith.constant 8 : index
    %c0_67 = arith.constant 0 : index
    %168 = vector.load %arg3[%c8_66, %c0_67] : memref<72x128xf32, #tpu.memory_space<vmem>>, vector<1x32xf32>
    %cst_68 = arith.constant dense<0.000000e+00> : vector<6xf32>
    %169 = vector.multi_reduction <add>, %166, %cst_68 [1] : vector<6x32xf32> to vector<6xf32>
    %170 = vector.shape_cast %169 : vector<6xf32> to vector<6x1xf32>
    %cst_69 = arith.constant 3.200000e+01 : f32
    %171 = vector.broadcast %cst_69 : f32 to vector<6x1xf32>
    %172 = arith.divf %170, %171 : vector<6x1xf32>
    %173 = vector.broadcast %172 : vector<6x1xf32> to vector<6x32xf32>
    %174 = arith.subf %166, %173 : vector<6x32xf32>
    %175 = arith.mulf %174, %174 : vector<6x32xf32>
    %cst_70 = arith.constant dense<0.000000e+00> : vector<6xf32>
    %176 = vector.multi_reduction <add>, %175, %cst_70 [1] : vector<6x32xf32> to vector<6xf32>
    %177 = vector.shape_cast %176 : vector<6xf32> to vector<6x1xf32>
    %cst_71 = arith.constant 3.200000e+01 : f32
    %178 = vector.broadcast %cst_71 : f32 to vector<6x1xf32>
    %179 = arith.divf %177, %178 : vector<6x1xf32>
    %cst_72 = arith.constant 9.99999974E-6 : f32
    %180 = vector.broadcast %cst_72 : f32 to vector<6x1xf32>
    %181 = arith.addf %179, %180 : vector<6x1xf32>
    %182 = math.rsqrt %181 : vector<6x1xf32>
    %183 = vector.broadcast %182 : vector<6x1xf32> to vector<6x32xf32>
    %184 = arith.mulf %174, %183 : vector<6x32xf32>
    %185 = vector.broadcast %167 : vector<1x32xf32> to vector<6x32xf32>
    %186 = arith.mulf %184, %185 : vector<6x32xf32>
    %187 = vector.broadcast %168 : vector<1x32xf32> to vector<6x32xf32>
    %188 = arith.addf %186, %187 : vector<6x32xf32>
    %c144 = arith.constant 144 : index
    %c0_73 = arith.constant 0 : index
    %189 = vector.load %arg2[%c144, %c0_73] : memref<1016x128xf32, #tpu.memory_space<vmem>>, vector<32x96xf32>
    %c17 = arith.constant 17 : index
    %c0_74 = arith.constant 0 : index
    %190 = vector.load %arg3[%c17, %c0_74] : memref<72x128xf32, #tpu.memory_space<vmem>>, vector<1x96xf32>
    %cst_75 = arith.constant dense<0.000000e+00> : vector<6x96xf32>
    %191 = tpu.matmul %188, %189, %cst_75 {dimension_numbers = #tpu.dot_dimension_numbers<[1], [0], [0], [1], [0, 0, 1, 1], [], []>} : vector<6x32xf32>, vector<32x96xf32>, vector<6x96xf32> -> vector<6x96xf32>
    %192 = vector.broadcast %190 : vector<1x96xf32> to vector<6x96xf32>
    %193 = arith.addf %191, %192 : vector<6x96xf32>
    %194 = vector.extract_strided_slice %193 {offsets = [0, 0], sizes = [6, 32], strides = [1, 1]} : vector<6x96xf32> to vector<6x32xf32>
    %195 = vector.extract_strided_slice %193 {offsets = [0, 32], sizes = [6, 32], strides = [1, 1]} : vector<6x96xf32> to vector<6x32xf32>
    %196 = vector.extract_strided_slice %193 {offsets = [0, 64], sizes = [6, 32], strides = [1, 1]} : vector<6x96xf32> to vector<6x32xf32>
    %c176 = arith.constant 176 : index
    %c0_76 = arith.constant 0 : index
    %197 = vector.load %arg2[%c176, %c0_76] : memref<1016x128xf32, #tpu.memory_space<vmem>>, vector<32x32xf32>
    %c18 = arith.constant 18 : index
    %c0_77 = arith.constant 0 : index
    %198 = vector.load %arg3[%c18, %c0_77] : memref<72x128xf32, #tpu.memory_space<vmem>>, vector<1x32xf32>
    %199 = vector.extract_strided_slice %194 {offsets = [0, 0], sizes = [6, 16], strides = [1, 1]} : vector<6x32xf32> to vector<6x16xf32>
    %200 = vector.extract_strided_slice %195 {offsets = [0, 0], sizes = [6, 16], strides = [1, 1]} : vector<6x32xf32> to vector<6x16xf32>
    %201 = vector.extract_strided_slice %196 {offsets = [0, 0], sizes = [6, 16], strides = [1, 1]} : vector<6x32xf32> to vector<6x16xf32>
    %cst_78 = arith.constant dense<0.000000e+00> : vector<6x6xf32>
    %202 = tpu.matmul %199, %200, %cst_78 {dimension_numbers = #tpu.dot_dimension_numbers<[1], [1], [0], [0], [0, 0, 1, 0], [], []>} : vector<6x16xf32>, vector<6x16xf32>, vector<6x6xf32> -> vector<6x6xf32>
    %cst_79 = arith.constant 2.500000e-01 : f32
    %203 = vector.broadcast %cst_79 : f32 to vector<6x6xf32>
    %204 = arith.mulf %202, %203 : vector<6x6xf32>
    %205 = arith.addf %204, %4 : vector<6x6xf32>
    %cst_80 = arith.constant dense<0xFF800000> : vector<6xf32>
    %206 = vector.multi_reduction <maximumf>, %205, %cst_80 [1] : vector<6x6xf32> to vector<6xf32>
    %207 = vector.shape_cast %206 : vector<6xf32> to vector<6x1xf32>
    %208 = vector.broadcast %207 : vector<6x1xf32> to vector<6x6xf32>
    %209 = arith.subf %205, %208 : vector<6x6xf32>
    %210 = math.exp %209 : vector<6x6xf32>
    %cst_81 = arith.constant dense<0.000000e+00> : vector<6xf32>
    %211 = vector.multi_reduction <add>, %210, %cst_81 [1] : vector<6x6xf32> to vector<6xf32>
    %212 = vector.shape_cast %211 : vector<6xf32> to vector<6x1xf32>
    %213 = vector.broadcast %212 : vector<6x1xf32> to vector<6x6xf32>
    %214 = arith.divf %210, %213 : vector<6x6xf32>
    %cst_82 = arith.constant dense<0.000000e+00> : vector<6x16xf32>
    %215 = tpu.matmul %214, %201, %cst_82 {dimension_numbers = #tpu.dot_dimension_numbers<[1], [0], [0], [1], [0, 0, 1, 1], [], []>} : vector<6x6xf32>, vector<6x16xf32>, vector<6x16xf32> -> vector<6x16xf32>
    %216 = vector.extract_strided_slice %197 {offsets = [0, 0], sizes = [16, 32], strides = [1, 1]} : vector<32x32xf32> to vector<16x32xf32>
    %cst_83 = arith.constant dense<0.000000e+00> : vector<6x32xf32>
    %217 = tpu.matmul %215, %216, %cst_83 {dimension_numbers = #tpu.dot_dimension_numbers<[1], [0], [0], [1], [0, 0, 1, 1], [], []>} : vector<6x16xf32>, vector<16x32xf32>, vector<6x32xf32> -> vector<6x32xf32>
    %218 = vector.extract_strided_slice %194 {offsets = [0, 16], sizes = [6, 16], strides = [1, 1]} : vector<6x32xf32> to vector<6x16xf32>
    %219 = vector.extract_strided_slice %195 {offsets = [0, 16], sizes = [6, 16], strides = [1, 1]} : vector<6x32xf32> to vector<6x16xf32>
    %220 = vector.extract_strided_slice %196 {offsets = [0, 16], sizes = [6, 16], strides = [1, 1]} : vector<6x32xf32> to vector<6x16xf32>
    %cst_84 = arith.constant dense<0.000000e+00> : vector<6x6xf32>
    %221 = tpu.matmul %218, %219, %cst_84 {dimension_numbers = #tpu.dot_dimension_numbers<[1], [1], [0], [0], [0, 0, 1, 0], [], []>} : vector<6x16xf32>, vector<6x16xf32>, vector<6x6xf32> -> vector<6x6xf32>
    %cst_85 = arith.constant 2.500000e-01 : f32
    %222 = vector.broadcast %cst_85 : f32 to vector<6x6xf32>
    %223 = arith.mulf %221, %222 : vector<6x6xf32>
    %224 = arith.addf %223, %4 : vector<6x6xf32>
    %cst_86 = arith.constant dense<0xFF800000> : vector<6xf32>
    %225 = vector.multi_reduction <maximumf>, %224, %cst_86 [1] : vector<6x6xf32> to vector<6xf32>
    %226 = vector.shape_cast %225 : vector<6xf32> to vector<6x1xf32>
    %227 = vector.broadcast %226 : vector<6x1xf32> to vector<6x6xf32>
    %228 = arith.subf %224, %227 : vector<6x6xf32>
    %229 = math.exp %228 : vector<6x6xf32>
    %cst_87 = arith.constant dense<0.000000e+00> : vector<6xf32>
    %230 = vector.multi_reduction <add>, %229, %cst_87 [1] : vector<6x6xf32> to vector<6xf32>
    %231 = vector.shape_cast %230 : vector<6xf32> to vector<6x1xf32>
    %232 = vector.broadcast %231 : vector<6x1xf32> to vector<6x6xf32>
    %233 = arith.divf %229, %232 : vector<6x6xf32>
    %cst_88 = arith.constant dense<0.000000e+00> : vector<6x16xf32>
    %234 = tpu.matmul %233, %220, %cst_88 {dimension_numbers = #tpu.dot_dimension_numbers<[1], [0], [0], [1], [0, 0, 1, 1], [], []>} : vector<6x6xf32>, vector<6x16xf32>, vector<6x16xf32> -> vector<6x16xf32>
    %235 = vector.extract_strided_slice %197 {offsets = [16, 0], sizes = [16, 32], strides = [1, 1]} : vector<32x32xf32> to vector<16x32xf32>
    %cst_89 = arith.constant dense<0.000000e+00> : vector<6x32xf32>
    %236 = tpu.matmul %234, %235, %cst_89 {dimension_numbers = #tpu.dot_dimension_numbers<[1], [0], [0], [1], [0, 0, 1, 1], [], []>} : vector<6x16xf32>, vector<16x32xf32>, vector<6x32xf32> -> vector<6x32xf32>
    %237 = arith.addf %217, %236 : vector<6x32xf32>
    %238 = vector.broadcast %198 : vector<1x32xf32> to vector<6x32xf32>
    %239 = arith.addf %237, %238 : vector<6x32xf32>
    %240 = arith.addf %188, %239 : vector<6x32xf32>
    %c13 = arith.constant 13 : index
    %c0_90 = arith.constant 0 : index
    %241 = vector.load %arg3[%c13, %c0_90] : memref<72x128xf32, #tpu.memory_space<vmem>>, vector<1x32xf32>
    %c14 = arith.constant 14 : index
    %c0_91 = arith.constant 0 : index
    %242 = vector.load %arg3[%c14, %c0_91] : memref<72x128xf32, #tpu.memory_space<vmem>>, vector<1x32xf32>
    %cst_92 = arith.constant dense<0.000000e+00> : vector<6xf32>
    %243 = vector.multi_reduction <add>, %240, %cst_92 [1] : vector<6x32xf32> to vector<6xf32>
    %244 = vector.shape_cast %243 : vector<6xf32> to vector<6x1xf32>
    %cst_93 = arith.constant 3.200000e+01 : f32
    %245 = vector.broadcast %cst_93 : f32 to vector<6x1xf32>
    %246 = arith.divf %244, %245 : vector<6x1xf32>
    %247 = vector.broadcast %246 : vector<6x1xf32> to vector<6x32xf32>
    %248 = arith.subf %240, %247 : vector<6x32xf32>
    %249 = arith.mulf %248, %248 : vector<6x32xf32>
    %cst_94 = arith.constant dense<0.000000e+00> : vector<6xf32>
    %250 = vector.multi_reduction <add>, %249, %cst_94 [1] : vector<6x32xf32> to vector<6xf32>
    %251 = vector.shape_cast %250 : vector<6xf32> to vector<6x1xf32>
    %cst_95 = arith.constant 3.200000e+01 : f32
    %252 = vector.broadcast %cst_95 : f32 to vector<6x1xf32>
    %253 = arith.divf %251, %252 : vector<6x1xf32>
    %cst_96 = arith.constant 9.99999974E-6 : f32
    %254 = vector.broadcast %cst_96 : f32 to vector<6x1xf32>
    %255 = arith.addf %253, %254 : vector<6x1xf32>
    %256 = math.rsqrt %255 : vector<6x1xf32>
    %257 = vector.broadcast %256 : vector<6x1xf32> to vector<6x32xf32>
    %258 = arith.mulf %248, %257 : vector<6x32xf32>
    %259 = vector.broadcast %241 : vector<1x32xf32> to vector<6x32xf32>
    %260 = arith.mulf %258, %259 : vector<6x32xf32>
    %261 = vector.broadcast %242 : vector<1x32xf32> to vector<6x32xf32>
    %262 = arith.addf %260, %261 : vector<6x32xf32>
    %c208 = arith.constant 208 : index
    %c0_97 = arith.constant 0 : index
    %263 = vector.load %arg2[%c208, %c0_97] : memref<1016x128xf32, #tpu.memory_space<vmem>>, vector<32x32xf32>
    %c19 = arith.constant 19 : index
    %c0_98 = arith.constant 0 : index
    %264 = vector.load %arg3[%c19, %c0_98] : memref<72x128xf32, #tpu.memory_space<vmem>>, vector<1x32xf32>
    %cst_99 = arith.constant dense<0.000000e+00> : vector<6x32xf32>
    %265 = tpu.matmul %262, %263, %cst_99 {dimension_numbers = #tpu.dot_dimension_numbers<[1], [0], [0], [1], [0, 0, 1, 1], [], []>} : vector<6x32xf32>, vector<32x32xf32>, vector<6x32xf32> -> vector<6x32xf32>
    %266 = vector.broadcast %264 : vector<1x32xf32> to vector<6x32xf32>
    %267 = arith.addf %265, %266 : vector<6x32xf32>
    %cst_100 = arith.constant 5.000000e-01 : f32
    %268 = vector.broadcast %cst_100 : f32 to vector<6x32xf32>
    %269 = arith.mulf %268, %267 : vector<6x32xf32>
    %cst_101 = arith.constant 4.471500e-02 : f32
    %270 = vector.broadcast %cst_101 : f32 to vector<6x32xf32>
    %271 = arith.mulf %270, %267 : vector<6x32xf32>
    %272 = arith.mulf %271, %267 : vector<6x32xf32>
    %273 = arith.mulf %272, %267 : vector<6x32xf32>
    %274 = arith.addf %267, %273 : vector<6x32xf32>
    %cst_102 = arith.constant 0.797884583 : f32
    %275 = vector.broadcast %cst_102 : f32 to vector<6x32xf32>
    %276 = arith.mulf %275, %274 : vector<6x32xf32>
    %277 = math.tanh %276 : vector<6x32xf32>
    %cst_103 = arith.constant 1.000000e+00 : f32
    %278 = vector.broadcast %cst_103 : f32 to vector<6x32xf32>
    %279 = arith.addf %278, %277 : vector<6x32xf32>
    %280 = arith.mulf %269, %279 : vector<6x32xf32>
    %c240 = arith.constant 240 : index
    %c0_104 = arith.constant 0 : index
    %281 = vector.load %arg2[%c240, %c0_104] : memref<1016x128xf32, #tpu.memory_space<vmem>>, vector<32x32xf32>
    %c20 = arith.constant 20 : index
    %c0_105 = arith.constant 0 : index
    %282 = vector.load %arg3[%c20, %c0_105] : memref<72x128xf32, #tpu.memory_space<vmem>>, vector<1x32xf32>
    %cst_106 = arith.constant dense<0.000000e+00> : vector<6x32xf32>
    %283 = tpu.matmul %280, %281, %cst_106 {dimension_numbers = #tpu.dot_dimension_numbers<[1], [0], [0], [1], [0, 0, 1, 1], [], []>} : vector<6x32xf32>, vector<32x32xf32>, vector<6x32xf32> -> vector<6x32xf32>
    %284 = vector.broadcast %282 : vector<1x32xf32> to vector<6x32xf32>
    %285 = arith.addf %283, %284 : vector<6x32xf32>
    %286 = arith.addf %262, %285 : vector<6x32xf32>
    %c15 = arith.constant 15 : index
    %c0_107 = arith.constant 0 : index
    %287 = vector.load %arg3[%c15, %c0_107] : memref<72x128xf32, #tpu.memory_space<vmem>>, vector<1x32xf32>
    %c16_108 = arith.constant 16 : index
    %c0_109 = arith.constant 0 : index
    %288 = vector.load %arg3[%c16_108, %c0_109] : memref<72x128xf32, #tpu.memory_space<vmem>>, vector<1x32xf32>
    %cst_110 = arith.constant dense<0.000000e+00> : vector<6xf32>
    %289 = vector.multi_reduction <add>, %286, %cst_110 [1] : vector<6x32xf32> to vector<6xf32>
    %290 = vector.shape_cast %289 : vector<6xf32> to vector<6x1xf32>
    %cst_111 = arith.constant 3.200000e+01 : f32
    %291 = vector.broadcast %cst_111 : f32 to vector<6x1xf32>
    %292 = arith.divf %290, %291 : vector<6x1xf32>
    %293 = vector.broadcast %292 : vector<6x1xf32> to vector<6x32xf32>
    %294 = arith.subf %286, %293 : vector<6x32xf32>
    %295 = arith.mulf %294, %294 : vector<6x32xf32>
    %cst_112 = arith.constant dense<0.000000e+00> : vector<6xf32>
    %296 = vector.multi_reduction <add>, %295, %cst_112 [1] : vector<6x32xf32> to vector<6xf32>
    %297 = vector.shape_cast %296 : vector<6xf32> to vector<6x1xf32>
    %cst_113 = arith.constant 3.200000e+01 : f32
    %298 = vector.broadcast %cst_113 : f32 to vector<6x1xf32>
    %299 = arith.divf %297, %298 : vector<6x1xf32>
    %cst_114 = arith.constant 9.99999974E-6 : f32
    %300 = vector.broadcast %cst_114 : f32 to vector<6x1xf32>
    %301 = arith.addf %299, %300 : vector<6x1xf32>
    %302 = math.rsqrt %301 : vector<6x1xf32>
    %303 = vector.broadcast %302 : vector<6x1xf32> to vector<6x32xf32>
    %304 = arith.mulf %294, %303 : vector<6x32xf32>
    %305 = vector.broadcast %287 : vector<1x32xf32> to vector<6x32xf32>
    %306 = arith.mulf %304, %305 : vector<6x32xf32>
    %307 = vector.broadcast %288 : vector<1x32xf32> to vector<6x32xf32>
    %308 = arith.addf %306, %307 : vector<6x32xf32>
    %c272 = arith.constant 272 : index
    %c0_115 = arith.constant 0 : index
    %309 = vector.load %arg2[%c272, %c0_115] : memref<1016x128xf32, #tpu.memory_space<vmem>>, vector<32x32xf32>
    %c21 = arith.constant 21 : index
    %c0_116 = arith.constant 0 : index
    %310 = vector.load %arg3[%c21, %c0_116] : memref<72x128xf32, #tpu.memory_space<vmem>>, vector<1x32xf32>
    %cst_117 = arith.constant dense<0.000000e+00> : vector<6x32xf32>
    %311 = tpu.matmul %308, %309, %cst_117 {dimension_numbers = #tpu.dot_dimension_numbers<[1], [0], [0], [1], [0, 0, 1, 1], [], []>} : vector<6x32xf32>, vector<32x32xf32>, vector<6x32xf32> -> vector<6x32xf32>
    %312 = vector.broadcast %310 : vector<1x32xf32> to vector<6x32xf32>
    %313 = arith.addf %311, %312 : vector<6x32xf32>
    %cst_118 = arith.constant 5.000000e-01 : f32
    %314 = vector.broadcast %cst_118 : f32 to vector<6x32xf32>
    %315 = arith.mulf %314, %313 : vector<6x32xf32>
    %cst_119 = arith.constant 4.471500e-02 : f32
    %316 = vector.broadcast %cst_119 : f32 to vector<6x32xf32>
    %317 = arith.mulf %316, %313 : vector<6x32xf32>
    %318 = arith.mulf %317, %313 : vector<6x32xf32>
    %319 = arith.mulf %318, %313 : vector<6x32xf32>
    %320 = arith.addf %313, %319 : vector<6x32xf32>
    %cst_120 = arith.constant 0.797884583 : f32
    %321 = vector.broadcast %cst_120 : f32 to vector<6x32xf32>
    %322 = arith.mulf %321, %320 : vector<6x32xf32>
    %323 = math.tanh %322 : vector<6x32xf32>
    %cst_121 = arith.constant 1.000000e+00 : f32
    %324 = vector.broadcast %cst_121 : f32 to vector<6x32xf32>
    %325 = arith.addf %324, %323 : vector<6x32xf32>
    %326 = arith.mulf %315, %325 : vector<6x32xf32>
    %c22 = arith.constant 22 : index
    %c0_122 = arith.constant 0 : index
    %327 = vector.load %arg3[%c22, %c0_122] : memref<72x128xf32, #tpu.memory_space<vmem>>, vector<1x32xf32>
    %c23 = arith.constant 23 : index
    %c0_123 = arith.constant 0 : index
    %328 = vector.load %arg3[%c23, %c0_123] : memref<72x128xf32, #tpu.memory_space<vmem>>, vector<1x32xf32>
    %cst_124 = arith.constant dense<0.000000e+00> : vector<6xf32>
    %329 = vector.multi_reduction <add>, %326, %cst_124 [1] : vector<6x32xf32> to vector<6xf32>
    %330 = vector.shape_cast %329 : vector<6xf32> to vector<6x1xf32>
    %cst_125 = arith.constant 3.200000e+01 : f32
    %331 = vector.broadcast %cst_125 : f32 to vector<6x1xf32>
    %332 = arith.divf %330, %331 : vector<6x1xf32>
    %333 = vector.broadcast %332 : vector<6x1xf32> to vector<6x32xf32>
    %334 = arith.subf %326, %333 : vector<6x32xf32>
    %335 = arith.mulf %334, %334 : vector<6x32xf32>
    %cst_126 = arith.constant dense<0.000000e+00> : vector<6xf32>
    %336 = vector.multi_reduction <add>, %335, %cst_126 [1] : vector<6x32xf32> to vector<6xf32>
    %337 = vector.shape_cast %336 : vector<6xf32> to vector<6x1xf32>
    %cst_127 = arith.constant 3.200000e+01 : f32
    %338 = vector.broadcast %cst_127 : f32 to vector<6x1xf32>
    %339 = arith.divf %337, %338 : vector<6x1xf32>
    %cst_128 = arith.constant 9.99999974E-6 : f32
    %340 = vector.broadcast %cst_128 : f32 to vector<6x1xf32>
    %341 = arith.addf %339, %340 : vector<6x1xf32>
    %342 = math.rsqrt %341 : vector<6x1xf32>
    %343 = vector.broadcast %342 : vector<6x1xf32> to vector<6x32xf32>
    %344 = arith.mulf %334, %343 : vector<6x32xf32>
    %345 = vector.broadcast %327 : vector<1x32xf32> to vector<6x32xf32>
    %346 = arith.mulf %344, %345 : vector<6x32xf32>
    %347 = vector.broadcast %328 : vector<1x32xf32> to vector<6x32xf32>
    %348 = arith.addf %346, %347 : vector<6x32xf32>
    %c304 = arith.constant 304 : index
    %c0_129 = arith.constant 0 : index
    %349 = vector.load %arg2[%c304, %c0_129] : memref<1016x128xf32, #tpu.memory_space<vmem>>, vector<32x1xf32>
    %c24_130 = arith.constant 24 : index
    %c0_131 = arith.constant 0 : index
    %350 = vector.load %arg3[%c24_130, %c0_131] : memref<72x128xf32, #tpu.memory_space<vmem>>, vector<1x1xf32>
    %cst_132 = arith.constant dense<0.000000e+00> : vector<6x1xf32>
    %351 = tpu.matmul %348, %349, %cst_132 {dimension_numbers = #tpu.dot_dimension_numbers<[1], [0], [0], [1], [0, 0, 1, 1], [], []>} : vector<6x32xf32>, vector<32x1xf32>, vector<6x1xf32> -> vector<6x1xf32>
    %352 = vector.broadcast %350 : vector<1x1xf32> to vector<6x1xf32>
    %353 = arith.addf %351, %352 : vector<6x1xf32>
    %c25 = arith.constant 25 : index
    %c0_133 = arith.constant 0 : index
    %354 = vector.load %arg3[%c25, %c0_133] : memref<72x128xf32, #tpu.memory_space<vmem>>, vector<1x32xf32>
    %c26 = arith.constant 26 : index
    %c0_134 = arith.constant 0 : index
    %355 = vector.load %arg3[%c26, %c0_134] : memref<72x128xf32, #tpu.memory_space<vmem>>, vector<1x32xf32>
    %cst_135 = arith.constant dense<0.000000e+00> : vector<6xf32>
    %356 = vector.multi_reduction <add>, %308, %cst_135 [1] : vector<6x32xf32> to vector<6xf32>
    %357 = vector.shape_cast %356 : vector<6xf32> to vector<6x1xf32>
    %cst_136 = arith.constant 3.200000e+01 : f32
    %358 = vector.broadcast %cst_136 : f32 to vector<6x1xf32>
    %359 = arith.divf %357, %358 : vector<6x1xf32>
    %360 = vector.broadcast %359 : vector<6x1xf32> to vector<6x32xf32>
    %361 = arith.subf %308, %360 : vector<6x32xf32>
    %362 = arith.mulf %361, %361 : vector<6x32xf32>
    %cst_137 = arith.constant dense<0.000000e+00> : vector<6xf32>
    %363 = vector.multi_reduction <add>, %362, %cst_137 [1] : vector<6x32xf32> to vector<6xf32>
    %364 = vector.shape_cast %363 : vector<6xf32> to vector<6x1xf32>
    %cst_138 = arith.constant 3.200000e+01 : f32
    %365 = vector.broadcast %cst_138 : f32 to vector<6x1xf32>
    %366 = arith.divf %364, %365 : vector<6x1xf32>
    %cst_139 = arith.constant 9.99999974E-6 : f32
    %367 = vector.broadcast %cst_139 : f32 to vector<6x1xf32>
    %368 = arith.addf %366, %367 : vector<6x1xf32>
    %369 = math.rsqrt %368 : vector<6x1xf32>
    %370 = vector.broadcast %369 : vector<6x1xf32> to vector<6x32xf32>
    %371 = arith.mulf %361, %370 : vector<6x32xf32>
    %372 = vector.broadcast %354 : vector<1x32xf32> to vector<6x32xf32>
    %373 = arith.mulf %371, %372 : vector<6x32xf32>
    %374 = vector.broadcast %355 : vector<1x32xf32> to vector<6x32xf32>
    %375 = arith.addf %373, %374 : vector<6x32xf32>
    %c336 = arith.constant 336 : index
    %c0_140 = arith.constant 0 : index
    %376 = vector.load %arg2[%c336, %c0_140] : memref<1016x128xf32, #tpu.memory_space<vmem>>, vector<32x64xf32>
    %c27 = arith.constant 27 : index
    %c0_141 = arith.constant 0 : index
    %377 = vector.load %arg3[%c27, %c0_141] : memref<72x128xf32, #tpu.memory_space<vmem>>, vector<1x64xf32>
    %cst_142 = arith.constant dense<0.000000e+00> : vector<6x64xf32>
    %378 = tpu.matmul %375, %376, %cst_142 {dimension_numbers = #tpu.dot_dimension_numbers<[1], [0], [0], [1], [0, 0, 1, 1], [], []>} : vector<6x32xf32>, vector<32x64xf32>, vector<6x64xf32> -> vector<6x64xf32>
    %379 = vector.broadcast %377 : vector<1x64xf32> to vector<6x64xf32>
    %380 = arith.addf %378, %379 : vector<6x64xf32>
    %cst_143 = arith.constant 5.000000e-01 : f32
    %381 = vector.broadcast %cst_143 : f32 to vector<6x64xf32>
    %382 = arith.mulf %381, %380 : vector<6x64xf32>
    %cst_144 = arith.constant 4.471500e-02 : f32
    %383 = vector.broadcast %cst_144 : f32 to vector<6x64xf32>
    %384 = arith.mulf %383, %380 : vector<6x64xf32>
    %385 = arith.mulf %384, %380 : vector<6x64xf32>
    %386 = arith.mulf %385, %380 : vector<6x64xf32>
    %387 = arith.addf %380, %386 : vector<6x64xf32>
    %cst_145 = arith.constant 0.797884583 : f32
    %388 = vector.broadcast %cst_145 : f32 to vector<6x64xf32>
    %389 = arith.mulf %388, %387 : vector<6x64xf32>
    %390 = math.tanh %389 : vector<6x64xf32>
    %cst_146 = arith.constant 1.000000e+00 : f32
    %391 = vector.broadcast %cst_146 : f32 to vector<6x64xf32>
    %392 = arith.addf %391, %390 : vector<6x64xf32>
    %393 = arith.mulf %382, %392 : vector<6x64xf32>
    %c28 = arith.constant 28 : index
    %c0_147 = arith.constant 0 : index
    %394 = vector.load %arg3[%c28, %c0_147] : memref<72x128xf32, #tpu.memory_space<vmem>>, vector<1x64xf32>
    %c29 = arith.constant 29 : index
    %c0_148 = arith.constant 0 : index
    %395 = vector.load %arg3[%c29, %c0_148] : memref<72x128xf32, #tpu.memory_space<vmem>>, vector<1x64xf32>
    %cst_149 = arith.constant dense<0.000000e+00> : vector<6xf32>
    %396 = vector.multi_reduction <add>, %393, %cst_149 [1] : vector<6x64xf32> to vector<6xf32>
    %397 = vector.shape_cast %396 : vector<6xf32> to vector<6x1xf32>
    %cst_150 = arith.constant 6.400000e+01 : f32
    %398 = vector.broadcast %cst_150 : f32 to vector<6x1xf32>
    %399 = arith.divf %397, %398 : vector<6x1xf32>
    %400 = vector.broadcast %399 : vector<6x1xf32> to vector<6x64xf32>
    %401 = arith.subf %393, %400 : vector<6x64xf32>
    %402 = arith.mulf %401, %401 : vector<6x64xf32>
    %cst_151 = arith.constant dense<0.000000e+00> : vector<6xf32>
    %403 = vector.multi_reduction <add>, %402, %cst_151 [1] : vector<6x64xf32> to vector<6xf32>
    %404 = vector.shape_cast %403 : vector<6xf32> to vector<6x1xf32>
    %cst_152 = arith.constant 6.400000e+01 : f32
    %405 = vector.broadcast %cst_152 : f32 to vector<6x1xf32>
    %406 = arith.divf %404, %405 : vector<6x1xf32>
    %cst_153 = arith.constant 9.99999974E-6 : f32
    %407 = vector.broadcast %cst_153 : f32 to vector<6x1xf32>
    %408 = arith.addf %406, %407 : vector<6x1xf32>
    %409 = math.rsqrt %408 : vector<6x1xf32>
    %410 = vector.broadcast %409 : vector<6x1xf32> to vector<6x64xf32>
    %411 = arith.mulf %401, %410 : vector<6x64xf32>
    %412 = vector.broadcast %394 : vector<1x64xf32> to vector<6x64xf32>
    %413 = arith.mulf %411, %412 : vector<6x64xf32>
    %414 = vector.broadcast %395 : vector<1x64xf32> to vector<6x64xf32>
    %415 = arith.addf %413, %414 : vector<6x64xf32>
    %c368 = arith.constant 368 : index
    %c0_154 = arith.constant 0 : index
    %416 = vector.load %arg2[%c368, %c0_154] : memref<1016x128xf32, #tpu.memory_space<vmem>>, vector<64x64xf32>
    %c30 = arith.constant 30 : index
    %c0_155 = arith.constant 0 : index
    %417 = vector.load %arg3[%c30, %c0_155] : memref<72x128xf32, #tpu.memory_space<vmem>>, vector<1x64xf32>
    %cst_156 = arith.constant dense<0.000000e+00> : vector<6x64xf32>
    %418 = tpu.matmul %415, %416, %cst_156 {dimension_numbers = #tpu.dot_dimension_numbers<[1], [0], [0], [1], [0, 0, 1, 1], [], []>} : vector<6x64xf32>, vector<64x64xf32>, vector<6x64xf32> -> vector<6x64xf32>
    %419 = vector.broadcast %417 : vector<1x64xf32> to vector<6x64xf32>
    %420 = arith.addf %418, %419 : vector<6x64xf32>
    %cst_157 = arith.constant 5.000000e-01 : f32
    %421 = vector.broadcast %cst_157 : f32 to vector<6x64xf32>
    %422 = arith.mulf %421, %420 : vector<6x64xf32>
    %cst_158 = arith.constant 4.471500e-02 : f32
    %423 = vector.broadcast %cst_158 : f32 to vector<6x64xf32>
    %424 = arith.mulf %423, %420 : vector<6x64xf32>
    %425 = arith.mulf %424, %420 : vector<6x64xf32>
    %426 = arith.mulf %425, %420 : vector<6x64xf32>
    %427 = arith.addf %420, %426 : vector<6x64xf32>
    %cst_159 = arith.constant 0.797884583 : f32
    %428 = vector.broadcast %cst_159 : f32 to vector<6x64xf32>
    %429 = arith.mulf %428, %427 : vector<6x64xf32>
    %430 = math.tanh %429 : vector<6x64xf32>
    %cst_160 = arith.constant 1.000000e+00 : f32
    %431 = vector.broadcast %cst_160 : f32 to vector<6x64xf32>
    %432 = arith.addf %431, %430 : vector<6x64xf32>
    %433 = arith.mulf %422, %432 : vector<6x64xf32>
    %c31 = arith.constant 31 : index
    %c0_161 = arith.constant 0 : index
    %434 = vector.load %arg3[%c31, %c0_161] : memref<72x128xf32, #tpu.memory_space<vmem>>, vector<1x64xf32>
    %c32_162 = arith.constant 32 : index
    %c0_163 = arith.constant 0 : index
    %435 = vector.load %arg3[%c32_162, %c0_163] : memref<72x128xf32, #tpu.memory_space<vmem>>, vector<1x64xf32>
    %cst_164 = arith.constant dense<0.000000e+00> : vector<6xf32>
    %436 = vector.multi_reduction <add>, %433, %cst_164 [1] : vector<6x64xf32> to vector<6xf32>
    %437 = vector.shape_cast %436 : vector<6xf32> to vector<6x1xf32>
    %cst_165 = arith.constant 6.400000e+01 : f32
    %438 = vector.broadcast %cst_165 : f32 to vector<6x1xf32>
    %439 = arith.divf %437, %438 : vector<6x1xf32>
    %440 = vector.broadcast %439 : vector<6x1xf32> to vector<6x64xf32>
    %441 = arith.subf %433, %440 : vector<6x64xf32>
    %442 = arith.mulf %441, %441 : vector<6x64xf32>
    %cst_166 = arith.constant dense<0.000000e+00> : vector<6xf32>
    %443 = vector.multi_reduction <add>, %442, %cst_166 [1] : vector<6x64xf32> to vector<6xf32>
    %444 = vector.shape_cast %443 : vector<6xf32> to vector<6x1xf32>
    %cst_167 = arith.constant 6.400000e+01 : f32
    %445 = vector.broadcast %cst_167 : f32 to vector<6x1xf32>
    %446 = arith.divf %444, %445 : vector<6x1xf32>
    %cst_168 = arith.constant 9.99999974E-6 : f32
    %447 = vector.broadcast %cst_168 : f32 to vector<6x1xf32>
    %448 = arith.addf %446, %447 : vector<6x1xf32>
    %449 = math.rsqrt %448 : vector<6x1xf32>
    %450 = vector.broadcast %449 : vector<6x1xf32> to vector<6x64xf32>
    %451 = arith.mulf %441, %450 : vector<6x64xf32>
    %452 = vector.broadcast %434 : vector<1x64xf32> to vector<6x64xf32>
    %453 = arith.mulf %451, %452 : vector<6x64xf32>
    %454 = vector.broadcast %435 : vector<1x64xf32> to vector<6x64xf32>
    %455 = arith.addf %453, %454 : vector<6x64xf32>
    %c432 = arith.constant 432 : index
    %c0_169 = arith.constant 0 : index
    %456 = vector.load %arg2[%c432, %c0_169] : memref<1016x128xf32, #tpu.memory_space<vmem>>, vector<64x1xf32>
    %c33 = arith.constant 33 : index
    %c0_170 = arith.constant 0 : index
    %457 = vector.load %arg3[%c33, %c0_170] : memref<72x128xf32, #tpu.memory_space<vmem>>, vector<1x1xf32>
    %cst_171 = arith.constant dense<0.000000e+00> : vector<6x1xf32>
    %458 = tpu.matmul %455, %456, %cst_171 {dimension_numbers = #tpu.dot_dimension_numbers<[1], [0], [0], [1], [0, 0, 1, 1], [], []>} : vector<6x64xf32>, vector<64x1xf32>, vector<6x1xf32> -> vector<6x1xf32>
    %459 = vector.broadcast %457 : vector<1x1xf32> to vector<6x1xf32>
    %460 = arith.addf %458, %459 : vector<6x1xf32>
    %cst_172 = arith.constant 0.000000e+00 : f32
    %461 = vector.broadcast %cst_172 : f32 to vector<6x1xf32>
    %462 = arith.subf %461, %460 : vector<6x1xf32>
    %463 = math.exp %462 : vector<6x1xf32>
    %cst_173 = arith.constant 1.000000e+00 : f32
    %464 = vector.broadcast %cst_173 : f32 to vector<6x1xf32>
    %465 = arith.addf %464, %463 : vector<6x1xf32>
    %cst_174 = arith.constant 9.000000e+00 : f32
    %466 = vector.broadcast %cst_174 : f32 to vector<6x1xf32>
    %467 = arith.divf %466, %465 : vector<6x1xf32>
    %cst_175 = arith.constant 1.000000e+00 : f32
    %468 = vector.broadcast %cst_175 : f32 to vector<6x1xf32>
    %469 = arith.addf %467, %468 : vector<6x1xf32>
    %cst_176 = arith.constant 1.000000e+00 : f32
    %470 = vector.broadcast %cst_176 : f32 to vector<6x1xf32>
    %cst_177 = arith.constant 0.000000e+00 : f32
    %471 = vector.broadcast %cst_177 : f32 to vector<6x1xf32>
    %472 = vector.extract_strided_slice %0 {offsets = [0, 0], sizes = [6, 1], strides = [1, 1]} : vector<6x3xf32> to vector<6x1xf32>
    %473 = arith.mulf %469, %470 : vector<6x1xf32>
    %cst_178 = arith.constant dense<0.000000e+00> : vector<6x1xf32>
    %474 = tpu.matmul %3, %473, %cst_178 {dimension_numbers = #tpu.dot_dimension_numbers<[1], [0], [0], [1], [0, 0, 1, 1], [], []>} : vector<6x6xf32>, vector<6x1xf32>, vector<6x1xf32> -> vector<6x1xf32>
    %475 = arith.mulf %473, %472 : vector<6x1xf32>
    %cst_179 = arith.constant dense<0.000000e+00> : vector<6x1xf32>
    %476 = tpu.matmul %3, %475, %cst_179 {dimension_numbers = #tpu.dot_dimension_numbers<[1], [0], [0], [1], [0, 0, 1, 1], [], []>} : vector<6x6xf32>, vector<6x1xf32>, vector<6x1xf32> -> vector<6x1xf32>
    %477 = arith.divf %476, %474 : vector<6x1xf32>
    %478 = math.log %477 : vector<6x1xf32>
    %479 = arith.addf %471, %478 : vector<6x1xf32>
    %cst_180 = arith.constant 1.000000e+00 : f32
    %480 = vector.broadcast %cst_180 : f32 to vector<6x1xf32>
    %481 = arith.subf %480, %472 : vector<6x1xf32>
    %482 = arith.mulf %470, %481 : vector<6x1xf32>
    %483 = vector.extract_strided_slice %0 {offsets = [0, 1], sizes = [6, 1], strides = [1, 1]} : vector<6x3xf32> to vector<6x1xf32>
    %484 = arith.mulf %469, %482 : vector<6x1xf32>
    %cst_181 = arith.constant dense<0.000000e+00> : vector<6x1xf32>
    %485 = tpu.matmul %3, %484, %cst_181 {dimension_numbers = #tpu.dot_dimension_numbers<[1], [0], [0], [1], [0, 0, 1, 1], [], []>} : vector<6x6xf32>, vector<6x1xf32>, vector<6x1xf32> -> vector<6x1xf32>
    %486 = arith.mulf %484, %483 : vector<6x1xf32>
    %cst_182 = arith.constant dense<0.000000e+00> : vector<6x1xf32>
    %487 = tpu.matmul %3, %486, %cst_182 {dimension_numbers = #tpu.dot_dimension_numbers<[1], [0], [0], [1], [0, 0, 1, 1], [], []>} : vector<6x6xf32>, vector<6x1xf32>, vector<6x1xf32> -> vector<6x1xf32>
    %488 = arith.divf %487, %485 : vector<6x1xf32>
    %489 = math.log %488 : vector<6x1xf32>
    %490 = arith.addf %479, %489 : vector<6x1xf32>
    %cst_183 = arith.constant 1.000000e+00 : f32
    %491 = vector.broadcast %cst_183 : f32 to vector<6x1xf32>
    %492 = arith.subf %491, %483 : vector<6x1xf32>
    %493 = arith.mulf %482, %492 : vector<6x1xf32>
    %494 = vector.extract_strided_slice %0 {offsets = [0, 2], sizes = [6, 1], strides = [1, 1]} : vector<6x3xf32> to vector<6x1xf32>
    %495 = arith.mulf %469, %493 : vector<6x1xf32>
    %cst_184 = arith.constant dense<0.000000e+00> : vector<6x1xf32>
    %496 = tpu.matmul %3, %495, %cst_184 {dimension_numbers = #tpu.dot_dimension_numbers<[1], [0], [0], [1], [0, 0, 1, 1], [], []>} : vector<6x6xf32>, vector<6x1xf32>, vector<6x1xf32> -> vector<6x1xf32>
    %497 = arith.mulf %495, %494 : vector<6x1xf32>
    %cst_185 = arith.constant dense<0.000000e+00> : vector<6x1xf32>
    %498 = tpu.matmul %3, %497, %cst_185 {dimension_numbers = #tpu.dot_dimension_numbers<[1], [0], [0], [1], [0, 0, 1, 1], [], []>} : vector<6x6xf32>, vector<6x1xf32>, vector<6x1xf32> -> vector<6x1xf32>
    %499 = arith.divf %498, %496 : vector<6x1xf32>
    %500 = math.log %499 : vector<6x1xf32>
    %501 = arith.addf %490, %500 : vector<6x1xf32>
    %c496 = arith.constant 496 : index
    %c0_186 = arith.constant 0 : index
    %502 = vector.load %arg2[%c496, %c0_186] : memref<1016x128xf32, #tpu.memory_space<vmem>>, vector<6x32xf32>
    %cst_187 = arith.constant dense<0.000000e+00> : vector<6x32xf32>
    %503 = tpu.matmul %1, %502, %cst_187 {dimension_numbers = #tpu.dot_dimension_numbers<[1], [0], [0], [1], [0, 0, 1, 1], [], []>} : vector<6x6xf32>, vector<6x32xf32>, vector<6x32xf32> -> vector<6x32xf32>
    %cst_188 = arith.constant 5.000000e-01 : f32
    %504 = vector.broadcast %cst_188 : f32 to vector<6x32xf32>
    %505 = arith.mulf %504, %503 : vector<6x32xf32>
    %cst_189 = arith.constant 4.471500e-02 : f32
    %506 = vector.broadcast %cst_189 : f32 to vector<6x32xf32>
    %507 = arith.mulf %506, %503 : vector<6x32xf32>
    %508 = arith.mulf %507, %503 : vector<6x32xf32>
    %509 = arith.mulf %508, %503 : vector<6x32xf32>
    %510 = arith.addf %503, %509 : vector<6x32xf32>
    %cst_190 = arith.constant 0.797884583 : f32
    %511 = vector.broadcast %cst_190 : f32 to vector<6x32xf32>
    %512 = arith.mulf %511, %510 : vector<6x32xf32>
    %513 = math.tanh %512 : vector<6x32xf32>
    %cst_191 = arith.constant 1.000000e+00 : f32
    %514 = vector.broadcast %cst_191 : f32 to vector<6x32xf32>
    %515 = arith.addf %514, %513 : vector<6x32xf32>
    %516 = arith.mulf %505, %515 : vector<6x32xf32>
    %c34 = arith.constant 34 : index
    %c0_192 = arith.constant 0 : index
    %517 = vector.load %arg3[%c34, %c0_192] : memref<72x128xf32, #tpu.memory_space<vmem>>, vector<1x32xf32>
    %c35 = arith.constant 35 : index
    %c0_193 = arith.constant 0 : index
    %518 = vector.load %arg3[%c35, %c0_193] : memref<72x128xf32, #tpu.memory_space<vmem>>, vector<1x32xf32>
    %cst_194 = arith.constant dense<0.000000e+00> : vector<6xf32>
    %519 = vector.multi_reduction <add>, %516, %cst_194 [1] : vector<6x32xf32> to vector<6xf32>
    %520 = vector.shape_cast %519 : vector<6xf32> to vector<6x1xf32>
    %cst_195 = arith.constant 3.200000e+01 : f32
    %521 = vector.broadcast %cst_195 : f32 to vector<6x1xf32>
    %522 = arith.divf %520, %521 : vector<6x1xf32>
    %523 = vector.broadcast %522 : vector<6x1xf32> to vector<6x32xf32>
    %524 = arith.subf %516, %523 : vector<6x32xf32>
    %525 = arith.mulf %524, %524 : vector<6x32xf32>
    %cst_196 = arith.constant dense<0.000000e+00> : vector<6xf32>
    %526 = vector.multi_reduction <add>, %525, %cst_196 [1] : vector<6x32xf32> to vector<6xf32>
    %527 = vector.shape_cast %526 : vector<6xf32> to vector<6x1xf32>
    %cst_197 = arith.constant 3.200000e+01 : f32
    %528 = vector.broadcast %cst_197 : f32 to vector<6x1xf32>
    %529 = arith.divf %527, %528 : vector<6x1xf32>
    %cst_198 = arith.constant 9.99999974E-6 : f32
    %530 = vector.broadcast %cst_198 : f32 to vector<6x1xf32>
    %531 = arith.addf %529, %530 : vector<6x1xf32>
    %532 = math.rsqrt %531 : vector<6x1xf32>
    %533 = vector.broadcast %532 : vector<6x1xf32> to vector<6x32xf32>
    %534 = arith.mulf %524, %533 : vector<6x32xf32>
    %535 = vector.broadcast %517 : vector<1x32xf32> to vector<6x32xf32>
    %536 = arith.mulf %534, %535 : vector<6x32xf32>
    %537 = vector.broadcast %518 : vector<1x32xf32> to vector<6x32xf32>
    %538 = arith.addf %536, %537 : vector<6x32xf32>
    %c504 = arith.constant 504 : index
    %c0_199 = arith.constant 0 : index
    %539 = vector.load %arg2[%c504, %c0_199] : memref<1016x128xf32, #tpu.memory_space<vmem>>, vector<32x96xf32>
    %c42 = arith.constant 42 : index
    %c0_200 = arith.constant 0 : index
    %540 = vector.load %arg3[%c42, %c0_200] : memref<72x128xf32, #tpu.memory_space<vmem>>, vector<1x96xf32>
    %cst_201 = arith.constant dense<0.000000e+00> : vector<6x96xf32>
    %541 = tpu.matmul %538, %539, %cst_201 {dimension_numbers = #tpu.dot_dimension_numbers<[1], [0], [0], [1], [0, 0, 1, 1], [], []>} : vector<6x32xf32>, vector<32x96xf32>, vector<6x96xf32> -> vector<6x96xf32>
    %542 = vector.broadcast %540 : vector<1x96xf32> to vector<6x96xf32>
    %543 = arith.addf %541, %542 : vector<6x96xf32>
    %544 = vector.extract_strided_slice %543 {offsets = [0, 0], sizes = [6, 32], strides = [1, 1]} : vector<6x96xf32> to vector<6x32xf32>
    %545 = vector.extract_strided_slice %543 {offsets = [0, 32], sizes = [6, 32], strides = [1, 1]} : vector<6x96xf32> to vector<6x32xf32>
    %546 = vector.extract_strided_slice %543 {offsets = [0, 64], sizes = [6, 32], strides = [1, 1]} : vector<6x96xf32> to vector<6x32xf32>
    %c536 = arith.constant 536 : index
    %c0_202 = arith.constant 0 : index
    %547 = vector.load %arg2[%c536, %c0_202] : memref<1016x128xf32, #tpu.memory_space<vmem>>, vector<32x32xf32>
    %c43 = arith.constant 43 : index
    %c0_203 = arith.constant 0 : index
    %548 = vector.load %arg3[%c43, %c0_203] : memref<72x128xf32, #tpu.memory_space<vmem>>, vector<1x32xf32>
    %549 = vector.extract_strided_slice %544 {offsets = [0, 0], sizes = [6, 16], strides = [1, 1]} : vector<6x32xf32> to vector<6x16xf32>
    %550 = vector.extract_strided_slice %545 {offsets = [0, 0], sizes = [6, 16], strides = [1, 1]} : vector<6x32xf32> to vector<6x16xf32>
    %551 = vector.extract_strided_slice %546 {offsets = [0, 0], sizes = [6, 16], strides = [1, 1]} : vector<6x32xf32> to vector<6x16xf32>
    %cst_204 = arith.constant dense<0.000000e+00> : vector<6x6xf32>
    %552 = tpu.matmul %549, %550, %cst_204 {dimension_numbers = #tpu.dot_dimension_numbers<[1], [1], [0], [0], [0, 0, 1, 0], [], []>} : vector<6x16xf32>, vector<6x16xf32>, vector<6x6xf32> -> vector<6x6xf32>
    %cst_205 = arith.constant 2.500000e-01 : f32
    %553 = vector.broadcast %cst_205 : f32 to vector<6x6xf32>
    %554 = arith.mulf %552, %553 : vector<6x6xf32>
    %555 = arith.addf %554, %5 : vector<6x6xf32>
    %cst_206 = arith.constant dense<0xFF800000> : vector<6xf32>
    %556 = vector.multi_reduction <maximumf>, %555, %cst_206 [1] : vector<6x6xf32> to vector<6xf32>
    %557 = vector.shape_cast %556 : vector<6xf32> to vector<6x1xf32>
    %558 = vector.broadcast %557 : vector<6x1xf32> to vector<6x6xf32>
    %559 = arith.subf %555, %558 : vector<6x6xf32>
    %560 = math.exp %559 : vector<6x6xf32>
    %cst_207 = arith.constant dense<0.000000e+00> : vector<6xf32>
    %561 = vector.multi_reduction <add>, %560, %cst_207 [1] : vector<6x6xf32> to vector<6xf32>
    %562 = vector.shape_cast %561 : vector<6xf32> to vector<6x1xf32>
    %563 = vector.broadcast %562 : vector<6x1xf32> to vector<6x6xf32>
    %564 = arith.divf %560, %563 : vector<6x6xf32>
    %cst_208 = arith.constant dense<0.000000e+00> : vector<6x16xf32>
    %565 = tpu.matmul %564, %551, %cst_208 {dimension_numbers = #tpu.dot_dimension_numbers<[1], [0], [0], [1], [0, 0, 1, 1], [], []>} : vector<6x6xf32>, vector<6x16xf32>, vector<6x16xf32> -> vector<6x16xf32>
    %566 = vector.extract_strided_slice %547 {offsets = [0, 0], sizes = [16, 32], strides = [1, 1]} : vector<32x32xf32> to vector<16x32xf32>
    %cst_209 = arith.constant dense<0.000000e+00> : vector<6x32xf32>
    %567 = tpu.matmul %565, %566, %cst_209 {dimension_numbers = #tpu.dot_dimension_numbers<[1], [0], [0], [1], [0, 0, 1, 1], [], []>} : vector<6x16xf32>, vector<16x32xf32>, vector<6x32xf32> -> vector<6x32xf32>
    %568 = vector.extract_strided_slice %544 {offsets = [0, 16], sizes = [6, 16], strides = [1, 1]} : vector<6x32xf32> to vector<6x16xf32>
    %569 = vector.extract_strided_slice %545 {offsets = [0, 16], sizes = [6, 16], strides = [1, 1]} : vector<6x32xf32> to vector<6x16xf32>
    %570 = vector.extract_strided_slice %546 {offsets = [0, 16], sizes = [6, 16], strides = [1, 1]} : vector<6x32xf32> to vector<6x16xf32>
    %cst_210 = arith.constant dense<0.000000e+00> : vector<6x6xf32>
    %571 = tpu.matmul %568, %569, %cst_210 {dimension_numbers = #tpu.dot_dimension_numbers<[1], [1], [0], [0], [0, 0, 1, 0], [], []>} : vector<6x16xf32>, vector<6x16xf32>, vector<6x6xf32> -> vector<6x6xf32>
    %cst_211 = arith.constant 2.500000e-01 : f32
    %572 = vector.broadcast %cst_211 : f32 to vector<6x6xf32>
    %573 = arith.mulf %571, %572 : vector<6x6xf32>
    %574 = arith.addf %573, %5 : vector<6x6xf32>
    %cst_212 = arith.constant dense<0xFF800000> : vector<6xf32>
    %575 = vector.multi_reduction <maximumf>, %574, %cst_212 [1] : vector<6x6xf32> to vector<6xf32>
    %576 = vector.shape_cast %575 : vector<6xf32> to vector<6x1xf32>
    %577 = vector.broadcast %576 : vector<6x1xf32> to vector<6x6xf32>
    %578 = arith.subf %574, %577 : vector<6x6xf32>
    %579 = math.exp %578 : vector<6x6xf32>
    %cst_213 = arith.constant dense<0.000000e+00> : vector<6xf32>
    %580 = vector.multi_reduction <add>, %579, %cst_213 [1] : vector<6x6xf32> to vector<6xf32>
    %581 = vector.shape_cast %580 : vector<6xf32> to vector<6x1xf32>
    %582 = vector.broadcast %581 : vector<6x1xf32> to vector<6x6xf32>
    %583 = arith.divf %579, %582 : vector<6x6xf32>
    %cst_214 = arith.constant dense<0.000000e+00> : vector<6x16xf32>
    %584 = tpu.matmul %583, %570, %cst_214 {dimension_numbers = #tpu.dot_dimension_numbers<[1], [0], [0], [1], [0, 0, 1, 1], [], []>} : vector<6x6xf32>, vector<6x16xf32>, vector<6x16xf32> -> vector<6x16xf32>
    %585 = vector.extract_strided_slice %547 {offsets = [16, 0], sizes = [16, 32], strides = [1, 1]} : vector<32x32xf32> to vector<16x32xf32>
    %cst_215 = arith.constant dense<0.000000e+00> : vector<6x32xf32>
    %586 = tpu.matmul %584, %585, %cst_215 {dimension_numbers = #tpu.dot_dimension_numbers<[1], [0], [0], [1], [0, 0, 1, 1], [], []>} : vector<6x16xf32>, vector<16x32xf32>, vector<6x32xf32> -> vector<6x32xf32>
    %587 = arith.addf %567, %586 : vector<6x32xf32>
    %588 = vector.broadcast %548 : vector<1x32xf32> to vector<6x32xf32>
    %589 = arith.addf %587, %588 : vector<6x32xf32>
    %590 = arith.addf %538, %589 : vector<6x32xf32>
    %c36 = arith.constant 36 : index
    %c0_216 = arith.constant 0 : index
    %591 = vector.load %arg3[%c36, %c0_216] : memref<72x128xf32, #tpu.memory_space<vmem>>, vector<1x32xf32>
    %c37 = arith.constant 37 : index
    %c0_217 = arith.constant 0 : index
    %592 = vector.load %arg3[%c37, %c0_217] : memref<72x128xf32, #tpu.memory_space<vmem>>, vector<1x32xf32>
    %cst_218 = arith.constant dense<0.000000e+00> : vector<6xf32>
    %593 = vector.multi_reduction <add>, %590, %cst_218 [1] : vector<6x32xf32> to vector<6xf32>
    %594 = vector.shape_cast %593 : vector<6xf32> to vector<6x1xf32>
    %cst_219 = arith.constant 3.200000e+01 : f32
    %595 = vector.broadcast %cst_219 : f32 to vector<6x1xf32>
    %596 = arith.divf %594, %595 : vector<6x1xf32>
    %597 = vector.broadcast %596 : vector<6x1xf32> to vector<6x32xf32>
    %598 = arith.subf %590, %597 : vector<6x32xf32>
    %599 = arith.mulf %598, %598 : vector<6x32xf32>
    %cst_220 = arith.constant dense<0.000000e+00> : vector<6xf32>
    %600 = vector.multi_reduction <add>, %599, %cst_220 [1] : vector<6x32xf32> to vector<6xf32>
    %601 = vector.shape_cast %600 : vector<6xf32> to vector<6x1xf32>
    %cst_221 = arith.constant 3.200000e+01 : f32
    %602 = vector.broadcast %cst_221 : f32 to vector<6x1xf32>
    %603 = arith.divf %601, %602 : vector<6x1xf32>
    %cst_222 = arith.constant 9.99999974E-6 : f32
    %604 = vector.broadcast %cst_222 : f32 to vector<6x1xf32>
    %605 = arith.addf %603, %604 : vector<6x1xf32>
    %606 = math.rsqrt %605 : vector<6x1xf32>
    %607 = vector.broadcast %606 : vector<6x1xf32> to vector<6x32xf32>
    %608 = arith.mulf %598, %607 : vector<6x32xf32>
    %609 = vector.broadcast %591 : vector<1x32xf32> to vector<6x32xf32>
    %610 = arith.mulf %608, %609 : vector<6x32xf32>
    %611 = vector.broadcast %592 : vector<1x32xf32> to vector<6x32xf32>
    %612 = arith.addf %610, %611 : vector<6x32xf32>
    %c568 = arith.constant 568 : index
    %c0_223 = arith.constant 0 : index
    %613 = vector.load %arg2[%c568, %c0_223] : memref<1016x128xf32, #tpu.memory_space<vmem>>, vector<32x64xf32>
    %c44 = arith.constant 44 : index
    %c0_224 = arith.constant 0 : index
    %614 = vector.load %arg3[%c44, %c0_224] : memref<72x128xf32, #tpu.memory_space<vmem>>, vector<1x64xf32>
    %cst_225 = arith.constant dense<0.000000e+00> : vector<6x64xf32>
    %615 = tpu.matmul %612, %613, %cst_225 {dimension_numbers = #tpu.dot_dimension_numbers<[1], [0], [0], [1], [0, 0, 1, 1], [], []>} : vector<6x32xf32>, vector<32x64xf32>, vector<6x64xf32> -> vector<6x64xf32>
    %616 = vector.broadcast %614 : vector<1x64xf32> to vector<6x64xf32>
    %617 = arith.addf %615, %616 : vector<6x64xf32>
    %c600 = arith.constant 600 : index
    %c0_226 = arith.constant 0 : index
    %618 = vector.load %arg2[%c600, %c0_226] : memref<1016x128xf32, #tpu.memory_space<vmem>>, vector<32x32xf32>
    %c45 = arith.constant 45 : index
    %c0_227 = arith.constant 0 : index
    %619 = vector.load %arg3[%c45, %c0_227] : memref<72x128xf32, #tpu.memory_space<vmem>>, vector<1x32xf32>
    %cst_228 = arith.constant dense<0.000000e+00> : vector<6x32xf32>
    %620 = tpu.matmul %308, %618, %cst_228 {dimension_numbers = #tpu.dot_dimension_numbers<[1], [0], [0], [1], [0, 0, 1, 1], [], []>} : vector<6x32xf32>, vector<32x32xf32>, vector<6x32xf32> -> vector<6x32xf32>
    %621 = vector.broadcast %619 : vector<1x32xf32> to vector<6x32xf32>
    %622 = arith.addf %620, %621 : vector<6x32xf32>
    %623 = vector.extract_strided_slice %617 {offsets = [0, 0], sizes = [6, 32], strides = [1, 1]} : vector<6x64xf32> to vector<6x32xf32>
    %624 = vector.extract_strided_slice %617 {offsets = [0, 32], sizes = [6, 32], strides = [1, 1]} : vector<6x64xf32> to vector<6x32xf32>
    %c632 = arith.constant 632 : index
    %c0_229 = arith.constant 0 : index
    %625 = vector.load %arg2[%c632, %c0_229] : memref<1016x128xf32, #tpu.memory_space<vmem>>, vector<32x32xf32>
    %c46 = arith.constant 46 : index
    %c0_230 = arith.constant 0 : index
    %626 = vector.load %arg3[%c46, %c0_230] : memref<72x128xf32, #tpu.memory_space<vmem>>, vector<1x32xf32>
    %627 = vector.extract_strided_slice %622 {offsets = [0, 0], sizes = [6, 16], strides = [1, 1]} : vector<6x32xf32> to vector<6x16xf32>
    %628 = vector.extract_strided_slice %623 {offsets = [0, 0], sizes = [6, 16], strides = [1, 1]} : vector<6x32xf32> to vector<6x16xf32>
    %629 = vector.extract_strided_slice %624 {offsets = [0, 0], sizes = [6, 16], strides = [1, 1]} : vector<6x32xf32> to vector<6x16xf32>
    %cst_231 = arith.constant dense<0.000000e+00> : vector<6x6xf32>
    %630 = tpu.matmul %627, %628, %cst_231 {dimension_numbers = #tpu.dot_dimension_numbers<[1], [1], [0], [0], [0, 0, 1, 0], [], []>} : vector<6x16xf32>, vector<6x16xf32>, vector<6x6xf32> -> vector<6x6xf32>
    %cst_232 = arith.constant 2.500000e-01 : f32
    %631 = vector.broadcast %cst_232 : f32 to vector<6x6xf32>
    %632 = arith.mulf %630, %631 : vector<6x6xf32>
    %633 = arith.addf %632, %5 : vector<6x6xf32>
    %cst_233 = arith.constant dense<0xFF800000> : vector<6xf32>
    %634 = vector.multi_reduction <maximumf>, %633, %cst_233 [1] : vector<6x6xf32> to vector<6xf32>
    %635 = vector.shape_cast %634 : vector<6xf32> to vector<6x1xf32>
    %636 = vector.broadcast %635 : vector<6x1xf32> to vector<6x6xf32>
    %637 = arith.subf %633, %636 : vector<6x6xf32>
    %638 = math.exp %637 : vector<6x6xf32>
    %cst_234 = arith.constant dense<0.000000e+00> : vector<6xf32>
    %639 = vector.multi_reduction <add>, %638, %cst_234 [1] : vector<6x6xf32> to vector<6xf32>
    %640 = vector.shape_cast %639 : vector<6xf32> to vector<6x1xf32>
    %641 = vector.broadcast %640 : vector<6x1xf32> to vector<6x6xf32>
    %642 = arith.divf %638, %641 : vector<6x6xf32>
    %cst_235 = arith.constant dense<0.000000e+00> : vector<6x16xf32>
    %643 = tpu.matmul %642, %629, %cst_235 {dimension_numbers = #tpu.dot_dimension_numbers<[1], [0], [0], [1], [0, 0, 1, 1], [], []>} : vector<6x6xf32>, vector<6x16xf32>, vector<6x16xf32> -> vector<6x16xf32>
    %644 = vector.extract_strided_slice %625 {offsets = [0, 0], sizes = [16, 32], strides = [1, 1]} : vector<32x32xf32> to vector<16x32xf32>
    %cst_236 = arith.constant dense<0.000000e+00> : vector<6x32xf32>
    %645 = tpu.matmul %643, %644, %cst_236 {dimension_numbers = #tpu.dot_dimension_numbers<[1], [0], [0], [1], [0, 0, 1, 1], [], []>} : vector<6x16xf32>, vector<16x32xf32>, vector<6x32xf32> -> vector<6x32xf32>
    %646 = vector.extract_strided_slice %622 {offsets = [0, 16], sizes = [6, 16], strides = [1, 1]} : vector<6x32xf32> to vector<6x16xf32>
    %647 = vector.extract_strided_slice %623 {offsets = [0, 16], sizes = [6, 16], strides = [1, 1]} : vector<6x32xf32> to vector<6x16xf32>
    %648 = vector.extract_strided_slice %624 {offsets = [0, 16], sizes = [6, 16], strides = [1, 1]} : vector<6x32xf32> to vector<6x16xf32>
    %cst_237 = arith.constant dense<0.000000e+00> : vector<6x6xf32>
    %649 = tpu.matmul %646, %647, %cst_237 {dimension_numbers = #tpu.dot_dimension_numbers<[1], [1], [0], [0], [0, 0, 1, 0], [], []>} : vector<6x16xf32>, vector<6x16xf32>, vector<6x6xf32> -> vector<6x6xf32>
    %cst_238 = arith.constant 2.500000e-01 : f32
    %650 = vector.broadcast %cst_238 : f32 to vector<6x6xf32>
    %651 = arith.mulf %649, %650 : vector<6x6xf32>
    %652 = arith.addf %651, %5 : vector<6x6xf32>
    %cst_239 = arith.constant dense<0xFF800000> : vector<6xf32>
    %653 = vector.multi_reduction <maximumf>, %652, %cst_239 [1] : vector<6x6xf32> to vector<6xf32>
    %654 = vector.shape_cast %653 : vector<6xf32> to vector<6x1xf32>
    %655 = vector.broadcast %654 : vector<6x1xf32> to vector<6x6xf32>
    %656 = arith.subf %652, %655 : vector<6x6xf32>
    %657 = math.exp %656 : vector<6x6xf32>
    %cst_240 = arith.constant dense<0.000000e+00> : vector<6xf32>
    %658 = vector.multi_reduction <add>, %657, %cst_240 [1] : vector<6x6xf32> to vector<6xf32>
    %659 = vector.shape_cast %658 : vector<6xf32> to vector<6x1xf32>
    %660 = vector.broadcast %659 : vector<6x1xf32> to vector<6x6xf32>
    %661 = arith.divf %657, %660 : vector<6x6xf32>
    %cst_241 = arith.constant dense<0.000000e+00> : vector<6x16xf32>
    %662 = tpu.matmul %661, %648, %cst_241 {dimension_numbers = #tpu.dot_dimension_numbers<[1], [0], [0], [1], [0, 0, 1, 1], [], []>} : vector<6x6xf32>, vector<6x16xf32>, vector<6x16xf32> -> vector<6x16xf32>
    %663 = vector.extract_strided_slice %625 {offsets = [16, 0], sizes = [16, 32], strides = [1, 1]} : vector<32x32xf32> to vector<16x32xf32>
    %cst_242 = arith.constant dense<0.000000e+00> : vector<6x32xf32>
    %664 = tpu.matmul %662, %663, %cst_242 {dimension_numbers = #tpu.dot_dimension_numbers<[1], [0], [0], [1], [0, 0, 1, 1], [], []>} : vector<6x16xf32>, vector<16x32xf32>, vector<6x32xf32> -> vector<6x32xf32>
    %665 = arith.addf %645, %664 : vector<6x32xf32>
    %666 = vector.broadcast %626 : vector<1x32xf32> to vector<6x32xf32>
    %667 = arith.addf %665, %666 : vector<6x32xf32>
    %668 = arith.addf %308, %667 : vector<6x32xf32>
    %c38 = arith.constant 38 : index
    %c0_243 = arith.constant 0 : index
    %669 = vector.load %arg3[%c38, %c0_243] : memref<72x128xf32, #tpu.memory_space<vmem>>, vector<1x32xf32>
    %c39 = arith.constant 39 : index
    %c0_244 = arith.constant 0 : index
    %670 = vector.load %arg3[%c39, %c0_244] : memref<72x128xf32, #tpu.memory_space<vmem>>, vector<1x32xf32>
    %cst_245 = arith.constant dense<0.000000e+00> : vector<6xf32>
    %671 = vector.multi_reduction <add>, %668, %cst_245 [1] : vector<6x32xf32> to vector<6xf32>
    %672 = vector.shape_cast %671 : vector<6xf32> to vector<6x1xf32>
    %cst_246 = arith.constant 3.200000e+01 : f32
    %673 = vector.broadcast %cst_246 : f32 to vector<6x1xf32>
    %674 = arith.divf %672, %673 : vector<6x1xf32>
    %675 = vector.broadcast %674 : vector<6x1xf32> to vector<6x32xf32>
    %676 = arith.subf %668, %675 : vector<6x32xf32>
    %677 = arith.mulf %676, %676 : vector<6x32xf32>
    %cst_247 = arith.constant dense<0.000000e+00> : vector<6xf32>
    %678 = vector.multi_reduction <add>, %677, %cst_247 [1] : vector<6x32xf32> to vector<6xf32>
    %679 = vector.shape_cast %678 : vector<6xf32> to vector<6x1xf32>
    %cst_248 = arith.constant 3.200000e+01 : f32
    %680 = vector.broadcast %cst_248 : f32 to vector<6x1xf32>
    %681 = arith.divf %679, %680 : vector<6x1xf32>
    %cst_249 = arith.constant 9.99999974E-6 : f32
    %682 = vector.broadcast %cst_249 : f32 to vector<6x1xf32>
    %683 = arith.addf %681, %682 : vector<6x1xf32>
    %684 = math.rsqrt %683 : vector<6x1xf32>
    %685 = vector.broadcast %684 : vector<6x1xf32> to vector<6x32xf32>
    %686 = arith.mulf %676, %685 : vector<6x32xf32>
    %687 = vector.broadcast %669 : vector<1x32xf32> to vector<6x32xf32>
    %688 = arith.mulf %686, %687 : vector<6x32xf32>
    %689 = vector.broadcast %670 : vector<1x32xf32> to vector<6x32xf32>
    %690 = arith.addf %688, %689 : vector<6x32xf32>
    %c664 = arith.constant 664 : index
    %c0_250 = arith.constant 0 : index
    %691 = vector.load %arg2[%c664, %c0_250] : memref<1016x128xf32, #tpu.memory_space<vmem>>, vector<32x32xf32>
    %c47 = arith.constant 47 : index
    %c0_251 = arith.constant 0 : index
    %692 = vector.load %arg3[%c47, %c0_251] : memref<72x128xf32, #tpu.memory_space<vmem>>, vector<1x32xf32>
    %cst_252 = arith.constant dense<0.000000e+00> : vector<6x32xf32>
    %693 = tpu.matmul %690, %691, %cst_252 {dimension_numbers = #tpu.dot_dimension_numbers<[1], [0], [0], [1], [0, 0, 1, 1], [], []>} : vector<6x32xf32>, vector<32x32xf32>, vector<6x32xf32> -> vector<6x32xf32>
    %694 = vector.broadcast %692 : vector<1x32xf32> to vector<6x32xf32>
    %695 = arith.addf %693, %694 : vector<6x32xf32>
    %cst_253 = arith.constant 5.000000e-01 : f32
    %696 = vector.broadcast %cst_253 : f32 to vector<6x32xf32>
    %697 = arith.mulf %696, %695 : vector<6x32xf32>
    %cst_254 = arith.constant 4.471500e-02 : f32
    %698 = vector.broadcast %cst_254 : f32 to vector<6x32xf32>
    %699 = arith.mulf %698, %695 : vector<6x32xf32>
    %700 = arith.mulf %699, %695 : vector<6x32xf32>
    %701 = arith.mulf %700, %695 : vector<6x32xf32>
    %702 = arith.addf %695, %701 : vector<6x32xf32>
    %cst_255 = arith.constant 0.797884583 : f32
    %703 = vector.broadcast %cst_255 : f32 to vector<6x32xf32>
    %704 = arith.mulf %703, %702 : vector<6x32xf32>
    %705 = math.tanh %704 : vector<6x32xf32>
    %cst_256 = arith.constant 1.000000e+00 : f32
    %706 = vector.broadcast %cst_256 : f32 to vector<6x32xf32>
    %707 = arith.addf %706, %705 : vector<6x32xf32>
    %708 = arith.mulf %697, %707 : vector<6x32xf32>
    %c696 = arith.constant 696 : index
    %c0_257 = arith.constant 0 : index
    %709 = vector.load %arg2[%c696, %c0_257] : memref<1016x128xf32, #tpu.memory_space<vmem>>, vector<32x32xf32>
    %c48_258 = arith.constant 48 : index
    %c0_259 = arith.constant 0 : index
    %710 = vector.load %arg3[%c48_258, %c0_259] : memref<72x128xf32, #tpu.memory_space<vmem>>, vector<1x32xf32>
    %cst_260 = arith.constant dense<0.000000e+00> : vector<6x32xf32>
    %711 = tpu.matmul %708, %709, %cst_260 {dimension_numbers = #tpu.dot_dimension_numbers<[1], [0], [0], [1], [0, 0, 1, 1], [], []>} : vector<6x32xf32>, vector<32x32xf32>, vector<6x32xf32> -> vector<6x32xf32>
    %712 = vector.broadcast %710 : vector<1x32xf32> to vector<6x32xf32>
    %713 = arith.addf %711, %712 : vector<6x32xf32>
    %714 = arith.addf %690, %713 : vector<6x32xf32>
    %c40_261 = arith.constant 40 : index
    %c0_262 = arith.constant 0 : index
    %715 = vector.load %arg3[%c40_261, %c0_262] : memref<72x128xf32, #tpu.memory_space<vmem>>, vector<1x32xf32>
    %c41 = arith.constant 41 : index
    %c0_263 = arith.constant 0 : index
    %716 = vector.load %arg3[%c41, %c0_263] : memref<72x128xf32, #tpu.memory_space<vmem>>, vector<1x32xf32>
    %cst_264 = arith.constant dense<0.000000e+00> : vector<6xf32>
    %717 = vector.multi_reduction <add>, %714, %cst_264 [1] : vector<6x32xf32> to vector<6xf32>
    %718 = vector.shape_cast %717 : vector<6xf32> to vector<6x1xf32>
    %cst_265 = arith.constant 3.200000e+01 : f32
    %719 = vector.broadcast %cst_265 : f32 to vector<6x1xf32>
    %720 = arith.divf %718, %719 : vector<6x1xf32>
    %721 = vector.broadcast %720 : vector<6x1xf32> to vector<6x32xf32>
    %722 = arith.subf %714, %721 : vector<6x32xf32>
    %723 = arith.mulf %722, %722 : vector<6x32xf32>
    %cst_266 = arith.constant dense<0.000000e+00> : vector<6xf32>
    %724 = vector.multi_reduction <add>, %723, %cst_266 [1] : vector<6x32xf32> to vector<6xf32>
    %725 = vector.shape_cast %724 : vector<6xf32> to vector<6x1xf32>
    %cst_267 = arith.constant 3.200000e+01 : f32
    %726 = vector.broadcast %cst_267 : f32 to vector<6x1xf32>
    %727 = arith.divf %725, %726 : vector<6x1xf32>
    %cst_268 = arith.constant 9.99999974E-6 : f32
    %728 = vector.broadcast %cst_268 : f32 to vector<6x1xf32>
    %729 = arith.addf %727, %728 : vector<6x1xf32>
    %730 = math.rsqrt %729 : vector<6x1xf32>
    %731 = vector.broadcast %730 : vector<6x1xf32> to vector<6x32xf32>
    %732 = arith.mulf %722, %731 : vector<6x32xf32>
    %733 = vector.broadcast %715 : vector<1x32xf32> to vector<6x32xf32>
    %734 = arith.mulf %732, %733 : vector<6x32xf32>
    %735 = vector.broadcast %716 : vector<1x32xf32> to vector<6x32xf32>
    %736 = arith.addf %734, %735 : vector<6x32xf32>
    %c728 = arith.constant 728 : index
    %c0_269 = arith.constant 0 : index
    %737 = vector.load %arg2[%c728, %c0_269] : memref<1016x128xf32, #tpu.memory_space<vmem>>, vector<32x96xf32>
    %c55 = arith.constant 55 : index
    %c0_270 = arith.constant 0 : index
    %738 = vector.load %arg3[%c55, %c0_270] : memref<72x128xf32, #tpu.memory_space<vmem>>, vector<1x96xf32>
    %cst_271 = arith.constant dense<0.000000e+00> : vector<6x96xf32>
    %739 = tpu.matmul %736, %737, %cst_271 {dimension_numbers = #tpu.dot_dimension_numbers<[1], [0], [0], [1], [0, 0, 1, 1], [], []>} : vector<6x32xf32>, vector<32x96xf32>, vector<6x96xf32> -> vector<6x96xf32>
    %740 = vector.broadcast %738 : vector<1x96xf32> to vector<6x96xf32>
    %741 = arith.addf %739, %740 : vector<6x96xf32>
    %742 = vector.extract_strided_slice %741 {offsets = [0, 0], sizes = [6, 32], strides = [1, 1]} : vector<6x96xf32> to vector<6x32xf32>
    %743 = vector.extract_strided_slice %741 {offsets = [0, 32], sizes = [6, 32], strides = [1, 1]} : vector<6x96xf32> to vector<6x32xf32>
    %744 = vector.extract_strided_slice %741 {offsets = [0, 64], sizes = [6, 32], strides = [1, 1]} : vector<6x96xf32> to vector<6x32xf32>
    %c760 = arith.constant 760 : index
    %c0_272 = arith.constant 0 : index
    %745 = vector.load %arg2[%c760, %c0_272] : memref<1016x128xf32, #tpu.memory_space<vmem>>, vector<32x32xf32>
    %c56 = arith.constant 56 : index
    %c0_273 = arith.constant 0 : index
    %746 = vector.load %arg3[%c56, %c0_273] : memref<72x128xf32, #tpu.memory_space<vmem>>, vector<1x32xf32>
    %747 = vector.extract_strided_slice %742 {offsets = [0, 0], sizes = [6, 16], strides = [1, 1]} : vector<6x32xf32> to vector<6x16xf32>
    %748 = vector.extract_strided_slice %743 {offsets = [0, 0], sizes = [6, 16], strides = [1, 1]} : vector<6x32xf32> to vector<6x16xf32>
    %749 = vector.extract_strided_slice %744 {offsets = [0, 0], sizes = [6, 16], strides = [1, 1]} : vector<6x32xf32> to vector<6x16xf32>
    %cst_274 = arith.constant dense<0.000000e+00> : vector<6x6xf32>
    %750 = tpu.matmul %747, %748, %cst_274 {dimension_numbers = #tpu.dot_dimension_numbers<[1], [1], [0], [0], [0, 0, 1, 0], [], []>} : vector<6x16xf32>, vector<6x16xf32>, vector<6x6xf32> -> vector<6x6xf32>
    %cst_275 = arith.constant 2.500000e-01 : f32
    %751 = vector.broadcast %cst_275 : f32 to vector<6x6xf32>
    %752 = arith.mulf %750, %751 : vector<6x6xf32>
    %753 = arith.addf %752, %5 : vector<6x6xf32>
    %cst_276 = arith.constant dense<0xFF800000> : vector<6xf32>
    %754 = vector.multi_reduction <maximumf>, %753, %cst_276 [1] : vector<6x6xf32> to vector<6xf32>
    %755 = vector.shape_cast %754 : vector<6xf32> to vector<6x1xf32>
    %756 = vector.broadcast %755 : vector<6x1xf32> to vector<6x6xf32>
    %757 = arith.subf %753, %756 : vector<6x6xf32>
    %758 = math.exp %757 : vector<6x6xf32>
    %cst_277 = arith.constant dense<0.000000e+00> : vector<6xf32>
    %759 = vector.multi_reduction <add>, %758, %cst_277 [1] : vector<6x6xf32> to vector<6xf32>
    %760 = vector.shape_cast %759 : vector<6xf32> to vector<6x1xf32>
    %761 = vector.broadcast %760 : vector<6x1xf32> to vector<6x6xf32>
    %762 = arith.divf %758, %761 : vector<6x6xf32>
    %cst_278 = arith.constant dense<0.000000e+00> : vector<6x16xf32>
    %763 = tpu.matmul %762, %749, %cst_278 {dimension_numbers = #tpu.dot_dimension_numbers<[1], [0], [0], [1], [0, 0, 1, 1], [], []>} : vector<6x6xf32>, vector<6x16xf32>, vector<6x16xf32> -> vector<6x16xf32>
    %764 = vector.extract_strided_slice %745 {offsets = [0, 0], sizes = [16, 32], strides = [1, 1]} : vector<32x32xf32> to vector<16x32xf32>
    %cst_279 = arith.constant dense<0.000000e+00> : vector<6x32xf32>
    %765 = tpu.matmul %763, %764, %cst_279 {dimension_numbers = #tpu.dot_dimension_numbers<[1], [0], [0], [1], [0, 0, 1, 1], [], []>} : vector<6x16xf32>, vector<16x32xf32>, vector<6x32xf32> -> vector<6x32xf32>
    %766 = vector.extract_strided_slice %742 {offsets = [0, 16], sizes = [6, 16], strides = [1, 1]} : vector<6x32xf32> to vector<6x16xf32>
    %767 = vector.extract_strided_slice %743 {offsets = [0, 16], sizes = [6, 16], strides = [1, 1]} : vector<6x32xf32> to vector<6x16xf32>
    %768 = vector.extract_strided_slice %744 {offsets = [0, 16], sizes = [6, 16], strides = [1, 1]} : vector<6x32xf32> to vector<6x16xf32>
    %cst_280 = arith.constant dense<0.000000e+00> : vector<6x6xf32>
    %769 = tpu.matmul %766, %767, %cst_280 {dimension_numbers = #tpu.dot_dimension_numbers<[1], [1], [0], [0], [0, 0, 1, 0], [], []>} : vector<6x16xf32>, vector<6x16xf32>, vector<6x6xf32> -> vector<6x6xf32>
    %cst_281 = arith.constant 2.500000e-01 : f32
    %770 = vector.broadcast %cst_281 : f32 to vector<6x6xf32>
    %771 = arith.mulf %769, %770 : vector<6x6xf32>
    %772 = arith.addf %771, %5 : vector<6x6xf32>
    %cst_282 = arith.constant dense<0xFF800000> : vector<6xf32>
    %773 = vector.multi_reduction <maximumf>, %772, %cst_282 [1] : vector<6x6xf32> to vector<6xf32>
    %774 = vector.shape_cast %773 : vector<6xf32> to vector<6x1xf32>
    %775 = vector.broadcast %774 : vector<6x1xf32> to vector<6x6xf32>
    %776 = arith.subf %772, %775 : vector<6x6xf32>
    %777 = math.exp %776 : vector<6x6xf32>
    %cst_283 = arith.constant dense<0.000000e+00> : vector<6xf32>
    %778 = vector.multi_reduction <add>, %777, %cst_283 [1] : vector<6x6xf32> to vector<6xf32>
    %779 = vector.shape_cast %778 : vector<6xf32> to vector<6x1xf32>
    %780 = vector.broadcast %779 : vector<6x1xf32> to vector<6x6xf32>
    %781 = arith.divf %777, %780 : vector<6x6xf32>
    %cst_284 = arith.constant dense<0.000000e+00> : vector<6x16xf32>
    %782 = tpu.matmul %781, %768, %cst_284 {dimension_numbers = #tpu.dot_dimension_numbers<[1], [0], [0], [1], [0, 0, 1, 1], [], []>} : vector<6x6xf32>, vector<6x16xf32>, vector<6x16xf32> -> vector<6x16xf32>
    %783 = vector.extract_strided_slice %745 {offsets = [16, 0], sizes = [16, 32], strides = [1, 1]} : vector<32x32xf32> to vector<16x32xf32>
    %cst_285 = arith.constant dense<0.000000e+00> : vector<6x32xf32>
    %784 = tpu.matmul %782, %783, %cst_285 {dimension_numbers = #tpu.dot_dimension_numbers<[1], [0], [0], [1], [0, 0, 1, 1], [], []>} : vector<6x16xf32>, vector<16x32xf32>, vector<6x32xf32> -> vector<6x32xf32>
    %785 = arith.addf %765, %784 : vector<6x32xf32>
    %786 = vector.broadcast %746 : vector<1x32xf32> to vector<6x32xf32>
    %787 = arith.addf %785, %786 : vector<6x32xf32>
    %788 = arith.addf %736, %787 : vector<6x32xf32>
    %c49 = arith.constant 49 : index
    %c0_286 = arith.constant 0 : index
    %789 = vector.load %arg3[%c49, %c0_286] : memref<72x128xf32, #tpu.memory_space<vmem>>, vector<1x32xf32>
    %c50 = arith.constant 50 : index
    %c0_287 = arith.constant 0 : index
    %790 = vector.load %arg3[%c50, %c0_287] : memref<72x128xf32, #tpu.memory_space<vmem>>, vector<1x32xf32>
    %cst_288 = arith.constant dense<0.000000e+00> : vector<6xf32>
    %791 = vector.multi_reduction <add>, %788, %cst_288 [1] : vector<6x32xf32> to vector<6xf32>
    %792 = vector.shape_cast %791 : vector<6xf32> to vector<6x1xf32>
    %cst_289 = arith.constant 3.200000e+01 : f32
    %793 = vector.broadcast %cst_289 : f32 to vector<6x1xf32>
    %794 = arith.divf %792, %793 : vector<6x1xf32>
    %795 = vector.broadcast %794 : vector<6x1xf32> to vector<6x32xf32>
    %796 = arith.subf %788, %795 : vector<6x32xf32>
    %797 = arith.mulf %796, %796 : vector<6x32xf32>
    %cst_290 = arith.constant dense<0.000000e+00> : vector<6xf32>
    %798 = vector.multi_reduction <add>, %797, %cst_290 [1] : vector<6x32xf32> to vector<6xf32>
    %799 = vector.shape_cast %798 : vector<6xf32> to vector<6x1xf32>
    %cst_291 = arith.constant 3.200000e+01 : f32
    %800 = vector.broadcast %cst_291 : f32 to vector<6x1xf32>
    %801 = arith.divf %799, %800 : vector<6x1xf32>
    %cst_292 = arith.constant 9.99999974E-6 : f32
    %802 = vector.broadcast %cst_292 : f32 to vector<6x1xf32>
    %803 = arith.addf %801, %802 : vector<6x1xf32>
    %804 = math.rsqrt %803 : vector<6x1xf32>
    %805 = vector.broadcast %804 : vector<6x1xf32> to vector<6x32xf32>
    %806 = arith.mulf %796, %805 : vector<6x32xf32>
    %807 = vector.broadcast %789 : vector<1x32xf32> to vector<6x32xf32>
    %808 = arith.mulf %806, %807 : vector<6x32xf32>
    %809 = vector.broadcast %790 : vector<1x32xf32> to vector<6x32xf32>
    %810 = arith.addf %808, %809 : vector<6x32xf32>
    %c792 = arith.constant 792 : index
    %c0_293 = arith.constant 0 : index
    %811 = vector.load %arg2[%c792, %c0_293] : memref<1016x128xf32, #tpu.memory_space<vmem>>, vector<32x64xf32>
    %c57 = arith.constant 57 : index
    %c0_294 = arith.constant 0 : index
    %812 = vector.load %arg3[%c57, %c0_294] : memref<72x128xf32, #tpu.memory_space<vmem>>, vector<1x64xf32>
    %cst_295 = arith.constant dense<0.000000e+00> : vector<6x64xf32>
    %813 = tpu.matmul %810, %811, %cst_295 {dimension_numbers = #tpu.dot_dimension_numbers<[1], [0], [0], [1], [0, 0, 1, 1], [], []>} : vector<6x32xf32>, vector<32x64xf32>, vector<6x64xf32> -> vector<6x64xf32>
    %814 = vector.broadcast %812 : vector<1x64xf32> to vector<6x64xf32>
    %815 = arith.addf %813, %814 : vector<6x64xf32>
    %c824 = arith.constant 824 : index
    %c0_296 = arith.constant 0 : index
    %816 = vector.load %arg2[%c824, %c0_296] : memref<1016x128xf32, #tpu.memory_space<vmem>>, vector<32x32xf32>
    %c58 = arith.constant 58 : index
    %c0_297 = arith.constant 0 : index
    %817 = vector.load %arg3[%c58, %c0_297] : memref<72x128xf32, #tpu.memory_space<vmem>>, vector<1x32xf32>
    %cst_298 = arith.constant dense<0.000000e+00> : vector<6x32xf32>
    %818 = tpu.matmul %308, %816, %cst_298 {dimension_numbers = #tpu.dot_dimension_numbers<[1], [0], [0], [1], [0, 0, 1, 1], [], []>} : vector<6x32xf32>, vector<32x32xf32>, vector<6x32xf32> -> vector<6x32xf32>
    %819 = vector.broadcast %817 : vector<1x32xf32> to vector<6x32xf32>
    %820 = arith.addf %818, %819 : vector<6x32xf32>
    %821 = vector.extract_strided_slice %815 {offsets = [0, 0], sizes = [6, 32], strides = [1, 1]} : vector<6x64xf32> to vector<6x32xf32>
    %822 = vector.extract_strided_slice %815 {offsets = [0, 32], sizes = [6, 32], strides = [1, 1]} : vector<6x64xf32> to vector<6x32xf32>
    %c856 = arith.constant 856 : index
    %c0_299 = arith.constant 0 : index
    %823 = vector.load %arg2[%c856, %c0_299] : memref<1016x128xf32, #tpu.memory_space<vmem>>, vector<32x32xf32>
    %c59 = arith.constant 59 : index
    %c0_300 = arith.constant 0 : index
    %824 = vector.load %arg3[%c59, %c0_300] : memref<72x128xf32, #tpu.memory_space<vmem>>, vector<1x32xf32>
    %825 = vector.extract_strided_slice %820 {offsets = [0, 0], sizes = [6, 16], strides = [1, 1]} : vector<6x32xf32> to vector<6x16xf32>
    %826 = vector.extract_strided_slice %821 {offsets = [0, 0], sizes = [6, 16], strides = [1, 1]} : vector<6x32xf32> to vector<6x16xf32>
    %827 = vector.extract_strided_slice %822 {offsets = [0, 0], sizes = [6, 16], strides = [1, 1]} : vector<6x32xf32> to vector<6x16xf32>
    %cst_301 = arith.constant dense<0.000000e+00> : vector<6x6xf32>
    %828 = tpu.matmul %825, %826, %cst_301 {dimension_numbers = #tpu.dot_dimension_numbers<[1], [1], [0], [0], [0, 0, 1, 0], [], []>} : vector<6x16xf32>, vector<6x16xf32>, vector<6x6xf32> -> vector<6x6xf32>
    %cst_302 = arith.constant 2.500000e-01 : f32
    %829 = vector.broadcast %cst_302 : f32 to vector<6x6xf32>
    %830 = arith.mulf %828, %829 : vector<6x6xf32>
    %831 = arith.addf %830, %5 : vector<6x6xf32>
    %cst_303 = arith.constant dense<0xFF800000> : vector<6xf32>
    %832 = vector.multi_reduction <maximumf>, %831, %cst_303 [1] : vector<6x6xf32> to vector<6xf32>
    %833 = vector.shape_cast %832 : vector<6xf32> to vector<6x1xf32>
    %834 = vector.broadcast %833 : vector<6x1xf32> to vector<6x6xf32>
    %835 = arith.subf %831, %834 : vector<6x6xf32>
    %836 = math.exp %835 : vector<6x6xf32>
    %cst_304 = arith.constant dense<0.000000e+00> : vector<6xf32>
    %837 = vector.multi_reduction <add>, %836, %cst_304 [1] : vector<6x6xf32> to vector<6xf32>
    %838 = vector.shape_cast %837 : vector<6xf32> to vector<6x1xf32>
    %839 = vector.broadcast %838 : vector<6x1xf32> to vector<6x6xf32>
    %840 = arith.divf %836, %839 : vector<6x6xf32>
    %cst_305 = arith.constant dense<0.000000e+00> : vector<6x16xf32>
    %841 = tpu.matmul %840, %827, %cst_305 {dimension_numbers = #tpu.dot_dimension_numbers<[1], [0], [0], [1], [0, 0, 1, 1], [], []>} : vector<6x6xf32>, vector<6x16xf32>, vector<6x16xf32> -> vector<6x16xf32>
    %842 = vector.extract_strided_slice %823 {offsets = [0, 0], sizes = [16, 32], strides = [1, 1]} : vector<32x32xf32> to vector<16x32xf32>
    %cst_306 = arith.constant dense<0.000000e+00> : vector<6x32xf32>
    %843 = tpu.matmul %841, %842, %cst_306 {dimension_numbers = #tpu.dot_dimension_numbers<[1], [0], [0], [1], [0, 0, 1, 1], [], []>} : vector<6x16xf32>, vector<16x32xf32>, vector<6x32xf32> -> vector<6x32xf32>
    %844 = vector.extract_strided_slice %820 {offsets = [0, 16], sizes = [6, 16], strides = [1, 1]} : vector<6x32xf32> to vector<6x16xf32>
    %845 = vector.extract_strided_slice %821 {offsets = [0, 16], sizes = [6, 16], strides = [1, 1]} : vector<6x32xf32> to vector<6x16xf32>
    %846 = vector.extract_strided_slice %822 {offsets = [0, 16], sizes = [6, 16], strides = [1, 1]} : vector<6x32xf32> to vector<6x16xf32>
    %cst_307 = arith.constant dense<0.000000e+00> : vector<6x6xf32>
    %847 = tpu.matmul %844, %845, %cst_307 {dimension_numbers = #tpu.dot_dimension_numbers<[1], [1], [0], [0], [0, 0, 1, 0], [], []>} : vector<6x16xf32>, vector<6x16xf32>, vector<6x6xf32> -> vector<6x6xf32>
    %cst_308 = arith.constant 2.500000e-01 : f32
    %848 = vector.broadcast %cst_308 : f32 to vector<6x6xf32>
    %849 = arith.mulf %847, %848 : vector<6x6xf32>
    %850 = arith.addf %849, %5 : vector<6x6xf32>
    %cst_309 = arith.constant dense<0xFF800000> : vector<6xf32>
    %851 = vector.multi_reduction <maximumf>, %850, %cst_309 [1] : vector<6x6xf32> to vector<6xf32>
    %852 = vector.shape_cast %851 : vector<6xf32> to vector<6x1xf32>
    %853 = vector.broadcast %852 : vector<6x1xf32> to vector<6x6xf32>
    %854 = arith.subf %850, %853 : vector<6x6xf32>
    %855 = math.exp %854 : vector<6x6xf32>
    %cst_310 = arith.constant dense<0.000000e+00> : vector<6xf32>
    %856 = vector.multi_reduction <add>, %855, %cst_310 [1] : vector<6x6xf32> to vector<6xf32>
    %857 = vector.shape_cast %856 : vector<6xf32> to vector<6x1xf32>
    %858 = vector.broadcast %857 : vector<6x1xf32> to vector<6x6xf32>
    %859 = arith.divf %855, %858 : vector<6x6xf32>
    %cst_311 = arith.constant dense<0.000000e+00> : vector<6x16xf32>
    %860 = tpu.matmul %859, %846, %cst_311 {dimension_numbers = #tpu.dot_dimension_numbers<[1], [0], [0], [1], [0, 0, 1, 1], [], []>} : vector<6x6xf32>, vector<6x16xf32>, vector<6x16xf32> -> vector<6x16xf32>
    %861 = vector.extract_strided_slice %823 {offsets = [16, 0], sizes = [16, 32], strides = [1, 1]} : vector<32x32xf32> to vector<16x32xf32>
    %cst_312 = arith.constant dense<0.000000e+00> : vector<6x32xf32>
    %862 = tpu.matmul %860, %861, %cst_312 {dimension_numbers = #tpu.dot_dimension_numbers<[1], [0], [0], [1], [0, 0, 1, 1], [], []>} : vector<6x16xf32>, vector<16x32xf32>, vector<6x32xf32> -> vector<6x32xf32>
    %863 = arith.addf %843, %862 : vector<6x32xf32>
    %864 = vector.broadcast %824 : vector<1x32xf32> to vector<6x32xf32>
    %865 = arith.addf %863, %864 : vector<6x32xf32>
    %866 = arith.addf %308, %865 : vector<6x32xf32>
    %c51 = arith.constant 51 : index
    %c0_313 = arith.constant 0 : index
    %867 = vector.load %arg3[%c51, %c0_313] : memref<72x128xf32, #tpu.memory_space<vmem>>, vector<1x32xf32>
    %c52 = arith.constant 52 : index
    %c0_314 = arith.constant 0 : index
    %868 = vector.load %arg3[%c52, %c0_314] : memref<72x128xf32, #tpu.memory_space<vmem>>, vector<1x32xf32>
    %cst_315 = arith.constant dense<0.000000e+00> : vector<6xf32>
    %869 = vector.multi_reduction <add>, %866, %cst_315 [1] : vector<6x32xf32> to vector<6xf32>
    %870 = vector.shape_cast %869 : vector<6xf32> to vector<6x1xf32>
    %cst_316 = arith.constant 3.200000e+01 : f32
    %871 = vector.broadcast %cst_316 : f32 to vector<6x1xf32>
    %872 = arith.divf %870, %871 : vector<6x1xf32>
    %873 = vector.broadcast %872 : vector<6x1xf32> to vector<6x32xf32>
    %874 = arith.subf %866, %873 : vector<6x32xf32>
    %875 = arith.mulf %874, %874 : vector<6x32xf32>
    %cst_317 = arith.constant dense<0.000000e+00> : vector<6xf32>
    %876 = vector.multi_reduction <add>, %875, %cst_317 [1] : vector<6x32xf32> to vector<6xf32>
    %877 = vector.shape_cast %876 : vector<6xf32> to vector<6x1xf32>
    %cst_318 = arith.constant 3.200000e+01 : f32
    %878 = vector.broadcast %cst_318 : f32 to vector<6x1xf32>
    %879 = arith.divf %877, %878 : vector<6x1xf32>
    %cst_319 = arith.constant 9.99999974E-6 : f32
    %880 = vector.broadcast %cst_319 : f32 to vector<6x1xf32>
    %881 = arith.addf %879, %880 : vector<6x1xf32>
    %882 = math.rsqrt %881 : vector<6x1xf32>
    %883 = vector.broadcast %882 : vector<6x1xf32> to vector<6x32xf32>
    %884 = arith.mulf %874, %883 : vector<6x32xf32>
    %885 = vector.broadcast %867 : vector<1x32xf32> to vector<6x32xf32>
    %886 = arith.mulf %884, %885 : vector<6x32xf32>
    %887 = vector.broadcast %868 : vector<1x32xf32> to vector<6x32xf32>
    %888 = arith.addf %886, %887 : vector<6x32xf32>
    %c888 = arith.constant 888 : index
    %c0_320 = arith.constant 0 : index
    %889 = vector.load %arg2[%c888, %c0_320] : memref<1016x128xf32, #tpu.memory_space<vmem>>, vector<32x32xf32>
    %c60 = arith.constant 60 : index
    %c0_321 = arith.constant 0 : index
    %890 = vector.load %arg3[%c60, %c0_321] : memref<72x128xf32, #tpu.memory_space<vmem>>, vector<1x32xf32>
    %cst_322 = arith.constant dense<0.000000e+00> : vector<6x32xf32>
    %891 = tpu.matmul %888, %889, %cst_322 {dimension_numbers = #tpu.dot_dimension_numbers<[1], [0], [0], [1], [0, 0, 1, 1], [], []>} : vector<6x32xf32>, vector<32x32xf32>, vector<6x32xf32> -> vector<6x32xf32>
    %892 = vector.broadcast %890 : vector<1x32xf32> to vector<6x32xf32>
    %893 = arith.addf %891, %892 : vector<6x32xf32>
    %cst_323 = arith.constant 5.000000e-01 : f32
    %894 = vector.broadcast %cst_323 : f32 to vector<6x32xf32>
    %895 = arith.mulf %894, %893 : vector<6x32xf32>
    %cst_324 = arith.constant 4.471500e-02 : f32
    %896 = vector.broadcast %cst_324 : f32 to vector<6x32xf32>
    %897 = arith.mulf %896, %893 : vector<6x32xf32>
    %898 = arith.mulf %897, %893 : vector<6x32xf32>
    %899 = arith.mulf %898, %893 : vector<6x32xf32>
    %900 = arith.addf %893, %899 : vector<6x32xf32>
    %cst_325 = arith.constant 0.797884583 : f32
    %901 = vector.broadcast %cst_325 : f32 to vector<6x32xf32>
    %902 = arith.mulf %901, %900 : vector<6x32xf32>
    %903 = math.tanh %902 : vector<6x32xf32>
    %cst_326 = arith.constant 1.000000e+00 : f32
    %904 = vector.broadcast %cst_326 : f32 to vector<6x32xf32>
    %905 = arith.addf %904, %903 : vector<6x32xf32>
    %906 = arith.mulf %895, %905 : vector<6x32xf32>
    %c920 = arith.constant 920 : index
    %c0_327 = arith.constant 0 : index
    %907 = vector.load %arg2[%c920, %c0_327] : memref<1016x128xf32, #tpu.memory_space<vmem>>, vector<32x32xf32>
    %c61 = arith.constant 61 : index
    %c0_328 = arith.constant 0 : index
    %908 = vector.load %arg3[%c61, %c0_328] : memref<72x128xf32, #tpu.memory_space<vmem>>, vector<1x32xf32>
    %cst_329 = arith.constant dense<0.000000e+00> : vector<6x32xf32>
    %909 = tpu.matmul %906, %907, %cst_329 {dimension_numbers = #tpu.dot_dimension_numbers<[1], [0], [0], [1], [0, 0, 1, 1], [], []>} : vector<6x32xf32>, vector<32x32xf32>, vector<6x32xf32> -> vector<6x32xf32>
    %910 = vector.broadcast %908 : vector<1x32xf32> to vector<6x32xf32>
    %911 = arith.addf %909, %910 : vector<6x32xf32>
    %912 = arith.addf %888, %911 : vector<6x32xf32>
    %c53 = arith.constant 53 : index
    %c0_330 = arith.constant 0 : index
    %913 = vector.load %arg3[%c53, %c0_330] : memref<72x128xf32, #tpu.memory_space<vmem>>, vector<1x32xf32>
    %c54 = arith.constant 54 : index
    %c0_331 = arith.constant 0 : index
    %914 = vector.load %arg3[%c54, %c0_331] : memref<72x128xf32, #tpu.memory_space<vmem>>, vector<1x32xf32>
    %cst_332 = arith.constant dense<0.000000e+00> : vector<6xf32>
    %915 = vector.multi_reduction <add>, %912, %cst_332 [1] : vector<6x32xf32> to vector<6xf32>
    %916 = vector.shape_cast %915 : vector<6xf32> to vector<6x1xf32>
    %cst_333 = arith.constant 3.200000e+01 : f32
    %917 = vector.broadcast %cst_333 : f32 to vector<6x1xf32>
    %918 = arith.divf %916, %917 : vector<6x1xf32>
    %919 = vector.broadcast %918 : vector<6x1xf32> to vector<6x32xf32>
    %920 = arith.subf %912, %919 : vector<6x32xf32>
    %921 = arith.mulf %920, %920 : vector<6x32xf32>
    %cst_334 = arith.constant dense<0.000000e+00> : vector<6xf32>
    %922 = vector.multi_reduction <add>, %921, %cst_334 [1] : vector<6x32xf32> to vector<6xf32>
    %923 = vector.shape_cast %922 : vector<6xf32> to vector<6x1xf32>
    %cst_335 = arith.constant 3.200000e+01 : f32
    %924 = vector.broadcast %cst_335 : f32 to vector<6x1xf32>
    %925 = arith.divf %923, %924 : vector<6x1xf32>
    %cst_336 = arith.constant 9.99999974E-6 : f32
    %926 = vector.broadcast %cst_336 : f32 to vector<6x1xf32>
    %927 = arith.addf %925, %926 : vector<6x1xf32>
    %928 = math.rsqrt %927 : vector<6x1xf32>
    %929 = vector.broadcast %928 : vector<6x1xf32> to vector<6x32xf32>
    %930 = arith.mulf %920, %929 : vector<6x32xf32>
    %931 = vector.broadcast %913 : vector<1x32xf32> to vector<6x32xf32>
    %932 = arith.mulf %930, %931 : vector<6x32xf32>
    %933 = vector.broadcast %914 : vector<1x32xf32> to vector<6x32xf32>
    %934 = arith.addf %932, %933 : vector<6x32xf32>
    %c952 = arith.constant 952 : index
    %c0_337 = arith.constant 0 : index
    %935 = vector.load %arg2[%c952, %c0_337] : memref<1016x128xf32, #tpu.memory_space<vmem>>, vector<32x32xf32>
    %c62 = arith.constant 62 : index
    %c0_338 = arith.constant 0 : index
    %936 = vector.load %arg3[%c62, %c0_338] : memref<72x128xf32, #tpu.memory_space<vmem>>, vector<1x32xf32>
    %cst_339 = arith.constant dense<0.000000e+00> : vector<6x32xf32>
    %937 = tpu.matmul %934, %935, %cst_339 {dimension_numbers = #tpu.dot_dimension_numbers<[1], [0], [0], [1], [0, 0, 1, 1], [], []>} : vector<6x32xf32>, vector<32x32xf32>, vector<6x32xf32> -> vector<6x32xf32>
    %938 = vector.broadcast %936 : vector<1x32xf32> to vector<6x32xf32>
    %939 = arith.addf %937, %938 : vector<6x32xf32>
    %cst_340 = arith.constant 5.000000e-01 : f32
    %940 = vector.broadcast %cst_340 : f32 to vector<6x32xf32>
    %941 = arith.mulf %940, %939 : vector<6x32xf32>
    %cst_341 = arith.constant 4.471500e-02 : f32
    %942 = vector.broadcast %cst_341 : f32 to vector<6x32xf32>
    %943 = arith.mulf %942, %939 : vector<6x32xf32>
    %944 = arith.mulf %943, %939 : vector<6x32xf32>
    %945 = arith.mulf %944, %939 : vector<6x32xf32>
    %946 = arith.addf %939, %945 : vector<6x32xf32>
    %cst_342 = arith.constant 0.797884583 : f32
    %947 = vector.broadcast %cst_342 : f32 to vector<6x32xf32>
    %948 = arith.mulf %947, %946 : vector<6x32xf32>
    %949 = math.tanh %948 : vector<6x32xf32>
    %cst_343 = arith.constant 1.000000e+00 : f32
    %950 = vector.broadcast %cst_343 : f32 to vector<6x32xf32>
    %951 = arith.addf %950, %949 : vector<6x32xf32>
    %952 = arith.mulf %941, %951 : vector<6x32xf32>
    %c63 = arith.constant 63 : index
    %c0_344 = arith.constant 0 : index
    %953 = vector.load %arg3[%c63, %c0_344] : memref<72x128xf32, #tpu.memory_space<vmem>>, vector<1x32xf32>
    %c64 = arith.constant 64 : index
    %c0_345 = arith.constant 0 : index
    %954 = vector.load %arg3[%c64, %c0_345] : memref<72x128xf32, #tpu.memory_space<vmem>>, vector<1x32xf32>
    %cst_346 = arith.constant dense<0.000000e+00> : vector<6xf32>
    %955 = vector.multi_reduction <add>, %952, %cst_346 [1] : vector<6x32xf32> to vector<6xf32>
    %956 = vector.shape_cast %955 : vector<6xf32> to vector<6x1xf32>
    %cst_347 = arith.constant 3.200000e+01 : f32
    %957 = vector.broadcast %cst_347 : f32 to vector<6x1xf32>
    %958 = arith.divf %956, %957 : vector<6x1xf32>
    %959 = vector.broadcast %958 : vector<6x1xf32> to vector<6x32xf32>
    %960 = arith.subf %952, %959 : vector<6x32xf32>
    %961 = arith.mulf %960, %960 : vector<6x32xf32>
    %cst_348 = arith.constant dense<0.000000e+00> : vector<6xf32>
    %962 = vector.multi_reduction <add>, %961, %cst_348 [1] : vector<6x32xf32> to vector<6xf32>
    %963 = vector.shape_cast %962 : vector<6xf32> to vector<6x1xf32>
    %cst_349 = arith.constant 3.200000e+01 : f32
    %964 = vector.broadcast %cst_349 : f32 to vector<6x1xf32>
    %965 = arith.divf %963, %964 : vector<6x1xf32>
    %cst_350 = arith.constant 9.99999974E-6 : f32
    %966 = vector.broadcast %cst_350 : f32 to vector<6x1xf32>
    %967 = arith.addf %965, %966 : vector<6x1xf32>
    %968 = math.rsqrt %967 : vector<6x1xf32>
    %969 = vector.broadcast %968 : vector<6x1xf32> to vector<6x32xf32>
    %970 = arith.mulf %960, %969 : vector<6x32xf32>
    %971 = vector.broadcast %953 : vector<1x32xf32> to vector<6x32xf32>
    %972 = arith.mulf %970, %971 : vector<6x32xf32>
    %973 = vector.broadcast %954 : vector<1x32xf32> to vector<6x32xf32>
    %974 = arith.addf %972, %973 : vector<6x32xf32>
    %c984 = arith.constant 984 : index
    %c0_351 = arith.constant 0 : index
    %975 = vector.load %arg2[%c984, %c0_351] : memref<1016x128xf32, #tpu.memory_space<vmem>>, vector<32x5xf32>
    %c65 = arith.constant 65 : index
    %c0_352 = arith.constant 0 : index
    %976 = vector.load %arg3[%c65, %c0_352] : memref<72x128xf32, #tpu.memory_space<vmem>>, vector<1x5xf32>
    %cst_353 = arith.constant dense<0.000000e+00> : vector<6x5xf32>
    %977 = tpu.matmul %974, %975, %cst_353 {dimension_numbers = #tpu.dot_dimension_numbers<[1], [0], [0], [1], [0, 0, 1, 1], [], []>} : vector<6x32xf32>, vector<32x5xf32>, vector<6x5xf32> -> vector<6x5xf32>
    %978 = vector.broadcast %976 : vector<1x5xf32> to vector<6x5xf32>
    %979 = arith.addf %977, %978 : vector<6x5xf32>
    %cst_354 = arith.constant dense<0xFF800000> : vector<6xf32>
    %980 = vector.multi_reduction <maximumf>, %979, %cst_354 [1] : vector<6x5xf32> to vector<6xf32>
    %981 = vector.shape_cast %980 : vector<6xf32> to vector<6x1xf32>
    %982 = vector.broadcast %981 : vector<6x1xf32> to vector<6x5xf32>
    %983 = arith.subf %979, %982 : vector<6x5xf32>
    %984 = math.exp %983 : vector<6x5xf32>
    %cst_355 = arith.constant dense<0.000000e+00> : vector<6xf32>
    %985 = vector.multi_reduction <add>, %984, %cst_355 [1] : vector<6x5xf32> to vector<6xf32>
    %986 = vector.shape_cast %985 : vector<6xf32> to vector<6x1xf32>
    %987 = math.log %986 : vector<6x1xf32>
    %988 = vector.broadcast %987 : vector<6x1xf32> to vector<6x5xf32>
    %989 = arith.subf %983, %988 : vector<6x5xf32>
    %990 = math.exp %989 : vector<6x5xf32>
    %991 = arith.mulf %2, %989 : vector<6x5xf32>
    %cst_356 = arith.constant dense<0.000000e+00> : vector<6xf32>
    %992 = vector.multi_reduction <add>, %991, %cst_356 [1] : vector<6x5xf32> to vector<6xf32>
    %993 = vector.shape_cast %992 : vector<6xf32> to vector<6x1xf32>
    %994 = arith.mulf %990, %989 : vector<6x5xf32>
    %cst_357 = arith.constant dense<0.000000e+00> : vector<6xf32>
    %995 = vector.multi_reduction <add>, %994, %cst_357 [1] : vector<6x5xf32> to vector<6xf32>
    %996 = vector.shape_cast %995 : vector<6xf32> to vector<6x1xf32>
    %cst_358 = arith.constant 0.000000e+00 : f32
    %997 = vector.broadcast %cst_358 : f32 to vector<6x1xf32>
    %998 = arith.subf %997, %996 : vector<6x1xf32>
    %cst_359 = arith.constant 0.000000e+00 : f32
    %999 = vector.broadcast %cst_359 : f32 to vector<6x124xf32>
    %1000 = tpu.concatenate %353, %501, %993, %998, %999 in 1 : vector<6x1xf32>, vector<6x1xf32>, vector<6x1xf32>, vector<6x1xf32>, vector<6x124xf32> -> vector<6x128xf32>
    %c0_360 = arith.constant 0 : index
    %c0_361 = arith.constant 0 : index
    %1001 = vector.load %arg4[%c0_360, %c0_361] : memref<6x128xf32, #tpu.memory_space<vmem>>, vector<6x128xf32>
    tpu.vector_store %arg4[%c0_360, %c0_361], %1000 {strides = array<i32>} : memref<6x128xf32, #tpu.memory_space<vmem>>, vector<6x128xf32>,
    return
  }
}

</mosaic_0001>

<llo_original>
// kernel: squeeze.3
$region0: #{squeeze.3}
  %s0 = inlined_call_operand.vmem [shape: f32[6], index: 0, kind: input, shape index: {}]
  %s1 = inlined_call_operand.vmem [shape: f32[2,3], index: 1, kind: output, shape index: {}]
  $region1: #{squeeze.3} parent=0
    #allocation0 [shape = 'u8[4096]{0}', space=vmem, size = 0x1000, scoped, tag = 'scoped mem for output reshape']
    #allocation1 [shape = 'u8[4096]{0}', space=vmem, size = 0x1000, scoped, tag = 'scoped mem for input reshape']
    %s3 = sshll.u32 1, 1
    %s4 = ssub.s32 %s3, 1
    %v5 = vld [vmem:[%s0] sm:%s4]
    %6 = vst [vmem:[#allocation1] sm:%s4] %v5
    %v7 = vld [vmem:[#allocation1] sm:$0x1]
    %vm8 = vcmask 23552
    %9 = vst.msk [vmem:[#allocation0] sm:$0x1] %vm8, %v7
    %v10 = vld [vmem:[#allocation1] sm:$0x1]
    %11 = vrot.lane.b32.xlu0 %v10, 125
    %v12 = vpop.permute.xlu0 %11
    %vm13 = vcmask 23552
    %s14 = scalar_lea.vmem [#allocation0], 1
    %15 = vst.msk [vmem:[%s14] sm:$0x1] %vm13, %v12
    %s17 = sshll.u32 1, 2
    %s18 = ssub.s32 %s17, 1
    %v20 = vld [vmem:[#allocation0] sm:%s18]
    %s21 = sshll.u32 1, 2
    %s22 = ssub.s32 %s21, 1
    %23 = vst [vmem:[%s1] sm:%s22] %v20

// kernel: mat_forward.1
$region0: #{mat_forward.1}
  #allocation0 [shape = 'u32[]', space=smem, size = 0x4, offset = 0x4, fixed_abs, tag = 'smem constant byte address 0x4 - core index']
  #allocation1 [shape = 'u32[144,128]{1,0:T(1,128)}', space=vmem, size = 0x12000, scoped, tag = 'internal scratch']
  %s0 = inlined_call_operand.vmem [shape: f32[6,16], index: 0, kind: input, shape index: {}]
  %s1 = inlined_call_operand.vmem [shape: f32[6,128], index: 1, kind: input, shape index: {}]
  %s2 = inlined_call_operand.hbm [shape: f32[1016,128], index: 2, kind: input, shape index: {}]
  %s3 = inlined_call_operand.vmem [shape: f32[72,128], index: 3, kind: input, shape index: {}]
  %s4 = inlined_call_operand.vmem [shape: f32[6,128], index: 4, kind: output, shape index: {}]
  %s5 = sld [smem:[#allocation0]]
  $region30: #{mat_forward.1} parent=0
    _
  %s7 = ssub.s32 1, %s5
  %s8 = scalar_select 0, %s7, %s5
  $region1: #{mat_forward.1} parent=0
    #allocation2 [shape = 'u8[520192]{0}', space=vmem, size = 0x7f000, scoped, tag = 'input window, operand 2, single buffered']
    #allocation3 [shape = 's32[1]{0}', space=sflag, size = 0x4, scoped, tag = 'scoped memory for mat_forward.1']
    %9 = vsyncpa [#allocation3], 0
    // Predicated region
    $region2: #{mat_forward.1} parent=1 // pred_check
      _
    $region3: #{mat_forward.1} parent=1 // pred_check_branch
      %11 = sbr.rel (0) target = $region5
    $region4: #{mat_forward.1} parent=1 // pred_region
      _
    $region5: #{mat_forward.1} parent=1 // pred_fallthru
      _
    // Predicated region
    $region6: #{mat_forward.1} parent=1 // pred_check
      _
    $region7: #{mat_forward.1} parent=1 // pred_check_branch
      %13 = sbr.rel (0) target = $region9
    $region8: #{mat_forward.1} parent=1 // pred_region
      _
    $region9: #{mat_forward.1} parent=1 // pred_fallthru
      _
    // Predicated region
    $region10: #{mat_forward.1} parent=1 // pred_check
      _
    $region11: #{mat_forward.1} parent=1 // pred_check_branch
      %15 = sbr.rel (0) target = $region13
    $region12: #{mat_forward.1} parent=1 // pred_region
      %s17 = ssub.s32 16256, 16256
      %18 = vsyncadd [#allocation3], %s17
      %s19 = sshll.u32 [#allocation2], 4
      %s20 = int_to_ptr.vmem [resolvable:$true] %s19
      %25 = dma.hbm_to_vmem [thread:$0]  %s2, 16256, %s20, [#allocation3], 128, 128, 8
    $region13: #{mat_forward.1} parent=1 // pred_fallthru
      _
    // Predicated region
    $region14: #{mat_forward.1} parent=1 // pred_check
      _
    $region15: #{mat_forward.1} parent=1 // pred_check_branch
      %27 = sbr.rel (0) target = $region17
    $region16: #{mat_forward.1} parent=1 // pred_region
      _
    $region17: #{mat_forward.1} parent=1 // pred_fallthru
      _
    // Predicated region
    $region18: #{mat_forward.1} parent=1 // pred_check
      _
    $region19: #{mat_forward.1} parent=1 // pred_check_branch
      %29 = sbr.rel (0) target = $region21
    $region20: #{mat_forward.1} parent=1 // pred_region
      %30 = dma.done [#allocation3], 16256
    $region21: #{mat_forward.1} parent=1 // pred_fallthru
      _
    %v31 = vld [vmem:[%s1] sm:$0x3f]
    %v32 = vld [vmem:[%s0] sm:$0x3f]
    %v33 = vld [vmem:[%s3] sm:$0x1]
    %v34 = vld [vmem:[%s3 + $0x1] sm:$0x1]
    %vm35 = vcmask 128000
    %v36 = vsel %vm35, %v32, 0.0
    %37 = vadd.xlane.f32.xlu0 %v36
    %v38 = vpop.xlane.xlu0 %37
    %v39 = vrcp.pop 16.0
    %v40 = vmul.f32 %v38, %v39
    %v41 = vsub.f32 %v32, %v40
    %v42 = vmul.f32 %v41, %v41
    %v43 = vsel %vm35, %v42, 0.0
    %44 = vadd.xlane.f32.xlu0 %v43
    %v45 = vpop.xlane.xlu0 %44
    %v46 = vmul.f32 %v45, %v39
    %v47 = vadd.f32 %v46, 1e-05
    %v48 = vrsqrt.pop %v47
    %v49 = vmul.f32 %v41, %v48
    %v50 = vlaneseq
    %v51 = vshrl.u32 %v50, 7
    %v52 = vsub.s32 0, %v51
    %v53 = vrot.slane %v33, %v52
    %v54 = vmul.f32 %v49, %v53
    %v55 = vlaneseq
    %v56 = vshrl.u32 %v55, 7
    %v57 = vsub.s32 0, %v56
    %v58 = vrot.slane %v34, %v57
    %v59 = vadd.f32 %v54, %v58
    %v60 = vld [vmem:[#allocation2] sm:$0xff]
    %v61 = vld [vmem:[#allocation2 + $0x8] sm:$0xff]
    %v62 = vld [vmem:[%s3 + $0x2] sm:$0x1]
    %v63 = vlaneseq
    %v64 = vshrl.u32 %v63, 7
    %v65 = vsub.s32 0, %v64
    %v66 = vrot.slane %v62, %v65
    %vm67 = vcmask 130048
    %v69 = vsel %vm67, %v59, 0
    %71 = vmatprep.subr.mxu0 0.0
    %72 = vmatpush1.msra.mxu0 0.0
    %73 = vmatprep.subr.mxu0 0.0
    %74 = vmatpush1.msra.mxu0 0.0
    %75 = vmatprep.subr.mxu0 0.0
    %76 = vmatpush1.msra.mxu0 0.0
    %77 = vmatprep.subr.mxu0 0.0
    %78 = vmatpush1.msra.mxu0 0.0
    %79 = vmatprep.subr.mxu0 0.0
    %80 = vmatpush1.msra.mxu0 0.0
    %81 = vmatprep.subr.mxu0 0.0
    %82 = vmatpush1.msra.mxu0 0.0
    %83 = vmatprep.subr.mxu0 0.0
    %84 = vmatpush1.msra.mxu0 0.0
    %85 = vmatprep.subr.mxu0 0.0
    %86 = vmatpush1.msra.mxu0 0.0
    %87 = vmatprep.subr.mxu0 0.0
    %88 = vmatpush1.msra.mxu0 0.0
    %89 = vmatprep.subr.mxu0 0.0
    %90 = vmatpush1.msra.mxu0 0.0
    %91 = vmatprep.subr.mxu0 0.0
    %92 = vmatpush1.msra.mxu0 0.0
    %93 = vmatprep.subr.mxu0 0.0
    %94 = vmatpush1.msra.mxu0 0.0
    %95 = vmatprep.subr.mxu0 0.0
    %96 = vmatpush1.msra.mxu0 0.0
    %97 = vmatprep.subr.mxu0 0.0
    %98 = vmatpush1.msra.mxu0 0.0
    %99 = vmatprep.subr.mxu0 0.0
    %100 = vmatpush1.msra.mxu0 %v61
    %101 = vmatprep.subr.mxu0 0.0
    %102 = vmatpush1.msra.mxu0 %v60
    %103 = vmatprep.subr.mxu0 0.0
    %104 = vmatpush2.msra.mxu0 0.0
    %105 = vmatprep.subr.mxu0 0.0
    %106 = vmatpush2.msra.mxu0 0.0
    %107 = vmatprep.subr.mxu0 0.0
    %108 = vmatpush2.msra.mxu0 0.0
    %109 = vmatprep.subr.mxu0 0.0
    %110 = vmatpush2.msra.mxu0 0.0
    %111 = vmatprep.subr.mxu0 0.0
    %112 = vmatpush2.msra.mxu0 0.0
    %113 = vmatprep.subr.mxu0 0.0
    %114 = vmatpush2.msra.mxu0 0.0
    %115 = vmatprep.subr.mxu0 0.0
    %116 = vmatpush2.msra.mxu0 0.0
    %117 = vmatprep.subr.mxu0 0.0
    %118 = vmatpush2.msra.mxu0 0.0
    %119 = vmatprep.subr.mxu0 0.0
    %120 = vmatpush2.msra.mxu0 0.0
    %121 = vmatprep.subr.mxu0 0.0
    %122 = vmatpush2.msra.mxu0 0.0
    %123 = vmatprep.subr.mxu0 0.0
    %124 = vmatpush2.msra.mxu0 0.0
    %125 = vmatprep.subr.mxu0 0.0
    %126 = vmatpush2.msra.mxu0 0.0
    %127 = vmatprep.subr.mxu0 0.0
    %128 = vmatpush2.msra.mxu0 0.0
    %129 = vmatprep.subr.mxu0 0.0
    %130 = vmatpush2.msra.mxu0 0.0
    %131 = vmatprep.subr.mxu0 0.0
    %132 = vmatpush2.msra.mxu0 0.0
    %133 = vmatprep.subr.mxu0 0.0
    %134 = vmatpush2.msra.mxu0 0.0
    %135 = vmatprep.mubr.f32.mxu0 0.0
    %136 = vmatmul.mubr.f32.gmra.mxu0 %v69
    %v137 = vpop.f32.mrf.mxu0
    %v138 = vadd.f32 %v66, %v137
    %v139 = vpop.f32.mrf.mxu0
    %140 = vdwg.mxu0
    %v141 = vmul.f32 %v138, 0.5
    %v142 = vmul.f32 %v138, 0.044715
    %v143 = vmul.f32 %v142, %v138
    %v144 = vmul.f32 %v143, %v138
    %v145 = vadd.f32 %v138, %v144
    %v146 = vmul.f32 %v145, 0.7978846
    %v147 = vtanh.pop %v146
    %v148 = vadd.f32 %v147, 1.0
    %v149 = vmul.f32 %v141, %v148
    %v150 = vld [vmem:[%s3 + $0x3] sm:$0x1]
    %v151 = vld [vmem:[%s3 + $0x4] sm:$0x1]
    %vm152 = vcmask 259072
    %v153 = vsel %vm152, %v149, 0.0
    %154 = vadd.xlane.f32.xlu0 %v153
    %v155 = vpop.xlane.xlu0 %154
    %v156 = vrcp.pop 32.0
    %v157 = vmul.f32 %v155, %v156
    %v158 = vsub.f32 %v149, %v157
    %v159 = vmul.f32 %v158, %v158
    %v160 = vsel %vm152, %v159, 0.0
    %161 = vadd.xlane.f32.xlu0 %v160
    %v162 = vpop.xlane.xlu0 %161
    %v163 = vmul.f32 %v162, %v156
    %v164 = vadd.f32 %v163, 1e-05
    %v165 = vrsqrt.pop %v164
    %v166 = vmul.f32 %v158, %v165
    %v167 = vlaneseq
    %v168 = vshrl.u32 %v167, 7
    %v169 = vsub.s32 0, %v168
    %v170 = vrot.slane %v150, %v169
    %v171 = vmul.f32 %v166, %v170
    %v172 = vlaneseq
    %v173 = vshrl.u32 %v172, 7
    %v174 = vsub.s32 0, %v173
    %v175 = vrot.slane %v151, %v174
    %v176 = vadd.f32 %v171, %v175
    %v177 = vld [vmem:[#allocation2 + $0x10] sm:$0xff]
    %v178 = vld [vmem:[#allocation2 + $0x18] sm:$0xff]
    %v179 = vld [vmem:[#allocation2 + $0x20] sm:$0xff]
    %v180 = vld [vmem:[#allocation2 + $0x28] sm:$0xff]
    %v181 = vld [vmem:[%s3 + $0x9] sm:$0x1]
    %v182 = vlaneseq
    %v183 = vshrl.u32 %v182, 7
    %v184 = vsub.s32 0, %v183
    %v185 = vrot.slane %v181, %v184
    %vm186 = vcmask 261120
    %v188 = vsel %vm186, %v176, 0
    %190 = vmatprep.subr.mxu0 0.0
    %191 = vmatpush1.msra.mxu0 0.0
    %192 = vmatprep.subr.mxu0 0.0
    %193 = vmatpush1.msra.mxu0 0.0
    %194 = vmatprep.subr.mxu0 0.0
    %195 = vmatpush1.msra.mxu0 0.0
    %196 = vmatprep.subr.mxu0 0.0
    %197 = vmatpush1.msra.mxu0 0.0
    %198 = vmatprep.subr.mxu0 0.0
    %199 = vmatpush1.msra.mxu0 0.0
    %200 = vmatprep.subr.mxu0 0.0
    %201 = vmatpush1.msra.mxu0 0.0
    %202 = vmatprep.subr.mxu0 0.0
    %203 = vmatpush1.msra.mxu0 0.0
    %204 = vmatprep.subr.mxu0 0.0
    %205 = vmatpush1.msra.mxu0 0.0
    %206 = vmatprep.subr.mxu0 0.0
    %207 = vmatpush1.msra.mxu0 0.0
    %208 = vmatprep.subr.mxu0 0.0
    %209 = vmatpush1.msra.mxu0 0.0
    %210 = vmatprep.subr.mxu0 0.0
    %211 = vmatpush1.msra.mxu0 0.0
    %212 = vmatprep.subr.mxu0 0.0
    %213 = vmatpush1.msra.mxu0 0.0
    %214 = vmatprep.subr.mxu0 0.0
    %215 = vmatpush1.msra.mxu0 %v180
    %216 = vmatprep.subr.mxu0 0.0
    %217 = vmatpush1.msra.mxu0 %v179
    %218 = vmatprep.subr.mxu0 0.0
    %219 = vmatpush1.msra.mxu0 %v178
    %220 = vmatprep.subr.mxu0 0.0
    %221 = vmatpush1.msra.mxu0 %v177
    %222 = vmatprep.subr.mxu0 0.0
    %223 = vmatpush2.msra.mxu0 0.0
    %224 = vmatprep.subr.mxu0 0.0
    %225 = vmatpush2.msra.mxu0 0.0
    %226 = vmatprep.subr.mxu0 0.0
    %227 = vmatpush2.msra.mxu0 0.0
    %228 = vmatprep.subr.mxu0 0.0
    %229 = vmatpush2.msra.mxu0 0.0
    %230 = vmatprep.subr.mxu0 0.0
    %231 = vmatpush2.msra.mxu0 0.0
    %232 = vmatprep.subr.mxu0 0.0
    %233 = vmatpush2.msra.mxu0 0.0
    %234 = vmatprep.subr.mxu0 0.0
    %235 = vmatpush2.msra.mxu0 0.0
    %236 = vmatprep.subr.mxu0 0.0
    %237 = vmatpush2.msra.mxu0 0.0
    %238 = vmatprep.subr.mxu0 0.0
    %239 = vmatpush2.msra.mxu0 0.0
    %240 = vmatprep.subr.mxu0 0.0
    %241 = vmatpush2.msra.mxu0 0.0
    %242 = vmatprep.subr.mxu0 0.0
    %243 = vmatpush2.msra.mxu0 0.0
    %244 = vmatprep.subr.mxu0 0.0
    %245 = vmatpush2.msra.mxu0 0.0
    %246 = vmatprep.subr.mxu0 0.0
    %247 = vmatpush2.msra.mxu0 0.0
    %248 = vmatprep.subr.mxu0 0.0
    %249 = vmatpush2.msra.mxu0 0.0
    %250 = vmatprep.subr.mxu0 0.0
    %251 = vmatpush2.msra.mxu0 0.0
    %252 = vmatprep.subr.mxu0 0.0
    %253 = vmatpush2.msra.mxu0 0.0
    %254 = vmatprep.mubr.f32.mxu0 0.0
    %255 = vmatmul.mubr.f32.gmra.mxu0 %v188
    %v256 = vpop.f32.mrf.mxu0
    %v257 = vadd.f32 %v185, %v256
    %v258 = vpop.f32.mrf.mxu0
    %259 = vdwg.mxu0
    %v260 = vld [vmem:[#allocation2 + $0x30] sm:$0xff]
    %v261 = vld [vmem:[#allocation2 + $0x38] sm:$0xff]
    %v262 = vld [vmem:[#allocation2 + $0x40] sm:$0xff]
    %v263 = vld [vmem:[#allocation2 + $0x48] sm:$0xff]
    %v264 = vld [vmem:[%s3 + $0xa] sm:$0x1]
    %266 = vrot.lane.b32.xlu0 %v257, 96
    %v267 = vpop.permute.xlu0 %266
    %v268 = vsel %vm67, %v257, 0
    %v270 = vsel %vm67, %v267, 0
    %272 = vmatprep.subr.mxu0 0.0
    %273 = vmatpush1.xpose.msra.mxu0 0.0
    %274 = vmatprep.subr.mxu0 0.0
    %275 = vmatpush1.xpose.msra.mxu0 0.0
    %276 = vmatprep.subr.mxu0 0.0
    %277 = vmatpush1.xpose.msra.mxu0 0.0
    %278 = vmatprep.subr.mxu0 0.0
    %279 = vmatpush1.xpose.msra.mxu0 0.0
    %280 = vmatprep.subr.mxu0 0.0
    %281 = vmatpush1.xpose.msra.mxu0 0.0
    %282 = vmatprep.subr.mxu0 0.0
    %283 = vmatpush1.xpose.msra.mxu0 0.0
    %284 = vmatprep.subr.mxu0 0.0
    %285 = vmatpush1.xpose.msra.mxu0 0.0
    %286 = vmatprep.subr.mxu0 0.0
    %287 = vmatpush1.xpose.msra.mxu0 0.0
    %288 = vmatprep.subr.mxu0 0.0
    %289 = vmatpush1.xpose.msra.mxu0 0.0
    %290 = vmatprep.subr.mxu0 0.0
    %291 = vmatpush1.xpose.msra.mxu0 0.0
    %292 = vmatprep.subr.mxu0 0.0
    %293 = vmatpush1.xpose.msra.mxu0 0.0
    %294 = vmatprep.subr.mxu0 0.0
    %295 = vmatpush1.xpose.msra.mxu0 0.0
    %296 = vmatprep.subr.mxu0 0.0
    %297 = vmatpush1.xpose.msra.mxu0 0.0
    %298 = vmatprep.subr.mxu0 0.0
    %299 = vmatpush1.xpose.msra.mxu0 0.0
    %300 = vmatprep.subr.mxu0 0.0
    %301 = vmatpush1.xpose.msra.mxu0 0.0
    %302 = vmatprep.subr.mxu0 0.0
    %303 = vmatpush1.xpose.msra.mxu0 %v270
    %304 = vmatprep.subr.mxu0 0.0
    %305 = vmatpush2.xpose.msra.mxu0 0.0
    %306 = vmatprep.subr.mxu0 0.0
    %307 = vmatpush2.xpose.msra.mxu0 0.0
    %308 = vmatprep.subr.mxu0 0.0
    %309 = vmatpush2.xpose.msra.mxu0 0.0
    %310 = vmatprep.subr.mxu0 0.0
    %311 = vmatpush2.xpose.msra.mxu0 0.0
    %312 = vmatprep.subr.mxu0 0.0
    %313 = vmatpush2.xpose.msra.mxu0 0.0
    %314 = vmatprep.subr.mxu0 0.0
    %315 = vmatpush2.xpose.msra.mxu0 0.0
    %316 = vmatprep.subr.mxu0 0.0
    %317 = vmatpush2.xpose.msra.mxu0 0.0
    %318 = vmatprep.subr.mxu0 0.0
    %319 = vmatpush2.xpose.msra.mxu0 0.0
    %320 = vmatprep.subr.mxu0 0.0
    %321 = vmatpush2.xpose.msra.mxu0 0.0
    %322 = vmatprep.subr.mxu0 0.0
    %323 = vmatpush2.xpose.msra.mxu0 0.0
    %324 = vmatprep.subr.mxu0 0.0
    %325 = vmatpush2.xpose.msra.mxu0 0.0
    %326 = vmatprep.subr.mxu0 0.0
    %327 = vmatpush2.xpose.msra.mxu0 0.0
    %328 = vmatprep.subr.mxu0 0.0
    %329 = vmatpush2.xpose.msra.mxu0 0.0
    %330 = vmatprep.subr.mxu0 0.0
    %331 = vmatpush2.xpose.msra.mxu0 0.0
    %332 = vmatprep.subr.mxu0 0.0
    %333 = vmatpush2.xpose.msra.mxu0 0.0
    %334 = vmatprep.subr.mxu0 0.0
    %335 = vmatpush2.xpose.msra.mxu0 0.0
    %336 = vmatprep.mubr.f32.mxu0 0.0
    %337 = vmatmul.mubr.f32.gmra.mxu0 %v268
    %v338 = vpop.f32.mrf.mxu0
    %v339 = vadd.f32 0.0, %v338
    %v340 = vpop.f32.mrf.mxu0
    %341 = vdwg.mxu0
    %v342 = vmul.f32 %v339, 0.25
    %344 = vrot.lane.b32.xlu0 %v31, 96
    %v345 = vpop.permute.xlu0 %344
    %v347 = vadd.f32 %v342, %v345
    %vm348 = vcmask 46080
    %v349 = vsel %vm348, %v347, -inf
    %350 = vmax.xlane.f32.xlu0 %v349
    %v351 = vpop.xlane.xlu0 %350
    %v352 = vsub.f32 %v347, %v351
    %v353 = vmul.f32 %v352, 1.442695
    %v354 = vpow.pop %v353
    %v355 = vsel %vm348, %v354, 0.0
    %356 = vadd.xlane.f32.xlu0 %v355
    %v357 = vpop.xlane.xlu0 %356
    %v358 = vrcp.pop %v357
    %v359 = vmul.f32 %v354, %v358
    %360 = vrot.lane.b32.xlu0 %v257, 64
    %v361 = vpop.permute.xlu0 %360
    %vm362 = vcmask 48128
    %v364 = vsel %vm362, %v359, 0
    %vm366 = vcmask 1045504
    %v367 = vsel %vm366, %v361, 0
    %369 = vmatprep.subr.mxu0 0.0
    %370 = vmatpush1.msra.mxu0 0.0
    %371 = vmatprep.subr.mxu0 0.0
    %372 = vmatpush1.msra.mxu0 0.0
    %373 = vmatprep.subr.mxu0 0.0
    %374 = vmatpush1.msra.mxu0 0.0
    %375 = vmatprep.subr.mxu0 0.0
    %376 = vmatpush1.msra.mxu0 0.0
    %377 = vmatprep.subr.mxu0 0.0
    %378 = vmatpush1.msra.mxu0 0.0
    %379 = vmatprep.subr.mxu0 0.0
    %380 = vmatpush1.msra.mxu0 0.0
    %381 = vmatprep.subr.mxu0 0.0
    %382 = vmatpush1.msra.mxu0 0.0
    %383 = vmatprep.subr.mxu0 0.0
    %384 = vmatpush1.msra.mxu0 0.0
    %385 = vmatprep.subr.mxu0 0.0
    %386 = vmatpush1.msra.mxu0 0.0
    %387 = vmatprep.subr.mxu0 0.0
    %388 = vmatpush1.msra.mxu0 0.0
    %389 = vmatprep.subr.mxu0 0.0
    %390 = vmatpush1.msra.mxu0 0.0
    %391 = vmatprep.subr.mxu0 0.0
    %392 = vmatpush1.msra.mxu0 0.0
    %393 = vmatprep.subr.mxu0 0.0
    %394 = vmatpush1.msra.mxu0 0.0
    %395 = vmatprep.subr.mxu0 0.0
    %396 = vmatpush1.msra.mxu0 0.0
    %397 = vmatprep.subr.mxu0 0.0
    %398 = vmatpush1.msra.mxu0 0.0
    %399 = vmatprep.subr.mxu0 0.0
    %400 = vmatpush1.msra.mxu0 %v367
    %401 = vmatprep.subr.mxu0 0.0
    %402 = vmatpush2.msra.mxu0 0.0
    %403 = vmatprep.subr.mxu0 0.0
    %404 = vmatpush2.msra.mxu0 0.0
    %405 = vmatprep.subr.mxu0 0.0
    %406 = vmatpush2.msra.mxu0 0.0
    %407 = vmatprep.subr.mxu0 0.0
    %408 = vmatpush2.msra.mxu0 0.0
    %409 = vmatprep.subr.mxu0 0.0
    %410 = vmatpush2.msra.mxu0 0.0
    %411 = vmatprep.subr.mxu0 0.0
    %412 = vmatpush2.msra.mxu0 0.0
    %413 = vmatprep.subr.mxu0 0.0
    %414 = vmatpush2.msra.mxu0 0.0
    %415 = vmatprep.subr.mxu0 0.0
    %416 = vmatpush2.msra.mxu0 0.0
    %417 = vmatprep.subr.mxu0 0.0
    %418 = vmatpush2.msra.mxu0 0.0
    %419 = vmatprep.subr.mxu0 0.0
    %420 = vmatpush2.msra.mxu0 0.0
    %421 = vmatprep.subr.mxu0 0.0
    %422 = vmatpush2.msra.mxu0 0.0
    %423 = vmatprep.subr.mxu0 0.0
    %424 = vmatpush2.msra.mxu0 0.0
    %425 = vmatprep.subr.mxu0 0.0
    %426 = vmatpush2.msra.mxu0 0.0
    %427 = vmatprep.subr.mxu0 0.0
    %428 = vmatpush2.msra.mxu0 0.0
    %429 = vmatprep.subr.mxu0 0.0
    %430 = vmatpush2.msra.mxu0 0.0
    %431 = vmatprep.subr.mxu0 0.0
    %432 = vmatpush2.msra.mxu0 0.0
    %433 = vmatprep.mubr.f32.mxu0 0.0
    %434 = vmatmul.mubr.f32.gmra.mxu0 %v364
    %v435 = vpop.f32.mrf.mxu0
    %v436 = vadd.f32 0.0, %v435
    %v437 = vpop.f32.mrf.mxu0
    %438 = vdwg.mxu0
    %439 = vrot.lane.b32.xlu0 %v257, 112
    %v440 = vpop.permute.xlu0 %439
    %441 = vrot.lane.b32.xlu0 %v257, 80
    %v442 = vpop.permute.xlu0 %441
    %v443 = vsel %vm67, %v440, 0
    %v445 = vsel %vm67, %v442, 0
    %447 = vmatprep.subr.mxu0 0.0
    %448 = vmatpush1.xpose.msra.mxu0 0.0
    %449 = vmatprep.subr.mxu0 0.0
    %450 = vmatpush1.xpose.msra.mxu0 0.0
    %451 = vmatprep.subr.mxu0 0.0
    %452 = vmatpush1.xpose.msra.mxu0 0.0
    %453 = vmatprep.subr.mxu0 0.0
    %454 = vmatpush1.xpose.msra.mxu0 0.0
    %455 = vmatprep.subr.mxu0 0.0
    %456 = vmatpush1.xpose.msra.mxu0 0.0
    %457 = vmatprep.subr.mxu0 0.0
    %458 = vmatpush1.xpose.msra.mxu0 0.0
    %459 = vmatprep.subr.mxu0 0.0
    %460 = vmatpush1.xpose.msra.mxu0 0.0
    %461 = vmatprep.subr.mxu0 0.0
    %462 = vmatpush1.xpose.msra.mxu0 0.0
    %463 = vmatprep.subr.mxu0 0.0
    %464 = vmatpush1.xpose.msra.mxu0 0.0
    %465 = vmatprep.subr.mxu0 0.0
    %466 = vmatpush1.xpose.msra.mxu0 0.0
    %467 = vmatprep.subr.mxu0 0.0
    %468 = vmatpush1.xpose.msra.mxu0 0.0
    %469 = vmatprep.subr.mxu0 0.0
    %470 = vmatpush1.xpose.msra.mxu0 0.0
    %471 = vmatprep.subr.mxu0 0.0
    %472 = vmatpush1.xpose.msra.mxu0 0.0
    %473 = vmatprep.subr.mxu0 0.0
    %474 = vmatpush1.xpose.msra.mxu0 0.0
    %475 = vmatprep.subr.mxu0 0.0
    %476 = vmatpush1.xpose.msra.mxu0 0.0
    %477 = vmatprep.subr.mxu0 0.0
    %478 = vmatpush1.xpose.msra.mxu0 %v445
    %479 = vmatprep.subr.mxu0 0.0
    %480 = vmatpush2.xpose.msra.mxu0 0.0
    %481 = vmatprep.subr.mxu0 0.0
    %482 = vmatpush2.xpose.msra.mxu0 0.0
    %483 = vmatprep.subr.mxu0 0.0
    %484 = vmatpush2.xpose.msra.mxu0 0.0
    %485 = vmatprep.subr.mxu0 0.0
    %486 = vmatpush2.xpose.msra.mxu0 0.0
    %487 = vmatprep.subr.mxu0 0.0
    %488 = vmatpush2.xpose.msra.mxu0 0.0
    %489 = vmatprep.subr.mxu0 0.0
    %490 = vmatpush2.xpose.msra.mxu0 0.0
    %491 = vmatprep.subr.mxu0 0.0
    %492 = vmatpush2.xpose.msra.mxu0 0.0
    %493 = vmatprep.subr.mxu0 0.0
    %494 = vmatpush2.xpose.msra.mxu0 0.0
    %495 = vmatprep.subr.mxu0 0.0
    %496 = vmatpush2.xpose.msra.mxu0 0.0
    %497 = vmatprep.subr.mxu0 0.0
    %498 = vmatpush2.xpose.msra.mxu0 0.0
    %499 = vmatprep.subr.mxu0 0.0
    %500 = vmatpush2.xpose.msra.mxu0 0.0
    %501 = vmatprep.subr.mxu0 0.0
    %502 = vmatpush2.xpose.msra.mxu0 0.0
    %503 = vmatprep.subr.mxu0 0.0
    %504 = vmatpush2.xpose.msra.mxu0 0.0
    %505 = vmatprep.subr.mxu0 0.0
    %506 = vmatpush2.xpose.msra.mxu0 0.0
    %507 = vmatprep.subr.mxu0 0.0
    %508 = vmatpush2.xpose.msra.mxu0 0.0
    %509 = vmatprep.subr.mxu0 0.0
    %510 = vmatpush2.xpose.msra.mxu0 0.0
    %511 = vmatprep.mubr.f32.mxu0 0.0
    %512 = vmatmul.mubr.f32.gmra.mxu0 %v443
    %v513 = vpop.f32.mrf.mxu0
    %v514 = vadd.f32 0.0, %v513
    %v515 = vpop.f32.mrf.mxu0
    %516 = vdwg.mxu0
    %v517 = vmul.f32 %v514, 0.25
    %v518 = vadd.f32 %v517, %v345
    %v519 = vsel %vm348, %v518, -inf
    %520 = vmax.xlane.f32.xlu0 %v519
    %v521 = vpop.xlane.xlu0 %520
    %v522 = vsub.f32 %v518, %v521
    %v523 = vmul.f32 %v522, 1.442695
    %v524 = vpow.pop %v523
    %v525 = vsel %vm348, %v524, 0.0
    %526 = vadd.xlane.f32.xlu0 %v525
    %v527 = vpop.xlane.xlu0 %526
    %v528 = vrcp.pop %v527
    %v529 = vmul.f32 %v524, %v528
    %530 = vrot.lane.b32.xlu0 %v257, 48
    %v531 = vpop.permute.xlu0 %530
    %v533 = vsel %vm362, %v529, 0
    %v535 = vsel %vm366, %v531, 0
    %537 = vmatprep.subr.mxu0 0.0
    %538 = vmatpush1.msra.mxu0 0.0
    %539 = vmatprep.subr.mxu0 0.0
    %540 = vmatpush1.msra.mxu0 0.0
    %541 = vmatprep.subr.mxu0 0.0
    %542 = vmatpush1.msra.mxu0 0.0
    %543 = vmatprep.subr.mxu0 0.0
    %544 = vmatpush1.msra.mxu0 0.0
    %545 = vmatprep.subr.mxu0 0.0
    %546 = vmatpush1.msra.mxu0 0.0
    %547 = vmatprep.subr.mxu0 0.0
    %548 = vmatpush1.msra.mxu0 0.0
    %549 = vmatprep.subr.mxu0 0.0
    %550 = vmatpush1.msra.mxu0 0.0
    %551 = vmatprep.subr.mxu0 0.0
    %552 = vmatpush1.msra.mxu0 0.0
    %553 = vmatprep.subr.mxu0 0.0
    %554 = vmatpush1.msra.mxu0 0.0
    %555 = vmatprep.subr.mxu0 0.0
    %556 = vmatpush1.msra.mxu0 0.0
    %557 = vmatprep.subr.mxu0 0.0
    %558 = vmatpush1.msra.mxu0 0.0
    %559 = vmatprep.subr.mxu0 0.0
    %560 = vmatpush1.msra.mxu0 0.0
    %561 = vmatprep.subr.mxu0 0.0
    %562 = vmatpush1.msra.mxu0 0.0
    %563 = vmatprep.subr.mxu0 0.0
    %564 = vmatpush1.msra.mxu0 0.0
    %565 = vmatprep.subr.mxu0 0.0
    %566 = vmatpush1.msra.mxu0 0.0
    %567 = vmatprep.subr.mxu0 0.0
    %568 = vmatpush1.msra.mxu0 %v535
    %569 = vmatprep.subr.mxu0 0.0
    %570 = vmatpush2.msra.mxu0 0.0
    %571 = vmatprep.subr.mxu0 0.0
    %572 = vmatpush2.msra.mxu0 0.0
    %573 = vmatprep.subr.mxu0 0.0
    %574 = vmatpush2.msra.mxu0 0.0
    %575 = vmatprep.subr.mxu0 0.0
    %576 = vmatpush2.msra.mxu0 0.0
    %577 = vmatprep.subr.mxu0 0.0
    %578 = vmatpush2.msra.mxu0 0.0
    %579 = vmatprep.subr.mxu0 0.0
    %580 = vmatpush2.msra.mxu0 0.0
    %581 = vmatprep.subr.mxu0 0.0
    %582 = vmatpush2.msra.mxu0 0.0
    %583 = vmatprep.subr.mxu0 0.0
    %584 = vmatpush2.msra.mxu0 0.0
    %585 = vmatprep.subr.mxu0 0.0
    %586 = vmatpush2.msra.mxu0 0.0
    %587 = vmatprep.subr.mxu0 0.0
    %588 = vmatpush2.msra.mxu0 0.0
    %589 = vmatprep.subr.mxu0 0.0
    %590 = vmatpush2.msra.mxu0 0.0
    %591 = vmatprep.subr.mxu0 0.0
    %592 = vmatpush2.msra.mxu0 0.0
    %593 = vmatprep.subr.mxu0 0.0
    %594 = vmatpush2.msra.mxu0 0.0
    %595 = vmatprep.subr.mxu0 0.0
    %596 = vmatpush2.msra.mxu0 0.0
    %597 = vmatprep.subr.mxu0 0.0
    %598 = vmatpush2.msra.mxu0 0.0
    %599 = vmatprep.subr.mxu0 0.0
    %600 = vmatpush2.msra.mxu0 0.0
    %601 = vmatprep.mubr.f32.mxu0 0.0
    %602 = vmatmul.mubr.f32.gmra.mxu0 %v533
    %v603 = vpop.f32.mrf.mxu0
    %v604 = vadd.f32 0.0, %v603
    %v605 = vpop.f32.mrf.mxu0
    %606 = vdwg.mxu0
    %v608 = vsel %vm67, %v604, 0
    %610 = vmatprep.subr.mxu0 0.0
    %611 = vmatpush1.msra.mxu0 0.0
    %612 = vmatprep.subr.mxu0 0.0
    %613 = vmatpush1.msra.mxu0 0.0
    %614 = vmatprep.subr.mxu0 0.0
    %615 = vmatpush1.msra.mxu0 0.0
    %616 = vmatprep.subr.mxu0 0.0
    %617 = vmatpush1.msra.mxu0 0.0
    %618 = vmatprep.subr.mxu0 0.0
    %619 = vmatpush1.msra.mxu0 0.0
    %620 = vmatprep.subr.mxu0 0.0
    %621 = vmatpush1.msra.mxu0 0.0
    %622 = vmatprep.subr.mxu0 0.0
    %623 = vmatpush1.msra.mxu0 0.0
    %624 = vmatprep.subr.mxu0 0.0
    %625 = vmatpush1.msra.mxu0 0.0
    %626 = vmatprep.subr.mxu0 0.0
    %627 = vmatpush1.msra.mxu0 0.0
    %628 = vmatprep.subr.mxu0 0.0
    %629 = vmatpush1.msra.mxu0 0.0
    %630 = vmatprep.subr.mxu0 0.0
    %631 = vmatpush1.msra.mxu0 0.0
    %632 = vmatprep.subr.mxu0 0.0
    %633 = vmatpush1.msra.mxu0 0.0
    %634 = vmatprep.subr.mxu0 0.0
    %635 = vmatpush1.msra.mxu0 0.0
    %636 = vmatprep.subr.mxu0 0.0
    %637 = vmatpush1.msra.mxu0 0.0
    %638 = vmatprep.subr.mxu0 0.0
    %639 = vmatpush1.msra.mxu0 %v263
    %640 = vmatprep.subr.mxu0 0.0
    %641 = vmatpush1.msra.mxu0 %v262
    %642 = vmatprep.subr.mxu0 0.0
    %643 = vmatpush2.msra.mxu0 0.0
    %644 = vmatprep.subr.mxu0 0.0
    %645 = vmatpush2.msra.mxu0 0.0
    %646 = vmatprep.subr.mxu0 0.0
    %647 = vmatpush2.msra.mxu0 0.0
    %648 = vmatprep.subr.mxu0 0.0
    %649 = vmatpush2.msra.mxu0 0.0
    %650 = vmatprep.subr.mxu0 0.0
    %651 = vmatpush2.msra.mxu0 0.0
    %652 = vmatprep.subr.mxu0 0.0
    %653 = vmatpush2.msra.mxu0 0.0
    %654 = vmatprep.subr.mxu0 0.0
    %655 = vmatpush2.msra.mxu0 0.0
    %656 = vmatprep.subr.mxu0 0.0
    %657 = vmatpush2.msra.mxu0 0.0
    %658 = vmatprep.subr.mxu0 0.0
    %659 = vmatpush2.msra.mxu0 0.0
    %660 = vmatprep.subr.mxu0 0.0
    %661 = vmatpush2.msra.mxu0 0.0
    %662 = vmatprep.subr.mxu0 0.0
    %663 = vmatpush2.msra.mxu0 0.0
    %664 = vmatprep.subr.mxu0 0.0
    %665 = vmatpush2.msra.mxu0 0.0
    %666 = vmatprep.subr.mxu0 0.0
    %667 = vmatpush2.msra.mxu0 0.0
    %668 = vmatprep.subr.mxu0 0.0
    %669 = vmatpush2.msra.mxu0 0.0
    %670 = vmatprep.subr.mxu0 0.0
    %671 = vmatpush2.msra.mxu0 0.0
    %672 = vmatprep.subr.mxu0 0.0
    %673 = vmatpush2.msra.mxu0 0.0
    %674 = vmatprep.mubr.f32.mxu0 0.0
    %675 = vmatmul.mubr.f32.gmra.mxu0 %v608
    %v676 = vpop.f32.mrf.mxu0
    %v677 = vadd.f32 0.0, %v676
    %v678 = vpop.f32.mrf.mxu0
    %679 = vdwg.mxu0
    %v681 = vsel %vm67, %v436, 0
    %683 = vmatprep.subr.mxu0 0.0
    %684 = vmatpush1.msra.mxu0 0.0
    %685 = vmatprep.subr.mxu0 0.0
    %686 = vmatpush1.msra.mxu0 0.0
    %687 = vmatprep.subr.mxu0 0.0
    %688 = vmatpush1.msra.mxu0 0.0
    %689 = vmatprep.subr.mxu0 0.0
    %690 = vmatpush1.msra.mxu0 0.0
    %691 = vmatprep.subr.mxu0 0.0
    %692 = vmatpush1.msra.mxu0 0.0
    %693 = vmatprep.subr.mxu0 0.0
    %694 = vmatpush1.msra.mxu0 0.0
    %695 = vmatprep.subr.mxu0 0.0
    %696 = vmatpush1.msra.mxu0 0.0
    %697 = vmatprep.subr.mxu0 0.0
    %698 = vmatpush1.msra.mxu0 0.0
    %699 = vmatprep.subr.mxu0 0.0
    %700 = vmatpush1.msra.mxu0 0.0
    %701 = vmatprep.subr.mxu0 0.0
    %702 = vmatpush1.msra.mxu0 0.0
    %703 = vmatprep.subr.mxu0 0.0
    %704 = vmatpush1.msra.mxu0 0.0
    %705 = vmatprep.subr.mxu0 0.0
    %706 = vmatpush1.msra.mxu0 0.0
    %707 = vmatprep.subr.mxu0 0.0
    %708 = vmatpush1.msra.mxu0 0.0
    %709 = vmatprep.subr.mxu0 0.0
    %710 = vmatpush1.msra.mxu0 0.0
    %711 = vmatprep.subr.mxu0 0.0
    %712 = vmatpush1.msra.mxu0 %v261
    %713 = vmatprep.subr.mxu0 0.0
    %714 = vmatpush1.msra.mxu0 %v260
    %715 = vmatprep.subr.mxu0 0.0
    %716 = vmatpush2.msra.mxu0 0.0
    %717 = vmatprep.subr.mxu0 0.0
    %718 = vmatpush2.msra.mxu0 0.0
    %719 = vmatprep.subr.mxu0 0.0
    %720 = vmatpush2.msra.mxu0 0.0
    %721 = vmatprep.subr.mxu0 0.0
    %722 = vmatpush2.msra.mxu0 0.0
    %723 = vmatprep.subr.mxu0 0.0
    %724 = vmatpush2.msra.mxu0 0.0
    %725 = vmatprep.subr.mxu0 0.0
    %726 = vmatpush2.msra.mxu0 0.0
    %727 = vmatprep.subr.mxu0 0.0
    %728 = vmatpush2.msra.mxu0 0.0
    %729 = vmatprep.subr.mxu0 0.0
    %730 = vmatpush2.msra.mxu0 0.0
    %731 = vmatprep.subr.mxu0 0.0
    %732 = vmatpush2.msra.mxu0 0.0
    %733 = vmatprep.subr.mxu0 0.0
    %734 = vmatpush2.msra.mxu0 0.0
    %735 = vmatprep.subr.mxu0 0.0
    %736 = vmatpush2.msra.mxu0 0.0
    %737 = vmatprep.subr.mxu0 0.0
    %738 = vmatpush2.msra.mxu0 0.0
    %739 = vmatprep.subr.mxu0 0.0
    %740 = vmatpush2.msra.mxu0 0.0
    %741 = vmatprep.subr.mxu0 0.0
    %742 = vmatpush2.msra.mxu0 0.0
    %743 = vmatprep.subr.mxu0 0.0
    %744 = vmatpush2.msra.mxu0 0.0
    %745 = vmatprep.subr.mxu0 0.0
    %746 = vmatpush2.msra.mxu0 0.0
    %747 = vmatprep.mubr.f32.mxu0 0.0
    %748 = vmatmul.mubr.f32.gmra.mxu0 %v681
    %v749 = vpop.f32.mrf.mxu0
    %v750 = vadd.f32 %v677, %v749
    %v751 = vpop.f32.mrf.mxu0
    %752 = vdwg.mxu0
    %v753 = vlaneseq
    %v754 = vshrl.u32 %v753, 7
    %v755 = vsub.s32 0, %v754
    %v756 = vrot.slane %v264, %v755
    %v757 = vadd.f32 %v750, %v756
    %v758 = vadd.f32 %v176, %v757
    %v759 = vld [vmem:[%s3 + $0x5] sm:$0x1]
    %v760 = vld [vmem:[%s3 + $0x6] sm:$0x1]
    %v761 = vsel %vm152, %v758, 0.0
    %762 = vadd.xlane.f32.xlu0 %v761
    %v763 = vpop.xlane.xlu0 %762
    %v764 = vmul.f32 %v763, %v156
    %v765 = vsub.f32 %v758, %v764
    %v766 = vmul.f32 %v765, %v765
    %v767 = vsel %vm152, %v766, 0.0
    %768 = vadd.xlane.f32.xlu0 %v767
    %v769 = vpop.xlane.xlu0 %768
    %v770 = vmul.f32 %v769, %v156
    %v771 = vadd.f32 %v770, 1e-05
    %v772 = vrsqrt.pop %v771
    %v773 = vmul.f32 %v765, %v772
    %v774 = vlaneseq
    %v775 = vshrl.u32 %v774, 7
    %v776 = vsub.s32 0, %v775
    %v777 = vrot.slane %v759, %v776
    %v778 = vmul.f32 %v773, %v777
    %v779 = vlaneseq
    %v780 = vshrl.u32 %v779, 7
    %v781 = vsub.s32 0, %v780
    %v782 = vrot.slane %v760, %v781
    %v783 = vadd.f32 %v778, %v782
    %v784 = vld [vmem:[#allocation2 + $0x50] sm:$0xff]
    %v785 = vld [vmem:[#allocation2 + $0x58] sm:$0xff]
    %v786 = vld [vmem:[#allocation2 + $0x60] sm:$0xff]
    %v787 = vld [vmem:[#allocation2 + $0x68] sm:$0xff]
    %v788 = vld [vmem:[%s3 + $0xb] sm:$0x1]
    %v789 = vlaneseq
    %v790 = vshrl.u32 %v789, 7
    %v791 = vsub.s32 0, %v790
    %v792 = vrot.slane %v788, %v791
    %v794 = vsel %vm186, %v783, 0
    %796 = vmatprep.subr.mxu0 0.0
    %797 = vmatpush1.msra.mxu0 0.0
    %798 = vmatprep.subr.mxu0 0.0
    %799 = vmatpush1.msra.mxu0 0.0
    %800 = vmatprep.subr.mxu0 0.0
    %801 = vmatpush1.msra.mxu0 0.0
    %802 = vmatprep.subr.mxu0 0.0
    %803 = vmatpush1.msra.mxu0 0.0
    %804 = vmatprep.subr.mxu0 0.0
    %805 = vmatpush1.msra.mxu0 0.0
    %806 = vmatprep.subr.mxu0 0.0
    %807 = vmatpush1.msra.mxu0 0.0
    %808 = vmatprep.subr.mxu0 0.0
    %809 = vmatpush1.msra.mxu0 0.0
    %810 = vmatprep.subr.mxu0 0.0
    %811 = vmatpush1.msra.mxu0 0.0
    %812 = vmatprep.subr.mxu0 0.0
    %813 = vmatpush1.msra.mxu0 0.0
    %814 = vmatprep.subr.mxu0 0.0
    %815 = vmatpush1.msra.mxu0 0.0
    %816 = vmatprep.subr.mxu0 0.0
    %817 = vmatpush1.msra.mxu0 0.0
    %818 = vmatprep.subr.mxu0 0.0
    %819 = vmatpush1.msra.mxu0 0.0
    %820 = vmatprep.subr.mxu0 0.0
    %821 = vmatpush1.msra.mxu0 %v787
    %822 = vmatprep.subr.mxu0 0.0
    %823 = vmatpush1.msra.mxu0 %v786
    %824 = vmatprep.subr.mxu0 0.0
    %825 = vmatpush1.msra.mxu0 %v785
    %826 = vmatprep.subr.mxu0 0.0
    %827 = vmatpush1.msra.mxu0 %v784
    %828 = vmatprep.subr.mxu0 0.0
    %829 = vmatpush2.msra.mxu0 0.0
    %830 = vmatprep.subr.mxu0 0.0
    %831 = vmatpush2.msra.mxu0 0.0
    %832 = vmatprep.subr.mxu0 0.0
    %833 = vmatpush2.msra.mxu0 0.0
    %834 = vmatprep.subr.mxu0 0.0
    %835 = vmatpush2.msra.mxu0 0.0
    %836 = vmatprep.subr.mxu0 0.0
    %837 = vmatpush2.msra.mxu0 0.0
    %838 = vmatprep.subr.mxu0 0.0
    %839 = vmatpush2.msra.mxu0 0.0
    %840 = vmatprep.subr.mxu0 0.0
    %841 = vmatpush2.msra.mxu0 0.0
    %842 = vmatprep.subr.mxu0 0.0
    %843 = vmatpush2.msra.mxu0 0.0
    %844 = vmatprep.subr.mxu0 0.0
    %845 = vmatpush2.msra.mxu0 0.0
    %846 = vmatprep.subr.mxu0 0.0
    %847 = vmatpush2.msra.mxu0 0.0
    %848 = vmatprep.subr.mxu0 0.0
    %849 = vmatpush2.msra.mxu0 0.0
    %850 = vmatprep.subr.mxu0 0.0
    %851 = vmatpush2.msra.mxu0 0.0
    %852 = vmatprep.subr.mxu0 0.0
    %853 = vmatpush2.msra.mxu0 0.0
    %854 = vmatprep.subr.mxu0 0.0
    %855 = vmatpush2.msra.mxu0 0.0
    %856 = vmatprep.subr.mxu0 0.0
    %857 = vmatpush2.msra.mxu0 0.0
    %858 = vmatprep.subr.mxu0 0.0
    %859 = vmatpush2.msra.mxu0 0.0
    %860 = vmatprep.mubr.f32.mxu0 0.0
    %861 = vmatmul.mubr.f32.gmra.mxu0 %v794
    %v862 = vpop.f32.mrf.mxu0
    %v863 = vadd.f32 %v792, %v862
    %v864 = vpop.f32.mrf.mxu0
    %865 = vdwg.mxu0
    %v866 = vmul.f32 %v863, 0.5
    %v867 = vmul.f32 %v863, 0.044715
    %v868 = vmul.f32 %v867, %v863
    %v869 = vmul.f32 %v868, %v863
    %v870 = vadd.f32 %v863, %v869
    %v871 = vmul.f32 %v870, 0.7978846
    %v872 = vtanh.pop %v871
    %v873 = vadd.f32 %v872, 1.0
    %v874 = vmul.f32 %v866, %v873
    %v875 = vld [vmem:[#allocation2 + $0x70] sm:$0xff]
    %v876 = vld [vmem:[#allocation2 + $0x78] sm:$0xff]
    %v877 = vld [vmem:[#allocation2 + $0x80] sm:$0xff]
    %v878 = vld [vmem:[#allocation2 + $0x88] sm:$0xff]
    %v879 = vld [vmem:[%s3 + $0xc] sm:$0x1]
    %v880 = vlaneseq
    %v881 = vshrl.u32 %v880, 7
    %v882 = vsub.s32 0, %v881
    %v883 = vrot.slane %v879, %v882
    %v885 = vsel %vm186, %v874, 0
    %887 = vmatprep.subr.mxu0 0.0
    %888 = vmatpush1.msra.mxu0 0.0
    %889 = vmatprep.subr.mxu0 0.0
    %890 = vmatpush1.msra.mxu0 0.0
    %891 = vmatprep.subr.mxu0 0.0
    %892 = vmatpush1.msra.mxu0 0.0
    %893 = vmatprep.subr.mxu0 0.0
    %894 = vmatpush1.msra.mxu0 0.0
    %895 = vmatprep.subr.mxu0 0.0
    %896 = vmatpush1.msra.mxu0 0.0
    %897 = vmatprep.subr.mxu0 0.0
    %898 = vmatpush1.msra.mxu0 0.0
    %899 = vmatprep.subr.mxu0 0.0
    %900 = vmatpush1.msra.mxu0 0.0
    %901 = vmatprep.subr.mxu0 0.0
    %902 = vmatpush1.msra.mxu0 0.0
    %903 = vmatprep.subr.mxu0 0.0
    %904 = vmatpush1.msra.mxu0 0.0
    %905 = vmatprep.subr.mxu0 0.0
    %906 = vmatpush1.msra.mxu0 0.0
    %907 = vmatprep.subr.mxu0 0.0
    %908 = vmatpush1.msra.mxu0 0.0
    %909 = vmatprep.subr.mxu0 0.0
    %910 = vmatpush1.msra.mxu0 0.0
    %911 = vmatprep.subr.mxu0 0.0
    %912 = vmatpush1.msra.mxu0 %v878
    %913 = vmatprep.subr.mxu0 0.0
    %914 = vmatpush1.msra.mxu0 %v877
    %915 = vmatprep.subr.mxu0 0.0
    %916 = vmatpush1.msra.mxu0 %v876
    %917 = vmatprep.subr.mxu0 0.0
    %918 = vmatpush1.msra.mxu0 %v875
    %919 = vmatprep.subr.mxu0 0.0
    %920 = vmatpush2.msra.mxu0 0.0
    %921 = vmatprep.subr.mxu0 0.0
    %922 = vmatpush2.msra.mxu0 0.0
    %923 = vmatprep.subr.mxu0 0.0
    %924 = vmatpush2.msra.mxu0 0.0
    %925 = vmatprep.subr.mxu0 0.0
    %926 = vmatpush2.msra.mxu0 0.0
    %927 = vmatprep.subr.mxu0 0.0
    %928 = vmatpush2.msra.mxu0 0.0
    %929 = vmatprep.subr.mxu0 0.0
    %930 = vmatpush2.msra.mxu0 0.0
    %931 = vmatprep.subr.mxu0 0.0
    %932 = vmatpush2.msra.mxu0 0.0
    %933 = vmatprep.subr.mxu0 0.0
    %934 = vmatpush2.msra.mxu0 0.0
    %935 = vmatprep.subr.mxu0 0.0
    %936 = vmatpush2.msra.mxu0 0.0
    %937 = vmatprep.subr.mxu0 0.0
    %938 = vmatpush2.msra.mxu0 0.0
    %939 = vmatprep.subr.mxu0 0.0
    %940 = vmatpush2.msra.mxu0 0.0
    %941 = vmatprep.subr.mxu0 0.0
    %942 = vmatpush2.msra.mxu0 0.0
    %943 = vmatprep.subr.mxu0 0.0
    %944 = vmatpush2.msra.mxu0 0.0
    %945 = vmatprep.subr.mxu0 0.0
    %946 = vmatpush2.msra.mxu0 0.0
    %947 = vmatprep.subr.mxu0 0.0
    %948 = vmatpush2.msra.mxu0 0.0
    %949 = vmatprep.subr.mxu0 0.0
    %950 = vmatpush2.msra.mxu0 0.0
    %951 = vmatprep.mubr.f32.mxu0 0.0
    %952 = vmatmul.mubr.f32.gmra.mxu0 %v885
    %v953 = vpop.f32.mrf.mxu0
    %v954 = vadd.f32 %v883, %v953
    %v955 = vpop.f32.mrf.mxu0
    %956 = vdwg.mxu0
    %v957 = vadd.f32 %v783, %v954
    %v958 = vld [vmem:[%s3 + $0x7] sm:$0x1]
    %v959 = vld [vmem:[%s3 + $0x8] sm:$0x1]
    %v960 = vsel %vm152, %v957, 0.0
    %961 = vadd.xlane.f32.xlu0 %v960
    %v962 = vpop.xlane.xlu0 %961
    %v963 = vmul.f32 %v962, %v156
    %v964 = vsub.f32 %v957, %v963
    %v965 = vmul.f32 %v964, %v964
    %v966 = vsel %vm152, %v965, 0.0
    %967 = vadd.xlane.f32.xlu0 %v966
    %v968 = vpop.xlane.xlu0 %967
    %v969 = vmul.f32 %v968, %v156
    %v970 = vadd.f32 %v969, 1e-05
    %v971 = vrsqrt.pop %v970
    %v972 = vmul.f32 %v964, %v971
    %v973 = vlaneseq
    %v974 = vshrl.u32 %v973, 7
    %v975 = vsub.s32 0, %v974
    %v976 = vrot.slane %v958, %v975
    %v977 = vmul.f32 %v972, %v976
    %v978 = vlaneseq
    %v979 = vshrl.u32 %v978, 7
    %v980 = vsub.s32 0, %v979
    %v981 = vrot.slane %v959, %v980
    %v982 = vadd.f32 %v977, %v981
    %v983 = vld [vmem:[#allocation2 + $0x90] sm:$0xff]
    %v984 = vld [vmem:[#allocation2 + $0x98] sm:$0xff]
    %v985 = vld [vmem:[#allocation2 + $0xa0] sm:$0xff]
    %v986 = vld [vmem:[#allocation2 + $0xa8] sm:$0xff]
    %v987 = vld [vmem:[%s3 + $0x11] sm:$0x1]
    %v988 = vlaneseq
    %v989 = vshrl.u32 %v988, 7
    %v990 = vsub.s32 0, %v989
    %v991 = vrot.slane %v987, %v990
    %v993 = vsel %vm186, %v982, 0
    %995 = vmatprep.subr.mxu0 0.0
    %996 = vmatpush1.msra.mxu0 0.0
    %997 = vmatprep.subr.mxu0 0.0
    %998 = vmatpush1.msra.mxu0 0.0
    %999 = vmatprep.subr.mxu0 0.0
    %1000 = vmatpush1.msra.mxu0 0.0
    %1001 = vmatprep.subr.mxu0 0.0
    %1002 = vmatpush1.msra.mxu0 0.0
    %1003 = vmatprep.subr.mxu0 0.0
    %1004 = vmatpush1.msra.mxu0 0.0
    %1005 = vmatprep.subr.mxu0 0.0
    %1006 = vmatpush1.msra.mxu0 0.0
    %1007 = vmatprep.subr.mxu0 0.0
    %1008 = vmatpush1.msra.mxu0 0.0
    %1009 = vmatprep.subr.mxu0 0.0
    %1010 = vmatpush1.msra.mxu0 0.0
    %1011 = vmatprep.subr.mxu0 0.0
    %1012 = vmatpush1.msra.mxu0 0.0
    %1013 = vmatprep.subr.mxu0 0.0
    %1014 = vmatpush1.msra.mxu0 0.0
    %1015 = vmatprep.subr.mxu0 0.0
    %1016 = vmatpush1.msra.mxu0 0.0
    %1017 = vmatprep.subr.mxu0 0.0
    %1018 = vmatpush1.msra.mxu0 0.0
    %1019 = vmatprep.subr.mxu0 0.0
    %1020 = vmatpush1.msra.mxu0 %v986
    %1021 = vmatprep.subr.mxu0 0.0
    %1022 = vmatpush1.msra.mxu0 %v985
    %1023 = vmatprep.subr.mxu0 0.0
    %1024 = vmatpush1.msra.mxu0 %v984
    %1025 = vmatprep.subr.mxu0 0.0
    %1026 = vmatpush1.msra.mxu0 %v983
    %1027 = vmatprep.subr.mxu0 0.0
    %1028 = vmatpush2.msra.mxu0 0.0
    %1029 = vmatprep.subr.mxu0 0.0
    %1030 = vmatpush2.msra.mxu0 0.0
    %1031 = vmatprep.subr.mxu0 0.0
    %1032 = vmatpush2.msra.mxu0 0.0
    %1033 = vmatprep.subr.mxu0 0.0
    %1034 = vmatpush2.msra.mxu0 0.0
    %1035 = vmatprep.subr.mxu0 0.0
    %1036 = vmatpush2.msra.mxu0 0.0
    %1037 = vmatprep.subr.mxu0 0.0
    %1038 = vmatpush2.msra.mxu0 0.0
    %1039 = vmatprep.subr.mxu0 0.0
    %1040 = vmatpush2.msra.mxu0 0.0
    %1041 = vmatprep.subr.mxu0 0.0
    %1042 = vmatpush2.msra.mxu0 0.0
    %1043 = vmatprep.subr.mxu0 0.0
    %1044 = vmatpush2.msra.mxu0 0.0
    %1045 = vmatprep.subr.mxu0 0.0
    %1046 = vmatpush2.msra.mxu0 0.0
    %1047 = vmatprep.subr.mxu0 0.0
    %1048 = vmatpush2.msra.mxu0 0.0
    %1049 = vmatprep.subr.mxu0 0.0
    %1050 = vmatpush2.msra.mxu0 0.0
    %1051 = vmatprep.subr.mxu0 0.0
    %1052 = vmatpush2.msra.mxu0 0.0
    %1053 = vmatprep.subr.mxu0 0.0
    %1054 = vmatpush2.msra.mxu0 0.0
    %1055 = vmatprep.subr.mxu0 0.0
    %1056 = vmatpush2.msra.mxu0 0.0
    %1057 = vmatprep.subr.mxu0 0.0
    %1058 = vmatpush2.msra.mxu0 0.0
    %1059 = vmatprep.mubr.f32.mxu0 0.0
    %1060 = vmatmul.mubr.f32.gmra.mxu0 %v993
    %v1061 = vpop.f32.mrf.mxu0
    %v1062 = vadd.f32 %v991, %v1061
    %v1063 = vpop.f32.mrf.mxu0
    %1064 = vdwg.mxu0
    %v1065 = vld [vmem:[#allocation2 + $0xb0] sm:$0xff]
    %v1066 = vld [vmem:[#allocation2 + $0xb8] sm:$0xff]
    %v1067 = vld [vmem:[#allocation2 + $0xc0] sm:$0xff]
    %v1068 = vld [vmem:[#allocation2 + $0xc8] sm:$0xff]
    %v1069 = vld [vmem:[%s3 + $0x12] sm:$0x1]
    %1071 = vrot.lane.b32.xlu0 %v1062, 96
    %v1072 = vpop.permute.xlu0 %1071
    %v1073 = vsel %vm67, %v1062, 0
    %v1075 = vsel %vm67, %v1072, 0
    %1077 = vmatprep.subr.mxu0 0.0
    %1078 = vmatpush1.xpose.msra.mxu0 0.0
    %1079 = vmatprep.subr.mxu0 0.0
    %1080 = vmatpush1.xpose.msra.mxu0 0.0
    %1081 = vmatprep.subr.mxu0 0.0
    %1082 = vmatpush1.xpose.msra.mxu0 0.0
    %1083 = vmatprep.subr.mxu0 0.0
    %1084 = vmatpush1.xpose.msra.mxu0 0.0
    %1085 = vmatprep.subr.mxu0 0.0
    %1086 = vmatpush1.xpose.msra.mxu0 0.0
    %1087 = vmatprep.subr.mxu0 0.0
    %1088 = vmatpush1.xpose.msra.mxu0 0.0
    %1089 = vmatprep.subr.mxu0 0.0
    %1090 = vmatpush1.xpose.msra.mxu0 0.0
    %1091 = vmatprep.subr.mxu0 0.0
    %1092 = vmatpush1.xpose.msra.mxu0 0.0
    %1093 = vmatprep.subr.mxu0 0.0
    %1094 = vmatpush1.xpose.msra.mxu0 0.0
    %1095 = vmatprep.subr.mxu0 0.0
    %1096 = vmatpush1.xpose.msra.mxu0 0.0
    %1097 = vmatprep.subr.mxu0 0.0
    %1098 = vmatpush1.xpose.msra.mxu0 0.0
    %1099 = vmatprep.subr.mxu0 0.0
    %1100 = vmatpush1.xpose.msra.mxu0 0.0
    %1101 = vmatprep.subr.mxu0 0.0
    %1102 = vmatpush1.xpose.msra.mxu0 0.0
    %1103 = vmatprep.subr.mxu0 0.0
    %1104 = vmatpush1.xpose.msra.mxu0 0.0
    %1105 = vmatprep.subr.mxu0 0.0
    %1106 = vmatpush1.xpose.msra.mxu0 0.0
    %1107 = vmatprep.subr.mxu0 0.0
    %1108 = vmatpush1.xpose.msra.mxu0 %v1075
    %1109 = vmatprep.subr.mxu0 0.0
    %1110 = vmatpush2.xpose.msra.mxu0 0.0
    %1111 = vmatprep.subr.mxu0 0.0
    %1112 = vmatpush2.xpose.msra.mxu0 0.0
    %1113 = vmatprep.subr.mxu0 0.0
    %1114 = vmatpush2.xpose.msra.mxu0 0.0
    %1115 = vmatprep.subr.mxu0 0.0
    %1116 = vmatpush2.xpose.msra.mxu0 0.0
    %1117 = vmatprep.subr.mxu0 0.0
    %1118 = vmatpush2.xpose.msra.mxu0 0.0
    %1119 = vmatprep.subr.mxu0 0.0
    %1120 = vmatpush2.xpose.msra.mxu0 0.0
    %1121 = vmatprep.subr.mxu0 0.0
    %1122 = vmatpush2.xpose.msra.mxu0 0.0
    %1123 = vmatprep.subr.mxu0 0.0
    %1124 = vmatpush2.xpose.msra.mxu0 0.0
    %1125 = vmatprep.subr.mxu0 0.0
    %1126 = vmatpush2.xpose.msra.mxu0 0.0
    %1127 = vmatprep.subr.mxu0 0.0
    %1128 = vmatpush2.xpose.msra.mxu0 0.0
    %1129 = vmatprep.subr.mxu0 0.0
    %1130 = vmatpush2.xpose.msra.mxu0 0.0
    %1131 = vmatprep.subr.mxu0 0.0
    %1132 = vmatpush2.xpose.msra.mxu0 0.0
    %1133 = vmatprep.subr.mxu0 0.0
    %1134 = vmatpush2.xpose.msra.mxu0 0.0
    %1135 = vmatprep.subr.mxu0 0.0
    %1136 = vmatpush2.xpose.msra.mxu0 0.0
    %1137 = vmatprep.subr.mxu0 0.0
    %1138 = vmatpush2.xpose.msra.mxu0 0.0
    %1139 = vmatprep.subr.mxu0 0.0
    %1140 = vmatpush2.xpose.msra.mxu0 0.0
    %1141 = vmatprep.mubr.f32.mxu0 0.0
    %1142 = vmatmul.mubr.f32.gmra.mxu0 %v1073
    %v1143 = vpop.f32.mrf.mxu0
    %v1144 = vadd.f32 0.0, %v1143
    %v1145 = vpop.f32.mrf.mxu0
    %1146 = vdwg.mxu0
    %v1147 = vmul.f32 %v1144, 0.25
    %v1148 = vadd.f32 %v1147, %v345
    %v1149 = vsel %vm348, %v1148, -inf
    %1150 = vmax.xlane.f32.xlu0 %v1149
    %v1151 = vpop.xlane.xlu0 %1150
    %v1152 = vsub.f32 %v1148, %v1151
    %v1153 = vmul.f32 %v1152, 1.442695
    %v1154 = vpow.pop %v1153
    %v1155 = vsel %vm348, %v1154, 0.0
    %1156 = vadd.xlane.f32.xlu0 %v1155
    %v1157 = vpop.xlane.xlu0 %1156
    %v1158 = vrcp.pop %v1157
    %v1159 = vmul.f32 %v1154, %v1158
    %1160 = vrot.lane.b32.xlu0 %v1062, 64
    %v1161 = vpop.permute.xlu0 %1160
    %v1163 = vsel %vm362, %v1159, 0
    %v1165 = vsel %vm366, %v1161, 0
    %1167 = vmatprep.subr.mxu0 0.0
    %1168 = vmatpush1.msra.mxu0 0.0
    %1169 = vmatprep.subr.mxu0 0.0
    %1170 = vmatpush1.msra.mxu0 0.0
    %1171 = vmatprep.subr.mxu0 0.0
    %1172 = vmatpush1.msra.mxu0 0.0
    %1173 = vmatprep.subr.mxu0 0.0
    %1174 = vmatpush1.msra.mxu0 0.0
    %1175 = vmatprep.subr.mxu0 0.0
    %1176 = vmatpush1.msra.mxu0 0.0
    %1177 = vmatprep.subr.mxu0 0.0
    %1178 = vmatpush1.msra.mxu0 0.0
    %1179 = vmatprep.subr.mxu0 0.0
    %1180 = vmatpush1.msra.mxu0 0.0
    %1181 = vmatprep.subr.mxu0 0.0
    %1182 = vmatpush1.msra.mxu0 0.0
    %1183 = vmatprep.subr.mxu0 0.0
    %1184 = vmatpush1.msra.mxu0 0.0
    %1185 = vmatprep.subr.mxu0 0.0
    %1186 = vmatpush1.msra.mxu0 0.0
    %1187 = vmatprep.subr.mxu0 0.0
    %1188 = vmatpush1.msra.mxu0 0.0
    %1189 = vmatprep.subr.mxu0 0.0
    %1190 = vmatpush1.msra.mxu0 0.0
    %1191 = vmatprep.subr.mxu0 0.0
    %1192 = vmatpush1.msra.mxu0 0.0
    %1193 = vmatprep.subr.mxu0 0.0
    %1194 = vmatpush1.msra.mxu0 0.0
    %1195 = vmatprep.subr.mxu0 0.0
    %1196 = vmatpush1.msra.mxu0 0.0
    %1197 = vmatprep.subr.mxu0 0.0
    %1198 = vmatpush1.msra.mxu0 %v1165
    %1199 = vmatprep.subr.mxu0 0.0
    %1200 = vmatpush2.msra.mxu0 0.0
    %1201 = vmatprep.subr.mxu0 0.0
    %1202 = vmatpush2.msra.mxu0 0.0
    %1203 = vmatprep.subr.mxu0 0.0
    %1204 = vmatpush2.msra.mxu0 0.0
    %1205 = vmatprep.subr.mxu0 0.0
    %1206 = vmatpush2.msra.mxu0 0.0
    %1207 = vmatprep.subr.mxu0 0.0
    %1208 = vmatpush2.msra.mxu0 0.0
    %1209 = vmatprep.subr.mxu0 0.0
    %1210 = vmatpush2.msra.mxu0 0.0
    %1211 = vmatprep.subr.mxu0 0.0
    %1212 = vmatpush2.msra.mxu0 0.0
    %1213 = vmatprep.subr.mxu0 0.0
    %1214 = vmatpush2.msra.mxu0 0.0
    %1215 = vmatprep.subr.mxu0 0.0
    %1216 = vmatpush2.msra.mxu0 0.0
    %1217 = vmatprep.subr.mxu0 0.0
    %1218 = vmatpush2.msra.mxu0 0.0
    %1219 = vmatprep.subr.mxu0 0.0
    %1220 = vmatpush2.msra.mxu0 0.0
    %1221 = vmatprep.subr.mxu0 0.0
    %1222 = vmatpush2.msra.mxu0 0.0
    %1223 = vmatprep.subr.mxu0 0.0
    %1224 = vmatpush2.msra.mxu0 0.0
    %1225 = vmatprep.subr.mxu0 0.0
    %1226 = vmatpush2.msra.mxu0 0.0
    %1227 = vmatprep.subr.mxu0 0.0
    %1228 = vmatpush2.msra.mxu0 0.0
    %1229 = vmatprep.subr.mxu0 0.0
    %1230 = vmatpush2.msra.mxu0 0.0
    %1231 = vmatprep.mubr.f32.mxu0 0.0
    %1232 = vmatmul.mubr.f32.gmra.mxu0 %v1163
    %v1233 = vpop.f32.mrf.mxu0
    %v1234 = vadd.f32 0.0, %v1233
    %v1235 = vpop.f32.mrf.mxu0
    %1236 = vdwg.mxu0
    %1237 = vrot.lane.b32.xlu0 %v1062, 112
    %v1238 = vpop.permute.xlu0 %1237
    %1239 = vrot.lane.b32.xlu0 %v1062, 80
    %v1240 = vpop.permute.xlu0 %1239
    %v1241 = vsel %vm67, %v1238, 0
    %v1243 = vsel %vm67, %v1240, 0
    %1245 = vmatprep.subr.mxu0 0.0
    %1246 = vmatpush1.xpose.msra.mxu0 0.0
    %1247 = vmatprep.subr.mxu0 0.0
    %1248 = vmatpush1.xpose.msra.mxu0 0.0
    %1249 = vmatprep.subr.mxu0 0.0
    %1250 = vmatpush1.xpose.msra.mxu0 0.0
    %1251 = vmatprep.subr.mxu0 0.0
    %1252 = vmatpush1.xpose.msra.mxu0 0.0
    %1253 = vmatprep.subr.mxu0 0.0
    %1254 = vmatpush1.xpose.msra.mxu0 0.0
    %1255 = vmatprep.subr.mxu0 0.0
    %1256 = vmatpush1.xpose.msra.mxu0 0.0
    %1257 = vmatprep.subr.mxu0 0.0
    %1258 = vmatpush1.xpose.msra.mxu0 0.0
    %1259 = vmatprep.subr.mxu0 0.0
    %1260 = vmatpush1.xpose.msra.mxu0 0.0
    %1261 = vmatprep.subr.mxu0 0.0
    %1262 = vmatpush1.xpose.msra.mxu0 0.0
    %1263 = vmatprep.subr.mxu0 0.0
    %1264 = vmatpush1.xpose.msra.mxu0 0.0
    %1265 = vmatprep.subr.mxu0 0.0
    %1266 = vmatpush1.xpose.msra.mxu0 0.0
    %1267 = vmatprep.subr.mxu0 0.0
    %1268 = vmatpush1.xpose.msra.mxu0 0.0
    %1269 = vmatprep.subr.mxu0 0.0
    %1270 = vmatpush1.xpose.msra.mxu0 0.0
    %1271 = vmatprep.subr.mxu0 0.0
    %1272 = vmatpush1.xpose.msra.mxu0 0.0
    %1273 = vmatprep.subr.mxu0 0.0
    %1274 = vmatpush1.xpose.msra.mxu0 0.0
    %1275 = vmatprep.subr.mxu0 0.0
    %1276 = vmatpush1.xpose.msra.mxu0 %v1243
    %1277 = vmatprep.subr.mxu0 0.0
    %1278 = vmatpush2.xpose.msra.mxu0 0.0
    %1279 = vmatprep.subr.mxu0 0.0
    %1280 = vmatpush2.xpose.msra.mxu0 0.0
    %1281 = vmatprep.subr.mxu0 0.0
    %1282 = vmatpush2.xpose.msra.mxu0 0.0
    %1283 = vmatprep.subr.mxu0 0.0
    %1284 = vmatpush2.xpose.msra.mxu0 0.0
    %1285 = vmatprep.subr.mxu0 0.0
    %1286 = vmatpush2.xpose.msra.mxu0 0.0
    %1287 = vmatprep.subr.mxu0 0.0
    %1288 = vmatpush2.xpose.msra.mxu0 0.0
    %1289 = vmatprep.subr.mxu0 0.0
    %1290 = vmatpush2.xpose.msra.mxu0 0.0
    %1291 = vmatprep.subr.mxu0 0.0
    %1292 = vmatpush2.xpose.msra.mxu0 0.0
    %1293 = vmatprep.subr.mxu0 0.0
    %1294 = vmatpush2.xpose.msra.mxu0 0.0
    %1295 = vmatprep.subr.mxu0 0.0
    %1296 = vmatpush2.xpose.msra.mxu0 0.0
    %1297 = vmatprep.subr.mxu0 0.0
    %1298 = vmatpush2.xpose.msra.mxu0 0.0
    %1299 = vmatprep.subr.mxu0 0.0
    %1300 = vmatpush2.xpose.msra.mxu0 0.0
    %1301 = vmatprep.subr.mxu0 0.0
    %1302 = vmatpush2.xpose.msra.mxu0 0.0
    %1303 = vmatprep.subr.mxu0 0.0
    %1304 = vmatpush2.xpose.msra.mxu0 0.0
    %1305 = vmatprep.subr.mxu0 0.0
    %1306 = vmatpush2.xpose.msra.mxu0 0.0
    %1307 = vmatprep.subr.mxu0 0.0
    %1308 = vmatpush2.xpose.msra.mxu0 0.0
    %1309 = vmatprep.mubr.f32.mxu0 0.0
    %1310 = vmatmul.mubr.f32.gmra.mxu0 %v1241
    %v1311 = vpop.f32.mrf.mxu0
    %v1312 = vadd.f32 0.0, %v1311
    %v1313 = vpop.f32.mrf.mxu0
    %1314 = vdwg.mxu0
    %v1315 = vmul.f32 %v1312, 0.25
    %v1316 = vadd.f32 %v1315, %v345
    %v1317 = vsel %vm348, %v1316, -inf
    %1318 = vmax.xlane.f32.xlu0 %v1317
    %v1319 = vpop.xlane.xlu0 %1318
    %v1320 = vsub.f32 %v1316, %v1319
    %v1321 = vmul.f32 %v1320, 1.442695
    %v1322 = vpow.pop %v1321
    %v1323 = vsel %vm348, %v1322, 0.0
    %1324 = vadd.xlane.f32.xlu0 %v1323
    %v1325 = vpop.xlane.xlu0 %1324
    %v1326 = vrcp.pop %v1325
    %v1327 = vmul.f32 %v1322, %v1326
    %1328 = vrot.lane.b32.xlu0 %v1062, 48
    %v1329 = vpop.permute.xlu0 %1328
    %v1331 = vsel %vm362, %v1327, 0
    %v1333 = vsel %vm366, %v1329, 0
    %1335 = vmatprep.subr.mxu0 0.0
    %1336 = vmatpush1.msra.mxu0 0.0
    %1337 = vmatprep.subr.mxu0 0.0
    %1338 = vmatpush1.msra.mxu0 0.0
    %1339 = vmatprep.subr.mxu0 0.0
    %1340 = vmatpush1.msra.mxu0 0.0
    %1341 = vmatprep.subr.mxu0 0.0
    %1342 = vmatpush1.msra.mxu0 0.0
    %1343 = vmatprep.subr.mxu0 0.0
    %1344 = vmatpush1.msra.mxu0 0.0
    %1345 = vmatprep.subr.mxu0 0.0
    %1346 = vmatpush1.msra.mxu0 0.0
    %1347 = vmatprep.subr.mxu0 0.0
    %1348 = vmatpush1.msra.mxu0 0.0
    %1349 = vmatprep.subr.mxu0 0.0
    %1350 = vmatpush1.msra.mxu0 0.0
    %1351 = vmatprep.subr.mxu0 0.0
    %1352 = vmatpush1.msra.mxu0 0.0
    %1353 = vmatprep.subr.mxu0 0.0
    %1354 = vmatpush1.msra.mxu0 0.0
    %1355 = vmatprep.subr.mxu0 0.0
    %1356 = vmatpush1.msra.mxu0 0.0
    %1357 = vmatprep.subr.mxu0 0.0
    %1358 = vmatpush1.msra.mxu0 0.0
    %1359 = vmatprep.subr.mxu0 0.0
    %1360 = vmatpush1.msra.mxu0 0.0
    %1361 = vmatprep.subr.mxu0 0.0
    %1362 = vmatpush1.msra.mxu0 0.0
    %1363 = vmatprep.subr.mxu0 0.0
    %1364 = vmatpush1.msra.mxu0 0.0
    %1365 = vmatprep.subr.mxu0 0.0
    %1366 = vmatpush1.msra.mxu0 %v1333
    %1367 = vmatprep.subr.mxu0 0.0
    %1368 = vmatpush2.msra.mxu0 0.0
    %1369 = vmatprep.subr.mxu0 0.0
    %1370 = vmatpush2.msra.mxu0 0.0
    %1371 = vmatprep.subr.mxu0 0.0
    %1372 = vmatpush2.msra.mxu0 0.0
    %1373 = vmatprep.subr.mxu0 0.0
    %1374 = vmatpush2.msra.mxu0 0.0
    %1375 = vmatprep.subr.mxu0 0.0
    %1376 = vmatpush2.msra.mxu0 0.0
    %1377 = vmatprep.subr.mxu0 0.0
    %1378 = vmatpush2.msra.mxu0 0.0
    %1379 = vmatprep.subr.mxu0 0.0
    %1380 = vmatpush2.msra.mxu0 0.0
    %1381 = vmatprep.subr.mxu0 0.0
    %1382 = vmatpush2.msra.mxu0 0.0
    %1383 = vmatprep.subr.mxu0 0.0
    %1384 = vmatpush2.msra.mxu0 0.0
    %1385 = vmatprep.subr.mxu0 0.0
    %1386 = vmatpush2.msra.mxu0 0.0
    %1387 = vmatprep.subr.mxu0 0.0
    %1388 = vmatpush2.msra.mxu0 0.0
    %1389 = vmatprep.subr.mxu0 0.0
    %1390 = vmatpush2.msra.mxu0 0.0
    %1391 = vmatprep.subr.mxu0 0.0
    %1392 = vmatpush2.msra.mxu0 0.0
    %1393 = vmatprep.subr.mxu0 0.0
    %1394 = vmatpush2.msra.mxu0 0.0
    %1395 = vmatprep.subr.mxu0 0.0
    %1396 = vmatpush2.msra.mxu0 0.0
    %1397 = vmatprep.subr.mxu0 0.0
    %1398 = vmatpush2.msra.mxu0 0.0
    %1399 = vmatprep.mubr.f32.mxu0 0.0
    %1400 = vmatmul.mubr.f32.gmra.mxu0 %v1331
    %v1401 = vpop.f32.mrf.mxu0
    %v1402 = vadd.f32 0.0, %v1401
    %v1403 = vpop.f32.mrf.mxu0
    %1404 = vdwg.mxu0
    %v1406 = vsel %vm67, %v1402, 0
    %1408 = vmatprep.subr.mxu0 0.0
    %1409 = vmatpush1.msra.mxu0 0.0
    %1410 = vmatprep.subr.mxu0 0.0
    %1411 = vmatpush1.msra.mxu0 0.0
    %1412 = vmatprep.subr.mxu0 0.0
    %1413 = vmatpush1.msra.mxu0 0.0
    %1414 = vmatprep.subr.mxu0 0.0
    %1415 = vmatpush1.msra.mxu0 0.0
    %1416 = vmatprep.subr.mxu0 0.0
    %1417 = vmatpush1.msra.mxu0 0.0
    %1418 = vmatprep.subr.mxu0 0.0
    %1419 = vmatpush1.msra.mxu0 0.0
    %1420 = vmatprep.subr.mxu0 0.0
    %1421 = vmatpush1.msra.mxu0 0.0
    %1422 = vmatprep.subr.mxu0 0.0
    %1423 = vmatpush1.msra.mxu0 0.0
    %1424 = vmatprep.subr.mxu0 0.0
    %1425 = vmatpush1.msra.mxu0 0.0
    %1426 = vmatprep.subr.mxu0 0.0
    %1427 = vmatpush1.msra.mxu0 0.0
    %1428 = vmatprep.subr.mxu0 0.0
    %1429 = vmatpush1.msra.mxu0 0.0
    %1430 = vmatprep.subr.mxu0 0.0
    %1431 = vmatpush1.msra.mxu0 0.0
    %1432 = vmatprep.subr.mxu0 0.0
    %1433 = vmatpush1.msra.mxu0 0.0
    %1434 = vmatprep.subr.mxu0 0.0
    %1435 = vmatpush1.msra.mxu0 0.0
    %1436 = vmatprep.subr.mxu0 0.0
    %1437 = vmatpush1.msra.mxu0 %v1068
    %1438 = vmatprep.subr.mxu0 0.0
    %1439 = vmatpush1.msra.mxu0 %v1067
    %1440 = vmatprep.subr.mxu0 0.0
    %1441 = vmatpush2.msra.mxu0 0.0
    %1442 = vmatprep.subr.mxu0 0.0
    %1443 = vmatpush2.msra.mxu0 0.0
    %1444 = vmatprep.subr.mxu0 0.0
    %1445 = vmatpush2.msra.mxu0 0.0
    %1446 = vmatprep.subr.mxu0 0.0
    %1447 = vmatpush2.msra.mxu0 0.0
    %1448 = vmatprep.subr.mxu0 0.0
    %1449 = vmatpush2.msra.mxu0 0.0
    %1450 = vmatprep.subr.mxu0 0.0
    %1451 = vmatpush2.msra.mxu0 0.0
    %1452 = vmatprep.subr.mxu0 0.0
    %1453 = vmatpush2.msra.mxu0 0.0
    %1454 = vmatprep.subr.mxu0 0.0
    %1455 = vmatpush2.msra.mxu0 0.0
    %1456 = vmatprep.subr.mxu0 0.0
    %1457 = vmatpush2.msra.mxu0 0.0
    %1458 = vmatprep.subr.mxu0 0.0
    %1459 = vmatpush2.msra.mxu0 0.0
    %1460 = vmatprep.subr.mxu0 0.0
    %1461 = vmatpush2.msra.mxu0 0.0
    %1462 = vmatprep.subr.mxu0 0.0
    %1463 = vmatpush2.msra.mxu0 0.0
    %1464 = vmatprep.subr.mxu0 0.0
    %1465 = vmatpush2.msra.mxu0 0.0
    %1466 = vmatprep.subr.mxu0 0.0
    %1467 = vmatpush2.msra.mxu0 0.0
    %1468 = vmatprep.subr.mxu0 0.0
    %1469 = vmatpush2.msra.mxu0 0.0
    %1470 = vmatprep.subr.mxu0 0.0
    %1471 = vmatpush2.msra.mxu0 0.0
    %1472 = vmatprep.mubr.f32.mxu0 0.0
    %1473 = vmatmul.mubr.f32.gmra.mxu0 %v1406
    %v1474 = vpop.f32.mrf.mxu0
    %v1475 = vadd.f32 0.0, %v1474
    %v1476 = vpop.f32.mrf.mxu0
    %1477 = vdwg.mxu0
    %v1479 = vsel %vm67, %v1234, 0
    %1481 = vmatprep.subr.mxu0 0.0
    %1482 = vmatpush1.msra.mxu0 0.0
    %1483 = vmatprep.subr.mxu0 0.0
    %1484 = vmatpush1.msra.mxu0 0.0
    %1485 = vmatprep.subr.mxu0 0.0
    %1486 = vmatpush1.msra.mxu0 0.0
    %1487 = vmatprep.subr.mxu0 0.0
    %1488 = vmatpush1.msra.mxu0 0.0
    %1489 = vmatprep.subr.mxu0 0.0
    %1490 = vmatpush1.msra.mxu0 0.0
    %1491 = vmatprep.subr.mxu0 0.0
    %1492 = vmatpush1.msra.mxu0 0.0
    %1493 = vmatprep.subr.mxu0 0.0
    %1494 = vmatpush1.msra.mxu0 0.0
    %1495 = vmatprep.subr.mxu0 0.0
    %1496 = vmatpush1.msra.mxu0 0.0
    %1497 = vmatprep.subr.mxu0 0.0
    %1498 = vmatpush1.msra.mxu0 0.0
    %1499 = vmatprep.subr.mxu0 0.0
    %1500 = vmatpush1.msra.mxu0 0.0
    %1501 = vmatprep.subr.mxu0 0.0
    %1502 = vmatpush1.msra.mxu0 0.0
    %1503 = vmatprep.subr.mxu0 0.0
    %1504 = vmatpush1.msra.mxu0 0.0
    %1505 = vmatprep.subr.mxu0 0.0
    %1506 = vmatpush1.msra.mxu0 0.0
    %1507 = vmatprep.subr.mxu0 0.0
    %1508 = vmatpush1.msra.mxu0 0.0
    %1509 = vmatprep.subr.mxu0 0.0
    %1510 = vmatpush1.msra.mxu0 %v1066
    %1511 = vmatprep.subr.mxu0 0.0
    %1512 = vmatpush1.msra.mxu0 %v1065
    %1513 = vmatprep.subr.mxu0 0.0
    %1514 = vmatpush2.msra.mxu0 0.0
    %1515 = vmatprep.subr.mxu0 0.0
    %1516 = vmatpush2.msra.mxu0 0.0
    %1517 = vmatprep.subr.mxu0 0.0
    %1518 = vmatpush2.msra.mxu0 0.0
    %1519 = vmatprep.subr.mxu0 0.0
    %1520 = vmatpush2.msra.mxu0 0.0
    %1521 = vmatprep.subr.mxu0 0.0
    %1522 = vmatpush2.msra.mxu0 0.0
    %1523 = vmatprep.subr.mxu0 0.0
    %1524 = vmatpush2.msra.mxu0 0.0
    %1525 = vmatprep.subr.mxu0 0.0
    %1526 = vmatpush2.msra.mxu0 0.0
    %1527 = vmatprep.subr.mxu0 0.0
    %1528 = vmatpush2.msra.mxu0 0.0
    %1529 = vmatprep.subr.mxu0 0.0
    %1530 = vmatpush2.msra.mxu0 0.0
    %1531 = vmatprep.subr.mxu0 0.0
    %1532 = vmatpush2.msra.mxu0 0.0
    %1533 = vmatprep.subr.mxu0 0.0
    %1534 = vmatpush2.msra.mxu0 0.0
    %1535 = vmatprep.subr.mxu0 0.0
    %1536 = vmatpush2.msra.mxu0 0.0
    %1537 = vmatprep.subr.mxu0 0.0
    %1538 = vmatpush2.msra.mxu0 0.0
    %1539 = vmatprep.subr.mxu0 0.0
    %1540 = vmatpush2.msra.mxu0 0.0
    %1541 = vmatprep.subr.mxu0 0.0
    %1542 = vmatpush2.msra.mxu0 0.0
    %1543 = vmatprep.subr.mxu0 0.0
    %1544 = vmatpush2.msra.mxu0 0.0
    %1545 = vmatprep.mubr.f32.mxu0 0.0
    %1546 = vmatmul.mubr.f32.gmra.mxu0 %v1479
    %v1547 = vpop.f32.mrf.mxu0
    %v1548 = vadd.f32 %v1475, %v1547
    %v1549 = vpop.f32.mrf.mxu0
    %1550 = vdwg.mxu0
    %v1551 = vlaneseq
    %v1552 = vshrl.u32 %v1551, 7
    %v1553 = vsub.s32 0, %v1552
    %v1554 = vrot.slane %v1069, %v1553
    %v1555 = vadd.f32 %v1548, %v1554
    %v1556 = vadd.f32 %v982, %v1555
    %v1557 = vld [vmem:[%s3 + $0xd] sm:$0x1]
    %v1558 = vld [vmem:[%s3 + $0xe] sm:$0x1]
    %v1559 = vsel %vm152, %v1556, 0.0
    %1560 = vadd.xlane.f32.xlu0 %v1559
    %v1561 = vpop.xlane.xlu0 %1560
    %v1562 = vmul.f32 %v1561, %v156
    %v1563 = vsub.f32 %v1556, %v1562
    %v1564 = vmul.f32 %v1563, %v1563
    %v1565 = vsel %vm152, %v1564, 0.0
    %1566 = vadd.xlane.f32.xlu0 %v1565
    %v1567 = vpop.xlane.xlu0 %1566
    %v1568 = vmul.f32 %v1567, %v156
    %v1569 = vadd.f32 %v1568, 1e-05
    %v1570 = vrsqrt.pop %v1569
    %v1571 = vmul.f32 %v1563, %v1570
    %v1572 = vlaneseq
    %v1573 = vshrl.u32 %v1572, 7
    %v1574 = vsub.s32 0, %v1573
    %v1575 = vrot.slane %v1557, %v1574
    %v1576 = vmul.f32 %v1571, %v1575
    %v1577 = vlaneseq
    %v1578 = vshrl.u32 %v1577, 7
    %v1579 = vsub.s32 0, %v1578
    %v1580 = vrot.slane %v1558, %v1579
    %v1581 = vadd.f32 %v1576, %v1580
    %v1582 = vld [vmem:[#allocation2 + $0xd0] sm:$0xff]
    %v1583 = vld [vmem:[#allocation2 + $0xd8] sm:$0xff]
    %v1584 = vld [vmem:[#allocation2 + $0xe0] sm:$0xff]
    %v1585 = vld [vmem:[#allocation2 + $0xe8] sm:$0xff]
    %v1586 = vld [vmem:[%s3 + $0x13] sm:$0x1]
    %v1587 = vlaneseq
    %v1588 = vshrl.u32 %v1587, 7
    %v1589 = vsub.s32 0, %v1588
    %v1590 = vrot.slane %v1586, %v1589
    %v1592 = vsel %vm186, %v1581, 0
    %1594 = vmatprep.subr.mxu0 0.0
    %1595 = vmatpush1.msra.mxu0 0.0
    %1596 = vmatprep.subr.mxu0 0.0
    %1597 = vmatpush1.msra.mxu0 0.0
    %1598 = vmatprep.subr.mxu0 0.0
    %1599 = vmatpush1.msra.mxu0 0.0
    %1600 = vmatprep.subr.mxu0 0.0
    %1601 = vmatpush1.msra.mxu0 0.0
    %1602 = vmatprep.subr.mxu0 0.0
    %1603 = vmatpush1.msra.mxu0 0.0
    %1604 = vmatprep.subr.mxu0 0.0
    %1605 = vmatpush1.msra.mxu0 0.0
    %1606 = vmatprep.subr.mxu0 0.0
    %1607 = vmatpush1.msra.mxu0 0.0
    %1608 = vmatprep.subr.mxu0 0.0
    %1609 = vmatpush1.msra.mxu0 0.0
    %1610 = vmatprep.subr.mxu0 0.0
    %1611 = vmatpush1.msra.mxu0 0.0
    %1612 = vmatprep.subr.mxu0 0.0
    %1613 = vmatpush1.msra.mxu0 0.0
    %1614 = vmatprep.subr.mxu0 0.0
    %1615 = vmatpush1.msra.mxu0 0.0
    %1616 = vmatprep.subr.mxu0 0.0
    %1617 = vmatpush1.msra.mxu0 0.0
    %1618 = vmatprep.subr.mxu0 0.0
    %1619 = vmatpush1.msra.mxu0 %v1585
    %1620 = vmatprep.subr.mxu0 0.0
    %1621 = vmatpush1.msra.mxu0 %v1584
    %1622 = vmatprep.subr.mxu0 0.0
    %1623 = vmatpush1.msra.mxu0 %v1583
    %1624 = vmatprep.subr.mxu0 0.0
    %1625 = vmatpush1.msra.mxu0 %v1582
    %1626 = vmatprep.subr.mxu0 0.0
    %1627 = vmatpush2.msra.mxu0 0.0
    %1628 = vmatprep.subr.mxu0 0.0
    %1629 = vmatpush2.msra.mxu0 0.0
    %1630 = vmatprep.subr.mxu0 0.0
    %1631 = vmatpush2.msra.mxu0 0.0
    %1632 = vmatprep.subr.mxu0 0.0
    %1633 = vmatpush2.msra.mxu0 0.0
    %1634 = vmatprep.subr.mxu0 0.0
    %1635 = vmatpush2.msra.mxu0 0.0
    %1636 = vmatprep.subr.mxu0 0.0
    %1637 = vmatpush2.msra.mxu0 0.0
    %1638 = vmatprep.subr.mxu0 0.0
    %1639 = vmatpush2.msra.mxu0 0.0
    %1640 = vmatprep.subr.mxu0 0.0
    %1641 = vmatpush2.msra.mxu0 0.0
    %1642 = vmatprep.subr.mxu0 0.0
    %1643 = vmatpush2.msra.mxu0 0.0
    %1644 = vmatprep.subr.mxu0 0.0
    %1645 = vmatpush2.msra.mxu0 0.0
    %1646 = vmatprep.subr.mxu0 0.0
    %1647 = vmatpush2.msra.mxu0 0.0
    %1648 = vmatprep.subr.mxu0 0.0
    %1649 = vmatpush2.msra.mxu0 0.0
    %1650 = vmatprep.subr.mxu0 0.0
    %1651 = vmatpush2.msra.mxu0 0.0
    %1652 = vmatprep.subr.mxu0 0.0
    %1653 = vmatpush2.msra.mxu0 0.0
    %1654 = vmatprep.subr.mxu0 0.0
    %1655 = vmatpush2.msra.mxu0 0.0
    %1656 = vmatprep.subr.mxu0 0.0
    %1657 = vmatpush2.msra.mxu0 0.0
    %1658 = vmatprep.mubr.f32.mxu0 0.0
    %1659 = vmatmul.mubr.f32.gmra.mxu0 %v1592
    %v1660 = vpop.f32.mrf.mxu0
    %v1661 = vadd.f32 %v1590, %v1660
    %v1662 = vpop.f32.mrf.mxu0
    %1663 = vdwg.mxu0
    %v1664 = vmul.f32 %v1661, 0.5
    %v1665 = vmul.f32 %v1661, 0.044715
    %v1666 = vmul.f32 %v1665, %v1661
    %v1667 = vmul.f32 %v1666, %v1661
    %v1668 = vadd.f32 %v1661, %v1667
    %v1669 = vmul.f32 %v1668, 0.7978846
    %v1670 = vtanh.pop %v1669
    %v1671 = vadd.f32 %v1670, 1.0
    %v1672 = vmul.f32 %v1664, %v1671
    %v1673 = vld [vmem:[#allocation2 + $0xf0] sm:$0xff]
    %v1674 = vld [vmem:[#allocation2 + $0xf8] sm:$0xff]
    %v1675 = vld [vmem:[#allocation2 + $0x100] sm:$0xff]
    %v1676 = vld [vmem:[#allocation2 + $0x108] sm:$0xff]
    %v1677 = vld [vmem:[%s3 + $0x14] sm:$0x1]
    %v1678 = vlaneseq
    %v1679 = vshrl.u32 %v1678, 7
    %v1680 = vsub.s32 0, %v1679
    %v1681 = vrot.slane %v1677, %v1680
    %v1683 = vsel %vm186, %v1672, 0
    %1685 = vmatprep.subr.mxu0 0.0
    %1686 = vmatpush1.msra.mxu0 0.0
    %1687 = vmatprep.subr.mxu0 0.0
    %1688 = vmatpush1.msra.mxu0 0.0
    %1689 = vmatprep.subr.mxu0 0.0
    %1690 = vmatpush1.msra.mxu0 0.0
    %1691 = vmatprep.subr.mxu0 0.0
    %1692 = vmatpush1.msra.mxu0 0.0
    %1693 = vmatprep.subr.mxu0 0.0
    %1694 = vmatpush1.msra.mxu0 0.0
    %1695 = vmatprep.subr.mxu0 0.0
    %1696 = vmatpush1.msra.mxu0 0.0
    %1697 = vmatprep.subr.mxu0 0.0
    %1698 = vmatpush1.msra.mxu0 0.0
    %1699 = vmatprep.subr.mxu0 0.0
    %1700 = vmatpush1.msra.mxu0 0.0
    %1701 = vmatprep.subr.mxu0 0.0
    %1702 = vmatpush1.msra.mxu0 0.0
    %1703 = vmatprep.subr.mxu0 0.0
    %1704 = vmatpush1.msra.mxu0 0.0
    %1705 = vmatprep.subr.mxu0 0.0
    %1706 = vmatpush1.msra.mxu0 0.0
    %1707 = vmatprep.subr.mxu0 0.0
    %1708 = vmatpush1.msra.mxu0 0.0
    %1709 = vmatprep.subr.mxu0 0.0
    %1710 = vmatpush1.msra.mxu0 %v1676
    %1711 = vmatprep.subr.mxu0 0.0
    %1712 = vmatpush1.msra.mxu0 %v1675
    %1713 = vmatprep.subr.mxu0 0.0
    %1714 = vmatpush1.msra.mxu0 %v1674
    %1715 = vmatprep.subr.mxu0 0.0
    %1716 = vmatpush1.msra.mxu0 %v1673
    %1717 = vmatprep.subr.mxu0 0.0
    %1718 = vmatpush2.msra.mxu0 0.0
    %1719 = vmatprep.subr.mxu0 0.0
    %1720 = vmatpush2.msra.mxu0 0.0
    %1721 = vmatprep.subr.mxu0 0.0
    %1722 = vmatpush2.msra.mxu0 0.0
    %1723 = vmatprep.subr.mxu0 0.0
    %1724 = vmatpush2.msra.mxu0 0.0
    %1725 = vmatprep.subr.mxu0 0.0
    %1726 = vmatpush2.msra.mxu0 0.0
    %1727 = vmatprep.subr.mxu0 0.0
    %1728 = vmatpush2.msra.mxu0 0.0
    %1729 = vmatprep.subr.mxu0 0.0
    %1730 = vmatpush2.msra.mxu0 0.0
    %1731 = vmatprep.subr.mxu0 0.0
    %1732 = vmatpush2.msra.mxu0 0.0
    %1733 = vmatprep.subr.mxu0 0.0
    %1734 = vmatpush2.msra.mxu0 0.0
    %1735 = vmatprep.subr.mxu0 0.0
    %1736 = vmatpush2.msra.mxu0 0.0
    %1737 = vmatprep.subr.mxu0 0.0
    %1738 = vmatpush2.msra.mxu0 0.0
    %1739 = vmatprep.subr.mxu0 0.0
    %1740 = vmatpush2.msra.mxu0 0.0
    %1741 = vmatprep.subr.mxu0 0.0
    %1742 = vmatpush2.msra.mxu0 0.0
    %1743 = vmatprep.subr.mxu0 0.0
    %1744 = vmatpush2.msra.mxu0 0.0
    %1745 = vmatprep.subr.mxu0 0.0
    %1746 = vmatpush2.msra.mxu0 0.0
    %1747 = vmatprep.subr.mxu0 0.0
    %1748 = vmatpush2.msra.mxu0 0.0
    %1749 = vmatprep.mubr.f32.mxu0 0.0
    %1750 = vmatmul.mubr.f32.gmra.mxu0 %v1683
    %v1751 = vpop.f32.mrf.mxu0
    %v1752 = vadd.f32 %v1681, %v1751
    %v1753 = vpop.f32.mrf.mxu0
    %1754 = vdwg.mxu0
    %v1755 = vadd.f32 %v1581, %v1752
    %v1756 = vld [vmem:[%s3 + $0xf] sm:$0x1]
    %v1757 = vld [vmem:[%s3 + $0x10] sm:$0x1]
    %v1758 = vsel %vm152, %v1755, 0.0
    %1759 = vadd.xlane.f32.xlu0 %v1758
    %v1760 = vpop.xlane.xlu0 %1759
    %v1761 = vmul.f32 %v1760, %v156
    %v1762 = vsub.f32 %v1755, %v1761
    %v1763 = vmul.f32 %v1762, %v1762
    %v1764 = vsel %vm152, %v1763, 0.0
    %1765 = vadd.xlane.f32.xlu0 %v1764
    %v1766 = vpop.xlane.xlu0 %1765
    %v1767 = vmul.f32 %v1766, %v156
    %v1768 = vadd.f32 %v1767, 1e-05
    %v1769 = vrsqrt.pop %v1768
    %v1770 = vmul.f32 %v1762, %v1769
    %v1771 = vlaneseq
    %v1772 = vshrl.u32 %v1771, 7
    %v1773 = vsub.s32 0, %v1772
    %v1774 = vrot.slane %v1756, %v1773
    %v1775 = vmul.f32 %v1770, %v1774
    %v1776 = vlaneseq
    %v1777 = vshrl.u32 %v1776, 7
    %v1778 = vsub.s32 0, %v1777
    %v1779 = vrot.slane %v1757, %v1778
    %v1780 = vadd.f32 %v1775, %v1779
    %v1781 = vld [vmem:[#allocation2 + $0x110] sm:$0xff]
    %v1782 = vld [vmem:[#allocation2 + $0x118] sm:$0xff]
    %v1783 = vld [vmem:[#allocation2 + $0x120] sm:$0xff]
    %v1784 = vld [vmem:[#allocation2 + $0x128] sm:$0xff]
    %v1785 = vld [vmem:[%s3 + $0x15] sm:$0x1]
    %v1786 = vlaneseq
    %v1787 = vshrl.u32 %v1786, 7
    %v1788 = vsub.s32 0, %v1787
    %v1789 = vrot.slane %v1785, %v1788
    %v1791 = vsel %vm186, %v1780, 0
    %1793 = vmatprep.subr.mxu0 0.0
    %1794 = vmatpush1.msra.mxu0 0.0
    %1795 = vmatprep.subr.mxu0 0.0
    %1796 = vmatpush1.msra.mxu0 0.0
    %1797 = vmatprep.subr.mxu0 0.0
    %1798 = vmatpush1.msra.mxu0 0.0
    %1799 = vmatprep.subr.mxu0 0.0
    %1800 = vmatpush1.msra.mxu0 0.0
    %1801 = vmatprep.subr.mxu0 0.0
    %1802 = vmatpush1.msra.mxu0 0.0
    %1803 = vmatprep.subr.mxu0 0.0
    %1804 = vmatpush1.msra.mxu0 0.0
    %1805 = vmatprep.subr.mxu0 0.0
    %1806 = vmatpush1.msra.mxu0 0.0
    %1807 = vmatprep.subr.mxu0 0.0
    %1808 = vmatpush1.msra.mxu0 0.0
    %1809 = vmatprep.subr.mxu0 0.0
    %1810 = vmatpush1.msra.mxu0 0.0
    %1811 = vmatprep.subr.mxu0 0.0
    %1812 = vmatpush1.msra.mxu0 0.0
    %1813 = vmatprep.subr.mxu0 0.0
    %1814 = vmatpush1.msra.mxu0 0.0
    %1815 = vmatprep.subr.mxu0 0.0
    %1816 = vmatpush1.msra.mxu0 0.0
    %1817 = vmatprep.subr.mxu0 0.0
    %1818 = vmatpush1.msra.mxu0 %v1784
    %1819 = vmatprep.subr.mxu0 0.0
    %1820 = vmatpush1.msra.mxu0 %v1783
    %1821 = vmatprep.subr.mxu0 0.0
    %1822 = vmatpush1.msra.mxu0 %v1782
    %1823 = vmatprep.subr.mxu0 0.0
    %1824 = vmatpush1.msra.mxu0 %v1781
    %1825 = vmatprep.subr.mxu0 0.0
    %1826 = vmatpush2.msra.mxu0 0.0
    %1827 = vmatprep.subr.mxu0 0.0
    %1828 = vmatpush2.msra.mxu0 0.0
    %1829 = vmatprep.subr.mxu0 0.0
    %1830 = vmatpush2.msra.mxu0 0.0
    %1831 = vmatprep.subr.mxu0 0.0
    %1832 = vmatpush2.msra.mxu0 0.0
    %1833 = vmatprep.subr.mxu0 0.0
    %1834 = vmatpush2.msra.mxu0 0.0
    %1835 = vmatprep.subr.mxu0 0.0
    %1836 = vmatpush2.msra.mxu0 0.0
    %1837 = vmatprep.subr.mxu0 0.0
    %1838 = vmatpush2.msra.mxu0 0.0
    %1839 = vmatprep.subr.mxu0 0.0
    %1840 = vmatpush2.msra.mxu0 0.0
    %1841 = vmatprep.subr.mxu0 0.0
    %1842 = vmatpush2.msra.mxu0 0.0
    %1843 = vmatprep.subr.mxu0 0.0
    %1844 = vmatpush2.msra.mxu0 0.0
    %1845 = vmatprep.subr.mxu0 0.0
    %1846 = vmatpush2.msra.mxu0 0.0
    %1847 = vmatprep.subr.mxu0 0.0
    %1848 = vmatpush2.msra.mxu0 0.0
    %1849 = vmatprep.subr.mxu0 0.0
    %1850 = vmatpush2.msra.mxu0 0.0
    %1851 = vmatprep.subr.mxu0 0.0
    %1852 = vmatpush2.msra.mxu0 0.0
    %1853 = vmatprep.subr.mxu0 0.0
    %1854 = vmatpush2.msra.mxu0 0.0
    %1855 = vmatprep.subr.mxu0 0.0
    %1856 = vmatpush2.msra.mxu0 0.0
    %1857 = vmatprep.mubr.f32.mxu0 0.0
    %1858 = vmatmul.mubr.f32.gmra.mxu0 %v1791
    %v1859 = vpop.f32.mrf.mxu0
    %v1860 = vadd.f32 %v1789, %v1859
    %v1861 = vpop.f32.mrf.mxu0
    %1862 = vdwg.mxu0
    %v1863 = vmul.f32 %v1860, 0.5
    %v1864 = vmul.f32 %v1860, 0.044715
    %v1865 = vmul.f32 %v1864, %v1860
    %v1866 = vmul.f32 %v1865, %v1860
    %v1867 = vadd.f32 %v1860, %v1866
    %v1868 = vmul.f32 %v1867, 0.7978846
    %v1869 = vtanh.pop %v1868
    %v1870 = vadd.f32 %v1869, 1.0
    %v1871 = vmul.f32 %v1863, %v1870
    %v1872 = vld [vmem:[%s3 + $0x16] sm:$0x1]
    %v1873 = vld [vmem:[%s3 + $0x17] sm:$0x1]
    %v1874 = vsel %vm152, %v1871, 0.0
    %1875 = vadd.xlane.f32.xlu0 %v1874
    %v1876 = vpop.xlane.xlu0 %1875
    %v1877 = vmul.f32 %v1876, %v156
    %v1878 = vsub.f32 %v1871, %v1877
    %v1879 = vmul.f32 %v1878, %v1878
    %v1880 = vsel %vm152, %v1879, 0.0
    %1881 = vadd.xlane.f32.xlu0 %v1880
    %v1882 = vpop.xlane.xlu0 %1881
    %v1883 = vmul.f32 %v1882, %v156
    %v1884 = vadd.f32 %v1883, 1e-05
    %v1885 = vrsqrt.pop %v1884
    %v1886 = vmul.f32 %v1878, %v1885
    %v1887 = vlaneseq
    %v1888 = vshrl.u32 %v1887, 7
    %v1889 = vsub.s32 0, %v1888
    %v1890 = vrot.slane %v1872, %v1889
    %v1891 = vmul.f32 %v1886, %v1890
    %v1892 = vlaneseq
    %v1893 = vshrl.u32 %v1892, 7
    %v1894 = vsub.s32 0, %v1893
    %v1895 = vrot.slane %v1873, %v1894
    %v1896 = vadd.f32 %v1891, %v1895
    %v1897 = vld [vmem:[#allocation2 + $0x130] sm:$0xff]
    %v1898 = vld [vmem:[#allocation2 + $0x138] sm:$0xff]
    %v1899 = vld [vmem:[#allocation2 + $0x140] sm:$0xff]
    %v1900 = vld [vmem:[#allocation2 + $0x148] sm:$0xff]
    %v1901 = vld [vmem:[%s3 + $0x18] sm:$0x1]
    %v1902 = vlaneseq
    %v1903 = vshrl.u32 %v1902, 7
    %v1904 = vsub.s32 0, %v1903
    %v1905 = vrot.slane %v1901, %v1904
    %v1907 = vsel %vm186, %v1896, 0
    %1909 = vmatprep.subr.mxu0 0.0
    %1910 = vmatpush1.msra.mxu0 0.0
    %1911 = vmatprep.subr.mxu0 0.0
    %1912 = vmatpush1.msra.mxu0 0.0
    %1913 = vmatprep.subr.mxu0 0.0
    %1914 = vmatpush1.msra.mxu0 0.0
    %1915 = vmatprep.subr.mxu0 0.0
    %1916 = vmatpush1.msra.mxu0 0.0
    %1917 = vmatprep.subr.mxu0 0.0
    %1918 = vmatpush1.msra.mxu0 0.0
    %1919 = vmatprep.subr.mxu0 0.0
    %1920 = vmatpush1.msra.mxu0 0.0
    %1921 = vmatprep.subr.mxu0 0.0
    %1922 = vmatpush1.msra.mxu0 0.0
    %1923 = vmatprep.subr.mxu0 0.0
    %1924 = vmatpush1.msra.mxu0 0.0
    %1925 = vmatprep.subr.mxu0 0.0
    %1926 = vmatpush1.msra.mxu0 0.0
    %1927 = vmatprep.subr.mxu0 0.0
    %1928 = vmatpush1.msra.mxu0 0.0
    %1929 = vmatprep.subr.mxu0 0.0
    %1930 = vmatpush1.msra.mxu0 0.0
    %1931 = vmatprep.subr.mxu0 0.0
    %1932 = vmatpush1.msra.mxu0 0.0
    %1933 = vmatprep.subr.mxu0 0.0
    %1934 = vmatpush1.msra.mxu0 %v1900
    %1935 = vmatprep.subr.mxu0 0.0
    %1936 = vmatpush1.msra.mxu0 %v1899
    %1937 = vmatprep.subr.mxu0 0.0
    %1938 = vmatpush1.msra.mxu0 %v1898
    %1939 = vmatprep.subr.mxu0 0.0
    %1940 = vmatpush1.msra.mxu0 %v1897
    %1941 = vmatprep.subr.mxu0 0.0
    %1942 = vmatpush2.msra.mxu0 0.0
    %1943 = vmatprep.subr.mxu0 0.0
    %1944 = vmatpush2.msra.mxu0 0.0
    %1945 = vmatprep.subr.mxu0 0.0
    %1946 = vmatpush2.msra.mxu0 0.0
    %1947 = vmatprep.subr.mxu0 0.0
    %1948 = vmatpush2.msra.mxu0 0.0
    %1949 = vmatprep.subr.mxu0 0.0
    %1950 = vmatpush2.msra.mxu0 0.0
    %1951 = vmatprep.subr.mxu0 0.0
    %1952 = vmatpush2.msra.mxu0 0.0
    %1953 = vmatprep.subr.mxu0 0.0
    %1954 = vmatpush2.msra.mxu0 0.0
    %1955 = vmatprep.subr.mxu0 0.0
    %1956 = vmatpush2.msra.mxu0 0.0
    %1957 = vmatprep.subr.mxu0 0.0
    %1958 = vmatpush2.msra.mxu0 0.0
    %1959 = vmatprep.subr.mxu0 0.0
    %1960 = vmatpush2.msra.mxu0 0.0
    %1961 = vmatprep.subr.mxu0 0.0
    %1962 = vmatpush2.msra.mxu0 0.0
    %1963 = vmatprep.subr.mxu0 0.0
    %1964 = vmatpush2.msra.mxu0 0.0
    %1965 = vmatprep.subr.mxu0 0.0
    %1966 = vmatpush2.msra.mxu0 0.0
    %1967 = vmatprep.subr.mxu0 0.0
    %1968 = vmatpush2.msra.mxu0 0.0
    %1969 = vmatprep.subr.mxu0 0.0
    %1970 = vmatpush2.msra.mxu0 0.0
    %1971 = vmatprep.subr.mxu0 0.0
    %1972 = vmatpush2.msra.mxu0 0.0
    %1973 = vmatprep.mubr.f32.mxu0 0.0
    %1974 = vmatmul.mubr.f32.gmra.mxu0 %v1907
    %v1975 = vpop.f32.mrf.mxu0
    %v1976 = vadd.f32 %v1905, %v1975
    %v1977 = vpop.f32.mrf.mxu0
    %1978 = vdwg.mxu0
    %v1979 = vld [vmem:[%s3 + $0x19] sm:$0x1]
    %v1980 = vld [vmem:[%s3 + $0x1a] sm:$0x1]
    %v1981 = vsel %vm152, %v1780, 0.0
    %1982 = vadd.xlane.f32.xlu0 %v1981
    %v1983 = vpop.xlane.xlu0 %1982
    %v1984 = vmul.f32 %v1983, %v156
    %v1985 = vsub.f32 %v1780, %v1984
    %v1986 = vmul.f32 %v1985, %v1985
    %v1987 = vsel %vm152, %v1986, 0.0
    %1988 = vadd.xlane.f32.xlu0 %v1987
    %v1989 = vpop.xlane.xlu0 %1988
    %v1990 = vmul.f32 %v1989, %v156
    %v1991 = vadd.f32 %v1990, 1e-05
    %v1992 = vrsqrt.pop %v1991
    %v1993 = vmul.f32 %v1985, %v1992
    %v1994 = vlaneseq
    %v1995 = vshrl.u32 %v1994, 7
    %v1996 = vsub.s32 0, %v1995
    %v1997 = vrot.slane %v1979, %v1996
    %v1998 = vmul.f32 %v1993, %v1997
    %v1999 = vlaneseq
    %v2000 = vshrl.u32 %v1999, 7
    %v2001 = vsub.s32 0, %v2000
    %v2002 = vrot.slane %v1980, %v2001
    %v2003 = vadd.f32 %v1998, %v2002
    %v2004 = vld [vmem:[#allocation2 + $0x150] sm:$0xff]
    %v2005 = vld [vmem:[#allocation2 + $0x158] sm:$0xff]
    %v2006 = vld [vmem:[#allocation2 + $0x160] sm:$0xff]
    %v2007 = vld [vmem:[#allocation2 + $0x168] sm:$0xff]
    %v2008 = vld [vmem:[%s3 + $0x1b] sm:$0x1]
    %v2009 = vlaneseq
    %v2010 = vshrl.u32 %v2009, 7
    %v2011 = vsub.s32 0, %v2010
    %v2012 = vrot.slane %v2008, %v2011
    %v2014 = vsel %vm186, %v2003, 0
    %2016 = vmatprep.subr.mxu0 0.0
    %2017 = vmatpush1.msra.mxu0 0.0
    %2018 = vmatprep.subr.mxu0 0.0
    %2019 = vmatpush1.msra.mxu0 0.0
    %2020 = vmatprep.subr.mxu0 0.0
    %2021 = vmatpush1.msra.mxu0 0.0
    %2022 = vmatprep.subr.mxu0 0.0
    %2023 = vmatpush1.msra.mxu0 0.0
    %2024 = vmatprep.subr.mxu0 0.0
    %2025 = vmatpush1.msra.mxu0 0.0
    %2026 = vmatprep.subr.mxu0 0.0
    %2027 = vmatpush1.msra.mxu0 0.0
    %2028 = vmatprep.subr.mxu0 0.0
    %2029 = vmatpush1.msra.mxu0 0.0
    %2030 = vmatprep.subr.mxu0 0.0
    %2031 = vmatpush1.msra.mxu0 0.0
    %2032 = vmatprep.subr.mxu0 0.0
    %2033 = vmatpush1.msra.mxu0 0.0
    %2034 = vmatprep.subr.mxu0 0.0
    %2035 = vmatpush1.msra.mxu0 0.0
    %2036 = vmatprep.subr.mxu0 0.0
    %2037 = vmatpush1.msra.mxu0 0.0
    %2038 = vmatprep.subr.mxu0 0.0
    %2039 = vmatpush1.msra.mxu0 0.0
    %2040 = vmatprep.subr.mxu0 0.0
    %2041 = vmatpush1.msra.mxu0 %v2007
    %2042 = vmatprep.subr.mxu0 0.0
    %2043 = vmatpush1.msra.mxu0 %v2006
    %2044 = vmatprep.subr.mxu0 0.0
    %2045 = vmatpush1.msra.mxu0 %v2005
    %2046 = vmatprep.subr.mxu0 0.0
    %2047 = vmatpush1.msra.mxu0 %v2004
    %2048 = vmatprep.subr.mxu0 0.0
    %2049 = vmatpush2.msra.mxu0 0.0
    %2050 = vmatprep.subr.mxu0 0.0
    %2051 = vmatpush2.msra.mxu0 0.0
    %2052 = vmatprep.subr.mxu0 0.0
    %2053 = vmatpush2.msra.mxu0 0.0
    %2054 = vmatprep.subr.mxu0 0.0
    %2055 = vmatpush2.msra.mxu0 0.0
    %2056 = vmatprep.subr.mxu0 0.0
    %2057 = vmatpush2.msra.mxu0 0.0
    %2058 = vmatprep.subr.mxu0 0.0
    %2059 = vmatpush2.msra.mxu0 0.0
    %2060 = vmatprep.subr.mxu0 0.0
    %2061 = vmatpush2.msra.mxu0 0.0
    %2062 = vmatprep.subr.mxu0 0.0
    %2063 = vmatpush2.msra.mxu0 0.0
    %2064 = vmatprep.subr.mxu0 0.0
    %2065 = vmatpush2.msra.mxu0 0.0
    %2066 = vmatprep.subr.mxu0 0.0
    %2067 = vmatpush2.msra.mxu0 0.0
    %2068 = vmatprep.subr.mxu0 0.0
    %2069 = vmatpush2.msra.mxu0 0.0
    %2070 = vmatprep.subr.mxu0 0.0
    %2071 = vmatpush2.msra.mxu0 0.0
    %2072 = vmatprep.subr.mxu0 0.0
    %2073 = vmatpush2.msra.mxu0 0.0
    %2074 = vmatprep.subr.mxu0 0.0
    %2075 = vmatpush2.msra.mxu0 0.0
    %2076 = vmatprep.subr.mxu0 0.0
    %2077 = vmatpush2.msra.mxu0 0.0
    %2078 = vmatprep.subr.mxu0 0.0
    %2079 = vmatpush2.msra.mxu0 0.0
    %2080 = vmatprep.mubr.f32.mxu0 0.0
    %2081 = vmatmul.mubr.f32.gmra.mxu0 %v2014
    %v2082 = vpop.f32.mrf.mxu0
    %v2083 = vadd.f32 %v2012, %v2082
    %v2084 = vpop.f32.mrf.mxu0
    %2085 = vdwg.mxu0
    %v2086 = vmul.f32 %v2083, 0.5
    %v2087 = vmul.f32 %v2083, 0.044715
    %v2088 = vmul.f32 %v2087, %v2083
    %v2089 = vmul.f32 %v2088, %v2083
    %v2090 = vadd.f32 %v2083, %v2089
    %v2091 = vmul.f32 %v2090, 0.7978846
    %v2092 = vtanh.pop %v2091
    %v2093 = vadd.f32 %v2092, 1.0
    %v2094 = vmul.f32 %v2086, %v2093
    %v2095 = vld [vmem:[%s3 + $0x1c] sm:$0x1]
    %v2096 = vld [vmem:[%s3 + $0x1d] sm:$0x1]
    %vm2097 = vcmask 521216
    %v2098 = vsel %vm2097, %v2094, 0.0
    %2099 = vadd.xlane.f32.xlu0 %v2098
    %v2100 = vpop.xlane.xlu0 %2099
    %v2101 = vrcp.pop 64.0
    %v2102 = vmul.f32 %v2100, %v2101
    %v2103 = vsub.f32 %v2094, %v2102
    %v2104 = vmul.f32 %v2103, %v2103
    %v2105 = vsel %vm2097, %v2104, 0.0
    %2106 = vadd.xlane.f32.xlu0 %v2105
    %v2107 = vpop.xlane.xlu0 %2106
    %v2108 = vmul.f32 %v2107, %v2101
    %v2109 = vadd.f32 %v2108, 1e-05
    %v2110 = vrsqrt.pop %v2109
    %v2111 = vmul.f32 %v2103, %v2110
    %v2112 = vlaneseq
    %v2113 = vshrl.u32 %v2112, 7
    %v2114 = vsub.s32 0, %v2113
    %v2115 = vrot.slane %v2095, %v2114
    %v2116 = vmul.f32 %v2111, %v2115
    %v2117 = vlaneseq
    %v2118 = vshrl.u32 %v2117, 7
    %v2119 = vsub.s32 0, %v2118
    %v2120 = vrot.slane %v2096, %v2119
    %v2121 = vadd.f32 %v2116, %v2120
    %v2122 = vld [vmem:[#allocation2 + $0x170] sm:$0xff]
    %v2123 = vld [vmem:[#allocation2 + $0x178] sm:$0xff]
    %v2124 = vld [vmem:[#allocation2 + $0x180] sm:$0xff]
    %v2125 = vld [vmem:[#allocation2 + $0x188] sm:$0xff]
    %v2126 = vld [vmem:[#allocation2 + $0x190] sm:$0xff]
    %v2127 = vld [vmem:[#allocation2 + $0x198] sm:$0xff]
    %v2128 = vld [vmem:[#allocation2 + $0x1a0] sm:$0xff]
    %v2129 = vld [vmem:[#allocation2 + $0x1a8] sm:$0xff]
    %v2130 = vld [vmem:[%s3 + $0x1e] sm:$0x1]
    %v2131 = vlaneseq
    %v2132 = vshrl.u32 %v2131, 7
    %v2133 = vsub.s32 0, %v2132
    %v2134 = vrot.slane %v2130, %v2133
    %vm2135 = vcmask 523264
    %v2137 = vsel %vm2135, %v2121, 0
    %2139 = vmatprep.subr.mxu0 0.0
    %2140 = vmatpush1.msra.mxu0 0.0
    %2141 = vmatprep.subr.mxu0 0.0
    %2142 = vmatpush1.msra.mxu0 0.0
    %2143 = vmatprep.subr.mxu0 0.0
    %2144 = vmatpush1.msra.mxu0 0.0
    %2145 = vmatprep.subr.mxu0 0.0
    %2146 = vmatpush1.msra.mxu0 0.0
    %2147 = vmatprep.subr.mxu0 0.0
    %2148 = vmatpush1.msra.mxu0 0.0
    %2149 = vmatprep.subr.mxu0 0.0
    %2150 = vmatpush1.msra.mxu0 0.0
    %2151 = vmatprep.subr.mxu0 0.0
    %2152 = vmatpush1.msra.mxu0 0.0
    %2153 = vmatprep.subr.mxu0 0.0
    %2154 = vmatpush1.msra.mxu0 0.0
    %2155 = vmatprep.subr.mxu0 0.0
    %2156 = vmatpush1.msra.mxu0 %v2129
    %2157 = vmatprep.subr.mxu0 0.0
    %2158 = vmatpush1.msra.mxu0 %v2128
    %2159 = vmatprep.subr.mxu0 0.0
    %2160 = vmatpush1.msra.mxu0 %v2127
    %2161 = vmatprep.subr.mxu0 0.0
    %2162 = vmatpush1.msra.mxu0 %v2126
    %2163 = vmatprep.subr.mxu0 0.0
    %2164 = vmatpush1.msra.mxu0 %v2125
    %2165 = vmatprep.subr.mxu0 0.0
    %2166 = vmatpush1.msra.mxu0 %v2124
    %2167 = vmatprep.subr.mxu0 0.0
    %2168 = vmatpush1.msra.mxu0 %v2123
    %2169 = vmatprep.subr.mxu0 0.0
    %2170 = vmatpush1.msra.mxu0 %v2122
    %2171 = vmatprep.subr.mxu0 0.0
    %2172 = vmatpush2.msra.mxu0 0.0
    %2173 = vmatprep.subr.mxu0 0.0
    %2174 = vmatpush2.msra.mxu0 0.0
    %2175 = vmatprep.subr.mxu0 0.0
    %2176 = vmatpush2.msra.mxu0 0.0
    %2177 = vmatprep.subr.mxu0 0.0
    %2178 = vmatpush2.msra.mxu0 0.0
    %2179 = vmatprep.subr.mxu0 0.0
    %2180 = vmatpush2.msra.mxu0 0.0
    %2181 = vmatprep.subr.mxu0 0.0
    %2182 = vmatpush2.msra.mxu0 0.0
    %2183 = vmatprep.subr.mxu0 0.0
    %2184 = vmatpush2.msra.mxu0 0.0
    %2185 = vmatprep.subr.mxu0 0.0
    %2186 = vmatpush2.msra.mxu0 0.0
    %2187 = vmatprep.subr.mxu0 0.0
    %2188 = vmatpush2.msra.mxu0 0.0
    %2189 = vmatprep.subr.mxu0 0.0
    %2190 = vmatpush2.msra.mxu0 0.0
    %2191 = vmatprep.subr.mxu0 0.0
    %2192 = vmatpush2.msra.mxu0 0.0
    %2193 = vmatprep.subr.mxu0 0.0
    %2194 = vmatpush2.msra.mxu0 0.0
    %2195 = vmatprep.subr.mxu0 0.0
    %2196 = vmatpush2.msra.mxu0 0.0
    %2197 = vmatprep.subr.mxu0 0.0
    %2198 = vmatpush2.msra.mxu0 0.0
    %2199 = vmatprep.subr.mxu0 0.0
    %2200 = vmatpush2.msra.mxu0 0.0
    %2201 = vmatprep.subr.mxu0 0.0
    %2202 = vmatpush2.msra.mxu0 0.0
    %2203 = vmatprep.mubr.f32.mxu0 0.0
    %2204 = vmatmul.mubr.f32.gmra.mxu0 %v2137
    %v2205 = vpop.f32.mrf.mxu0
    %v2206 = vadd.f32 %v2134, %v2205
    %v2207 = vpop.f32.mrf.mxu0
    %2208 = vdwg.mxu0
    %v2209 = vmul.f32 %v2206, 0.5
    %v2210 = vmul.f32 %v2206, 0.044715
    %v2211 = vmul.f32 %v2210, %v2206
    %v2212 = vmul.f32 %v2211, %v2206
    %v2213 = vadd.f32 %v2206, %v2212
    %v2214 = vmul.f32 %v2213, 0.7978846
    %v2215 = vtanh.pop %v2214
    %v2216 = vadd.f32 %v2215, 1.0
    %v2217 = vmul.f32 %v2209, %v2216
    %v2218 = vld [vmem:[%s3 + $0x1f] sm:$0x1]
    %v2219 = vld [vmem:[%s3 + $0x20] sm:$0x1]
    %v2220 = vsel %vm2097, %v2217, 0.0
    %2221 = vadd.xlane.f32.xlu0 %v2220
    %v2222 = vpop.xlane.xlu0 %2221
    %v2223 = vmul.f32 %v2222, %v2101
    %v2224 = vsub.f32 %v2217, %v2223
    %v2225 = vmul.f32 %v2224, %v2224
    %v2226 = vsel %vm2097, %v2225, 0.0
    %2227 = vadd.xlane.f32.xlu0 %v2226
    %v2228 = vpop.xlane.xlu0 %2227
    %v2229 = vmul.f32 %v2228, %v2101
    %v2230 = vadd.f32 %v2229, 1e-05
    %v2231 = vrsqrt.pop %v2230
    %v2232 = vmul.f32 %v2224, %v2231
    %v2233 = vlaneseq
    %v2234 = vshrl.u32 %v2233, 7
    %v2235 = vsub.s32 0, %v2234
    %v2236 = vrot.slane %v2218, %v2235
    %v2237 = vmul.f32 %v2232, %v2236
    %v2238 = vlaneseq
    %v2239 = vshrl.u32 %v2238, 7
    %v2240 = vsub.s32 0, %v2239
    %v2241 = vrot.slane %v2219, %v2240
    %v2242 = vadd.f32 %v2237, %v2241
    %v2243 = vld [vmem:[#allocation2 + $0x1b0] sm:$0xff]
    %v2244 = vld [vmem:[#allocation2 + $0x1b8] sm:$0xff]
    %v2245 = vld [vmem:[#allocation2 + $0x1c0] sm:$0xff]
    %v2246 = vld [vmem:[#allocation2 + $0x1c8] sm:$0xff]
    %v2247 = vld [vmem:[#allocation2 + $0x1d0] sm:$0xff]
    %v2248 = vld [vmem:[#allocation2 + $0x1d8] sm:$0xff]
    %v2249 = vld [vmem:[#allocation2 + $0x1e0] sm:$0xff]
    %v2250 = vld [vmem:[#allocation2 + $0x1e8] sm:$0xff]
    %v2251 = vld [vmem:[%s3 + $0x21] sm:$0x1]
    %v2252 = vlaneseq
    %v2253 = vshrl.u32 %v2252, 7
    %v2254 = vsub.s32 0, %v2253
    %v2255 = vrot.slane %v2251, %v2254
    %v2257 = vsel %vm2135, %v2242, 0
    %2259 = vmatprep.subr.mxu0 0.0
    %2260 = vmatpush1.msra.mxu0 0.0
    %2261 = vmatprep.subr.mxu0 0.0
    %2262 = vmatpush1.msra.mxu0 0.0
    %2263 = vmatprep.subr.mxu0 0.0
    %2264 = vmatpush1.msra.mxu0 0.0
    %2265 = vmatprep.subr.mxu0 0.0
    %2266 = vmatpush1.msra.mxu0 0.0
    %2267 = vmatprep.subr.mxu0 0.0
    %2268 = vmatpush1.msra.mxu0 0.0
    %2269 = vmatprep.subr.mxu0 0.0
    %2270 = vmatpush1.msra.mxu0 0.0
    %2271 = vmatprep.subr.mxu0 0.0
    %2272 = vmatpush1.msra.mxu0 0.0
    %2273 = vmatprep.subr.mxu0 0.0
    %2274 = vmatpush1.msra.mxu0 0.0
    %2275 = vmatprep.subr.mxu0 0.0
    %2276 = vmatpush1.msra.mxu0 %v2250
    %2277 = vmatprep.subr.mxu0 0.0
    %2278 = vmatpush1.msra.mxu0 %v2249
    %2279 = vmatprep.subr.mxu0 0.0
    %2280 = vmatpush1.msra.mxu0 %v2248
    %2281 = vmatprep.subr.mxu0 0.0
    %2282 = vmatpush1.msra.mxu0 %v2247
    %2283 = vmatprep.subr.mxu0 0.0
    %2284 = vmatpush1.msra.mxu0 %v2246
    %2285 = vmatprep.subr.mxu0 0.0
    %2286 = vmatpush1.msra.mxu0 %v2245
    %2287 = vmatprep.subr.mxu0 0.0
    %2288 = vmatpush1.msra.mxu0 %v2244
    %2289 = vmatprep.subr.mxu0 0.0
    %2290 = vmatpush1.msra.mxu0 %v2243
    %2291 = vmatprep.subr.mxu0 0.0
    %2292 = vmatpush2.msra.mxu0 0.0
    %2293 = vmatprep.subr.mxu0 0.0
    %2294 = vmatpush2.msra.mxu0 0.0
    %2295 = vmatprep.subr.mxu0 0.0
    %2296 = vmatpush2.msra.mxu0 0.0
    %2297 = vmatprep.subr.mxu0 0.0
    %2298 = vmatpush2.msra.mxu0 0.0
    %2299 = vmatprep.subr.mxu0 0.0
    %2300 = vmatpush2.msra.mxu0 0.0
    %2301 = vmatprep.subr.mxu0 0.0
    %2302 = vmatpush2.msra.mxu0 0.0
    %2303 = vmatprep.subr.mxu0 0.0
    %2304 = vmatpush2.msra.mxu0 0.0
    %2305 = vmatprep.subr.mxu0 0.0
    %2306 = vmatpush2.msra.mxu0 0.0
    %2307 = vmatprep.subr.mxu0 0.0
    %2308 = vmatpush2.msra.mxu0 0.0
    %2309 = vmatprep.subr.mxu0 0.0
    %2310 = vmatpush2.msra.mxu0 0.0
    %2311 = vmatprep.subr.mxu0 0.0
    %2312 = vmatpush2.msra.mxu0 0.0
    %2313 = vmatprep.subr.mxu0 0.0
    %2314 = vmatpush2.msra.mxu0 0.0
    %2315 = vmatprep.subr.mxu0 0.0
    %2316 = vmatpush2.msra.mxu0 0.0
    %2317 = vmatprep.subr.mxu0 0.0
    %2318 = vmatpush2.msra.mxu0 0.0
    %2319 = vmatprep.subr.mxu0 0.0
    %2320 = vmatpush2.msra.mxu0 0.0
    %2321 = vmatprep.subr.mxu0 0.0
    %2322 = vmatpush2.msra.mxu0 0.0
    %2323 = vmatprep.mubr.f32.mxu0 0.0
    %2324 = vmatmul.mubr.f32.gmra.mxu0 %v2257
    %v2325 = vpop.f32.mrf.mxu0
    %v2326 = vadd.f32 %v2255, %v2325
    %v2327 = vpop.f32.mrf.mxu0
    %2328 = vdwg.mxu0
    %v2329 = vsub.f32 0.0, %v2326
    %v2330 = vmul.f32 %v2329, 1.442695
    %v2331 = vpow.pop %v2330
    %v2332 = vadd.f32 %v2331, 1.0
    %v2333 = vrcp.pop %v2332
    %v2334 = vmul.f32 9.0, %v2333
    %v2335 = vadd.f32 %v2334, 1.0
    %2336 = vrot.lane.b32.xlu0 %v31, 104
    %v2337 = vpop.permute.xlu0 %2336
    %v2338 = vsel %vm362, %v2337, 0
    %v2341 = vsel %vm366, %v2335, 0
    %2343 = vmatprep.subr.mxu0 0.0
    %2344 = vmatpush1.msra.mxu0 0.0
    %2345 = vmatprep.subr.mxu0 0.0
    %2346 = vmatpush1.msra.mxu0 0.0
    %2347 = vmatprep.subr.mxu0 0.0
    %2348 = vmatpush1.msra.mxu0 0.0
    %2349 = vmatprep.subr.mxu0 0.0
    %2350 = vmatpush1.msra.mxu0 0.0
    %2351 = vmatprep.subr.mxu0 0.0
    %2352 = vmatpush1.msra.mxu0 0.0
    %2353 = vmatprep.subr.mxu0 0.0
    %2354 = vmatpush1.msra.mxu0 0.0
    %2355 = vmatprep.subr.mxu0 0.0
    %2356 = vmatpush1.msra.mxu0 0.0
    %2357 = vmatprep.subr.mxu0 0.0
    %2358 = vmatpush1.msra.mxu0 0.0
    %2359 = vmatprep.subr.mxu0 0.0
    %2360 = vmatpush1.msra.mxu0 0.0
    %2361 = vmatprep.subr.mxu0 0.0
    %2362 = vmatpush1.msra.mxu0 0.0
    %2363 = vmatprep.subr.mxu0 0.0
    %2364 = vmatpush1.msra.mxu0 0.0
    %2365 = vmatprep.subr.mxu0 0.0
    %2366 = vmatpush1.msra.mxu0 0.0
    %2367 = vmatprep.subr.mxu0 0.0
    %2368 = vmatpush1.msra.mxu0 0.0
    %2369 = vmatprep.subr.mxu0 0.0
    %2370 = vmatpush1.msra.mxu0 0.0
    %2371 = vmatprep.subr.mxu0 0.0
    %2372 = vmatpush1.msra.mxu0 0.0
    %2373 = vmatprep.subr.mxu0 0.0
    %2374 = vmatpush1.msra.mxu0 %v2341
    %2375 = vmatprep.subr.mxu0 0.0
    %2376 = vmatpush2.msra.mxu0 0.0
    %2377 = vmatprep.subr.mxu0 0.0
    %2378 = vmatpush2.msra.mxu0 0.0
    %2379 = vmatprep.subr.mxu0 0.0
    %2380 = vmatpush2.msra.mxu0 0.0
    %2381 = vmatprep.subr.mxu0 0.0
    %2382 = vmatpush2.msra.mxu0 0.0
    %2383 = vmatprep.subr.mxu0 0.0
    %2384 = vmatpush2.msra.mxu0 0.0
    %2385 = vmatprep.subr.mxu0 0.0
    %2386 = vmatpush2.msra.mxu0 0.0
    %2387 = vmatprep.subr.mxu0 0.0
    %2388 = vmatpush2.msra.mxu0 0.0
    %2389 = vmatprep.subr.mxu0 0.0
    %2390 = vmatpush2.msra.mxu0 0.0
    %2391 = vmatprep.subr.mxu0 0.0
    %2392 = vmatpush2.msra.mxu0 0.0
    %2393 = vmatprep.subr.mxu0 0.0
    %2394 = vmatpush2.msra.mxu0 0.0
    %2395 = vmatprep.subr.mxu0 0.0
    %2396 = vmatpush2.msra.mxu0 0.0
    %2397 = vmatprep.subr.mxu0 0.0
    %2398 = vmatpush2.msra.mxu0 0.0
    %2399 = vmatprep.subr.mxu0 0.0
    %2400 = vmatpush2.msra.mxu0 0.0
    %2401 = vmatprep.subr.mxu0 0.0
    %2402 = vmatpush2.msra.mxu0 0.0
    %2403 = vmatprep.subr.mxu0 0.0
    %2404 = vmatpush2.msra.mxu0 0.0
    %2405 = vmatprep.subr.mxu0 0.0
    %2406 = vmatpush2.msra.mxu0 0.0
    %2407 = vmatprep.mubr.f32.mxu0 0.0
    %2408 = vmatmul.mubr.f32.gmra.mxu0 %v2338
    %v2409 = vpop.f32.mrf.mxu0
    %v2410 = vadd.f32 0.0, %v2409
    %v2411 = vpop.f32.mrf.mxu0
    %2412 = vdwg.mxu0
    %v2413 = vmul.f32 %v2335, %v31
    %v2415 = vsel %vm366, %v2413, 0
    %2417 = vmatprep.subr.mxu0 0.0
    %2418 = vmatpush1.msra.mxu0 0.0
    %2419 = vmatprep.subr.mxu0 0.0
    %2420 = vmatpush1.msra.mxu0 0.0
    %2421 = vmatprep.subr.mxu0 0.0
    %2422 = vmatpush1.msra.mxu0 0.0
    %2423 = vmatprep.subr.mxu0 0.0
    %2424 = vmatpush1.msra.mxu0 0.0
    %2425 = vmatprep.subr.mxu0 0.0
    %2426 = vmatpush1.msra.mxu0 0.0
    %2427 = vmatprep.subr.mxu0 0.0
    %2428 = vmatpush1.msra.mxu0 0.0
    %2429 = vmatprep.subr.mxu0 0.0
    %2430 = vmatpush1.msra.mxu0 0.0
    %2431 = vmatprep.subr.mxu0 0.0
    %2432 = vmatpush1.msra.mxu0 0.0
    %2433 = vmatprep.subr.mxu0 0.0
    %2434 = vmatpush1.msra.mxu0 0.0
    %2435 = vmatprep.subr.mxu0 0.0
    %2436 = vmatpush1.msra.mxu0 0.0
    %2437 = vmatprep.subr.mxu0 0.0
    %2438 = vmatpush1.msra.mxu0 0.0
    %2439 = vmatprep.subr.mxu0 0.0
    %2440 = vmatpush1.msra.mxu0 0.0
    %2441 = vmatprep.subr.mxu0 0.0
    %2442 = vmatpush1.msra.mxu0 0.0
    %2443 = vmatprep.subr.mxu0 0.0
    %2444 = vmatpush1.msra.mxu0 0.0
    %2445 = vmatprep.subr.mxu0 0.0
    %2446 = vmatpush1.msra.mxu0 0.0
    %2447 = vmatprep.subr.mxu0 0.0
    %2448 = vmatpush1.msra.mxu0 %v2415
    %2449 = vmatprep.subr.mxu0 0.0
    %2450 = vmatpush2.msra.mxu0 0.0
    %2451 = vmatprep.subr.mxu0 0.0
    %2452 = vmatpush2.msra.mxu0 0.0
    %2453 = vmatprep.subr.mxu0 0.0
    %2454 = vmatpush2.msra.mxu0 0.0
    %2455 = vmatprep.subr.mxu0 0.0
    %2456 = vmatpush2.msra.mxu0 0.0
    %2457 = vmatprep.subr.mxu0 0.0
    %2458 = vmatpush2.msra.mxu0 0.0
    %2459 = vmatprep.subr.mxu0 0.0
    %2460 = vmatpush2.msra.mxu0 0.0
    %2461 = vmatprep.subr.mxu0 0.0
    %2462 = vmatpush2.msra.mxu0 0.0
    %2463 = vmatprep.subr.mxu0 0.0
    %2464 = vmatpush2.msra.mxu0 0.0
    %2465 = vmatprep.subr.mxu0 0.0
    %2466 = vmatpush2.msra.mxu0 0.0
    %2467 = vmatprep.subr.mxu0 0.0
    %2468 = vmatpush2.msra.mxu0 0.0
    %2469 = vmatprep.subr.mxu0 0.0
    %2470 = vmatpush2.msra.mxu0 0.0
    %2471 = vmatprep.subr.mxu0 0.0
    %2472 = vmatpush2.msra.mxu0 0.0
    %2473 = vmatprep.subr.mxu0 0.0
    %2474 = vmatpush2.msra.mxu0 0.0
    %2475 = vmatprep.subr.mxu0 0.0
    %2476 = vmatpush2.msra.mxu0 0.0
    %2477 = vmatprep.subr.mxu0 0.0
    %2478 = vmatpush2.msra.mxu0 0.0
    %2479 = vmatprep.subr.mxu0 0.0
    %2480 = vmatpush2.msra.mxu0 0.0
    %2481 = vmatprep.mubr.f32.mxu0 0.0
    %2482 = vmatmul.mubr.f32.gmra.mxu0 %v2338
    %v2483 = vpop.f32.mrf.mxu0
    %v2484 = vadd.f32 0.0, %v2483
    %v2485 = vpop.f32.mrf.mxu0
    %2486 = vdwg.mxu0
    %v2487 = vrcp.pop %v2410
    %v2488 = vmul.f32 %v2484, %v2487
    %v2489 = vlog2.pop %v2488
    %v2490 = vmul.f32 %v2489, 0.6931472
    %v2491 = vadd.f32 %v2490, 0.0
    %v2492 = vsub.f32 1.0, %v31
    %v2493 = vmul.f32 %v2335, %v2492
    %v2495 = vsel %vm366, %v2493, 0
    %2497 = vmatprep.subr.mxu0 0.0
    %2498 = vmatpush1.msra.mxu0 0.0
    %2499 = vmatprep.subr.mxu0 0.0
    %2500 = vmatpush1.msra.mxu0 0.0
    %2501 = vmatprep.subr.mxu0 0.0
    %2502 = vmatpush1.msra.mxu0 0.0
    %2503 = vmatprep.subr.mxu0 0.0
    %2504 = vmatpush1.msra.mxu0 0.0
    %2505 = vmatprep.subr.mxu0 0.0
    %2506 = vmatpush1.msra.mxu0 0.0
    %2507 = vmatprep.subr.mxu0 0.0
    %2508 = vmatpush1.msra.mxu0 0.0
    %2509 = vmatprep.subr.mxu0 0.0
    %2510 = vmatpush1.msra.mxu0 0.0
    %2511 = vmatprep.subr.mxu0 0.0
    %2512 = vmatpush1.msra.mxu0 0.0
    %2513 = vmatprep.subr.mxu0 0.0
    %2514 = vmatpush1.msra.mxu0 0.0
    %2515 = vmatprep.subr.mxu0 0.0
    %2516 = vmatpush1.msra.mxu0 0.0
    %2517 = vmatprep.subr.mxu0 0.0
    %2518 = vmatpush1.msra.mxu0 0.0
    %2519 = vmatprep.subr.mxu0 0.0
    %2520 = vmatpush1.msra.mxu0 0.0
    %2521 = vmatprep.subr.mxu0 0.0
    %2522 = vmatpush1.msra.mxu0 0.0
    %2523 = vmatprep.subr.mxu0 0.0
    %2524 = vmatpush1.msra.mxu0 0.0
    %2525 = vmatprep.subr.mxu0 0.0
    %2526 = vmatpush1.msra.mxu0 0.0
    %2527 = vmatprep.subr.mxu0 0.0
    %2528 = vmatpush1.msra.mxu0 %v2495
    %2529 = vmatprep.subr.mxu0 0.0
    %2530 = vmatpush2.msra.mxu0 0.0
    %2531 = vmatprep.subr.mxu0 0.0
    %2532 = vmatpush2.msra.mxu0 0.0
    %2533 = vmatprep.subr.mxu0 0.0
    %2534 = vmatpush2.msra.mxu0 0.0
    %2535 = vmatprep.subr.mxu0 0.0
    %2536 = vmatpush2.msra.mxu0 0.0
    %2537 = vmatprep.subr.mxu0 0.0
    %2538 = vmatpush2.msra.mxu0 0.0
    %2539 = vmatprep.subr.mxu0 0.0
    %2540 = vmatpush2.msra.mxu0 0.0
    %2541 = vmatprep.subr.mxu0 0.0
    %2542 = vmatpush2.msra.mxu0 0.0
    %2543 = vmatprep.subr.mxu0 0.0
    %2544 = vmatpush2.msra.mxu0 0.0
    %2545 = vmatprep.subr.mxu0 0.0
    %2546 = vmatpush2.msra.mxu0 0.0
    %2547 = vmatprep.subr.mxu0 0.0
    %2548 = vmatpush2.msra.mxu0 0.0
    %2549 = vmatprep.subr.mxu0 0.0
    %2550 = vmatpush2.msra.mxu0 0.0
    %2551 = vmatprep.subr.mxu0 0.0
    %2552 = vmatpush2.msra.mxu0 0.0
    %2553 = vmatprep.subr.mxu0 0.0
    %2554 = vmatpush2.msra.mxu0 0.0
    %2555 = vmatprep.subr.mxu0 0.0
    %2556 = vmatpush2.msra.mxu0 0.0
    %2557 = vmatprep.subr.mxu0 0.0
    %2558 = vmatpush2.msra.mxu0 0.0
    %2559 = vmatprep.subr.mxu0 0.0
    %2560 = vmatpush2.msra.mxu0 0.0
    %2561 = vmatprep.mubr.f32.mxu0 0.0
    %2562 = vmatmul.mubr.f32.gmra.mxu0 %v2338
    %v2563 = vpop.f32.mrf.mxu0
    %v2564 = vadd.f32 0.0, %v2563
    %v2565 = vpop.f32.mrf.mxu0
    %2566 = vdwg.mxu0
    %2567 = vrot.lane.b32.xlu0 %v31, 127
    %v2568 = vpop.permute.xlu0 %2567
    %v2570 = vmul.f32 %v2493, %v2568
    %v2572 = vsel %vm366, %v2570, 0
    %2574 = vmatprep.subr.mxu0 0.0
    %2575 = vmatpush1.msra.mxu0 0.0
    %2576 = vmatprep.subr.mxu0 0.0
    %2577 = vmatpush1.msra.mxu0 0.0
    %2578 = vmatprep.subr.mxu0 0.0
    %2579 = vmatpush1.msra.mxu0 0.0
    %2580 = vmatprep.subr.mxu0 0.0
    %2581 = vmatpush1.msra.mxu0 0.0
    %2582 = vmatprep.subr.mxu0 0.0
    %2583 = vmatpush1.msra.mxu0 0.0
    %2584 = vmatprep.subr.mxu0 0.0
    %2585 = vmatpush1.msra.mxu0 0.0
    %2586 = vmatprep.subr.mxu0 0.0
    %2587 = vmatpush1.msra.mxu0 0.0
    %2588 = vmatprep.subr.mxu0 0.0
    %2589 = vmatpush1.msra.mxu0 0.0
    %2590 = vmatprep.subr.mxu0 0.0
    %2591 = vmatpush1.msra.mxu0 0.0
    %2592 = vmatprep.subr.mxu0 0.0
    %2593 = vmatpush1.msra.mxu0 0.0
    %2594 = vmatprep.subr.mxu0 0.0
    %2595 = vmatpush1.msra.mxu0 0.0
    %2596 = vmatprep.subr.mxu0 0.0
    %2597 = vmatpush1.msra.mxu0 0.0
    %2598 = vmatprep.subr.mxu0 0.0
    %2599 = vmatpush1.msra.mxu0 0.0
    %2600 = vmatprep.subr.mxu0 0.0
    %2601 = vmatpush1.msra.mxu0 0.0
    %2602 = vmatprep.subr.mxu0 0.0
    %2603 = vmatpush1.msra.mxu0 0.0
    %2604 = vmatprep.subr.mxu0 0.0
    %2605 = vmatpush1.msra.mxu0 %v2572
    %2606 = vmatprep.subr.mxu0 0.0
    %2607 = vmatpush2.msra.mxu0 0.0
    %2608 = vmatprep.subr.mxu0 0.0
    %2609 = vmatpush2.msra.mxu0 0.0
    %2610 = vmatprep.subr.mxu0 0.0
    %2611 = vmatpush2.msra.mxu0 0.0
    %2612 = vmatprep.subr.mxu0 0.0
    %2613 = vmatpush2.msra.mxu0 0.0
    %2614 = vmatprep.subr.mxu0 0.0
    %2615 = vmatpush2.msra.mxu0 0.0
    %2616 = vmatprep.subr.mxu0 0.0
    %2617 = vmatpush2.msra.mxu0 0.0
    %2618 = vmatprep.subr.mxu0 0.0
    %2619 = vmatpush2.msra.mxu0 0.0
    %2620 = vmatprep.subr.mxu0 0.0
    %2621 = vmatpush2.msra.mxu0 0.0
    %2622 = vmatprep.subr.mxu0 0.0
    %2623 = vmatpush2.msra.mxu0 0.0
    %2624 = vmatprep.subr.mxu0 0.0
    %2625 = vmatpush2.msra.mxu0 0.0
    %2626 = vmatprep.subr.mxu0 0.0
    %2627 = vmatpush2.msra.mxu0 0.0
    %2628 = vmatprep.subr.mxu0 0.0
    %2629 = vmatpush2.msra.mxu0 0.0
    %2630 = vmatprep.subr.mxu0 0.0
    %2631 = vmatpush2.msra.mxu0 0.0
    %2632 = vmatprep.subr.mxu0 0.0
    %2633 = vmatpush2.msra.mxu0 0.0
    %2634 = vmatprep.subr.mxu0 0.0
    %2635 = vmatpush2.msra.mxu0 0.0
    %2636 = vmatprep.subr.mxu0 0.0
    %2637 = vmatpush2.msra.mxu0 0.0
    %2638 = vmatprep.mubr.f32.mxu0 0.0
    %2639 = vmatmul.mubr.f32.gmra.mxu0 %v2338
    %v2640 = vpop.f32.mrf.mxu0
    %v2641 = vadd.f32 0.0, %v2640
    %v2642 = vpop.f32.mrf.mxu0
    %2643 = vdwg.mxu0
    %v2644 = vrcp.pop %v2564
    %v2645 = vmul.f32 %v2641, %v2644
    %v2646 = vlog2.pop %v2645
    %v2647 = vmul.f32 %v2646, 0.6931472
    %v2648 = vadd.f32 %v2491, %v2647
    %2650 = vrot.lane.b32.xlu0 %v2492, 127
    %v2651 = vpop.permute.xlu0 %2650
    %v2653 = vmul.f32 %v2492, %v2651
    %v2654 = vmul.f32 %v2335, %v2653
    %v2656 = vsel %vm366, %v2654, 0
    %2658 = vmatprep.subr.mxu0 0.0
    %2659 = vmatpush1.msra.mxu0 0.0
    %2660 = vmatprep.subr.mxu0 0.0
    %2661 = vmatpush1.msra.mxu0 0.0
    %2662 = vmatprep.subr.mxu0 0.0
    %2663 = vmatpush1.msra.mxu0 0.0
    %2664 = vmatprep.subr.mxu0 0.0
    %2665 = vmatpush1.msra.mxu0 0.0
    %2666 = vmatprep.subr.mxu0 0.0
    %2667 = vmatpush1.msra.mxu0 0.0
    %2668 = vmatprep.subr.mxu0 0.0
    %2669 = vmatpush1.msra.mxu0 0.0
    %2670 = vmatprep.subr.mxu0 0.0
    %2671 = vmatpush1.msra.mxu0 0.0
    %2672 = vmatprep.subr.mxu0 0.0
    %2673 = vmatpush1.msra.mxu0 0.0
    %2674 = vmatprep.subr.mxu0 0.0
    %2675 = vmatpush1.msra.mxu0 0.0
    %2676 = vmatprep.subr.mxu0 0.0
    %2677 = vmatpush1.msra.mxu0 0.0
    %2678 = vmatprep.subr.mxu0 0.0
    %2679 = vmatpush1.msra.mxu0 0.0
    %2680 = vmatprep.subr.mxu0 0.0
    %2681 = vmatpush1.msra.mxu0 0.0
    %2682 = vmatprep.subr.mxu0 0.0
    %2683 = vmatpush1.msra.mxu0 0.0
    %2684 = vmatprep.subr.mxu0 0.0
    %2685 = vmatpush1.msra.mxu0 0.0
    %2686 = vmatprep.subr.mxu0 0.0
    %2687 = vmatpush1.msra.mxu0 0.0
    %2688 = vmatprep.subr.mxu0 0.0
    %2689 = vmatpush1.msra.mxu0 %v2656
    %2690 = vmatprep.subr.mxu0 0.0
    %2691 = vmatpush2.msra.mxu0 0.0
    %2692 = vmatprep.subr.mxu0 0.0
    %2693 = vmatpush2.msra.mxu0 0.0
    %2694 = vmatprep.subr.mxu0 0.0
    %2695 = vmatpush2.msra.mxu0 0.0
    %2696 = vmatprep.subr.mxu0 0.0
    %2697 = vmatpush2.msra.mxu0 0.0
    %2698 = vmatprep.subr.mxu0 0.0
    %2699 = vmatpush2.msra.mxu0 0.0
    %2700 = vmatprep.subr.mxu0 0.0
    %2701 = vmatpush2.msra.mxu0 0.0
    %2702 = vmatprep.subr.mxu0 0.0
    %2703 = vmatpush2.msra.mxu0 0.0
    %2704 = vmatprep.subr.mxu0 0.0
    %2705 = vmatpush2.msra.mxu0 0.0
    %2706 = vmatprep.subr.mxu0 0.0
    %2707 = vmatpush2.msra.mxu0 0.0
    %2708 = vmatprep.subr.mxu0 0.0
    %2709 = vmatpush2.msra.mxu0 0.0
    %2710 = vmatprep.subr.mxu0 0.0
    %2711 = vmatpush2.msra.mxu0 0.0
    %2712 = vmatprep.subr.mxu0 0.0
    %2713 = vmatpush2.msra.mxu0 0.0
    %2714 = vmatprep.subr.mxu0 0.0
    %2715 = vmatpush2.msra.mxu0 0.0
    %2716 = vmatprep.subr.mxu0 0.0
    %2717 = vmatpush2.msra.mxu0 0.0
    %2718 = vmatprep.subr.mxu0 0.0
    %2719 = vmatpush2.msra.mxu0 0.0
    %2720 = vmatprep.subr.mxu0 0.0
    %2721 = vmatpush2.msra.mxu0 0.0
    %2722 = vmatprep.mubr.f32.mxu0 0.0
    %2723 = vmatmul.mubr.f32.gmra.mxu0 %v2338
    %v2724 = vpop.f32.mrf.mxu0
    %v2725 = vadd.f32 0.0, %v2724
    %v2726 = vpop.f32.mrf.mxu0
    %2727 = vdwg.mxu0
    %2728 = vrot.lane.b32.xlu0 %v31, 126
    %v2729 = vpop.permute.xlu0 %2728
    %v2731 = vmul.f32 %v2654, %v2729
    %v2733 = vsel %vm366, %v2731, 0
    %2735 = vmatprep.subr.mxu0 0.0
    %2736 = vmatpush1.msra.mxu0 0.0
    %2737 = vmatprep.subr.mxu0 0.0
    %2738 = vmatpush1.msra.mxu0 0.0
    %2739 = vmatprep.subr.mxu0 0.0
    %2740 = vmatpush1.msra.mxu0 0.0
    %2741 = vmatprep.subr.mxu0 0.0
    %2742 = vmatpush1.msra.mxu0 0.0
    %2743 = vmatprep.subr.mxu0 0.0
    %2744 = vmatpush1.msra.mxu0 0.0
    %2745 = vmatprep.subr.mxu0 0.0
    %2746 = vmatpush1.msra.mxu0 0.0
    %2747 = vmatprep.subr.mxu0 0.0
    %2748 = vmatpush1.msra.mxu0 0.0
    %2749 = vmatprep.subr.mxu0 0.0
    %2750 = vmatpush1.msra.mxu0 0.0
    %2751 = vmatprep.subr.mxu0 0.0
    %2752 = vmatpush1.msra.mxu0 0.0
    %2753 = vmatprep.subr.mxu0 0.0
    %2754 = vmatpush1.msra.mxu0 0.0
    %2755 = vmatprep.subr.mxu0 0.0
    %2756 = vmatpush1.msra.mxu0 0.0
    %2757 = vmatprep.subr.mxu0 0.0
    %2758 = vmatpush1.msra.mxu0 0.0
    %2759 = vmatprep.subr.mxu0 0.0
    %2760 = vmatpush1.msra.mxu0 0.0
    %2761 = vmatprep.subr.mxu0 0.0
    %2762 = vmatpush1.msra.mxu0 0.0
    %2763 = vmatprep.subr.mxu0 0.0
    %2764 = vmatpush1.msra.mxu0 0.0
    %2765 = vmatprep.subr.mxu0 0.0
    %2766 = vmatpush1.msra.mxu0 %v2733
    %2767 = vmatprep.subr.mxu0 0.0
    %2768 = vmatpush2.msra.mxu0 0.0
    %2769 = vmatprep.subr.mxu0 0.0
    %2770 = vmatpush2.msra.mxu0 0.0
    %2771 = vmatprep.subr.mxu0 0.0
    %2772 = vmatpush2.msra.mxu0 0.0
    %2773 = vmatprep.subr.mxu0 0.0
    %2774 = vmatpush2.msra.mxu0 0.0
    %2775 = vmatprep.subr.mxu0 0.0
    %2776 = vmatpush2.msra.mxu0 0.0
    %2777 = vmatprep.subr.mxu0 0.0
    %2778 = vmatpush2.msra.mxu0 0.0
    %2779 = vmatprep.subr.mxu0 0.0
    %2780 = vmatpush2.msra.mxu0 0.0
    %2781 = vmatprep.subr.mxu0 0.0
    %2782 = vmatpush2.msra.mxu0 0.0
    %2783 = vmatprep.subr.mxu0 0.0
    %2784 = vmatpush2.msra.mxu0 0.0
    %2785 = vmatprep.subr.mxu0 0.0
    %2786 = vmatpush2.msra.mxu0 0.0
    %2787 = vmatprep.subr.mxu0 0.0
    %2788 = vmatpush2.msra.mxu0 0.0
    %2789 = vmatprep.subr.mxu0 0.0
    %2790 = vmatpush2.msra.mxu0 0.0
    %2791 = vmatprep.subr.mxu0 0.0
    %2792 = vmatpush2.msra.mxu0 0.0
    %2793 = vmatprep.subr.mxu0 0.0
    %2794 = vmatpush2.msra.mxu0 0.0
    %2795 = vmatprep.subr.mxu0 0.0
    %2796 = vmatpush2.msra.mxu0 0.0
    %2797 = vmatprep.subr.mxu0 0.0
    %2798 = vmatpush2.msra.mxu0 0.0
    %2799 = vmatprep.mubr.f32.mxu0 0.0
    %2800 = vmatmul.mubr.f32.gmra.mxu0 %v2338
    %v2801 = vpop.f32.mrf.mxu0
    %v2802 = vadd.f32 0.0, %v2801
    %v2803 = vpop.f32.mrf.mxu0
    %2804 = vdwg.mxu0
    %v2805 = vrcp.pop %v2725
    %v2806 = vmul.f32 %v2802, %v2805
    %v2807 = vlog2.pop %v2806
    %v2808 = vmul.f32 %v2807, 0.6931472
    %v2809 = vadd.f32 %v2648, %v2808
    %v2810 = vld [vmem:[#allocation2 + $0x1f0] sm:$0x3f]
    %2811 = vrot.lane.b32.xlu0 %v31, 120
    %v2812 = vpop.permute.xlu0 %2811
    %v2813 = vsel %vm362, %v2812, 0
    %v2816 = vsel %vm366, %v2810, 0
    %2818 = vmatprep.subr.mxu0 0.0
    %2819 = vmatpush1.msra.mxu0 0.0
    %2820 = vmatprep.subr.mxu0 0.0
    %2821 = vmatpush1.msra.mxu0 0.0
    %2822 = vmatprep.subr.mxu0 0.0
    %2823 = vmatpush1.msra.mxu0 0.0
    %2824 = vmatprep.subr.mxu0 0.0
    %2825 = vmatpush1.msra.mxu0 0.0
    %2826 = vmatprep.subr.mxu0 0.0
    %2827 = vmatpush1.msra.mxu0 0.0
    %2828 = vmatprep.subr.mxu0 0.0
    %2829 = vmatpush1.msra.mxu0 0.0
    %2830 = vmatprep.subr.mxu0 0.0
    %2831 = vmatpush1.msra.mxu0 0.0
    %2832 = vmatprep.subr.mxu0 0.0
    %2833 = vmatpush1.msra.mxu0 0.0
    %2834 = vmatprep.subr.mxu0 0.0
    %2835 = vmatpush1.msra.mxu0 0.0
    %2836 = vmatprep.subr.mxu0 0.0
    %2837 = vmatpush1.msra.mxu0 0.0
    %2838 = vmatprep.subr.mxu0 0.0
    %2839 = vmatpush1.msra.mxu0 0.0
    %2840 = vmatprep.subr.mxu0 0.0
    %2841 = vmatpush1.msra.mxu0 0.0
    %2842 = vmatprep.subr.mxu0 0.0
    %2843 = vmatpush1.msra.mxu0 0.0
    %2844 = vmatprep.subr.mxu0 0.0
    %2845 = vmatpush1.msra.mxu0 0.0
    %2846 = vmatprep.subr.mxu0 0.0
    %2847 = vmatpush1.msra.mxu0 0.0
    %2848 = vmatprep.subr.mxu0 0.0
    %2849 = vmatpush1.msra.mxu0 %v2816
    %2850 = vmatprep.subr.mxu0 0.0
    %2851 = vmatpush2.msra.mxu0 0.0
    %2852 = vmatprep.subr.mxu0 0.0
    %2853 = vmatpush2.msra.mxu0 0.0
    %2854 = vmatprep.subr.mxu0 0.0
    %2855 = vmatpush2.msra.mxu0 0.0
    %2856 = vmatprep.subr.mxu0 0.0
    %2857 = vmatpush2.msra.mxu0 0.0
    %2858 = vmatprep.subr.mxu0 0.0
    %2859 = vmatpush2.msra.mxu0 0.0
    %2860 = vmatprep.subr.mxu0 0.0
    %2861 = vmatpush2.msra.mxu0 0.0
    %2862 = vmatprep.subr.mxu0 0.0
    %2863 = vmatpush2.msra.mxu0 0.0
    %2864 = vmatprep.subr.mxu0 0.0
    %2865 = vmatpush2.msra.mxu0 0.0
    %2866 = vmatprep.subr.mxu0 0.0
    %2867 = vmatpush2.msra.mxu0 0.0
    %2868 = vmatprep.subr.mxu0 0.0
    %2869 = vmatpush2.msra.mxu0 0.0
    %2870 = vmatprep.subr.mxu0 0.0
    %2871 = vmatpush2.msra.mxu0 0.0
    %2872 = vmatprep.subr.mxu0 0.0
    %2873 = vmatpush2.msra.mxu0 0.0
    %2874 = vmatprep.subr.mxu0 0.0
    %2875 = vmatpush2.msra.mxu0 0.0
    %2876 = vmatprep.subr.mxu0 0.0
    %2877 = vmatpush2.msra.mxu0 0.0
    %2878 = vmatprep.subr.mxu0 0.0
    %2879 = vmatpush2.msra.mxu0 0.0
    %2880 = vmatprep.subr.mxu0 0.0
    %2881 = vmatpush2.msra.mxu0 0.0
    %2882 = vmatprep.mubr.f32.mxu0 0.0
    %2883 = vmatmul.mubr.f32.gmra.mxu0 %v2813
    %v2884 = vpop.f32.mrf.mxu0
    %v2885 = vadd.f32 0.0, %v2884
    %v2886 = vpop.f32.mrf.mxu0
    %2887 = vdwg.mxu0
    %v2888 = vmul.f32 %v2885, 0.5
    %v2889 = vmul.f32 %v2885, 0.044715
    %v2890 = vmul.f32 %v2889, %v2885
    %v2891 = vmul.f32 %v2890, %v2885
    %v2892 = vadd.f32 %v2885, %v2891
    %v2893 = vmul.f32 %v2892, 0.7978846
    %v2894 = vtanh.pop %v2893
    %v2895 = vadd.f32 %v2894, 1.0
    %v2896 = vmul.f32 %v2888, %v2895
    %v2897 = vld [vmem:[%s3 + $0x22] sm:$0x1]
    %v2898 = vld [vmem:[%s3 + $0x23] sm:$0x1]
    %v2899 = vsel %vm152, %v2896, 0.0
    %2900 = vadd.xlane.f32.xlu0 %v2899
    %v2901 = vpop.xlane.xlu0 %2900
    %v2902 = vmul.f32 %v2901, %v156
    %v2903 = vsub.f32 %v2896, %v2902
    %v2904 = vmul.f32 %v2903, %v2903
    %v2905 = vsel %vm152, %v2904, 0.0
    %2906 = vadd.xlane.f32.xlu0 %v2905
    %v2907 = vpop.xlane.xlu0 %2906
    %v2908 = vmul.f32 %v2907, %v156
    %v2909 = vadd.f32 %v2908, 1e-05
    %v2910 = vrsqrt.pop %v2909
    %v2911 = vmul.f32 %v2903, %v2910
    %v2912 = vlaneseq
    %v2913 = vshrl.u32 %v2912, 7
    %v2914 = vsub.s32 0, %v2913
    %v2915 = vrot.slane %v2897, %v2914
    %v2916 = vmul.f32 %v2911, %v2915
    %v2917 = vlaneseq
    %v2918 = vshrl.u32 %v2917, 7
    %v2919 = vsub.s32 0, %v2918
    %v2920 = vrot.slane %v2898, %v2919
    %v2921 = vadd.f32 %v2916, %v2920
    %v2922 = vld [vmem:[#allocation2 + $0x1f8] sm:$0xff]
    %v2923 = vld [vmem:[#allocation2 + $0x200] sm:$0xff]
    %v2924 = vld [vmem:[#allocation2 + $0x208] sm:$0xff]
    %v2925 = vld [vmem:[#allocation2 + $0x210] sm:$0xff]
    %v2926 = vld [vmem:[%s3 + $0x2a] sm:$0x1]
    %v2927 = vlaneseq
    %v2928 = vshrl.u32 %v2927, 7
    %v2929 = vsub.s32 0, %v2928
    %v2930 = vrot.slane %v2926, %v2929
    %v2932 = vsel %vm186, %v2921, 0
    %2934 = vmatprep.subr.mxu0 0.0
    %2935 = vmatpush1.msra.mxu0 0.0
    %2936 = vmatprep.subr.mxu0 0.0
    %2937 = vmatpush1.msra.mxu0 0.0
    %2938 = vmatprep.subr.mxu0 0.0
    %2939 = vmatpush1.msra.mxu0 0.0
    %2940 = vmatprep.subr.mxu0 0.0
    %2941 = vmatpush1.msra.mxu0 0.0
    %2942 = vmatprep.subr.mxu0 0.0
    %2943 = vmatpush1.msra.mxu0 0.0
    %2944 = vmatprep.subr.mxu0 0.0
    %2945 = vmatpush1.msra.mxu0 0.0
    %2946 = vmatprep.subr.mxu0 0.0
    %2947 = vmatpush1.msra.mxu0 0.0
    %2948 = vmatprep.subr.mxu0 0.0
    %2949 = vmatpush1.msra.mxu0 0.0
    %2950 = vmatprep.subr.mxu0 0.0
    %2951 = vmatpush1.msra.mxu0 0.0
    %2952 = vmatprep.subr.mxu0 0.0
    %2953 = vmatpush1.msra.mxu0 0.0
    %2954 = vmatprep.subr.mxu0 0.0
    %2955 = vmatpush1.msra.mxu0 0.0
    %2956 = vmatprep.subr.mxu0 0.0
    %2957 = vmatpush1.msra.mxu0 0.0
    %2958 = vmatprep.subr.mxu0 0.0
    %2959 = vmatpush1.msra.mxu0 %v2925
    %2960 = vmatprep.subr.mxu0 0.0
    %2961 = vmatpush1.msra.mxu0 %v2924
    %2962 = vmatprep.subr.mxu0 0.0
    %2963 = vmatpush1.msra.mxu0 %v2923
    %2964 = vmatprep.subr.mxu0 0.0
    %2965 = vmatpush1.msra.mxu0 %v2922
    %2966 = vmatprep.subr.mxu0 0.0
    %2967 = vmatpush2.msra.mxu0 0.0
    %2968 = vmatprep.subr.mxu0 0.0
    %2969 = vmatpush2.msra.mxu0 0.0
    %2970 = vmatprep.subr.mxu0 0.0
    %2971 = vmatpush2.msra.mxu0 0.0
    %2972 = vmatprep.subr.mxu0 0.0
    %2973 = vmatpush2.msra.mxu0 0.0
    %2974 = vmatprep.subr.mxu0 0.0
    %2975 = vmatpush2.msra.mxu0 0.0
    %2976 = vmatprep.subr.mxu0 0.0
    %2977 = vmatpush2.msra.mxu0 0.0
    %2978 = vmatprep.subr.mxu0 0.0
    %2979 = vmatpush2.msra.mxu0 0.0
    %2980 = vmatprep.subr.mxu0 0.0
    %2981 = vmatpush2.msra.mxu0 0.0
    %2982 = vmatprep.subr.mxu0 0.0
    %2983 = vmatpush2.msra.mxu0 0.0
    %2984 = vmatprep.subr.mxu0 0.0
    %2985 = vmatpush2.msra.mxu0 0.0
    %2986 = vmatprep.subr.mxu0 0.0
    %2987 = vmatpush2.msra.mxu0 0.0
    %2988 = vmatprep.subr.mxu0 0.0
    %2989 = vmatpush2.msra.mxu0 0.0
    %2990 = vmatprep.subr.mxu0 0.0
    %2991 = vmatpush2.msra.mxu0 0.0
    %2992 = vmatprep.subr.mxu0 0.0
    %2993 = vmatpush2.msra.mxu0 0.0
    %2994 = vmatprep.subr.mxu0 0.0
    %2995 = vmatpush2.msra.mxu0 0.0
    %2996 = vmatprep.subr.mxu0 0.0
    %2997 = vmatpush2.msra.mxu0 0.0
    %2998 = vmatprep.mubr.f32.mxu0 0.0
    %2999 = vmatmul.mubr.f32.gmra.mxu0 %v2932
    %v3000 = vpop.f32.mrf.mxu0
    %v3001 = vadd.f32 %v2930, %v3000
    %v3002 = vpop.f32.mrf.mxu0
    %3003 = vdwg.mxu0
    %v3004 = vld [vmem:[#allocation2 + $0x218] sm:$0xff]
    %v3005 = vld [vmem:[#allocation2 + $0x220] sm:$0xff]
    %v3006 = vld [vmem:[#allocation2 + $0x228] sm:$0xff]
    %v3007 = vld [vmem:[#allocation2 + $0x230] sm:$0xff]
    %v3008 = vld [vmem:[%s3 + $0x2b] sm:$0x1]
    %3010 = vrot.lane.b32.xlu0 %v3001, 96
    %v3011 = vpop.permute.xlu0 %3010
    %v3012 = vsel %vm67, %v3001, 0
    %v3014 = vsel %vm67, %v3011, 0
    %3016 = vmatprep.subr.mxu0 0.0
    %3017 = vmatpush1.xpose.msra.mxu0 0.0
    %3018 = vmatprep.subr.mxu0 0.0
    %3019 = vmatpush1.xpose.msra.mxu0 0.0
    %3020 = vmatprep.subr.mxu0 0.0
    %3021 = vmatpush1.xpose.msra.mxu0 0.0
    %3022 = vmatprep.subr.mxu0 0.0
    %3023 = vmatpush1.xpose.msra.mxu0 0.0
    %3024 = vmatprep.subr.mxu0 0.0
    %3025 = vmatpush1.xpose.msra.mxu0 0.0
    %3026 = vmatprep.subr.mxu0 0.0
    %3027 = vmatpush1.xpose.msra.mxu0 0.0
    %3028 = vmatprep.subr.mxu0 0.0
    %3029 = vmatpush1.xpose.msra.mxu0 0.0
    %3030 = vmatprep.subr.mxu0 0.0
    %3031 = vmatpush1.xpose.msra.mxu0 0.0
    %3032 = vmatprep.subr.mxu0 0.0
    %3033 = vmatpush1.xpose.msra.mxu0 0.0
    %3034 = vmatprep.subr.mxu0 0.0
    %3035 = vmatpush1.xpose.msra.mxu0 0.0
    %3036 = vmatprep.subr.mxu0 0.0
    %3037 = vmatpush1.xpose.msra.mxu0 0.0
    %3038 = vmatprep.subr.mxu0 0.0
    %3039 = vmatpush1.xpose.msra.mxu0 0.0
    %3040 = vmatprep.subr.mxu0 0.0
    %3041 = vmatpush1.xpose.msra.mxu0 0.0
    %3042 = vmatprep.subr.mxu0 0.0
    %3043 = vmatpush1.xpose.msra.mxu0 0.0
    %3044 = vmatprep.subr.mxu0 0.0
    %3045 = vmatpush1.xpose.msra.mxu0 0.0
    %3046 = vmatprep.subr.mxu0 0.0
    %3047 = vmatpush1.xpose.msra.mxu0 %v3014
    %3048 = vmatprep.subr.mxu0 0.0
    %3049 = vmatpush2.xpose.msra.mxu0 0.0
    %3050 = vmatprep.subr.mxu0 0.0
    %3051 = vmatpush2.xpose.msra.mxu0 0.0
    %3052 = vmatprep.subr.mxu0 0.0
    %3053 = vmatpush2.xpose.msra.mxu0 0.0
    %3054 = vmatprep.subr.mxu0 0.0
    %3055 = vmatpush2.xpose.msra.mxu0 0.0
    %3056 = vmatprep.subr.mxu0 0.0
    %3057 = vmatpush2.xpose.msra.mxu0 0.0
    %3058 = vmatprep.subr.mxu0 0.0
    %3059 = vmatpush2.xpose.msra.mxu0 0.0
    %3060 = vmatprep.subr.mxu0 0.0
    %3061 = vmatpush2.xpose.msra.mxu0 0.0
    %3062 = vmatprep.subr.mxu0 0.0
    %3063 = vmatpush2.xpose.msra.mxu0 0.0
    %3064 = vmatprep.subr.mxu0 0.0
    %3065 = vmatpush2.xpose.msra.mxu0 0.0
    %3066 = vmatprep.subr.mxu0 0.0
    %3067 = vmatpush2.xpose.msra.mxu0 0.0
    %3068 = vmatprep.subr.mxu0 0.0
    %3069 = vmatpush2.xpose.msra.mxu0 0.0
    %3070 = vmatprep.subr.mxu0 0.0
    %3071 = vmatpush2.xpose.msra.mxu0 0.0
    %3072 = vmatprep.subr.mxu0 0.0
    %3073 = vmatpush2.xpose.msra.mxu0 0.0
    %3074 = vmatprep.subr.mxu0 0.0
    %3075 = vmatpush2.xpose.msra.mxu0 0.0
    %3076 = vmatprep.subr.mxu0 0.0
    %3077 = vmatpush2.xpose.msra.mxu0 0.0
    %3078 = vmatprep.subr.mxu0 0.0
    %3079 = vmatpush2.xpose.msra.mxu0 0.0
    %3080 = vmatprep.mubr.f32.mxu0 0.0
    %3081 = vmatmul.mubr.f32.gmra.mxu0 %v3012
    %v3082 = vpop.f32.mrf.mxu0
    %v3083 = vadd.f32 0.0, %v3082
    %v3084 = vpop.f32.mrf.mxu0
    %3085 = vdwg.mxu0
    %v3086 = vmul.f32 %v3083, 0.25
    %3087 = vrot.lane.b32.xlu0 %v31, 88
    %v3088 = vpop.permute.xlu0 %3087
    %v3090 = vadd.f32 %v3086, %v3088
    %v3091 = vsel %vm348, %v3090, -inf
    %3092 = vmax.xlane.f32.xlu0 %v3091
    %v3093 = vpop.xlane.xlu0 %3092
    %v3094 = vsub.f32 %v3090, %v3093
    %v3095 = vmul.f32 %v3094, 1.442695
    %v3096 = vpow.pop %v3095
    %v3097 = vsel %vm348, %v3096, 0.0
    %3098 = vadd.xlane.f32.xlu0 %v3097
    %v3099 = vpop.xlane.xlu0 %3098
    %v3100 = vrcp.pop %v3099
    %v3101 = vmul.f32 %v3096, %v3100
    %3102 = vrot.lane.b32.xlu0 %v3001, 64
    %v3103 = vpop.permute.xlu0 %3102
    %v3105 = vsel %vm362, %v3101, 0
    %v3107 = vsel %vm366, %v3103, 0
    %3109 = vmatprep.subr.mxu0 0.0
    %3110 = vmatpush1.msra.mxu0 0.0
    %3111 = vmatprep.subr.mxu0 0.0
    %3112 = vmatpush1.msra.mxu0 0.0
    %3113 = vmatprep.subr.mxu0 0.0
    %3114 = vmatpush1.msra.mxu0 0.0
    %3115 = vmatprep.subr.mxu0 0.0
    %3116 = vmatpush1.msra.mxu0 0.0
    %3117 = vmatprep.subr.mxu0 0.0
    %3118 = vmatpush1.msra.mxu0 0.0
    %3119 = vmatprep.subr.mxu0 0.0
    %3120 = vmatpush1.msra.mxu0 0.0
    %3121 = vmatprep.subr.mxu0 0.0
    %3122 = vmatpush1.msra.mxu0 0.0
    %3123 = vmatprep.subr.mxu0 0.0
    %3124 = vmatpush1.msra.mxu0 0.0
    %3125 = vmatprep.subr.mxu0 0.0
    %3126 = vmatpush1.msra.mxu0 0.0
    %3127 = vmatprep.subr.mxu0 0.0
    %3128 = vmatpush1.msra.mxu0 0.0
    %3129 = vmatprep.subr.mxu0 0.0
    %3130 = vmatpush1.msra.mxu0 0.0
    %3131 = vmatprep.subr.mxu0 0.0
    %3132 = vmatpush1.msra.mxu0 0.0
    %3133 = vmatprep.subr.mxu0 0.0
    %3134 = vmatpush1.msra.mxu0 0.0
    %3135 = vmatprep.subr.mxu0 0.0
    %3136 = vmatpush1.msra.mxu0 0.0
    %3137 = vmatprep.subr.mxu0 0.0
    %3138 = vmatpush1.msra.mxu0 0.0
    %3139 = vmatprep.subr.mxu0 0.0
    %3140 = vmatpush1.msra.mxu0 %v3107
    %3141 = vmatprep.subr.mxu0 0.0
    %3142 = vmatpush2.msra.mxu0 0.0
    %3143 = vmatprep.subr.mxu0 0.0
    %3144 = vmatpush2.msra.mxu0 0.0
    %3145 = vmatprep.subr.mxu0 0.0
    %3146 = vmatpush2.msra.mxu0 0.0
    %3147 = vmatprep.subr.mxu0 0.0
    %3148 = vmatpush2.msra.mxu0 0.0
    %3149 = vmatprep.subr.mxu0 0.0
    %3150 = vmatpush2.msra.mxu0 0.0
    %3151 = vmatprep.subr.mxu0 0.0
    %3152 = vmatpush2.msra.mxu0 0.0
    %3153 = vmatprep.subr.mxu0 0.0
    %3154 = vmatpush2.msra.mxu0 0.0
    %3155 = vmatprep.subr.mxu0 0.0
    %3156 = vmatpush2.msra.mxu0 0.0
    %3157 = vmatprep.subr.mxu0 0.0
    %3158 = vmatpush2.msra.mxu0 0.0
    %3159 = vmatprep.subr.mxu0 0.0
    %3160 = vmatpush2.msra.mxu0 0.0
    %3161 = vmatprep.subr.mxu0 0.0
    %3162 = vmatpush2.msra.mxu0 0.0
    %3163 = vmatprep.subr.mxu0 0.0
    %3164 = vmatpush2.msra.mxu0 0.0
    %3165 = vmatprep.subr.mxu0 0.0
    %3166 = vmatpush2.msra.mxu0 0.0
    %3167 = vmatprep.subr.mxu0 0.0
    %3168 = vmatpush2.msra.mxu0 0.0
    %3169 = vmatprep.subr.mxu0 0.0
    %3170 = vmatpush2.msra.mxu0 0.0
    %3171 = vmatprep.subr.mxu0 0.0
    %3172 = vmatpush2.msra.mxu0 0.0
    %3173 = vmatprep.mubr.f32.mxu0 0.0
    %3174 = vmatmul.mubr.f32.gmra.mxu0 %v3105
    %v3175 = vpop.f32.mrf.mxu0
    %v3176 = vadd.f32 0.0, %v3175
    %v3177 = vpop.f32.mrf.mxu0
    %3178 = vdwg.mxu0
    %3179 = vrot.lane.b32.xlu0 %v3001, 112
    %v3180 = vpop.permute.xlu0 %3179
    %3181 = vrot.lane.b32.xlu0 %v3001, 80
    %v3182 = vpop.permute.xlu0 %3181
    %v3183 = vsel %vm67, %v3180, 0
    %v3185 = vsel %vm67, %v3182, 0
    %3187 = vmatprep.subr.mxu0 0.0
    %3188 = vmatpush1.xpose.msra.mxu0 0.0
    %3189 = vmatprep.subr.mxu0 0.0
    %3190 = vmatpush1.xpose.msra.mxu0 0.0
    %3191 = vmatprep.subr.mxu0 0.0
    %3192 = vmatpush1.xpose.msra.mxu0 0.0
    %3193 = vmatprep.subr.mxu0 0.0
    %3194 = vmatpush1.xpose.msra.mxu0 0.0
    %3195 = vmatprep.subr.mxu0 0.0
    %3196 = vmatpush1.xpose.msra.mxu0 0.0
    %3197 = vmatprep.subr.mxu0 0.0
    %3198 = vmatpush1.xpose.msra.mxu0 0.0
    %3199 = vmatprep.subr.mxu0 0.0
    %3200 = vmatpush1.xpose.msra.mxu0 0.0
    %3201 = vmatprep.subr.mxu0 0.0
    %3202 = vmatpush1.xpose.msra.mxu0 0.0
    %3203 = vmatprep.subr.mxu0 0.0
    %3204 = vmatpush1.xpose.msra.mxu0 0.0
    %3205 = vmatprep.subr.mxu0 0.0
    %3206 = vmatpush1.xpose.msra.mxu0 0.0
    %3207 = vmatprep.subr.mxu0 0.0
    %3208 = vmatpush1.xpose.msra.mxu0 0.0
    %3209 = vmatprep.subr.mxu0 0.0
    %3210 = vmatpush1.xpose.msra.mxu0 0.0
    %3211 = vmatprep.subr.mxu0 0.0
    %3212 = vmatpush1.xpose.msra.mxu0 0.0
    %3213 = vmatprep.subr.mxu0 0.0
    %3214 = vmatpush1.xpose.msra.mxu0 0.0
    %3215 = vmatprep.subr.mxu0 0.0
    %3216 = vmatpush1.xpose.msra.mxu0 0.0
    %3217 = vmatprep.subr.mxu0 0.0
    %3218 = vmatpush1.xpose.msra.mxu0 %v3185
    %3219 = vmatprep.subr.mxu0 0.0
    %3220 = vmatpush2.xpose.msra.mxu0 0.0
    %3221 = vmatprep.subr.mxu0 0.0
    %3222 = vmatpush2.xpose.msra.mxu0 0.0
    %3223 = vmatprep.subr.mxu0 0.0
    %3224 = vmatpush2.xpose.msra.mxu0 0.0
    %3225 = vmatprep.subr.mxu0 0.0
    %3226 = vmatpush2.xpose.msra.mxu0 0.0
    %3227 = vmatprep.subr.mxu0 0.0
    %3228 = vmatpush2.xpose.msra.mxu0 0.0
    %3229 = vmatprep.subr.mxu0 0.0
    %3230 = vmatpush2.xpose.msra.mxu0 0.0
    %3231 = vmatprep.subr.mxu0 0.0
    %3232 = vmatpush2.xpose.msra.mxu0 0.0
    %3233 = vmatprep.subr.mxu0 0.0
    %3234 = vmatpush2.xpose.msra.mxu0 0.0
    %3235 = vmatprep.subr.mxu0 0.0
    %3236 = vmatpush2.xpose.msra.mxu0 0.0
    %3237 = vmatprep.subr.mxu0 0.0
    %3238 = vmatpush2.xpose.msra.mxu0 0.0
    %3239 = vmatprep.subr.mxu0 0.0
    %3240 = vmatpush2.xpose.msra.mxu0 0.0
    %3241 = vmatprep.subr.mxu0 0.0
    %3242 = vmatpush2.xpose.msra.mxu0 0.0
    %3243 = vmatprep.subr.mxu0 0.0
    %3244 = vmatpush2.xpose.msra.mxu0 0.0
    %3245 = vmatprep.subr.mxu0 0.0
    %3246 = vmatpush2.xpose.msra.mxu0 0.0
    %3247 = vmatprep.subr.mxu0 0.0
    %3248 = vmatpush2.xpose.msra.mxu0 0.0
    %3249 = vmatprep.subr.mxu0 0.0
    %3250 = vmatpush2.xpose.msra.mxu0 0.0
    %3251 = vmatprep.mubr.f32.mxu0 0.0
    %3252 = vmatmul.mubr.f32.gmra.mxu0 %v3183
    %v3253 = vpop.f32.mrf.mxu0
    %v3254 = vadd.f32 0.0, %v3253
    %v3255 = vpop.f32.mrf.mxu0
    %3256 = vdwg.mxu0
    %v3257 = vmul.f32 %v3254, 0.25
    %v3258 = vadd.f32 %v3257, %v3088
    %v3259 = vsel %vm348, %v3258, -inf
    %3260 = vmax.xlane.f32.xlu0 %v3259
    %v3261 = vpop.xlane.xlu0 %3260
    %v3262 = vsub.f32 %v3258, %v3261
    %v3263 = vmul.f32 %v3262, 1.442695
    %v3264 = vpow.pop %v3263
    %v3265 = vsel %vm348, %v3264, 0.0
    %3266 = vadd.xlane.f32.xlu0 %v3265
    %v3267 = vpop.xlane.xlu0 %3266
    %v3268 = vrcp.pop %v3267
    %v3269 = vmul.f32 %v3264, %v3268
    %3270 = vrot.lane.b32.xlu0 %v3001, 48
    %v3271 = vpop.permute.xlu0 %3270
    %v3273 = vsel %vm362, %v3269, 0
    %v3275 = vsel %vm366, %v3271, 0
    %3277 = vmatprep.subr.mxu0 0.0
    %3278 = vmatpush1.msra.mxu0 0.0
    %3279 = vmatprep.subr.mxu0 0.0
    %3280 = vmatpush1.msra.mxu0 0.0
    %3281 = vmatprep.subr.mxu0 0.0
    %3282 = vmatpush1.msra.mxu0 0.0
    %3283 = vmatprep.subr.mxu0 0.0
    %3284 = vmatpush1.msra.mxu0 0.0
    %3285 = vmatprep.subr.mxu0 0.0
    %3286 = vmatpush1.msra.mxu0 0.0
    %3287 = vmatprep.subr.mxu0 0.0
    %3288 = vmatpush1.msra.mxu0 0.0
    %3289 = vmatprep.subr.mxu0 0.0
    %3290 = vmatpush1.msra.mxu0 0.0
    %3291 = vmatprep.subr.mxu0 0.0
    %3292 = vmatpush1.msra.mxu0 0.0
    %3293 = vmatprep.subr.mxu0 0.0
    %3294 = vmatpush1.msra.mxu0 0.0
    %3295 = vmatprep.subr.mxu0 0.0
    %3296 = vmatpush1.msra.mxu0 0.0
    %3297 = vmatprep.subr.mxu0 0.0
    %3298 = vmatpush1.msra.mxu0 0.0
    %3299 = vmatprep.subr.mxu0 0.0
    %3300 = vmatpush1.msra.mxu0 0.0
    %3301 = vmatprep.subr.mxu0 0.0
    %3302 = vmatpush1.msra.mxu0 0.0
    %3303 = vmatprep.subr.mxu0 0.0
    %3304 = vmatpush1.msra.mxu0 0.0
    %3305 = vmatprep.subr.mxu0 0.0
    %3306 = vmatpush1.msra.mxu0 0.0
    %3307 = vmatprep.subr.mxu0 0.0
    %3308 = vmatpush1.msra.mxu0 %v3275
    %3309 = vmatprep.subr.mxu0 0.0
    %3310 = vmatpush2.msra.mxu0 0.0
    %3311 = vmatprep.subr.mxu0 0.0
    %3312 = vmatpush2.msra.mxu0 0.0
    %3313 = vmatprep.subr.mxu0 0.0
    %3314 = vmatpush2.msra.mxu0 0.0
    %3315 = vmatprep.subr.mxu0 0.0
    %3316 = vmatpush2.msra.mxu0 0.0
    %3317 = vmatprep.subr.mxu0 0.0
    %3318 = vmatpush2.msra.mxu0 0.0
    %3319 = vmatprep.subr.mxu0 0.0
    %3320 = vmatpush2.msra.mxu0 0.0
    %3321 = vmatprep.subr.mxu0 0.0
    %3322 = vmatpush2.msra.mxu0 0.0
    %3323 = vmatprep.subr.mxu0 0.0
    %3324 = vmatpush2.msra.mxu0 0.0
    %3325 = vmatprep.subr.mxu0 0.0
    %3326 = vmatpush2.msra.mxu0 0.0
    %3327 = vmatprep.subr.mxu0 0.0
    %3328 = vmatpush2.msra.mxu0 0.0
    %3329 = vmatprep.subr.mxu0 0.0
    %3330 = vmatpush2.msra.mxu0 0.0
    %3331 = vmatprep.subr.mxu0 0.0
    %3332 = vmatpush2.msra.mxu0 0.0
    %3333 = vmatprep.subr.mxu0 0.0
    %3334 = vmatpush2.msra.mxu0 0.0
    %3335 = vmatprep.subr.mxu0 0.0
    %3336 = vmatpush2.msra.mxu0 0.0
    %3337 = vmatprep.subr.mxu0 0.0
    %3338 = vmatpush2.msra.mxu0 0.0
    %3339 = vmatprep.subr.mxu0 0.0
    %3340 = vmatpush2.msra.mxu0 0.0
    %3341 = vmatprep.mubr.f32.mxu0 0.0
    %3342 = vmatmul.mubr.f32.gmra.mxu0 %v3273
    %v3343 = vpop.f32.mrf.mxu0
    %v3344 = vadd.f32 0.0, %v3343
    %v3345 = vpop.f32.mrf.mxu0
    %3346 = vdwg.mxu0
    %v3348 = vsel %vm67, %v3344, 0
    %3350 = vmatprep.subr.mxu0 0.0
    %3351 = vmatpush1.msra.mxu0 0.0
    %3352 = vmatprep.subr.mxu0 0.0
    %3353 = vmatpush1.msra.mxu0 0.0
    %3354 = vmatprep.subr.mxu0 0.0
    %3355 = vmatpush1.msra.mxu0 0.0
    %3356 = vmatprep.subr.mxu0 0.0
    %3357 = vmatpush1.msra.mxu0 0.0
    %3358 = vmatprep.subr.mxu0 0.0
    %3359 = vmatpush1.msra.mxu0 0.0
    %3360 = vmatprep.subr.mxu0 0.0
    %3361 = vmatpush1.msra.mxu0 0.0
    %3362 = vmatprep.subr.mxu0 0.0
    %3363 = vmatpush1.msra.mxu0 0.0
    %3364 = vmatprep.subr.mxu0 0.0
    %3365 = vmatpush1.msra.mxu0 0.0
    %3366 = vmatprep.subr.mxu0 0.0
    %3367 = vmatpush1.msra.mxu0 0.0
    %3368 = vmatprep.subr.mxu0 0.0
    %3369 = vmatpush1.msra.mxu0 0.0
    %3370 = vmatprep.subr.mxu0 0.0
    %3371 = vmatpush1.msra.mxu0 0.0
    %3372 = vmatprep.subr.mxu0 0.0
    %3373 = vmatpush1.msra.mxu0 0.0
    %3374 = vmatprep.subr.mxu0 0.0
    %3375 = vmatpush1.msra.mxu0 0.0
    %3376 = vmatprep.subr.mxu0 0.0
    %3377 = vmatpush1.msra.mxu0 0.0
    %3378 = vmatprep.subr.mxu0 0.0
    %3379 = vmatpush1.msra.mxu0 %v3007
    %3380 = vmatprep.subr.mxu0 0.0
    %3381 = vmatpush1.msra.mxu0 %v3006
    %3382 = vmatprep.subr.mxu0 0.0
    %3383 = vmatpush2.msra.mxu0 0.0
    %3384 = vmatprep.subr.mxu0 0.0
    %3385 = vmatpush2.msra.mxu0 0.0
    %3386 = vmatprep.subr.mxu0 0.0
    %3387 = vmatpush2.msra.mxu0 0.0
    %3388 = vmatprep.subr.mxu0 0.0
    %3389 = vmatpush2.msra.mxu0 0.0
    %3390 = vmatprep.subr.mxu0 0.0
    %3391 = vmatpush2.msra.mxu0 0.0
    %3392 = vmatprep.subr.mxu0 0.0
    %3393 = vmatpush2.msra.mxu0 0.0
    %3394 = vmatprep.subr.mxu0 0.0
    %3395 = vmatpush2.msra.mxu0 0.0
    %3396 = vmatprep.subr.mxu0 0.0
    %3397 = vmatpush2.msra.mxu0 0.0
    %3398 = vmatprep.subr.mxu0 0.0
    %3399 = vmatpush2.msra.mxu0 0.0
    %3400 = vmatprep.subr.mxu0 0.0
    %3401 = vmatpush2.msra.mxu0 0.0
    %3402 = vmatprep.subr.mxu0 0.0
    %3403 = vmatpush2.msra.mxu0 0.0
    %3404 = vmatprep.subr.mxu0 0.0
    %3405 = vmatpush2.msra.mxu0 0.0
    %3406 = vmatprep.subr.mxu0 0.0
    %3407 = vmatpush2.msra.mxu0 0.0
    %3408 = vmatprep.subr.mxu0 0.0
    %3409 = vmatpush2.msra.mxu0 0.0
    %3410 = vmatprep.subr.mxu0 0.0
    %3411 = vmatpush2.msra.mxu0 0.0
    %3412 = vmatprep.subr.mxu0 0.0
    %3413 = vmatpush2.msra.mxu0 0.0
    %3414 = vmatprep.mubr.f32.mxu0 0.0
    %3415 = vmatmul.mubr.f32.gmra.mxu0 %v3348
    %v3416 = vpop.f32.mrf.mxu0
    %v3417 = vadd.f32 0.0, %v3416
    %v3418 = vpop.f32.mrf.mxu0
    %3419 = vdwg.mxu0
    %v3421 = vsel %vm67, %v3176, 0
    %3423 = vmatprep.subr.mxu0 0.0
    %3424 = vmatpush1.msra.mxu0 0.0
    %3425 = vmatprep.subr.mxu0 0.0
    %3426 = vmatpush1.msra.mxu0 0.0
    %3427 = vmatprep.subr.mxu0 0.0
    %3428 = vmatpush1.msra.mxu0 0.0
    %3429 = vmatprep.subr.mxu0 0.0
    %3430 = vmatpush1.msra.mxu0 0.0
    %3431 = vmatprep.subr.mxu0 0.0
    %3432 = vmatpush1.msra.mxu0 0.0
    %3433 = vmatprep.subr.mxu0 0.0
    %3434 = vmatpush1.msra.mxu0 0.0
    %3435 = vmatprep.subr.mxu0 0.0
    %3436 = vmatpush1.msra.mxu0 0.0
    %3437 = vmatprep.subr.mxu0 0.0
    %3438 = vmatpush1.msra.mxu0 0.0
    %3439 = vmatprep.subr.mxu0 0.0
    %3440 = vmatpush1.msra.mxu0 0.0
    %3441 = vmatprep.subr.mxu0 0.0
    %3442 = vmatpush1.msra.mxu0 0.0
    %3443 = vmatprep.subr.mxu0 0.0
    %3444 = vmatpush1.msra.mxu0 0.0
    %3445 = vmatprep.subr.mxu0 0.0
    %3446 = vmatpush1.msra.mxu0 0.0
    %3447 = vmatprep.subr.mxu0 0.0
    %3448 = vmatpush1.msra.mxu0 0.0
    %3449 = vmatprep.subr.mxu0 0.0
    %3450 = vmatpush1.msra.mxu0 0.0
    %3451 = vmatprep.subr.mxu0 0.0
    %3452 = vmatpush1.msra.mxu0 %v3005
    %3453 = vmatprep.subr.mxu0 0.0
    %3454 = vmatpush1.msra.mxu0 %v3004
    %3455 = vmatprep.subr.mxu0 0.0
    %3456 = vmatpush2.msra.mxu0 0.0
    %3457 = vmatprep.subr.mxu0 0.0
    %3458 = vmatpush2.msra.mxu0 0.0
    %3459 = vmatprep.subr.mxu0 0.0
    %3460 = vmatpush2.msra.mxu0 0.0
    %3461 = vmatprep.subr.mxu0 0.0
    %3462 = vmatpush2.msra.mxu0 0.0
    %3463 = vmatprep.subr.mxu0 0.0
    %3464 = vmatpush2.msra.mxu0 0.0
    %3465 = vmatprep.subr.mxu0 0.0
    %3466 = vmatpush2.msra.mxu0 0.0
    %3467 = vmatprep.subr.mxu0 0.0
    %3468 = vmatpush2.msra.mxu0 0.0
    %3469 = vmatprep.subr.mxu0 0.0
    %3470 = vmatpush2.msra.mxu0 0.0
    %3471 = vmatprep.subr.mxu0 0.0
    %3472 = vmatpush2.msra.mxu0 0.0
    %3473 = vmatprep.subr.mxu0 0.0
    %3474 = vmatpush2.msra.mxu0 0.0
    %3475 = vmatprep.subr.mxu0 0.0
    %3476 = vmatpush2.msra.mxu0 0.0
    %3477 = vmatprep.subr.mxu0 0.0
    %3478 = vmatpush2.msra.mxu0 0.0
    %3479 = vmatprep.subr.mxu0 0.0
    %3480 = vmatpush2.msra.mxu0 0.0
    %3481 = vmatprep.subr.mxu0 0.0
    %3482 = vmatpush2.msra.mxu0 0.0
    %3483 = vmatprep.subr.mxu0 0.0
    %3484 = vmatpush2.msra.mxu0 0.0
    %3485 = vmatprep.subr.mxu0 0.0
    %3486 = vmatpush2.msra.mxu0 0.0
    %3487 = vmatprep.mubr.f32.mxu0 0.0
    %3488 = vmatmul.mubr.f32.gmra.mxu0 %v3421
    %v3489 = vpop.f32.mrf.mxu0
    %v3490 = vadd.f32 %v3417, %v3489
    %v3491 = vpop.f32.mrf.mxu0
    %3492 = vdwg.mxu0
    %v3493 = vlaneseq
    %v3494 = vshrl.u32 %v3493, 7
    %v3495 = vsub.s32 0, %v3494
    %v3496 = vrot.slane %v3008, %v3495
    %v3497 = vadd.f32 %v3490, %v3496
    %v3498 = vadd.f32 %v2921, %v3497
    %v3499 = vld [vmem:[%s3 + $0x24] sm:$0x1]
    %v3500 = vld [vmem:[%s3 + $0x25] sm:$0x1]
    %v3501 = vsel %vm152, %v3498, 0.0
    %3502 = vadd.xlane.f32.xlu0 %v3501
    %v3503 = vpop.xlane.xlu0 %3502
    %v3504 = vmul.f32 %v3503, %v156
    %v3505 = vsub.f32 %v3498, %v3504
    %v3506 = vmul.f32 %v3505, %v3505
    %v3507 = vsel %vm152, %v3506, 0.0
    %3508 = vadd.xlane.f32.xlu0 %v3507
    %v3509 = vpop.xlane.xlu0 %3508
    %v3510 = vmul.f32 %v3509, %v156
    %v3511 = vadd.f32 %v3510, 1e-05
    %v3512 = vrsqrt.pop %v3511
    %v3513 = vmul.f32 %v3505, %v3512
    %v3514 = vlaneseq
    %v3515 = vshrl.u32 %v3514, 7
    %v3516 = vsub.s32 0, %v3515
    %v3517 = vrot.slane %v3499, %v3516
    %v3518 = vmul.f32 %v3513, %v3517
    %v3519 = vlaneseq
    %v3520 = vshrl.u32 %v3519, 7
    %v3521 = vsub.s32 0, %v3520
    %v3522 = vrot.slane %v3500, %v3521
    %v3523 = vadd.f32 %v3518, %v3522
    %v3524 = vld [vmem:[#allocation2 + $0x238] sm:$0xff]
    %v3525 = vld [vmem:[#allocation2 + $0x240] sm:$0xff]
    %v3526 = vld [vmem:[#allocation2 + $0x248] sm:$0xff]
    %v3527 = vld [vmem:[#allocation2 + $0x250] sm:$0xff]
    %v3528 = vld [vmem:[%s3 + $0x2c] sm:$0x1]
    %v3529 = vlaneseq
    %v3530 = vshrl.u32 %v3529, 7
    %v3531 = vsub.s32 0, %v3530
    %v3532 = vrot.slane %v3528, %v3531
    %v3534 = vsel %vm186, %v3523, 0
    %3536 = vmatprep.subr.mxu0 0.0
    %3537 = vmatpush1.msra.mxu0 0.0
    %3538 = vmatprep.subr.mxu0 0.0
    %3539 = vmatpush1.msra.mxu0 0.0
    %3540 = vmatprep.subr.mxu0 0.0
    %3541 = vmatpush1.msra.mxu0 0.0
    %3542 = vmatprep.subr.mxu0 0.0
    %3543 = vmatpush1.msra.mxu0 0.0
    %3544 = vmatprep.subr.mxu0 0.0
    %3545 = vmatpush1.msra.mxu0 0.0
    %3546 = vmatprep.subr.mxu0 0.0
    %3547 = vmatpush1.msra.mxu0 0.0
    %3548 = vmatprep.subr.mxu0 0.0
    %3549 = vmatpush1.msra.mxu0 0.0
    %3550 = vmatprep.subr.mxu0 0.0
    %3551 = vmatpush1.msra.mxu0 0.0
    %3552 = vmatprep.subr.mxu0 0.0
    %3553 = vmatpush1.msra.mxu0 0.0
    %3554 = vmatprep.subr.mxu0 0.0
    %3555 = vmatpush1.msra.mxu0 0.0
    %3556 = vmatprep.subr.mxu0 0.0
    %3557 = vmatpush1.msra.mxu0 0.0
    %3558 = vmatprep.subr.mxu0 0.0
    %3559 = vmatpush1.msra.mxu0 0.0
    %3560 = vmatprep.subr.mxu0 0.0
    %3561 = vmatpush1.msra.mxu0 %v3527
    %3562 = vmatprep.subr.mxu0 0.0
    %3563 = vmatpush1.msra.mxu0 %v3526
    %3564 = vmatprep.subr.mxu0 0.0
    %3565 = vmatpush1.msra.mxu0 %v3525
    %3566 = vmatprep.subr.mxu0 0.0
    %3567 = vmatpush1.msra.mxu0 %v3524
    %3568 = vmatprep.subr.mxu0 0.0
    %3569 = vmatpush2.msra.mxu0 0.0
    %3570 = vmatprep.subr.mxu0 0.0
    %3571 = vmatpush2.msra.mxu0 0.0
    %3572 = vmatprep.subr.mxu0 0.0
    %3573 = vmatpush2.msra.mxu0 0.0
    %3574 = vmatprep.subr.mxu0 0.0
    %3575 = vmatpush2.msra.mxu0 0.0
    %3576 = vmatprep.subr.mxu0 0.0
    %3577 = vmatpush2.msra.mxu0 0.0
    %3578 = vmatprep.subr.mxu0 0.0
    %3579 = vmatpush2.msra.mxu0 0.0
    %3580 = vmatprep.subr.mxu0 0.0
    %3581 = vmatpush2.msra.mxu0 0.0
    %3582 = vmatprep.subr.mxu0 0.0
    %3583 = vmatpush2.msra.mxu0 0.0
    %3584 = vmatprep.subr.mxu0 0.0
    %3585 = vmatpush2.msra.mxu0 0.0
    %3586 = vmatprep.subr.mxu0 0.0
    %3587 = vmatpush2.msra.mxu0 0.0
    %3588 = vmatprep.subr.mxu0 0.0
    %3589 = vmatpush2.msra.mxu0 0.0
    %3590 = vmatprep.subr.mxu0 0.0
    %3591 = vmatpush2.msra.mxu0 0.0
    %3592 = vmatprep.subr.mxu0 0.0
    %3593 = vmatpush2.msra.mxu0 0.0
    %3594 = vmatprep.subr.mxu0 0.0
    %3595 = vmatpush2.msra.mxu0 0.0
    %3596 = vmatprep.subr.mxu0 0.0
    %3597 = vmatpush2.msra.mxu0 0.0
    %3598 = vmatprep.subr.mxu0 0.0
    %3599 = vmatpush2.msra.mxu0 0.0
    %3600 = vmatprep.mubr.f32.mxu0 0.0
    %3601 = vmatmul.mubr.f32.gmra.mxu0 %v3534
    %v3602 = vpop.f32.mrf.mxu0
    %v3603 = vadd.f32 %v3532, %v3602
    %v3604 = vpop.f32.mrf.mxu0
    %3605 = vdwg.mxu0
    %v3606 = vld [vmem:[#allocation2 + $0x258] sm:$0xff]
    %v3607 = vld [vmem:[#allocation2 + $0x260] sm:$0xff]
    %v3608 = vld [vmem:[#allocation2 + $0x268] sm:$0xff]
    %v3609 = vld [vmem:[#allocation2 + $0x270] sm:$0xff]
    %v3610 = vld [vmem:[%s3 + $0x2d] sm:$0x1]
    %v3611 = vlaneseq
    %v3612 = vshrl.u32 %v3611, 7
    %v3613 = vsub.s32 0, %v3612
    %v3614 = vrot.slane %v3610, %v3613
    %3615 = vmatprep.subr.mxu0 0.0
    %3616 = vmatpush1.msra.mxu0 0.0
    %3617 = vmatprep.subr.mxu0 0.0
    %3618 = vmatpush1.msra.mxu0 0.0
    %3619 = vmatprep.subr.mxu0 0.0
    %3620 = vmatpush1.msra.mxu0 0.0
    %3621 = vmatprep.subr.mxu0 0.0
    %3622 = vmatpush1.msra.mxu0 0.0
    %3623 = vmatprep.subr.mxu0 0.0
    %3624 = vmatpush1.msra.mxu0 0.0
    %3625 = vmatprep.subr.mxu0 0.0
    %3626 = vmatpush1.msra.mxu0 0.0
    %3627 = vmatprep.subr.mxu0 0.0
    %3628 = vmatpush1.msra.mxu0 0.0
    %3629 = vmatprep.subr.mxu0 0.0
    %3630 = vmatpush1.msra.mxu0 0.0
    %3631 = vmatprep.subr.mxu0 0.0
    %3632 = vmatpush1.msra.mxu0 0.0
    %3633 = vmatprep.subr.mxu0 0.0
    %3634 = vmatpush1.msra.mxu0 0.0
    %3635 = vmatprep.subr.mxu0 0.0
    %3636 = vmatpush1.msra.mxu0 0.0
    %3637 = vmatprep.subr.mxu0 0.0
    %3638 = vmatpush1.msra.mxu0 0.0
    %3639 = vmatprep.subr.mxu0 0.0
    %3640 = vmatpush1.msra.mxu0 %v3609
    %3641 = vmatprep.subr.mxu0 0.0
    %3642 = vmatpush1.msra.mxu0 %v3608
    %3643 = vmatprep.subr.mxu0 0.0
    %3644 = vmatpush1.msra.mxu0 %v3607
    %3645 = vmatprep.subr.mxu0 0.0
    %3646 = vmatpush1.msra.mxu0 %v3606
    %3647 = vmatprep.subr.mxu0 0.0
    %3648 = vmatpush2.msra.mxu0 0.0
    %3649 = vmatprep.subr.mxu0 0.0
    %3650 = vmatpush2.msra.mxu0 0.0
    %3651 = vmatprep.subr.mxu0 0.0
    %3652 = vmatpush2.msra.mxu0 0.0
    %3653 = vmatprep.subr.mxu0 0.0
    %3654 = vmatpush2.msra.mxu0 0.0
    %3655 = vmatprep.subr.mxu0 0.0
    %3656 = vmatpush2.msra.mxu0 0.0
    %3657 = vmatprep.subr.mxu0 0.0
    %3658 = vmatpush2.msra.mxu0 0.0
    %3659 = vmatprep.subr.mxu0 0.0
    %3660 = vmatpush2.msra.mxu0 0.0
    %3661 = vmatprep.subr.mxu0 0.0
    %3662 = vmatpush2.msra.mxu0 0.0
    %3663 = vmatprep.subr.mxu0 0.0
    %3664 = vmatpush2.msra.mxu0 0.0
    %3665 = vmatprep.subr.mxu0 0.0
    %3666 = vmatpush2.msra.mxu0 0.0
    %3667 = vmatprep.subr.mxu0 0.0
    %3668 = vmatpush2.msra.mxu0 0.0
    %3669 = vmatprep.subr.mxu0 0.0
    %3670 = vmatpush2.msra.mxu0 0.0
    %3671 = vmatprep.subr.mxu0 0.0
    %3672 = vmatpush2.msra.mxu0 0.0
    %3673 = vmatprep.subr.mxu0 0.0
    %3674 = vmatpush2.msra.mxu0 0.0
    %3675 = vmatprep.subr.mxu0 0.0
    %3676 = vmatpush2.msra.mxu0 0.0
    %3677 = vmatprep.subr.mxu0 0.0
    %3678 = vmatpush2.msra.mxu0 0.0
    %3679 = vmatprep.mubr.f32.mxu0 0.0
    %3680 = vmatmul.mubr.f32.gmra.mxu0 %v1791
    %v3681 = vpop.f32.mrf.mxu0
    %v3682 = vadd.f32 %v3614, %v3681
    %v3683 = vpop.f32.mrf.mxu0
    %3684 = vdwg.mxu0
    %v3685 = vld [vmem:[#allocation2 + $0x278] sm:$0xff]
    %v3686 = vld [vmem:[#allocation2 + $0x280] sm:$0xff]
    %v3687 = vld [vmem:[#allocation2 + $0x288] sm:$0xff]
    %v3688 = vld [vmem:[#allocation2 + $0x290] sm:$0xff]
    %v3689 = vld [vmem:[%s3 + $0x2e] sm:$0x1]
    %v3691 = vsel %vm67, %v3682, 0
    %v3694 = vsel %vm67, %v3603, 0
    %3696 = vmatprep.subr.mxu0 0.0
    %3697 = vmatpush1.xpose.msra.mxu0 0.0
    %3698 = vmatprep.subr.mxu0 0.0
    %3699 = vmatpush1.xpose.msra.mxu0 0.0
    %3700 = vmatprep.subr.mxu0 0.0
    %3701 = vmatpush1.xpose.msra.mxu0 0.0
    %3702 = vmatprep.subr.mxu0 0.0
    %3703 = vmatpush1.xpose.msra.mxu0 0.0
    %3704 = vmatprep.subr.mxu0 0.0
    %3705 = vmatpush1.xpose.msra.mxu0 0.0
    %3706 = vmatprep.subr.mxu0 0.0
    %3707 = vmatpush1.xpose.msra.mxu0 0.0
    %3708 = vmatprep.subr.mxu0 0.0
    %3709 = vmatpush1.xpose.msra.mxu0 0.0
    %3710 = vmatprep.subr.mxu0 0.0
    %3711 = vmatpush1.xpose.msra.mxu0 0.0
    %3712 = vmatprep.subr.mxu0 0.0
    %3713 = vmatpush1.xpose.msra.mxu0 0.0
    %3714 = vmatprep.subr.mxu0 0.0
    %3715 = vmatpush1.xpose.msra.mxu0 0.0
    %3716 = vmatprep.subr.mxu0 0.0
    %3717 = vmatpush1.xpose.msra.mxu0 0.0
    %3718 = vmatprep.subr.mxu0 0.0
    %3719 = vmatpush1.xpose.msra.mxu0 0.0
    %3720 = vmatprep.subr.mxu0 0.0
    %3721 = vmatpush1.xpose.msra.mxu0 0.0
    %3722 = vmatprep.subr.mxu0 0.0
    %3723 = vmatpush1.xpose.msra.mxu0 0.0
    %3724 = vmatprep.subr.mxu0 0.0
    %3725 = vmatpush1.xpose.msra.mxu0 0.0
    %3726 = vmatprep.subr.mxu0 0.0
    %3727 = vmatpush1.xpose.msra.mxu0 %v3694
    %3728 = vmatprep.subr.mxu0 0.0
    %3729 = vmatpush2.xpose.msra.mxu0 0.0
    %3730 = vmatprep.subr.mxu0 0.0
    %3731 = vmatpush2.xpose.msra.mxu0 0.0
    %3732 = vmatprep.subr.mxu0 0.0
    %3733 = vmatpush2.xpose.msra.mxu0 0.0
    %3734 = vmatprep.subr.mxu0 0.0
    %3735 = vmatpush2.xpose.msra.mxu0 0.0
    %3736 = vmatprep.subr.mxu0 0.0
    %3737 = vmatpush2.xpose.msra.mxu0 0.0
    %3738 = vmatprep.subr.mxu0 0.0
    %3739 = vmatpush2.xpose.msra.mxu0 0.0
    %3740 = vmatprep.subr.mxu0 0.0
    %3741 = vmatpush2.xpose.msra.mxu0 0.0
    %3742 = vmatprep.subr.mxu0 0.0
    %3743 = vmatpush2.xpose.msra.mxu0 0.0
    %3744 = vmatprep.subr.mxu0 0.0
    %3745 = vmatpush2.xpose.msra.mxu0 0.0
    %3746 = vmatprep.subr.mxu0 0.0
    %3747 = vmatpush2.xpose.msra.mxu0 0.0
    %3748 = vmatprep.subr.mxu0 0.0
    %3749 = vmatpush2.xpose.msra.mxu0 0.0
    %3750 = vmatprep.subr.mxu0 0.0
    %3751 = vmatpush2.xpose.msra.mxu0 0.0
    %3752 = vmatprep.subr.mxu0 0.0
    %3753 = vmatpush2.xpose.msra.mxu0 0.0
    %3754 = vmatprep.subr.mxu0 0.0
    %3755 = vmatpush2.xpose.msra.mxu0 0.0
    %3756 = vmatprep.subr.mxu0 0.0
    %3757 = vmatpush2.xpose.msra.mxu0 0.0
    %3758 = vmatprep.subr.mxu0 0.0
    %3759 = vmatpush2.xpose.msra.mxu0 0.0
    %3760 = vmatprep.mubr.f32.mxu0 0.0
    %3761 = vmatmul.mubr.f32.gmra.mxu0 %v3691
    %v3762 = vpop.f32.mrf.mxu0
    %v3763 = vadd.f32 0.0, %v3762
    %v3764 = vpop.f32.mrf.mxu0
    %3765 = vdwg.mxu0
    %v3766 = vmul.f32 %v3763, 0.25
    %v3767 = vadd.f32 %v3766, %v3088
    %v3768 = vsel %vm348, %v3767, -inf
    %3769 = vmax.xlane.f32.xlu0 %v3768
    %v3770 = vpop.xlane.xlu0 %3769
    %v3771 = vsub.f32 %v3767, %v3770
    %v3772 = vmul.f32 %v3771, 1.442695
    %v3773 = vpow.pop %v3772
    %v3774 = vsel %vm348, %v3773, 0.0
    %3775 = vadd.xlane.f32.xlu0 %v3774
    %v3776 = vpop.xlane.xlu0 %3775
    %v3777 = vrcp.pop %v3776
    %v3778 = vmul.f32 %v3773, %v3777
    %3779 = vrot.lane.b32.xlu0 %v3603, 96
    %v3780 = vpop.permute.xlu0 %3779
    %v3782 = vsel %vm362, %v3778, 0
    %v3784 = vsel %vm366, %v3780, 0
    %3786 = vmatprep.subr.mxu0 0.0
    %3787 = vmatpush1.msra.mxu0 0.0
    %3788 = vmatprep.subr.mxu0 0.0
    %3789 = vmatpush1.msra.mxu0 0.0
    %3790 = vmatprep.subr.mxu0 0.0
    %3791 = vmatpush1.msra.mxu0 0.0
    %3792 = vmatprep.subr.mxu0 0.0
    %3793 = vmatpush1.msra.mxu0 0.0
    %3794 = vmatprep.subr.mxu0 0.0
    %3795 = vmatpush1.msra.mxu0 0.0
    %3796 = vmatprep.subr.mxu0 0.0
    %3797 = vmatpush1.msra.mxu0 0.0
    %3798 = vmatprep.subr.mxu0 0.0
    %3799 = vmatpush1.msra.mxu0 0.0
    %3800 = vmatprep.subr.mxu0 0.0
    %3801 = vmatpush1.msra.mxu0 0.0
    %3802 = vmatprep.subr.mxu0 0.0
    %3803 = vmatpush1.msra.mxu0 0.0
    %3804 = vmatprep.subr.mxu0 0.0
    %3805 = vmatpush1.msra.mxu0 0.0
    %3806 = vmatprep.subr.mxu0 0.0
    %3807 = vmatpush1.msra.mxu0 0.0
    %3808 = vmatprep.subr.mxu0 0.0
    %3809 = vmatpush1.msra.mxu0 0.0
    %3810 = vmatprep.subr.mxu0 0.0
    %3811 = vmatpush1.msra.mxu0 0.0
    %3812 = vmatprep.subr.mxu0 0.0
    %3813 = vmatpush1.msra.mxu0 0.0
    %3814 = vmatprep.subr.mxu0 0.0
    %3815 = vmatpush1.msra.mxu0 0.0
    %3816 = vmatprep.subr.mxu0 0.0
    %3817 = vmatpush1.msra.mxu0 %v3784
    %3818 = vmatprep.subr.mxu0 0.0
    %3819 = vmatpush2.msra.mxu0 0.0
    %3820 = vmatprep.subr.mxu0 0.0
    %3821 = vmatpush2.msra.mxu0 0.0
    %3822 = vmatprep.subr.mxu0 0.0
    %3823 = vmatpush2.msra.mxu0 0.0
    %3824 = vmatprep.subr.mxu0 0.0
    %3825 = vmatpush2.msra.mxu0 0.0
    %3826 = vmatprep.subr.mxu0 0.0
    %3827 = vmatpush2.msra.mxu0 0.0
    %3828 = vmatprep.subr.mxu0 0.0
    %3829 = vmatpush2.msra.mxu0 0.0
    %3830 = vmatprep.subr.mxu0 0.0
    %3831 = vmatpush2.msra.mxu0 0.0
    %3832 = vmatprep.subr.mxu0 0.0
    %3833 = vmatpush2.msra.mxu0 0.0
    %3834 = vmatprep.subr.mxu0 0.0
    %3835 = vmatpush2.msra.mxu0 0.0
    %3836 = vmatprep.subr.mxu0 0.0
    %3837 = vmatpush2.msra.mxu0 0.0
    %3838 = vmatprep.subr.mxu0 0.0
    %3839 = vmatpush2.msra.mxu0 0.0
    %3840 = vmatprep.subr.mxu0 0.0
    %3841 = vmatpush2.msra.mxu0 0.0
    %3842 = vmatprep.subr.mxu0 0.0
    %3843 = vmatpush2.msra.mxu0 0.0
    %3844 = vmatprep.subr.mxu0 0.0
    %3845 = vmatpush2.msra.mxu0 0.0
    %3846 = vmatprep.subr.mxu0 0.0
    %3847 = vmatpush2.msra.mxu0 0.0
    %3848 = vmatprep.subr.mxu0 0.0
    %3849 = vmatpush2.msra.mxu0 0.0
    %3850 = vmatprep.mubr.f32.mxu0 0.0
    %3851 = vmatmul.mubr.f32.gmra.mxu0 %v3782
    %v3852 = vpop.f32.mrf.mxu0
    %v3853 = vadd.f32 0.0, %v3852
    %v3854 = vpop.f32.mrf.mxu0
    %3855 = vdwg.mxu0
    %3856 = vrot.lane.b32.xlu0 %v3682, 112
    %v3857 = vpop.permute.xlu0 %3856
    %3858 = vrot.lane.b32.xlu0 %v3603, 112
    %v3859 = vpop.permute.xlu0 %3858
    %v3860 = vsel %vm67, %v3857, 0
    %v3862 = vsel %vm67, %v3859, 0
    %3864 = vmatprep.subr.mxu0 0.0
    %3865 = vmatpush1.xpose.msra.mxu0 0.0
    %3866 = vmatprep.subr.mxu0 0.0
    %3867 = vmatpush1.xpose.msra.mxu0 0.0
    %3868 = vmatprep.subr.mxu0 0.0
    %3869 = vmatpush1.xpose.msra.mxu0 0.0
    %3870 = vmatprep.subr.mxu0 0.0
    %3871 = vmatpush1.xpose.msra.mxu0 0.0
    %3872 = vmatprep.subr.mxu0 0.0
    %3873 = vmatpush1.xpose.msra.mxu0 0.0
    %3874 = vmatprep.subr.mxu0 0.0
    %3875 = vmatpush1.xpose.msra.mxu0 0.0
    %3876 = vmatprep.subr.mxu0 0.0
    %3877 = vmatpush1.xpose.msra.mxu0 0.0
    %3878 = vmatprep.subr.mxu0 0.0
    %3879 = vmatpush1.xpose.msra.mxu0 0.0
    %3880 = vmatprep.subr.mxu0 0.0
    %3881 = vmatpush1.xpose.msra.mxu0 0.0
    %3882 = vmatprep.subr.mxu0 0.0
    %3883 = vmatpush1.xpose.msra.mxu0 0.0
    %3884 = vmatprep.subr.mxu0 0.0
    %3885 = vmatpush1.xpose.msra.mxu0 0.0
    %3886 = vmatprep.subr.mxu0 0.0
    %3887 = vmatpush1.xpose.msra.mxu0 0.0
    %3888 = vmatprep.subr.mxu0 0.0
    %3889 = vmatpush1.xpose.msra.mxu0 0.0
    %3890 = vmatprep.subr.mxu0 0.0
    %3891 = vmatpush1.xpose.msra.mxu0 0.0
    %3892 = vmatprep.subr.mxu0 0.0
    %3893 = vmatpush1.xpose.msra.mxu0 0.0
    %3894 = vmatprep.subr.mxu0 0.0
    %3895 = vmatpush1.xpose.msra.mxu0 %v3862
    %3896 = vmatprep.subr.mxu0 0.0
    %3897 = vmatpush2.xpose.msra.mxu0 0.0
    %3898 = vmatprep.subr.mxu0 0.0
    %3899 = vmatpush2.xpose.msra.mxu0 0.0
    %3900 = vmatprep.subr.mxu0 0.0
    %3901 = vmatpush2.xpose.msra.mxu0 0.0
    %3902 = vmatprep.subr.mxu0 0.0
    %3903 = vmatpush2.xpose.msra.mxu0 0.0
    %3904 = vmatprep.subr.mxu0 0.0
    %3905 = vmatpush2.xpose.msra.mxu0 0.0
    %3906 = vmatprep.subr.mxu0 0.0
    %3907 = vmatpush2.xpose.msra.mxu0 0.0
    %3908 = vmatprep.subr.mxu0 0.0
    %3909 = vmatpush2.xpose.msra.mxu0 0.0
    %3910 = vmatprep.subr.mxu0 0.0
    %3911 = vmatpush2.xpose.msra.mxu0 0.0
    %3912 = vmatprep.subr.mxu0 0.0
    %3913 = vmatpush2.xpose.msra.mxu0 0.0
    %3914 = vmatprep.subr.mxu0 0.0
    %3915 = vmatpush2.xpose.msra.mxu0 0.0
    %3916 = vmatprep.subr.mxu0 0.0
    %3917 = vmatpush2.xpose.msra.mxu0 0.0
    %3918 = vmatprep.subr.mxu0 0.0
    %3919 = vmatpush2.xpose.msra.mxu0 0.0
    %3920 = vmatprep.subr.mxu0 0.0
    %3921 = vmatpush2.xpose.msra.mxu0 0.0
    %3922 = vmatprep.subr.mxu0 0.0
    %3923 = vmatpush2.xpose.msra.mxu0 0.0
    %3924 = vmatprep.subr.mxu0 0.0
    %3925 = vmatpush2.xpose.msra.mxu0 0.0
    %3926 = vmatprep.subr.mxu0 0.0
    %3927 = vmatpush2.xpose.msra.mxu0 0.0
    %3928 = vmatprep.mubr.f32.mxu0 0.0
    %3929 = vmatmul.mubr.f32.gmra.mxu0 %v3860
    %v3930 = vpop.f32.mrf.mxu0
    %v3931 = vadd.f32 0.0, %v3930
    %v3932 = vpop.f32.mrf.mxu0
    %3933 = vdwg.mxu0
    %v3934 = vmul.f32 %v3931, 0.25
    %v3935 = vadd.f32 %v3934, %v3088
    %v3936 = vsel %vm348, %v3935, -inf
    %3937 = vmax.xlane.f32.xlu0 %v3936
    %v3938 = vpop.xlane.xlu0 %3937
    %v3939 = vsub.f32 %v3935, %v3938
    %v3940 = vmul.f32 %v3939, 1.442695
    %v3941 = vpow.pop %v3940
    %v3942 = vsel %vm348, %v3941, 0.0
    %3943 = vadd.xlane.f32.xlu0 %v3942
    %v3944 = vpop.xlane.xlu0 %3943
    %v3945 = vrcp.pop %v3944
    %v3946 = vmul.f32 %v3941, %v3945
    %3947 = vrot.lane.b32.xlu0 %v3603, 80
    %v3948 = vpop.permute.xlu0 %3947
    %v3950 = vsel %vm362, %v3946, 0
    %v3952 = vsel %vm366, %v3948, 0
    %3954 = vmatprep.subr.mxu0 0.0
    %3955 = vmatpush1.msra.mxu0 0.0
    %3956 = vmatprep.subr.mxu0 0.0
    %3957 = vmatpush1.msra.mxu0 0.0
    %3958 = vmatprep.subr.mxu0 0.0
    %3959 = vmatpush1.msra.mxu0 0.0
    %3960 = vmatprep.subr.mxu0 0.0
    %3961 = vmatpush1.msra.mxu0 0.0
    %3962 = vmatprep.subr.mxu0 0.0
    %3963 = vmatpush1.msra.mxu0 0.0
    %3964 = vmatprep.subr.mxu0 0.0
    %3965 = vmatpush1.msra.mxu0 0.0
    %3966 = vmatprep.subr.mxu0 0.0
    %3967 = vmatpush1.msra.mxu0 0.0
    %3968 = vmatprep.subr.mxu0 0.0
    %3969 = vmatpush1.msra.mxu0 0.0
    %3970 = vmatprep.subr.mxu0 0.0
    %3971 = vmatpush1.msra.mxu0 0.0
    %3972 = vmatprep.subr.mxu0 0.0
    %3973 = vmatpush1.msra.mxu0 0.0
    %3974 = vmatprep.subr.mxu0 0.0
    %3975 = vmatpush1.msra.mxu0 0.0
    %3976 = vmatprep.subr.mxu0 0.0
    %3977 = vmatpush1.msra.mxu0 0.0
    %3978 = vmatprep.subr.mxu0 0.0
    %3979 = vmatpush1.msra.mxu0 0.0
    %3980 = vmatprep.subr.mxu0 0.0
    %3981 = vmatpush1.msra.mxu0 0.0
    %3982 = vmatprep.subr.mxu0 0.0
    %3983 = vmatpush1.msra.mxu0 0.0
    %3984 = vmatprep.subr.mxu0 0.0
    %3985 = vmatpush1.msra.mxu0 %v3952
    %3986 = vmatprep.subr.mxu0 0.0
    %3987 = vmatpush2.msra.mxu0 0.0
    %3988 = vmatprep.subr.mxu0 0.0
    %3989 = vmatpush2.msra.mxu0 0.0
    %3990 = vmatprep.subr.mxu0 0.0
    %3991 = vmatpush2.msra.mxu0 0.0
    %3992 = vmatprep.subr.mxu0 0.0
    %3993 = vmatpush2.msra.mxu0 0.0
    %3994 = vmatprep.subr.mxu0 0.0
    %3995 = vmatpush2.msra.mxu0 0.0
    %3996 = vmatprep.subr.mxu0 0.0
    %3997 = vmatpush2.msra.mxu0 0.0
    %3998 = vmatprep.subr.mxu0 0.0
    %3999 = vmatpush2.msra.mxu0 0.0
    %4000 = vmatprep.subr.mxu0 0.0
    %4001 = vmatpush2.msra.mxu0 0.0
    %4002 = vmatprep.subr.mxu0 0.0
    %4003 = vmatpush2.msra.mxu0 0.0
    %4004 = vmatprep.subr.mxu0 0.0
    %4005 = vmatpush2.msra.mxu0 0.0
    %4006 = vmatprep.subr.mxu0 0.0
    %4007 = vmatpush2.msra.mxu0 0.0
    %4008 = vmatprep.subr.mxu0 0.0
    %4009 = vmatpush2.msra.mxu0 0.0
    %4010 = vmatprep.subr.mxu0 0.0
    %4011 = vmatpush2.msra.mxu0 0.0
    %4012 = vmatprep.subr.mxu0 0.0
    %4013 = vmatpush2.msra.mxu0 0.0
    %4014 = vmatprep.subr.mxu0 0.0
    %4015 = vmatpush2.msra.mxu0 0.0
    %4016 = vmatprep.subr.mxu0 0.0
    %4017 = vmatpush2.msra.mxu0 0.0
    %4018 = vmatprep.mubr.f32.mxu0 0.0
    %4019 = vmatmul.mubr.f32.gmra.mxu0 %v3950
    %v4020 = vpop.f32.mrf.mxu0
    %v4021 = vadd.f32 0.0, %v4020
    %v4022 = vpop.f32.mrf.mxu0
    %4023 = vdwg.mxu0
    %v4025 = vsel %vm67, %v4021, 0
    %4027 = vmatprep.subr.mxu0 0.0
    %4028 = vmatpush1.msra.mxu0 0.0
    %4029 = vmatprep.subr.mxu0 0.0
    %4030 = vmatpush1.msra.mxu0 0.0
    %4031 = vmatprep.subr.mxu0 0.0
    %4032 = vmatpush1.msra.mxu0 0.0
    %4033 = vmatprep.subr.mxu0 0.0
    %4034 = vmatpush1.msra.mxu0 0.0
    %4035 = vmatprep.subr.mxu0 0.0
    %4036 = vmatpush1.msra.mxu0 0.0
    %4037 = vmatprep.subr.mxu0 0.0
    %4038 = vmatpush1.msra.mxu0 0.0
    %4039 = vmatprep.subr.mxu0 0.0
    %4040 = vmatpush1.msra.mxu0 0.0
    %4041 = vmatprep.subr.mxu0 0.0
    %4042 = vmatpush1.msra.mxu0 0.0
    %4043 = vmatprep.subr.mxu0 0.0
    %4044 = vmatpush1.msra.mxu0 0.0
    %4045 = vmatprep.subr.mxu0 0.0
    %4046 = vmatpush1.msra.mxu0 0.0
    %4047 = vmatprep.subr.mxu0 0.0
    %4048 = vmatpush1.msra.mxu0 0.0
    %4049 = vmatprep.subr.mxu0 0.0
    %4050 = vmatpush1.msra.mxu0 0.0
    %4051 = vmatprep.subr.mxu0 0.0
    %4052 = vmatpush1.msra.mxu0 0.0
    %4053 = vmatprep.subr.mxu0 0.0
    %4054 = vmatpush1.msra.mxu0 0.0
    %4055 = vmatprep.subr.mxu0 0.0
    %4056 = vmatpush1.msra.mxu0 %v3688
    %4057 = vmatprep.subr.mxu0 0.0
    %4058 = vmatpush1.msra.mxu0 %v3687
    %4059 = vmatprep.subr.mxu0 0.0
    %4060 = vmatpush2.msra.mxu0 0.0
    %4061 = vmatprep.subr.mxu0 0.0
    %4062 = vmatpush2.msra.mxu0 0.0
    %4063 = vmatprep.subr.mxu0 0.0
    %4064 = vmatpush2.msra.mxu0 0.0
    %4065 = vmatprep.subr.mxu0 0.0
    %4066 = vmatpush2.msra.mxu0 0.0
    %4067 = vmatprep.subr.mxu0 0.0
    %4068 = vmatpush2.msra.mxu0 0.0
    %4069 = vmatprep.subr.mxu0 0.0
    %4070 = vmatpush2.msra.mxu0 0.0
    %4071 = vmatprep.subr.mxu0 0.0
    %4072 = vmatpush2.msra.mxu0 0.0
    %4073 = vmatprep.subr.mxu0 0.0
    %4074 = vmatpush2.msra.mxu0 0.0
    %4075 = vmatprep.subr.mxu0 0.0
    %4076 = vmatpush2.msra.mxu0 0.0
    %4077 = vmatprep.subr.mxu0 0.0
    %4078 = vmatpush2.msra.mxu0 0.0
    %4079 = vmatprep.subr.mxu0 0.0
    %4080 = vmatpush2.msra.mxu0 0.0
    %4081 = vmatprep.subr.mxu0 0.0
    %4082 = vmatpush2.msra.mxu0 0.0
    %4083 = vmatprep.subr.mxu0 0.0
    %4084 = vmatpush2.msra.mxu0 0.0
    %4085 = vmatprep.subr.mxu0 0.0
    %4086 = vmatpush2.msra.mxu0 0.0
    %4087 = vmatprep.subr.mxu0 0.0
    %4088 = vmatpush2.msra.mxu0 0.0
    %4089 = vmatprep.subr.mxu0 0.0
    %4090 = vmatpush2.msra.mxu0 0.0
    %4091 = vmatprep.mubr.f32.mxu0 0.0
    %4092 = vmatmul.mubr.f32.gmra.mxu0 %v4025
    %v4093 = vpop.f32.mrf.mxu0
    %v4094 = vadd.f32 0.0, %v4093
    %v4095 = vpop.f32.mrf.mxu0
    %4096 = vdwg.mxu0
    %v4098 = vsel %vm67, %v3853, 0
    %4100 = vmatprep.subr.mxu0 0.0
    %4101 = vmatpush1.msra.mxu0 0.0
    %4102 = vmatprep.subr.mxu0 0.0
    %4103 = vmatpush1.msra.mxu0 0.0
    %4104 = vmatprep.subr.mxu0 0.0
    %4105 = vmatpush1.msra.mxu0 0.0
    %4106 = vmatprep.subr.mxu0 0.0
    %4107 = vmatpush1.msra.mxu0 0.0
    %4108 = vmatprep.subr.mxu0 0.0
    %4109 = vmatpush1.msra.mxu0 0.0
    %4110 = vmatprep.subr.mxu0 0.0
    %4111 = vmatpush1.msra.mxu0 0.0
    %4112 = vmatprep.subr.mxu0 0.0
    %4113 = vmatpush1.msra.mxu0 0.0
    %4114 = vmatprep.subr.mxu0 0.0
    %4115 = vmatpush1.msra.mxu0 0.0
    %4116 = vmatprep.subr.mxu0 0.0
    %4117 = vmatpush1.msra.mxu0 0.0
    %4118 = vmatprep.subr.mxu0 0.0
    %4119 = vmatpush1.msra.mxu0 0.0
    %4120 = vmatprep.subr.mxu0 0.0
    %4121 = vmatpush1.msra.mxu0 0.0
    %4122 = vmatprep.subr.mxu0 0.0
    %4123 = vmatpush1.msra.mxu0 0.0
    %4124 = vmatprep.subr.mxu0 0.0
    %4125 = vmatpush1.msra.mxu0 0.0
    %4126 = vmatprep.subr.mxu0 0.0
    %4127 = vmatpush1.msra.mxu0 0.0
    %4128 = vmatprep.subr.mxu0 0.0
    %4129 = vmatpush1.msra.mxu0 %v3686
    %4130 = vmatprep.subr.mxu0 0.0
    %4131 = vmatpush1.msra.mxu0 %v3685
    %4132 = vmatprep.subr.mxu0 0.0
    %4133 = vmatpush2.msra.mxu0 0.0
    %4134 = vmatprep.subr.mxu0 0.0
    %4135 = vmatpush2.msra.mxu0 0.0
    %4136 = vmatprep.subr.mxu0 0.0
    %4137 = vmatpush2.msra.mxu0 0.0
    %4138 = vmatprep.subr.mxu0 0.0
    %4139 = vmatpush2.msra.mxu0 0.0
    %4140 = vmatprep.subr.mxu0 0.0
    %4141 = vmatpush2.msra.mxu0 0.0
    %4142 = vmatprep.subr.mxu0 0.0
    %4143 = vmatpush2.msra.mxu0 0.0
    %4144 = vmatprep.subr.mxu0 0.0
    %4145 = vmatpush2.msra.mxu0 0.0
    %4146 = vmatprep.subr.mxu0 0.0
    %4147 = vmatpush2.msra.mxu0 0.0
    %4148 = vmatprep.subr.mxu0 0.0
    %4149 = vmatpush2.msra.mxu0 0.0
    %4150 = vmatprep.subr.mxu0 0.0
    %4151 = vmatpush2.msra.mxu0 0.0
    %4152 = vmatprep.subr.mxu0 0.0
    %4153 = vmatpush2.msra.mxu0 0.0
    %4154 = vmatprep.subr.mxu0 0.0
    %4155 = vmatpush2.msra.mxu0 0.0
    %4156 = vmatprep.subr.mxu0 0.0
    %4157 = vmatpush2.msra.mxu0 0.0
    %4158 = vmatprep.subr.mxu0 0.0
    %4159 = vmatpush2.msra.mxu0 0.0
    %4160 = vmatprep.subr.mxu0 0.0
    %4161 = vmatpush2.msra.mxu0 0.0
    %4162 = vmatprep.subr.mxu0 0.0
    %4163 = vmatpush2.msra.mxu0 0.0
    %4164 = vmatprep.mubr.f32.mxu0 0.0
    %4165 = vmatmul.mubr.f32.gmra.mxu0 %v4098
    %v4166 = vpop.f32.mrf.mxu0
    %v4167 = vadd.f32 %v4094, %v4166
    %v4168 = vpop.f32.mrf.mxu0
    %4169 = vdwg.mxu0
    %v4170 = vlaneseq
    %v4171 = vshrl.u32 %v4170, 7
    %v4172 = vsub.s32 0, %v4171
    %v4173 = vrot.slane %v3689, %v4172
    %v4174 = vadd.f32 %v4167, %v4173
    %v4175 = vadd.f32 %v1780, %v4174
    %v4176 = vld [vmem:[%s3 + $0x26] sm:$0x1]
    %v4177 = vld [vmem:[%s3 + $0x27] sm:$0x1]
    %v4178 = vsel %vm152, %v4175, 0.0
    %4179 = vadd.xlane.f32.xlu0 %v4178
    %v4180 = vpop.xlane.xlu0 %4179
    %v4181 = vmul.f32 %v4180, %v156
    %v4182 = vsub.f32 %v4175, %v4181
    %v4183 = vmul.f32 %v4182, %v4182
    %v4184 = vsel %vm152, %v4183, 0.0
    %4185 = vadd.xlane.f32.xlu0 %v4184
    %v4186 = vpop.xlane.xlu0 %4185
    %v4187 = vmul.f32 %v4186, %v156
    %v4188 = vadd.f32 %v4187, 1e-05
    %v4189 = vrsqrt.pop %v4188
    %v4190 = vmul.f32 %v4182, %v4189
    %v4191 = vlaneseq
    %v4192 = vshrl.u32 %v4191, 7
    %v4193 = vsub.s32 0, %v4192
    %v4194 = vrot.slane %v4176, %v4193
    %v4195 = vmul.f32 %v4190, %v4194
    %v4196 = vlaneseq
    %v4197 = vshrl.u32 %v4196, 7
    %v4198 = vsub.s32 0, %v4197
    %v4199 = vrot.slane %v4177, %v4198
    %v4200 = vadd.f32 %v4195, %v4199
    %v4201 = vld [vmem:[#allocation2 + $0x298] sm:$0xff]
    %v4202 = vld [vmem:[#allocation2 + $0x2a0] sm:$0xff]
    %v4203 = vld [vmem:[#allocation2 + $0x2a8] sm:$0xff]
    %v4204 = vld [vmem:[#allocation2 + $0x2b0] sm:$0xff]
    %v4205 = vld [vmem:[%s3 + $0x2f] sm:$0x1]
    %v4206 = vlaneseq
    %v4207 = vshrl.u32 %v4206, 7
    %v4208 = vsub.s32 0, %v4207
    %v4209 = vrot.slane %v4205, %v4208
    %v4211 = vsel %vm186, %v4200, 0
    %4213 = vmatprep.subr.mxu0 0.0
    %4214 = vmatpush1.msra.mxu0 0.0
    %4215 = vmatprep.subr.mxu0 0.0
    %4216 = vmatpush1.msra.mxu0 0.0
    %4217 = vmatprep.subr.mxu0 0.0
    %4218 = vmatpush1.msra.mxu0 0.0
    %4219 = vmatprep.subr.mxu0 0.0
    %4220 = vmatpush1.msra.mxu0 0.0
    %4221 = vmatprep.subr.mxu0 0.0
    %4222 = vmatpush1.msra.mxu0 0.0
    %4223 = vmatprep.subr.mxu0 0.0
    %4224 = vmatpush1.msra.mxu0 0.0
    %4225 = vmatprep.subr.mxu0 0.0
    %4226 = vmatpush1.msra.mxu0 0.0
    %4227 = vmatprep.subr.mxu0 0.0
    %4228 = vmatpush1.msra.mxu0 0.0
    %4229 = vmatprep.subr.mxu0 0.0
    %4230 = vmatpush1.msra.mxu0 0.0
    %4231 = vmatprep.subr.mxu0 0.0
    %4232 = vmatpush1.msra.mxu0 0.0
    %4233 = vmatprep.subr.mxu0 0.0
    %4234 = vmatpush1.msra.mxu0 0.0
    %4235 = vmatprep.subr.mxu0 0.0
    %4236 = vmatpush1.msra.mxu0 0.0
    %4237 = vmatprep.subr.mxu0 0.0
    %4238 = vmatpush1.msra.mxu0 %v4204
    %4239 = vmatprep.subr.mxu0 0.0
    %4240 = vmatpush1.msra.mxu0 %v4203
    %4241 = vmatprep.subr.mxu0 0.0
    %4242 = vmatpush1.msra.mxu0 %v4202
    %4243 = vmatprep.subr.mxu0 0.0
    %4244 = vmatpush1.msra.mxu0 %v4201
    %4245 = vmatprep.subr.mxu0 0.0
    %4246 = vmatpush2.msra.mxu0 0.0
    %4247 = vmatprep.subr.mxu0 0.0
    %4248 = vmatpush2.msra.mxu0 0.0
    %4249 = vmatprep.subr.mxu0 0.0
    %4250 = vmatpush2.msra.mxu0 0.0
    %4251 = vmatprep.subr.mxu0 0.0
    %4252 = vmatpush2.msra.mxu0 0.0
    %4253 = vmatprep.subr.mxu0 0.0
    %4254 = vmatpush2.msra.mxu0 0.0
    %4255 = vmatprep.subr.mxu0 0.0
    %4256 = vmatpush2.msra.mxu0 0.0
    %4257 = vmatprep.subr.mxu0 0.0
    %4258 = vmatpush2.msra.mxu0 0.0
    %4259 = vmatprep.subr.mxu0 0.0
    %4260 = vmatpush2.msra.mxu0 0.0
    %4261 = vmatprep.subr.mxu0 0.0
    %4262 = vmatpush2.msra.mxu0 0.0
    %4263 = vmatprep.subr.mxu0 0.0
    %4264 = vmatpush2.msra.mxu0 0.0
    %4265 = vmatprep.subr.mxu0 0.0
    %4266 = vmatpush2.msra.mxu0 0.0
    %4267 = vmatprep.subr.mxu0 0.0
    %4268 = vmatpush2.msra.mxu0 0.0
    %4269 = vmatprep.subr.mxu0 0.0
    %4270 = vmatpush2.msra.mxu0 0.0
    %4271 = vmatprep.subr.mxu0 0.0
    %4272 = vmatpush2.msra.mxu0 0.0
    %4273 = vmatprep.subr.mxu0 0.0
    %4274 = vmatpush2.msra.mxu0 0.0
    %4275 = vmatprep.subr.mxu0 0.0
    %4276 = vmatpush2.msra.mxu0 0.0
    %4277 = vmatprep.mubr.f32.mxu0 0.0
    %4278 = vmatmul.mubr.f32.gmra.mxu0 %v4211
    %v4279 = vpop.f32.mrf.mxu0
    %v4280 = vadd.f32 %v4209, %v4279
    %v4281 = vpop.f32.mrf.mxu0
    %4282 = vdwg.mxu0
    %v4283 = vmul.f32 %v4280, 0.5
    %v4284 = vmul.f32 %v4280, 0.044715
    %v4285 = vmul.f32 %v4284, %v4280
    %v4286 = vmul.f32 %v4285, %v4280
    %v4287 = vadd.f32 %v4280, %v4286
    %v4288 = vmul.f32 %v4287, 0.7978846
    %v4289 = vtanh.pop %v4288
    %v4290 = vadd.f32 %v4289, 1.0
    %v4291 = vmul.f32 %v4283, %v4290
    %v4292 = vld [vmem:[#allocation2 + $0x2b8] sm:$0xff]
    %v4293 = vld [vmem:[#allocation2 + $0x2c0] sm:$0xff]
    %v4294 = vld [vmem:[#allocation2 + $0x2c8] sm:$0xff]
    %v4295 = vld [vmem:[#allocation2 + $0x2d0] sm:$0xff]
    %v4296 = vld [vmem:[%s3 + $0x30] sm:$0x1]
    %v4297 = vlaneseq
    %v4298 = vshrl.u32 %v4297, 7
    %v4299 = vsub.s32 0, %v4298
    %v4300 = vrot.slane %v4296, %v4299
    %v4302 = vsel %vm186, %v4291, 0
    %4304 = vmatprep.subr.mxu0 0.0
    %4305 = vmatpush1.msra.mxu0 0.0
    %4306 = vmatprep.subr.mxu0 0.0
    %4307 = vmatpush1.msra.mxu0 0.0
    %4308 = vmatprep.subr.mxu0 0.0
    %4309 = vmatpush1.msra.mxu0 0.0
    %4310 = vmatprep.subr.mxu0 0.0
    %4311 = vmatpush1.msra.mxu0 0.0
    %4312 = vmatprep.subr.mxu0 0.0
    %4313 = vmatpush1.msra.mxu0 0.0
    %4314 = vmatprep.subr.mxu0 0.0
    %4315 = vmatpush1.msra.mxu0 0.0
    %4316 = vmatprep.subr.mxu0 0.0
    %4317 = vmatpush1.msra.mxu0 0.0
    %4318 = vmatprep.subr.mxu0 0.0
    %4319 = vmatpush1.msra.mxu0 0.0
    %4320 = vmatprep.subr.mxu0 0.0
    %4321 = vmatpush1.msra.mxu0 0.0
    %4322 = vmatprep.subr.mxu0 0.0
    %4323 = vmatpush1.msra.mxu0 0.0
    %4324 = vmatprep.subr.mxu0 0.0
    %4325 = vmatpush1.msra.mxu0 0.0
    %4326 = vmatprep.subr.mxu0 0.0
    %4327 = vmatpush1.msra.mxu0 0.0
    %4328 = vmatprep.subr.mxu0 0.0
    %4329 = vmatpush1.msra.mxu0 %v4295
    %4330 = vmatprep.subr.mxu0 0.0
    %4331 = vmatpush1.msra.mxu0 %v4294
    %4332 = vmatprep.subr.mxu0 0.0
    %4333 = vmatpush1.msra.mxu0 %v4293
    %4334 = vmatprep.subr.mxu0 0.0
    %4335 = vmatpush1.msra.mxu0 %v4292
    %4336 = vmatprep.subr.mxu0 0.0
    %4337 = vmatpush2.msra.mxu0 0.0
    %4338 = vmatprep.subr.mxu0 0.0
    %4339 = vmatpush2.msra.mxu0 0.0
    %4340 = vmatprep.subr.mxu0 0.0
    %4341 = vmatpush2.msra.mxu0 0.0
    %4342 = vmatprep.subr.mxu0 0.0
    %4343 = vmatpush2.msra.mxu0 0.0
    %4344 = vmatprep.subr.mxu0 0.0
    %4345 = vmatpush2.msra.mxu0 0.0
    %4346 = vmatprep.subr.mxu0 0.0
    %4347 = vmatpush2.msra.mxu0 0.0
    %4348 = vmatprep.subr.mxu0 0.0
    %4349 = vmatpush2.msra.mxu0 0.0
    %4350 = vmatprep.subr.mxu0 0.0
    %4351 = vmatpush2.msra.mxu0 0.0
    %4352 = vmatprep.subr.mxu0 0.0
    %4353 = vmatpush2.msra.mxu0 0.0
    %4354 = vmatprep.subr.mxu0 0.0
    %4355 = vmatpush2.msra.mxu0 0.0
    %4356 = vmatprep.subr.mxu0 0.0
    %4357 = vmatpush2.msra.mxu0 0.0
    %4358 = vmatprep.subr.mxu0 0.0
    %4359 = vmatpush2.msra.mxu0 0.0
    %4360 = vmatprep.subr.mxu0 0.0
    %4361 = vmatpush2.msra.mxu0 0.0
    %4362 = vmatprep.subr.mxu0 0.0
    %4363 = vmatpush2.msra.mxu0 0.0
    %4364 = vmatprep.subr.mxu0 0.0
    %4365 = vmatpush2.msra.mxu0 0.0
    %4366 = vmatprep.subr.mxu0 0.0
    %4367 = vmatpush2.msra.mxu0 0.0
    %4368 = vmatprep.mubr.f32.mxu0 0.0
    %4369 = vmatmul.mubr.f32.gmra.mxu0 %v4302
    %v4370 = vpop.f32.mrf.mxu0
    %v4371 = vadd.f32 %v4300, %v4370
    %v4372 = vpop.f32.mrf.mxu0
    %4373 = vdwg.mxu0
    %v4374 = vadd.f32 %v4200, %v4371
    %v4375 = vld [vmem:[%s3 + $0x28] sm:$0x1]
    %v4376 = vld [vmem:[%s3 + $0x29] sm:$0x1]
    %v4377 = vsel %vm152, %v4374, 0.0
    %4378 = vadd.xlane.f32.xlu0 %v4377
    %v4379 = vpop.xlane.xlu0 %4378
    %v4380 = vmul.f32 %v4379, %v156
    %v4381 = vsub.f32 %v4374, %v4380
    %v4382 = vmul.f32 %v4381, %v4381
    %v4383 = vsel %vm152, %v4382, 0.0
    %4384 = vadd.xlane.f32.xlu0 %v4383
    %v4385 = vpop.xlane.xlu0 %4384
    %v4386 = vmul.f32 %v4385, %v156
    %v4387 = vadd.f32 %v4386, 1e-05
    %v4388 = vrsqrt.pop %v4387
    %v4389 = vmul.f32 %v4381, %v4388
    %v4390 = vlaneseq
    %v4391 = vshrl.u32 %v4390, 7
    %v4392 = vsub.s32 0, %v4391
    %v4393 = vrot.slane %v4375, %v4392
    %v4394 = vmul.f32 %v4389, %v4393
    %v4395 = vlaneseq
    %v4396 = vshrl.u32 %v4395, 7
    %v4397 = vsub.s32 0, %v4396
    %v4398 = vrot.slane %v4376, %v4397
    %v4399 = vadd.f32 %v4394, %v4398
    %v4400 = vld [vmem:[#allocation2 + $0x2d8] sm:$0xff]
    %v4401 = vld [vmem:[#allocation2 + $0x2e0] sm:$0xff]
    %v4402 = vld [vmem:[#allocation2 + $0x2e8] sm:$0xff]
    %v4403 = vld [vmem:[#allocation2 + $0x2f0] sm:$0xff]
    %v4404 = vld [vmem:[%s3 + $0x37] sm:$0x1]
    %v4405 = vlaneseq
    %v4406 = vshrl.u32 %v4405, 7
    %v4407 = vsub.s32 0, %v4406
    %v4408 = vrot.slane %v4404, %v4407
    %v4410 = vsel %vm186, %v4399, 0
    %4412 = vmatprep.subr.mxu0 0.0
    %4413 = vmatpush1.msra.mxu0 0.0
    %4414 = vmatprep.subr.mxu0 0.0
    %4415 = vmatpush1.msra.mxu0 0.0
    %4416 = vmatprep.subr.mxu0 0.0
    %4417 = vmatpush1.msra.mxu0 0.0
    %4418 = vmatprep.subr.mxu0 0.0
    %4419 = vmatpush1.msra.mxu0 0.0
    %4420 = vmatprep.subr.mxu0 0.0
    %4421 = vmatpush1.msra.mxu0 0.0
    %4422 = vmatprep.subr.mxu0 0.0
    %4423 = vmatpush1.msra.mxu0 0.0
    %4424 = vmatprep.subr.mxu0 0.0
    %4425 = vmatpush1.msra.mxu0 0.0
    %4426 = vmatprep.subr.mxu0 0.0
    %4427 = vmatpush1.msra.mxu0 0.0
    %4428 = vmatprep.subr.mxu0 0.0
    %4429 = vmatpush1.msra.mxu0 0.0
    %4430 = vmatprep.subr.mxu0 0.0
    %4431 = vmatpush1.msra.mxu0 0.0
    %4432 = vmatprep.subr.mxu0 0.0
    %4433 = vmatpush1.msra.mxu0 0.0
    %4434 = vmatprep.subr.mxu0 0.0
    %4435 = vmatpush1.msra.mxu0 0.0
    %4436 = vmatprep.subr.mxu0 0.0
    %4437 = vmatpush1.msra.mxu0 %v4403
    %4438 = vmatprep.subr.mxu0 0.0
    %4439 = vmatpush1.msra.mxu0 %v4402
    %4440 = vmatprep.subr.mxu0 0.0
    %4441 = vmatpush1.msra.mxu0 %v4401
    %4442 = vmatprep.subr.mxu0 0.0
    %4443 = vmatpush1.msra.mxu0 %v4400
    %4444 = vmatprep.subr.mxu0 0.0
    %4445 = vmatpush2.msra.mxu0 0.0
    %4446 = vmatprep.subr.mxu0 0.0
    %4447 = vmatpush2.msra.mxu0 0.0
    %4448 = vmatprep.subr.mxu0 0.0
    %4449 = vmatpush2.msra.mxu0 0.0
    %4450 = vmatprep.subr.mxu0 0.0
    %4451 = vmatpush2.msra.mxu0 0.0
    %4452 = vmatprep.subr.mxu0 0.0
    %4453 = vmatpush2.msra.mxu0 0.0
    %4454 = vmatprep.subr.mxu0 0.0
    %4455 = vmatpush2.msra.mxu0 0.0
    %4456 = vmatprep.subr.mxu0 0.0
    %4457 = vmatpush2.msra.mxu0 0.0
    %4458 = vmatprep.subr.mxu0 0.0
    %4459 = vmatpush2.msra.mxu0 0.0
    %4460 = vmatprep.subr.mxu0 0.0
    %4461 = vmatpush2.msra.mxu0 0.0
    %4462 = vmatprep.subr.mxu0 0.0
    %4463 = vmatpush2.msra.mxu0 0.0
    %4464 = vmatprep.subr.mxu0 0.0
    %4465 = vmatpush2.msra.mxu0 0.0
    %4466 = vmatprep.subr.mxu0 0.0
    %4467 = vmatpush2.msra.mxu0 0.0
    %4468 = vmatprep.subr.mxu0 0.0
    %4469 = vmatpush2.msra.mxu0 0.0
    %4470 = vmatprep.subr.mxu0 0.0
    %4471 = vmatpush2.msra.mxu0 0.0
    %4472 = vmatprep.subr.mxu0 0.0
    %4473 = vmatpush2.msra.mxu0 0.0
    %4474 = vmatprep.subr.mxu0 0.0
    %4475 = vmatpush2.msra.mxu0 0.0
    %4476 = vmatprep.mubr.f32.mxu0 0.0
    %4477 = vmatmul.mubr.f32.gmra.mxu0 %v4410
    %v4478 = vpop.f32.mrf.mxu0
    %v4479 = vadd.f32 %v4408, %v4478
    %v4480 = vpop.f32.mrf.mxu0
    %4481 = vdwg.mxu0
    %v4482 = vld [vmem:[#allocation2 + $0x2f8] sm:$0xff]
    %v4483 = vld [vmem:[#allocation2 + $0x300] sm:$0xff]
    %v4484 = vld [vmem:[#allocation2 + $0x308] sm:$0xff]
    %v4485 = vld [vmem:[#allocation2 + $0x310] sm:$0xff]
    %v4486 = vld [vmem:[%s3 + $0x38] sm:$0x1]
    %4488 = vrot.lane.b32.xlu0 %v4479, 96
    %v4489 = vpop.permute.xlu0 %4488
    %v4490 = vsel %vm67, %v4479, 0
    %v4492 = vsel %vm67, %v4489, 0
    %4494 = vmatprep.subr.mxu0 0.0
    %4495 = vmatpush1.xpose.msra.mxu0 0.0
    %4496 = vmatprep.subr.mxu0 0.0
    %4497 = vmatpush1.xpose.msra.mxu0 0.0
    %4498 = vmatprep.subr.mxu0 0.0
    %4499 = vmatpush1.xpose.msra.mxu0 0.0
    %4500 = vmatprep.subr.mxu0 0.0
    %4501 = vmatpush1.xpose.msra.mxu0 0.0
    %4502 = vmatprep.subr.mxu0 0.0
    %4503 = vmatpush1.xpose.msra.mxu0 0.0
    %4504 = vmatprep.subr.mxu0 0.0
    %4505 = vmatpush1.xpose.msra.mxu0 0.0
    %4506 = vmatprep.subr.mxu0 0.0
    %4507 = vmatpush1.xpose.msra.mxu0 0.0
    %4508 = vmatprep.subr.mxu0 0.0
    %4509 = vmatpush1.xpose.msra.mxu0 0.0
    %4510 = vmatprep.subr.mxu0 0.0
    %4511 = vmatpush1.xpose.msra.mxu0 0.0
    %4512 = vmatprep.subr.mxu0 0.0
    %4513 = vmatpush1.xpose.msra.mxu0 0.0
    %4514 = vmatprep.subr.mxu0 0.0
    %4515 = vmatpush1.xpose.msra.mxu0 0.0
    %4516 = vmatprep.subr.mxu0 0.0
    %4517 = vmatpush1.xpose.msra.mxu0 0.0
    %4518 = vmatprep.subr.mxu0 0.0
    %4519 = vmatpush1.xpose.msra.mxu0 0.0
    %4520 = vmatprep.subr.mxu0 0.0
    %4521 = vmatpush1.xpose.msra.mxu0 0.0
    %4522 = vmatprep.subr.mxu0 0.0
    %4523 = vmatpush1.xpose.msra.mxu0 0.0
    %4524 = vmatprep.subr.mxu0 0.0
    %4525 = vmatpush1.xpose.msra.mxu0 %v4492
    %4526 = vmatprep.subr.mxu0 0.0
    %4527 = vmatpush2.xpose.msra.mxu0 0.0
    %4528 = vmatprep.subr.mxu0 0.0
    %4529 = vmatpush2.xpose.msra.mxu0 0.0
    %4530 = vmatprep.subr.mxu0 0.0
    %4531 = vmatpush2.xpose.msra.mxu0 0.0
    %4532 = vmatprep.subr.mxu0 0.0
    %4533 = vmatpush2.xpose.msra.mxu0 0.0
    %4534 = vmatprep.subr.mxu0 0.0
    %4535 = vmatpush2.xpose.msra.mxu0 0.0
    %4536 = vmatprep.subr.mxu0 0.0
    %4537 = vmatpush2.xpose.msra.mxu0 0.0
    %4538 = vmatprep.subr.mxu0 0.0
    %4539 = vmatpush2.xpose.msra.mxu0 0.0
    %4540 = vmatprep.subr.mxu0 0.0
    %4541 = vmatpush2.xpose.msra.mxu0 0.0
    %4542 = vmatprep.subr.mxu0 0.0
    %4543 = vmatpush2.xpose.msra.mxu0 0.0
    %4544 = vmatprep.subr.mxu0 0.0
    %4545 = vmatpush2.xpose.msra.mxu0 0.0
    %4546 = vmatprep.subr.mxu0 0.0
    %4547 = vmatpush2.xpose.msra.mxu0 0.0
    %4548 = vmatprep.subr.mxu0 0.0
    %4549 = vmatpush2.xpose.msra.mxu0 0.0
    %4550 = vmatprep.subr.mxu0 0.0
    %4551 = vmatpush2.xpose.msra.mxu0 0.0
    %4552 = vmatprep.subr.mxu0 0.0
    %4553 = vmatpush2.xpose.msra.mxu0 0.0
    %4554 = vmatprep.subr.mxu0 0.0
    %4555 = vmatpush2.xpose.msra.mxu0 0.0
    %4556 = vmatprep.subr.mxu0 0.0
    %4557 = vmatpush2.xpose.msra.mxu0 0.0
    %4558 = vmatprep.mubr.f32.mxu0 0.0
    %4559 = vmatmul.mubr.f32.gmra.mxu0 %v4490
    %v4560 = vpop.f32.mrf.mxu0
    %v4561 = vadd.f32 0.0, %v4560
    %v4562 = vpop.f32.mrf.mxu0
    %4563 = vdwg.mxu0
    %v4564 = vmul.f32 %v4561, 0.25
    %v4565 = vadd.f32 %v4564, %v3088
    %v4566 = vsel %vm348, %v4565, -inf
    %4567 = vmax.xlane.f32.xlu0 %v4566
    %v4568 = vpop.xlane.xlu0 %4567
    %v4569 = vsub.f32 %v4565, %v4568
    %v4570 = vmul.f32 %v4569, 1.442695
    %v4571 = vpow.pop %v4570
    %v4572 = vsel %vm348, %v4571, 0.0
    %4573 = vadd.xlane.f32.xlu0 %v4572
    %v4574 = vpop.xlane.xlu0 %4573
    %v4575 = vrcp.pop %v4574
    %v4576 = vmul.f32 %v4571, %v4575
    %4577 = vrot.lane.b32.xlu0 %v4479, 64
    %v4578 = vpop.permute.xlu0 %4577
    %v4580 = vsel %vm362, %v4576, 0
    %v4582 = vsel %vm366, %v4578, 0
    %4584 = vmatprep.subr.mxu0 0.0
    %4585 = vmatpush1.msra.mxu0 0.0
    %4586 = vmatprep.subr.mxu0 0.0
    %4587 = vmatpush1.msra.mxu0 0.0
    %4588 = vmatprep.subr.mxu0 0.0
    %4589 = vmatpush1.msra.mxu0 0.0
    %4590 = vmatprep.subr.mxu0 0.0
    %4591 = vmatpush1.msra.mxu0 0.0
    %4592 = vmatprep.subr.mxu0 0.0
    %4593 = vmatpush1.msra.mxu0 0.0
    %4594 = vmatprep.subr.mxu0 0.0
    %4595 = vmatpush1.msra.mxu0 0.0
    %4596 = vmatprep.subr.mxu0 0.0
    %4597 = vmatpush1.msra.mxu0 0.0
    %4598 = vmatprep.subr.mxu0 0.0
    %4599 = vmatpush1.msra.mxu0 0.0
    %4600 = vmatprep.subr.mxu0 0.0
    %4601 = vmatpush1.msra.mxu0 0.0
    %4602 = vmatprep.subr.mxu0 0.0
    %4603 = vmatpush1.msra.mxu0 0.0
    %4604 = vmatprep.subr.mxu0 0.0
    %4605 = vmatpush1.msra.mxu0 0.0
    %4606 = vmatprep.subr.mxu0 0.0
    %4607 = vmatpush1.msra.mxu0 0.0
    %4608 = vmatprep.subr.mxu0 0.0
    %4609 = vmatpush1.msra.mxu0 0.0
    %4610 = vmatprep.subr.mxu0 0.0
    %4611 = vmatpush1.msra.mxu0 0.0
    %4612 = vmatprep.subr.mxu0 0.0
    %4613 = vmatpush1.msra.mxu0 0.0
    %4614 = vmatprep.subr.mxu0 0.0
    %4615 = vmatpush1.msra.mxu0 %v4582
    %4616 = vmatprep.subr.mxu0 0.0
    %4617 = vmatpush2.msra.mxu0 0.0
    %4618 = vmatprep.subr.mxu0 0.0
    %4619 = vmatpush2.msra.mxu0 0.0
    %4620 = vmatprep.subr.mxu0 0.0
    %4621 = vmatpush2.msra.mxu0 0.0
    %4622 = vmatprep.subr.mxu0 0.0
    %4623 = vmatpush2.msra.mxu0 0.0
    %4624 = vmatprep.subr.mxu0 0.0
    %4625 = vmatpush2.msra.mxu0 0.0
    %4626 = vmatprep.subr.mxu0 0.0
    %4627 = vmatpush2.msra.mxu0 0.0
    %4628 = vmatprep.subr.mxu0 0.0
    %4629 = vmatpush2.msra.mxu0 0.0
    %4630 = vmatprep.subr.mxu0 0.0
    %4631 = vmatpush2.msra.mxu0 0.0
    %4632 = vmatprep.subr.mxu0 0.0
    %4633 = vmatpush2.msra.mxu0 0.0
    %4634 = vmatprep.subr.mxu0 0.0
    %4635 = vmatpush2.msra.mxu0 0.0
    %4636 = vmatprep.subr.mxu0 0.0
    %4637 = vmatpush2.msra.mxu0 0.0
    %4638 = vmatprep.subr.mxu0 0.0
    %4639 = vmatpush2.msra.mxu0 0.0
    %4640 = vmatprep.subr.mxu0 0.0
    %4641 = vmatpush2.msra.mxu0 0.0
    %4642 = vmatprep.subr.mxu0 0.0
    %4643 = vmatpush2.msra.mxu0 0.0
    %4644 = vmatprep.subr.mxu0 0.0
    %4645 = vmatpush2.msra.mxu0 0.0
    %4646 = vmatprep.subr.mxu0 0.0
    %4647 = vmatpush2.msra.mxu0 0.0
    %4648 = vmatprep.mubr.f32.mxu0 0.0
    %4649 = vmatmul.mubr.f32.gmra.mxu0 %v4580
    %v4650 = vpop.f32.mrf.mxu0
    %v4651 = vadd.f32 0.0, %v4650
    %v4652 = vpop.f32.mrf.mxu0
    %4653 = vdwg.mxu0
    %4654 = vrot.lane.b32.xlu0 %v4479, 112
    %v4655 = vpop.permute.xlu0 %4654
    %4656 = vrot.lane.b32.xlu0 %v4479, 80
    %v4657 = vpop.permute.xlu0 %4656
    %v4658 = vsel %vm67, %v4655, 0
    %v4660 = vsel %vm67, %v4657, 0
    %4662 = vmatprep.subr.mxu0 0.0
    %4663 = vmatpush1.xpose.msra.mxu0 0.0
    %4664 = vmatprep.subr.mxu0 0.0
    %4665 = vmatpush1.xpose.msra.mxu0 0.0
    %4666 = vmatprep.subr.mxu0 0.0
    %4667 = vmatpush1.xpose.msra.mxu0 0.0
    %4668 = vmatprep.subr.mxu0 0.0
    %4669 = vmatpush1.xpose.msra.mxu0 0.0
    %4670 = vmatprep.subr.mxu0 0.0
    %4671 = vmatpush1.xpose.msra.mxu0 0.0
    %4672 = vmatprep.subr.mxu0 0.0
    %4673 = vmatpush1.xpose.msra.mxu0 0.0
    %4674 = vmatprep.subr.mxu0 0.0
    %4675 = vmatpush1.xpose.msra.mxu0 0.0
    %4676 = vmatprep.subr.mxu0 0.0
    %4677 = vmatpush1.xpose.msra.mxu0 0.0
    %4678 = vmatprep.subr.mxu0 0.0
    %4679 = vmatpush1.xpose.msra.mxu0 0.0
    %4680 = vmatprep.subr.mxu0 0.0
    %4681 = vmatpush1.xpose.msra.mxu0 0.0
    %4682 = vmatprep.subr.mxu0 0.0
    %4683 = vmatpush1.xpose.msra.mxu0 0.0
    %4684 = vmatprep.subr.mxu0 0.0
    %4685 = vmatpush1.xpose.msra.mxu0 0.0
    %4686 = vmatprep.subr.mxu0 0.0
    %4687 = vmatpush1.xpose.msra.mxu0 0.0
    %4688 = vmatprep.subr.mxu0 0.0
    %4689 = vmatpush1.xpose.msra.mxu0 0.0
    %4690 = vmatprep.subr.mxu0 0.0
    %4691 = vmatpush1.xpose.msra.mxu0 0.0
    %4692 = vmatprep.subr.mxu0 0.0
    %4693 = vmatpush1.xpose.msra.mxu0 %v4660
    %4694 = vmatprep.subr.mxu0 0.0
    %4695 = vmatpush2.xpose.msra.mxu0 0.0
    %4696 = vmatprep.subr.mxu0 0.0
    %4697 = vmatpush2.xpose.msra.mxu0 0.0
    %4698 = vmatprep.subr.mxu0 0.0
    %4699 = vmatpush2.xpose.msra.mxu0 0.0
    %4700 = vmatprep.subr.mxu0 0.0
    %4701 = vmatpush2.xpose.msra.mxu0 0.0
    %4702 = vmatprep.subr.mxu0 0.0
    %4703 = vmatpush2.xpose.msra.mxu0 0.0
    %4704 = vmatprep.subr.mxu0 0.0
    %4705 = vmatpush2.xpose.msra.mxu0 0.0
    %4706 = vmatprep.subr.mxu0 0.0
    %4707 = vmatpush2.xpose.msra.mxu0 0.0
    %4708 = vmatprep.subr.mxu0 0.0
    %4709 = vmatpush2.xpose.msra.mxu0 0.0
    %4710 = vmatprep.subr.mxu0 0.0
    %4711 = vmatpush2.xpose.msra.mxu0 0.0
    %4712 = vmatprep.subr.mxu0 0.0
    %4713 = vmatpush2.xpose.msra.mxu0 0.0
    %4714 = vmatprep.subr.mxu0 0.0
    %4715 = vmatpush2.xpose.msra.mxu0 0.0
    %4716 = vmatprep.subr.mxu0 0.0
    %4717 = vmatpush2.xpose.msra.mxu0 0.0
    %4718 = vmatprep.subr.mxu0 0.0
    %4719 = vmatpush2.xpose.msra.mxu0 0.0
    %4720 = vmatprep.subr.mxu0 0.0
    %4721 = vmatpush2.xpose.msra.mxu0 0.0
    %4722 = vmatprep.subr.mxu0 0.0
    %4723 = vmatpush2.xpose.msra.mxu0 0.0
    %4724 = vmatprep.subr.mxu0 0.0
    %4725 = vmatpush2.xpose.msra.mxu0 0.0
    %4726 = vmatprep.mubr.f32.mxu0 0.0
    %4727 = vmatmul.mubr.f32.gmra.mxu0 %v4658
    %v4728 = vpop.f32.mrf.mxu0
    %v4729 = vadd.f32 0.0, %v4728
    %v4730 = vpop.f32.mrf.mxu0
    %4731 = vdwg.mxu0
    %v4732 = vmul.f32 %v4729, 0.25
    %v4733 = vadd.f32 %v4732, %v3088
    %v4734 = vsel %vm348, %v4733, -inf
    %4735 = vmax.xlane.f32.xlu0 %v4734
    %v4736 = vpop.xlane.xlu0 %4735
    %v4737 = vsub.f32 %v4733, %v4736
    %v4738 = vmul.f32 %v4737, 1.442695
    %v4739 = vpow.pop %v4738
    %v4740 = vsel %vm348, %v4739, 0.0
    %4741 = vadd.xlane.f32.xlu0 %v4740
    %v4742 = vpop.xlane.xlu0 %4741
    %v4743 = vrcp.pop %v4742
    %v4744 = vmul.f32 %v4739, %v4743
    %4745 = vrot.lane.b32.xlu0 %v4479, 48
    %v4746 = vpop.permute.xlu0 %4745
    %v4748 = vsel %vm362, %v4744, 0
    %v4750 = vsel %vm366, %v4746, 0
    %4752 = vmatprep.subr.mxu0 0.0
    %4753 = vmatpush1.msra.mxu0 0.0
    %4754 = vmatprep.subr.mxu0 0.0
    %4755 = vmatpush1.msra.mxu0 0.0
    %4756 = vmatprep.subr.mxu0 0.0
    %4757 = vmatpush1.msra.mxu0 0.0
    %4758 = vmatprep.subr.mxu0 0.0
    %4759 = vmatpush1.msra.mxu0 0.0
    %4760 = vmatprep.subr.mxu0 0.0
    %4761 = vmatpush1.msra.mxu0 0.0
    %4762 = vmatprep.subr.mxu0 0.0
    %4763 = vmatpush1.msra.mxu0 0.0
    %4764 = vmatprep.subr.mxu0 0.0
    %4765 = vmatpush1.msra.mxu0 0.0
    %4766 = vmatprep.subr.mxu0 0.0
    %4767 = vmatpush1.msra.mxu0 0.0
    %4768 = vmatprep.subr.mxu0 0.0
    %4769 = vmatpush1.msra.mxu0 0.0
    %4770 = vmatprep.subr.mxu0 0.0
    %4771 = vmatpush1.msra.mxu0 0.0
    %4772 = vmatprep.subr.mxu0 0.0
    %4773 = vmatpush1.msra.mxu0 0.0
    %4774 = vmatprep.subr.mxu0 0.0
    %4775 = vmatpush1.msra.mxu0 0.0
    %4776 = vmatprep.subr.mxu0 0.0
    %4777 = vmatpush1.msra.mxu0 0.0
    %4778 = vmatprep.subr.mxu0 0.0
    %4779 = vmatpush1.msra.mxu0 0.0
    %4780 = vmatprep.subr.mxu0 0.0
    %4781 = vmatpush1.msra.mxu0 0.0
    %4782 = vmatprep.subr.mxu0 0.0
    %4783 = vmatpush1.msra.mxu0 %v4750
    %4784 = vmatprep.subr.mxu0 0.0
    %4785 = vmatpush2.msra.mxu0 0.0
    %4786 = vmatprep.subr.mxu0 0.0
    %4787 = vmatpush2.msra.mxu0 0.0
    %4788 = vmatprep.subr.mxu0 0.0
    %4789 = vmatpush2.msra.mxu0 0.0
    %4790 = vmatprep.subr.mxu0 0.0
    %4791 = vmatpush2.msra.mxu0 0.0
    %4792 = vmatprep.subr.mxu0 0.0
    %4793 = vmatpush2.msra.mxu0 0.0
    %4794 = vmatprep.subr.mxu0 0.0
    %4795 = vmatpush2.msra.mxu0 0.0
    %4796 = vmatprep.subr.mxu0 0.0
    %4797 = vmatpush2.msra.mxu0 0.0
    %4798 = vmatprep.subr.mxu0 0.0
    %4799 = vmatpush2.msra.mxu0 0.0
    %4800 = vmatprep.subr.mxu0 0.0
    %4801 = vmatpush2.msra.mxu0 0.0
    %4802 = vmatprep.subr.mxu0 0.0
    %4803 = vmatpush2.msra.mxu0 0.0
    %4804 = vmatprep.subr.mxu0 0.0
    %4805 = vmatpush2.msra.mxu0 0.0
    %4806 = vmatprep.subr.mxu0 0.0
    %4807 = vmatpush2.msra.mxu0 0.0
    %4808 = vmatprep.subr.mxu0 0.0
    %4809 = vmatpush2.msra.mxu0 0.0
    %4810 = vmatprep.subr.mxu0 0.0
    %4811 = vmatpush2.msra.mxu0 0.0
    %4812 = vmatprep.subr.mxu0 0.0
    %4813 = vmatpush2.msra.mxu0 0.0
    %4814 = vmatprep.subr.mxu0 0.0
    %4815 = vmatpush2.msra.mxu0 0.0
    %4816 = vmatprep.mubr.f32.mxu0 0.0
    %4817 = vmatmul.mubr.f32.gmra.mxu0 %v4748
    %v4818 = vpop.f32.mrf.mxu0
    %v4819 = vadd.f32 0.0, %v4818
    %v4820 = vpop.f32.mrf.mxu0
    %4821 = vdwg.mxu0
    %v4823 = vsel %vm67, %v4819, 0
    %4825 = vmatprep.subr.mxu0 0.0
    %4826 = vmatpush1.msra.mxu0 0.0
    %4827 = vmatprep.subr.mxu0 0.0
    %4828 = vmatpush1.msra.mxu0 0.0
    %4829 = vmatprep.subr.mxu0 0.0
    %4830 = vmatpush1.msra.mxu0 0.0
    %4831 = vmatprep.subr.mxu0 0.0
    %4832 = vmatpush1.msra.mxu0 0.0
    %4833 = vmatprep.subr.mxu0 0.0
    %4834 = vmatpush1.msra.mxu0 0.0
    %4835 = vmatprep.subr.mxu0 0.0
    %4836 = vmatpush1.msra.mxu0 0.0
    %4837 = vmatprep.subr.mxu0 0.0
    %4838 = vmatpush1.msra.mxu0 0.0
    %4839 = vmatprep.subr.mxu0 0.0
    %4840 = vmatpush1.msra.mxu0 0.0
    %4841 = vmatprep.subr.mxu0 0.0
    %4842 = vmatpush1.msra.mxu0 0.0
    %4843 = vmatprep.subr.mxu0 0.0
    %4844 = vmatpush1.msra.mxu0 0.0
    %4845 = vmatprep.subr.mxu0 0.0
    %4846 = vmatpush1.msra.mxu0 0.0
    %4847 = vmatprep.subr.mxu0 0.0
    %4848 = vmatpush1.msra.mxu0 0.0
    %4849 = vmatprep.subr.mxu0 0.0
    %4850 = vmatpush1.msra.mxu0 0.0
    %4851 = vmatprep.subr.mxu0 0.0
    %4852 = vmatpush1.msra.mxu0 0.0
    %4853 = vmatprep.subr.mxu0 0.0
    %4854 = vmatpush1.msra.mxu0 %v4485
    %4855 = vmatprep.subr.mxu0 0.0
    %4856 = vmatpush1.msra.mxu0 %v4484
    %4857 = vmatprep.subr.mxu0 0.0
    %4858 = vmatpush2.msra.mxu0 0.0
    %4859 = vmatprep.subr.mxu0 0.0
    %4860 = vmatpush2.msra.mxu0 0.0
    %4861 = vmatprep.subr.mxu0 0.0
    %4862 = vmatpush2.msra.mxu0 0.0
    %4863 = vmatprep.subr.mxu0 0.0
    %4864 = vmatpush2.msra.mxu0 0.0
    %4865 = vmatprep.subr.mxu0 0.0
    %4866 = vmatpush2.msra.mxu0 0.0
    %4867 = vmatprep.subr.mxu0 0.0
    %4868 = vmatpush2.msra.mxu0 0.0
    %4869 = vmatprep.subr.mxu0 0.0
    %4870 = vmatpush2.msra.mxu0 0.0
    %4871 = vmatprep.subr.mxu0 0.0
    %4872 = vmatpush2.msra.mxu0 0.0
    %4873 = vmatprep.subr.mxu0 0.0
    %4874 = vmatpush2.msra.mxu0 0.0
    %4875 = vmatprep.subr.mxu0 0.0
    %4876 = vmatpush2.msra.mxu0 0.0
    %4877 = vmatprep.subr.mxu0 0.0
    %4878 = vmatpush2.msra.mxu0 0.0
    %4879 = vmatprep.subr.mxu0 0.0
    %4880 = vmatpush2.msra.mxu0 0.0
    %4881 = vmatprep.subr.mxu0 0.0
    %4882 = vmatpush2.msra.mxu0 0.0
    %4883 = vmatprep.subr.mxu0 0.0
    %4884 = vmatpush2.msra.mxu0 0.0
    %4885 = vmatprep.subr.mxu0 0.0
    %4886 = vmatpush2.msra.mxu0 0.0
    %4887 = vmatprep.subr.mxu0 0.0
    %4888 = vmatpush2.msra.mxu0 0.0
    %4889 = vmatprep.mubr.f32.mxu0 0.0
    %4890 = vmatmul.mubr.f32.gmra.mxu0 %v4823
    %v4891 = vpop.f32.mrf.mxu0
    %v4892 = vadd.f32 0.0, %v4891
    %v4893 = vpop.f32.mrf.mxu0
    %4894 = vdwg.mxu0
    %v4896 = vsel %vm67, %v4651, 0
    %4898 = vmatprep.subr.mxu0 0.0
    %4899 = vmatpush1.msra.mxu0 0.0
    %4900 = vmatprep.subr.mxu0 0.0
    %4901 = vmatpush1.msra.mxu0 0.0
    %4902 = vmatprep.subr.mxu0 0.0
    %4903 = vmatpush1.msra.mxu0 0.0
    %4904 = vmatprep.subr.mxu0 0.0
    %4905 = vmatpush1.msra.mxu0 0.0
    %4906 = vmatprep.subr.mxu0 0.0
    %4907 = vmatpush1.msra.mxu0 0.0
    %4908 = vmatprep.subr.mxu0 0.0
    %4909 = vmatpush1.msra.mxu0 0.0
    %4910 = vmatprep.subr.mxu0 0.0
    %4911 = vmatpush1.msra.mxu0 0.0
    %4912 = vmatprep.subr.mxu0 0.0
    %4913 = vmatpush1.msra.mxu0 0.0
    %4914 = vmatprep.subr.mxu0 0.0
    %4915 = vmatpush1.msra.mxu0 0.0
    %4916 = vmatprep.subr.mxu0 0.0
    %4917 = vmatpush1.msra.mxu0 0.0
    %4918 = vmatprep.subr.mxu0 0.0
    %4919 = vmatpush1.msra.mxu0 0.0
    %4920 = vmatprep.subr.mxu0 0.0
    %4921 = vmatpush1.msra.mxu0 0.0
    %4922 = vmatprep.subr.mxu0 0.0
    %4923 = vmatpush1.msra.mxu0 0.0
    %4924 = vmatprep.subr.mxu0 0.0
    %4925 = vmatpush1.msra.mxu0 0.0
    %4926 = vmatprep.subr.mxu0 0.0
    %4927 = vmatpush1.msra.mxu0 %v4483
    %4928 = vmatprep.subr.mxu0 0.0
    %4929 = vmatpush1.msra.mxu0 %v4482
    %4930 = vmatprep.subr.mxu0 0.0
    %4931 = vmatpush2.msra.mxu0 0.0
    %4932 = vmatprep.subr.mxu0 0.0
    %4933 = vmatpush2.msra.mxu0 0.0
    %4934 = vmatprep.subr.mxu0 0.0
    %4935 = vmatpush2.msra.mxu0 0.0
    %4936 = vmatprep.subr.mxu0 0.0
    %4937 = vmatpush2.msra.mxu0 0.0
    %4938 = vmatprep.subr.mxu0 0.0
    %4939 = vmatpush2.msra.mxu0 0.0
    %4940 = vmatprep.subr.mxu0 0.0
    %4941 = vmatpush2.msra.mxu0 0.0
    %4942 = vmatprep.subr.mxu0 0.0
    %4943 = vmatpush2.msra.mxu0 0.0
    %4944 = vmatprep.subr.mxu0 0.0
    %4945 = vmatpush2.msra.mxu0 0.0
    %4946 = vmatprep.subr.mxu0 0.0
    %4947 = vmatpush2.msra.mxu0 0.0
    %4948 = vmatprep.subr.mxu0 0.0
    %4949 = vmatpush2.msra.mxu0 0.0
    %4950 = vmatprep.subr.mxu0 0.0
    %4951 = vmatpush2.msra.mxu0 0.0
    %4952 = vmatprep.subr.mxu0 0.0
    %4953 = vmatpush2.msra.mxu0 0.0
    %4954 = vmatprep.subr.mxu0 0.0
    %4955 = vmatpush2.msra.mxu0 0.0
    %4956 = vmatprep.subr.mxu0 0.0
    %4957 = vmatpush2.msra.mxu0 0.0
    %4958 = vmatprep.subr.mxu0 0.0
    %4959 = vmatpush2.msra.mxu0 0.0
    %4960 = vmatprep.subr.mxu0 0.0
    %4961 = vmatpush2.msra.mxu0 0.0
    %4962 = vmatprep.mubr.f32.mxu0 0.0
    %4963 = vmatmul.mubr.f32.gmra.mxu0 %v4896
    %v4964 = vpop.f32.mrf.mxu0
    %v4965 = vadd.f32 %v4892, %v4964
    %v4966 = vpop.f32.mrf.mxu0
    %4967 = vdwg.mxu0
    %v4968 = vlaneseq
    %v4969 = vshrl.u32 %v4968, 7
    %v4970 = vsub.s32 0, %v4969
    %v4971 = vrot.slane %v4486, %v4970
    %v4972 = vadd.f32 %v4965, %v4971
    %v4973 = vadd.f32 %v4399, %v4972
    %v4974 = vld [vmem:[%s3 + $0x31] sm:$0x1]
    %v4975 = vld [vmem:[%s3 + $0x32] sm:$0x1]
    %v4976 = vsel %vm152, %v4973, 0.0
    %4977 = vadd.xlane.f32.xlu0 %v4976
    %v4978 = vpop.xlane.xlu0 %4977
    %v4979 = vmul.f32 %v4978, %v156
    %v4980 = vsub.f32 %v4973, %v4979
    %v4981 = vmul.f32 %v4980, %v4980
    %v4982 = vsel %vm152, %v4981, 0.0
    %4983 = vadd.xlane.f32.xlu0 %v4982
    %v4984 = vpop.xlane.xlu0 %4983
    %v4985 = vmul.f32 %v4984, %v156
    %v4986 = vadd.f32 %v4985, 1e-05
    %v4987 = vrsqrt.pop %v4986
    %v4988 = vmul.f32 %v4980, %v4987
    %v4989 = vlaneseq
    %v4990 = vshrl.u32 %v4989, 7
    %v4991 = vsub.s32 0, %v4990
    %v4992 = vrot.slane %v4974, %v4991
    %v4993 = vmul.f32 %v4988, %v4992
    %v4994 = vlaneseq
    %v4995 = vshrl.u32 %v4994, 7
    %v4996 = vsub.s32 0, %v4995
    %v4997 = vrot.slane %v4975, %v4996
    %v4998 = vadd.f32 %v4993, %v4997
    %v4999 = vld [vmem:[#allocation2 + $0x318] sm:$0xff]
    %v5000 = vld [vmem:[#allocation2 + $0x320] sm:$0xff]
    %v5001 = vld [vmem:[#allocation2 + $0x328] sm:$0xff]
    %v5002 = vld [vmem:[#allocation2 + $0x330] sm:$0xff]
    %v5003 = vld [vmem:[%s3 + $0x39] sm:$0x1]
    %v5004 = vlaneseq
    %v5005 = vshrl.u32 %v5004, 7
    %v5006 = vsub.s32 0, %v5005
    %v5007 = vrot.slane %v5003, %v5006
    %v5009 = vsel %vm186, %v4998, 0
    %5011 = vmatprep.subr.mxu0 0.0
    %5012 = vmatpush1.msra.mxu0 0.0
    %5013 = vmatprep.subr.mxu0 0.0
    %5014 = vmatpush1.msra.mxu0 0.0
    %5015 = vmatprep.subr.mxu0 0.0
    %5016 = vmatpush1.msra.mxu0 0.0
    %5017 = vmatprep.subr.mxu0 0.0
    %5018 = vmatpush1.msra.mxu0 0.0
    %5019 = vmatprep.subr.mxu0 0.0
    %5020 = vmatpush1.msra.mxu0 0.0
    %5021 = vmatprep.subr.mxu0 0.0
    %5022 = vmatpush1.msra.mxu0 0.0
    %5023 = vmatprep.subr.mxu0 0.0
    %5024 = vmatpush1.msra.mxu0 0.0
    %5025 = vmatprep.subr.mxu0 0.0
    %5026 = vmatpush1.msra.mxu0 0.0
    %5027 = vmatprep.subr.mxu0 0.0
    %5028 = vmatpush1.msra.mxu0 0.0
    %5029 = vmatprep.subr.mxu0 0.0
    %5030 = vmatpush1.msra.mxu0 0.0
    %5031 = vmatprep.subr.mxu0 0.0
    %5032 = vmatpush1.msra.mxu0 0.0
    %5033 = vmatprep.subr.mxu0 0.0
    %5034 = vmatpush1.msra.mxu0 0.0
    %5035 = vmatprep.subr.mxu0 0.0
    %5036 = vmatpush1.msra.mxu0 %v5002
    %5037 = vmatprep.subr.mxu0 0.0
    %5038 = vmatpush1.msra.mxu0 %v5001
    %5039 = vmatprep.subr.mxu0 0.0
    %5040 = vmatpush1.msra.mxu0 %v5000
    %5041 = vmatprep.subr.mxu0 0.0
    %5042 = vmatpush1.msra.mxu0 %v4999
    %5043 = vmatprep.subr.mxu0 0.0
    %5044 = vmatpush2.msra.mxu0 0.0
    %5045 = vmatprep.subr.mxu0 0.0
    %5046 = vmatpush2.msra.mxu0 0.0
    %5047 = vmatprep.subr.mxu0 0.0
    %5048 = vmatpush2.msra.mxu0 0.0
    %5049 = vmatprep.subr.mxu0 0.0
    %5050 = vmatpush2.msra.mxu0 0.0
    %5051 = vmatprep.subr.mxu0 0.0
    %5052 = vmatpush2.msra.mxu0 0.0
    %5053 = vmatprep.subr.mxu0 0.0
    %5054 = vmatpush2.msra.mxu0 0.0
    %5055 = vmatprep.subr.mxu0 0.0
    %5056 = vmatpush2.msra.mxu0 0.0
    %5057 = vmatprep.subr.mxu0 0.0
    %5058 = vmatpush2.msra.mxu0 0.0
    %5059 = vmatprep.subr.mxu0 0.0
    %5060 = vmatpush2.msra.mxu0 0.0
    %5061 = vmatprep.subr.mxu0 0.0
    %5062 = vmatpush2.msra.mxu0 0.0
    %5063 = vmatprep.subr.mxu0 0.0
    %5064 = vmatpush2.msra.mxu0 0.0
    %5065 = vmatprep.subr.mxu0 0.0
    %5066 = vmatpush2.msra.mxu0 0.0
    %5067 = vmatprep.subr.mxu0 0.0
    %5068 = vmatpush2.msra.mxu0 0.0
    %5069 = vmatprep.subr.mxu0 0.0
    %5070 = vmatpush2.msra.mxu0 0.0
    %5071 = vmatprep.subr.mxu0 0.0
    %5072 = vmatpush2.msra.mxu0 0.0
    %5073 = vmatprep.subr.mxu0 0.0
    %5074 = vmatpush2.msra.mxu0 0.0
    %5075 = vmatprep.mubr.f32.mxu0 0.0
    %5076 = vmatmul.mubr.f32.gmra.mxu0 %v5009
    %v5077 = vpop.f32.mrf.mxu0
    %v5078 = vadd.f32 %v5007, %v5077
    %v5079 = vpop.f32.mrf.mxu0
    %5080 = vdwg.mxu0
    %v5081 = vld [vmem:[#allocation2 + $0x338] sm:$0xff]
    %v5082 = vld [vmem:[#allocation2 + $0x340] sm:$0xff]
    %v5083 = vld [vmem:[#allocation2 + $0x348] sm:$0xff]
    %v5084 = vld [vmem:[#allocation2 + $0x350] sm:$0xff]
    %v5085 = vld [vmem:[%s3 + $0x3a] sm:$0x1]
    %v5086 = vlaneseq
    %v5087 = vshrl.u32 %v5086, 7
    %v5088 = vsub.s32 0, %v5087
    %v5089 = vrot.slane %v5085, %v5088
    %5090 = vmatprep.subr.mxu0 0.0
    %5091 = vmatpush1.msra.mxu0 0.0
    %5092 = vmatprep.subr.mxu0 0.0
    %5093 = vmatpush1.msra.mxu0 0.0
    %5094 = vmatprep.subr.mxu0 0.0
    %5095 = vmatpush1.msra.mxu0 0.0
    %5096 = vmatprep.subr.mxu0 0.0
    %5097 = vmatpush1.msra.mxu0 0.0
    %5098 = vmatprep.subr.mxu0 0.0
    %5099 = vmatpush1.msra.mxu0 0.0
    %5100 = vmatprep.subr.mxu0 0.0
    %5101 = vmatpush1.msra.mxu0 0.0
    %5102 = vmatprep.subr.mxu0 0.0
    %5103 = vmatpush1.msra.mxu0 0.0
    %5104 = vmatprep.subr.mxu0 0.0
    %5105 = vmatpush1.msra.mxu0 0.0
    %5106 = vmatprep.subr.mxu0 0.0
    %5107 = vmatpush1.msra.mxu0 0.0
    %5108 = vmatprep.subr.mxu0 0.0
    %5109 = vmatpush1.msra.mxu0 0.0
    %5110 = vmatprep.subr.mxu0 0.0
    %5111 = vmatpush1.msra.mxu0 0.0
    %5112 = vmatprep.subr.mxu0 0.0
    %5113 = vmatpush1.msra.mxu0 0.0
    %5114 = vmatprep.subr.mxu0 0.0
    %5115 = vmatpush1.msra.mxu0 %v5084
    %5116 = vmatprep.subr.mxu0 0.0
    %5117 = vmatpush1.msra.mxu0 %v5083
    %5118 = vmatprep.subr.mxu0 0.0
    %5119 = vmatpush1.msra.mxu0 %v5082
    %5120 = vmatprep.subr.mxu0 0.0
    %5121 = vmatpush1.msra.mxu0 %v5081
    %5122 = vmatprep.subr.mxu0 0.0
    %5123 = vmatpush2.msra.mxu0 0.0
    %5124 = vmatprep.subr.mxu0 0.0
    %5125 = vmatpush2.msra.mxu0 0.0
    %5126 = vmatprep.subr.mxu0 0.0
    %5127 = vmatpush2.msra.mxu0 0.0
    %5128 = vmatprep.subr.mxu0 0.0
    %5129 = vmatpush2.msra.mxu0 0.0
    %5130 = vmatprep.subr.mxu0 0.0
    %5131 = vmatpush2.msra.mxu0 0.0
    %5132 = vmatprep.subr.mxu0 0.0
    %5133 = vmatpush2.msra.mxu0 0.0
    %5134 = vmatprep.subr.mxu0 0.0
    %5135 = vmatpush2.msra.mxu0 0.0
    %5136 = vmatprep.subr.mxu0 0.0
    %5137 = vmatpush2.msra.mxu0 0.0
    %5138 = vmatprep.subr.mxu0 0.0
    %5139 = vmatpush2.msra.mxu0 0.0
    %5140 = vmatprep.subr.mxu0 0.0
    %5141 = vmatpush2.msra.mxu0 0.0
    %5142 = vmatprep.subr.mxu0 0.0
    %5143 = vmatpush2.msra.mxu0 0.0
    %5144 = vmatprep.subr.mxu0 0.0
    %5145 = vmatpush2.msra.mxu0 0.0
    %5146 = vmatprep.subr.mxu0 0.0
    %5147 = vmatpush2.msra.mxu0 0.0
    %5148 = vmatprep.subr.mxu0 0.0
    %5149 = vmatpush2.msra.mxu0 0.0
    %5150 = vmatprep.subr.mxu0 0.0
    %5151 = vmatpush2.msra.mxu0 0.0
    %5152 = vmatprep.subr.mxu0 0.0
    %5153 = vmatpush2.msra.mxu0 0.0
    %5154 = vmatprep.mubr.f32.mxu0 0.0
    %5155 = vmatmul.mubr.f32.gmra.mxu0 %v1791
    %v5156 = vpop.f32.mrf.mxu0
    %v5157 = vadd.f32 %v5089, %v5156
    %v5158 = vpop.f32.mrf.mxu0
    %5159 = vdwg.mxu0
    %v5160 = vld [vmem:[#allocation2 + $0x358] sm:$0xff]
    %v5161 = vld [vmem:[#allocation2 + $0x360] sm:$0xff]
    %v5162 = vld [vmem:[#allocation2 + $0x368] sm:$0xff]
    %v5163 = vld [vmem:[#allocation2 + $0x370] sm:$0xff]
    %v5164 = vld [vmem:[%s3 + $0x3b] sm:$0x1]
    %v5166 = vsel %vm67, %v5157, 0
    %v5169 = vsel %vm67, %v5078, 0
    %5171 = vmatprep.subr.mxu0 0.0
    %5172 = vmatpush1.xpose.msra.mxu0 0.0
    %5173 = vmatprep.subr.mxu0 0.0
    %5174 = vmatpush1.xpose.msra.mxu0 0.0
    %5175 = vmatprep.subr.mxu0 0.0
    %5176 = vmatpush1.xpose.msra.mxu0 0.0
    %5177 = vmatprep.subr.mxu0 0.0
    %5178 = vmatpush1.xpose.msra.mxu0 0.0
    %5179 = vmatprep.subr.mxu0 0.0
    %5180 = vmatpush1.xpose.msra.mxu0 0.0
    %5181 = vmatprep.subr.mxu0 0.0
    %5182 = vmatpush1.xpose.msra.mxu0 0.0
    %5183 = vmatprep.subr.mxu0 0.0
    %5184 = vmatpush1.xpose.msra.mxu0 0.0
    %5185 = vmatprep.subr.mxu0 0.0
    %5186 = vmatpush1.xpose.msra.mxu0 0.0
    %5187 = vmatprep.subr.mxu0 0.0
    %5188 = vmatpush1.xpose.msra.mxu0 0.0
    %5189 = vmatprep.subr.mxu0 0.0
    %5190 = vmatpush1.xpose.msra.mxu0 0.0
    %5191 = vmatprep.subr.mxu0 0.0
    %5192 = vmatpush1.xpose.msra.mxu0 0.0
    %5193 = vmatprep.subr.mxu0 0.0
    %5194 = vmatpush1.xpose.msra.mxu0 0.0
    %5195 = vmatprep.subr.mxu0 0.0
    %5196 = vmatpush1.xpose.msra.mxu0 0.0
    %5197 = vmatprep.subr.mxu0 0.0
    %5198 = vmatpush1.xpose.msra.mxu0 0.0
    %5199 = vmatprep.subr.mxu0 0.0
    %5200 = vmatpush1.xpose.msra.mxu0 0.0
    %5201 = vmatprep.subr.mxu0 0.0
    %5202 = vmatpush1.xpose.msra.mxu0 %v5169
    %5203 = vmatprep.subr.mxu0 0.0
    %5204 = vmatpush2.xpose.msra.mxu0 0.0
    %5205 = vmatprep.subr.mxu0 0.0
    %5206 = vmatpush2.xpose.msra.mxu0 0.0
    %5207 = vmatprep.subr.mxu0 0.0
    %5208 = vmatpush2.xpose.msra.mxu0 0.0
    %5209 = vmatprep.subr.mxu0 0.0
    %5210 = vmatpush2.xpose.msra.mxu0 0.0
    %5211 = vmatprep.subr.mxu0 0.0
    %5212 = vmatpush2.xpose.msra.mxu0 0.0
    %5213 = vmatprep.subr.mxu0 0.0
    %5214 = vmatpush2.xpose.msra.mxu0 0.0
    %5215 = vmatprep.subr.mxu0 0.0
    %5216 = vmatpush2.xpose.msra.mxu0 0.0
    %5217 = vmatprep.subr.mxu0 0.0
    %5218 = vmatpush2.xpose.msra.mxu0 0.0
    %5219 = vmatprep.subr.mxu0 0.0
    %5220 = vmatpush2.xpose.msra.mxu0 0.0
    %5221 = vmatprep.subr.mxu0 0.0
    %5222 = vmatpush2.xpose.msra.mxu0 0.0
    %5223 = vmatprep.subr.mxu0 0.0
    %5224 = vmatpush2.xpose.msra.mxu0 0.0
    %5225 = vmatprep.subr.mxu0 0.0
    %5226 = vmatpush2.xpose.msra.mxu0 0.0
    %5227 = vmatprep.subr.mxu0 0.0
    %5228 = vmatpush2.xpose.msra.mxu0 0.0
    %5229 = vmatprep.subr.mxu0 0.0
    %5230 = vmatpush2.xpose.msra.mxu0 0.0
    %5231 = vmatprep.subr.mxu0 0.0
    %5232 = vmatpush2.xpose.msra.mxu0 0.0
    %5233 = vmatprep.subr.mxu0 0.0
    %5234 = vmatpush2.xpose.msra.mxu0 0.0
    %5235 = vmatprep.mubr.f32.mxu0 0.0
    %5236 = vmatmul.mubr.f32.gmra.mxu0 %v5166
    %v5237 = vpop.f32.mrf.mxu0
    %v5238 = vadd.f32 0.0, %v5237
    %v5239 = vpop.f32.mrf.mxu0
    %5240 = vdwg.mxu0
    %v5241 = vmul.f32 %v5238, 0.25
    %v5242 = vadd.f32 %v5241, %v3088
    %v5243 = vsel %vm348, %v5242, -inf
    %5244 = vmax.xlane.f32.xlu0 %v5243
    %v5245 = vpop.xlane.xlu0 %5244
    %v5246 = vsub.f32 %v5242, %v5245
    %v5247 = vmul.f32 %v5246, 1.442695
    %v5248 = vpow.pop %v5247
    %v5249 = vsel %vm348, %v5248, 0.0
    %5250 = vadd.xlane.f32.xlu0 %v5249
    %v5251 = vpop.xlane.xlu0 %5250
    %v5252 = vrcp.pop %v5251
    %v5253 = vmul.f32 %v5248, %v5252
    %5254 = vrot.lane.b32.xlu0 %v5078, 96
    %v5255 = vpop.permute.xlu0 %5254
    %v5257 = vsel %vm362, %v5253, 0
    %v5259 = vsel %vm366, %v5255, 0
    %5261 = vmatprep.subr.mxu0 0.0
    %5262 = vmatpush1.msra.mxu0 0.0
    %5263 = vmatprep.subr.mxu0 0.0
    %5264 = vmatpush1.msra.mxu0 0.0
    %5265 = vmatprep.subr.mxu0 0.0
    %5266 = vmatpush1.msra.mxu0 0.0
    %5267 = vmatprep.subr.mxu0 0.0
    %5268 = vmatpush1.msra.mxu0 0.0
    %5269 = vmatprep.subr.mxu0 0.0
    %5270 = vmatpush1.msra.mxu0 0.0
    %5271 = vmatprep.subr.mxu0 0.0
    %5272 = vmatpush1.msra.mxu0 0.0
    %5273 = vmatprep.subr.mxu0 0.0
    %5274 = vmatpush1.msra.mxu0 0.0
    %5275 = vmatprep.subr.mxu0 0.0
    %5276 = vmatpush1.msra.mxu0 0.0
    %5277 = vmatprep.subr.mxu0 0.0
    %5278 = vmatpush1.msra.mxu0 0.0
    %5279 = vmatprep.subr.mxu0 0.0
    %5280 = vmatpush1.msra.mxu0 0.0
    %5281 = vmatprep.subr.mxu0 0.0
    %5282 = vmatpush1.msra.mxu0 0.0
    %5283 = vmatprep.subr.mxu0 0.0
    %5284 = vmatpush1.msra.mxu0 0.0
    %5285 = vmatprep.subr.mxu0 0.0
    %5286 = vmatpush1.msra.mxu0 0.0
    %5287 = vmatprep.subr.mxu0 0.0
    %5288 = vmatpush1.msra.mxu0 0.0
    %5289 = vmatprep.subr.mxu0 0.0
    %5290 = vmatpush1.msra.mxu0 0.0
    %5291 = vmatprep.subr.mxu0 0.0
    %5292 = vmatpush1.msra.mxu0 %v5259
    %5293 = vmatprep.subr.mxu0 0.0
    %5294 = vmatpush2.msra.mxu0 0.0
    %5295 = vmatprep.subr.mxu0 0.0
    %5296 = vmatpush2.msra.mxu0 0.0
    %5297 = vmatprep.subr.mxu0 0.0
    %5298 = vmatpush2.msra.mxu0 0.0
    %5299 = vmatprep.subr.mxu0 0.0
    %5300 = vmatpush2.msra.mxu0 0.0
    %5301 = vmatprep.subr.mxu0 0.0
    %5302 = vmatpush2.msra.mxu0 0.0
    %5303 = vmatprep.subr.mxu0 0.0
    %5304 = vmatpush2.msra.mxu0 0.0
    %5305 = vmatprep.subr.mxu0 0.0
    %5306 = vmatpush2.msra.mxu0 0.0
    %5307 = vmatprep.subr.mxu0 0.0
    %5308 = vmatpush2.msra.mxu0 0.0
    %5309 = vmatprep.subr.mxu0 0.0
    %5310 = vmatpush2.msra.mxu0 0.0
    %5311 = vmatprep.subr.mxu0 0.0
    %5312 = vmatpush2.msra.mxu0 0.0
    %5313 = vmatprep.subr.mxu0 0.0
    %5314 = vmatpush2.msra.mxu0 0.0
    %5315 = vmatprep.subr.mxu0 0.0
    %5316 = vmatpush2.msra.mxu0 0.0
    %5317 = vmatprep.subr.mxu0 0.0
    %5318 = vmatpush2.msra.mxu0 0.0
    %5319 = vmatprep.subr.mxu0 0.0
    %5320 = vmatpush2.msra.mxu0 0.0
    %5321 = vmatprep.subr.mxu0 0.0
    %5322 = vmatpush2.msra.mxu0 0.0
    %5323 = vmatprep.subr.mxu0 0.0
    %5324 = vmatpush2.msra.mxu0 0.0
    %5325 = vmatprep.mubr.f32.mxu0 0.0
    %5326 = vmatmul.mubr.f32.gmra.mxu0 %v5257
    %v5327 = vpop.f32.mrf.mxu0
    %v5328 = vadd.f32 0.0, %v5327
    %v5329 = vpop.f32.mrf.mxu0
    %5330 = vdwg.mxu0
    %5331 = vrot.lane.b32.xlu0 %v5157, 112
    %v5332 = vpop.permute.xlu0 %5331
    %5333 = vrot.lane.b32.xlu0 %v5078, 112
    %v5334 = vpop.permute.xlu0 %5333
    %v5335 = vsel %vm67, %v5332, 0
    %v5337 = vsel %vm67, %v5334, 0
    %5339 = vmatprep.subr.mxu0 0.0
    %5340 = vmatpush1.xpose.msra.mxu0 0.0
    %5341 = vmatprep.subr.mxu0 0.0
    %5342 = vmatpush1.xpose.msra.mxu0 0.0
    %5343 = vmatprep.subr.mxu0 0.0
    %5344 = vmatpush1.xpose.msra.mxu0 0.0
    %5345 = vmatprep.subr.mxu0 0.0
    %5346 = vmatpush1.xpose.msra.mxu0 0.0
    %5347 = vmatprep.subr.mxu0 0.0
    %5348 = vmatpush1.xpose.msra.mxu0 0.0
    %5349 = vmatprep.subr.mxu0 0.0
    %5350 = vmatpush1.xpose.msra.mxu0 0.0
    %5351 = vmatprep.subr.mxu0 0.0
    %5352 = vmatpush1.xpose.msra.mxu0 0.0
    %5353 = vmatprep.subr.mxu0 0.0
    %5354 = vmatpush1.xpose.msra.mxu0 0.0
    %5355 = vmatprep.subr.mxu0 0.0
    %5356 = vmatpush1.xpose.msra.mxu0 0.0
    %5357 = vmatprep.subr.mxu0 0.0
    %5358 = vmatpush1.xpose.msra.mxu0 0.0
    %5359 = vmatprep.subr.mxu0 0.0
    %5360 = vmatpush1.xpose.msra.mxu0 0.0
    %5361 = vmatprep.subr.mxu0 0.0
    %5362 = vmatpush1.xpose.msra.mxu0 0.0
    %5363 = vmatprep.subr.mxu0 0.0
    %5364 = vmatpush1.xpose.msra.mxu0 0.0
    %5365 = vmatprep.subr.mxu0 0.0
    %5366 = vmatpush1.xpose.msra.mxu0 0.0
    %5367 = vmatprep.subr.mxu0 0.0
    %5368 = vmatpush1.xpose.msra.mxu0 0.0
    %5369 = vmatprep.subr.mxu0 0.0
    %5370 = vmatpush1.xpose.msra.mxu0 %v5337
    %5371 = vmatprep.subr.mxu0 0.0
    %5372 = vmatpush2.xpose.msra.mxu0 0.0
    %5373 = vmatprep.subr.mxu0 0.0
    %5374 = vmatpush2.xpose.msra.mxu0 0.0
    %5375 = vmatprep.subr.mxu0 0.0
    %5376 = vmatpush2.xpose.msra.mxu0 0.0
    %5377 = vmatprep.subr.mxu0 0.0
    %5378 = vmatpush2.xpose.msra.mxu0 0.0
    %5379 = vmatprep.subr.mxu0 0.0
    %5380 = vmatpush2.xpose.msra.mxu0 0.0
    %5381 = vmatprep.subr.mxu0 0.0
    %5382 = vmatpush2.xpose.msra.mxu0 0.0
    %5383 = vmatprep.subr.mxu0 0.0
    %5384 = vmatpush2.xpose.msra.mxu0 0.0
    %5385 = vmatprep.subr.mxu0 0.0
    %5386 = vmatpush2.xpose.msra.mxu0 0.0
    %5387 = vmatprep.subr.mxu0 0.0
    %5388 = vmatpush2.xpose.msra.mxu0 0.0
    %5389 = vmatprep.subr.mxu0 0.0
    %5390 = vmatpush2.xpose.msra.mxu0 0.0
    %5391 = vmatprep.subr.mxu0 0.0
    %5392 = vmatpush2.xpose.msra.mxu0 0.0
    %5393 = vmatprep.subr.mxu0 0.0
    %5394 = vmatpush2.xpose.msra.mxu0 0.0
    %5395 = vmatprep.subr.mxu0 0.0
    %5396 = vmatpush2.xpose.msra.mxu0 0.0
    %5397 = vmatprep.subr.mxu0 0.0
    %5398 = vmatpush2.xpose.msra.mxu0 0.0
    %5399 = vmatprep.subr.mxu0 0.0
    %5400 = vmatpush2.xpose.msra.mxu0 0.0
    %5401 = vmatprep.subr.mxu0 0.0
    %5402 = vmatpush2.xpose.msra.mxu0 0.0
    %5403 = vmatprep.mubr.f32.mxu0 0.0
    %5404 = vmatmul.mubr.f32.gmra.mxu0 %v5335
    %v5405 = vpop.f32.mrf.mxu0
    %v5406 = vadd.f32 0.0, %v5405
    %v5407 = vpop.f32.mrf.mxu0
    %5408 = vdwg.mxu0
    %v5409 = vmul.f32 %v5406, 0.25
    %v5410 = vadd.f32 %v5409, %v3088
    %v5411 = vsel %vm348, %v5410, -inf
    %5412 = vmax.xlane.f32.xlu0 %v5411
    %v5413 = vpop.xlane.xlu0 %5412
    %v5414 = vsub.f32 %v5410, %v5413
    %v5415 = vmul.f32 %v5414, 1.442695
    %v5416 = vpow.pop %v5415
    %v5417 = vsel %vm348, %v5416, 0.0
    %5418 = vadd.xlane.f32.xlu0 %v5417
    %v5419 = vpop.xlane.xlu0 %5418
    %v5420 = vrcp.pop %v5419
    %v5421 = vmul.f32 %v5416, %v5420
    %5422 = vrot.lane.b32.xlu0 %v5078, 80
    %v5423 = vpop.permute.xlu0 %5422
    %v5425 = vsel %vm362, %v5421, 0
    %v5427 = vsel %vm366, %v5423, 0
    %5429 = vmatprep.subr.mxu0 0.0
    %5430 = vmatpush1.msra.mxu0 0.0
    %5431 = vmatprep.subr.mxu0 0.0
    %5432 = vmatpush1.msra.mxu0 0.0
    %5433 = vmatprep.subr.mxu0 0.0
    %5434 = vmatpush1.msra.mxu0 0.0
    %5435 = vmatprep.subr.mxu0 0.0
    %5436 = vmatpush1.msra.mxu0 0.0
    %5437 = vmatprep.subr.mxu0 0.0
    %5438 = vmatpush1.msra.mxu0 0.0
    %5439 = vmatprep.subr.mxu0 0.0
    %5440 = vmatpush1.msra.mxu0 0.0
    %5441 = vmatprep.subr.mxu0 0.0
    %5442 = vmatpush1.msra.mxu0 0.0
    %5443 = vmatprep.subr.mxu0 0.0
    %5444 = vmatpush1.msra.mxu0 0.0
    %5445 = vmatprep.subr.mxu0 0.0
    %5446 = vmatpush1.msra.mxu0 0.0
    %5447 = vmatprep.subr.mxu0 0.0
    %5448 = vmatpush1.msra.mxu0 0.0
    %5449 = vmatprep.subr.mxu0 0.0
    %5450 = vmatpush1.msra.mxu0 0.0
    %5451 = vmatprep.subr.mxu0 0.0
    %5452 = vmatpush1.msra.mxu0 0.0
    %5453 = vmatprep.subr.mxu0 0.0
    %5454 = vmatpush1.msra.mxu0 0.0
    %5455 = vmatprep.subr.mxu0 0.0
    %5456 = vmatpush1.msra.mxu0 0.0
    %5457 = vmatprep.subr.mxu0 0.0
    %5458 = vmatpush1.msra.mxu0 0.0
    %5459 = vmatprep.subr.mxu0 0.0
    %5460 = vmatpush1.msra.mxu0 %v5427
    %5461 = vmatprep.subr.mxu0 0.0
    %5462 = vmatpush2.msra.mxu0 0.0
    %5463 = vmatprep.subr.mxu0 0.0
    %5464 = vmatpush2.msra.mxu0 0.0
    %5465 = vmatprep.subr.mxu0 0.0
    %5466 = vmatpush2.msra.mxu0 0.0
    %5467 = vmatprep.subr.mxu0 0.0
    %5468 = vmatpush2.msra.mxu0 0.0
    %5469 = vmatprep.subr.mxu0 0.0
    %5470 = vmatpush2.msra.mxu0 0.0
    %5471 = vmatprep.subr.mxu0 0.0
    %5472 = vmatpush2.msra.mxu0 0.0
    %5473 = vmatprep.subr.mxu0 0.0
    %5474 = vmatpush2.msra.mxu0 0.0
    %5475 = vmatprep.subr.mxu0 0.0
    %5476 = vmatpush2.msra.mxu0 0.0
    %5477 = vmatprep.subr.mxu0 0.0
    %5478 = vmatpush2.msra.mxu0 0.0
    %5479 = vmatprep.subr.mxu0 0.0
    %5480 = vmatpush2.msra.mxu0 0.0
    %5481 = vmatprep.subr.mxu0 0.0
    %5482 = vmatpush2.msra.mxu0 0.0
    %5483 = vmatprep.subr.mxu0 0.0
    %5484 = vmatpush2.msra.mxu0 0.0
    %5485 = vmatprep.subr.mxu0 0.0
    %5486 = vmatpush2.msra.mxu0 0.0
    %5487 = vmatprep.subr.mxu0 0.0
    %5488 = vmatpush2.msra.mxu0 0.0
    %5489 = vmatprep.subr.mxu0 0.0
    %5490 = vmatpush2.msra.mxu0 0.0
    %5491 = vmatprep.subr.mxu0 0.0
    %5492 = vmatpush2.msra.mxu0 0.0
    %5493 = vmatprep.mubr.f32.mxu0 0.0
    %5494 = vmatmul.mubr.f32.gmra.mxu0 %v5425
    %v5495 = vpop.f32.mrf.mxu0
    %v5496 = vadd.f32 0.0, %v5495
    %v5497 = vpop.f32.mrf.mxu0
    %5498 = vdwg.mxu0
    %v5500 = vsel %vm67, %v5496, 0
    %5502 = vmatprep.subr.mxu0 0.0
    %5503 = vmatpush1.msra.mxu0 0.0
    %5504 = vmatprep.subr.mxu0 0.0
    %5505 = vmatpush1.msra.mxu0 0.0
    %5506 = vmatprep.subr.mxu0 0.0
    %5507 = vmatpush1.msra.mxu0 0.0
    %5508 = vmatprep.subr.mxu0 0.0
    %5509 = vmatpush1.msra.mxu0 0.0
    %5510 = vmatprep.subr.mxu0 0.0
    %5511 = vmatpush1.msra.mxu0 0.0
    %5512 = vmatprep.subr.mxu0 0.0
    %5513 = vmatpush1.msra.mxu0 0.0
    %5514 = vmatprep.subr.mxu0 0.0
    %5515 = vmatpush1.msra.mxu0 0.0
    %5516 = vmatprep.subr.mxu0 0.0
    %5517 = vmatpush1.msra.mxu0 0.0
    %5518 = vmatprep.subr.mxu0 0.0
    %5519 = vmatpush1.msra.mxu0 0.0
    %5520 = vmatprep.subr.mxu0 0.0
    %5521 = vmatpush1.msra.mxu0 0.0
    %5522 = vmatprep.subr.mxu0 0.0
    %5523 = vmatpush1.msra.mxu0 0.0
    %5524 = vmatprep.subr.mxu0 0.0
    %5525 = vmatpush1.msra.mxu0 0.0
    %5526 = vmatprep.subr.mxu0 0.0
    %5527 = vmatpush1.msra.mxu0 0.0
    %5528 = vmatprep.subr.mxu0 0.0
    %5529 = vmatpush1.msra.mxu0 0.0
    %5530 = vmatprep.subr.mxu0 0.0
    %5531 = vmatpush1.msra.mxu0 %v5163
    %5532 = vmatprep.subr.mxu0 0.0
    %5533 = vmatpush1.msra.mxu0 %v5162
    %5534 = vmatprep.subr.mxu0 0.0
    %5535 = vmatpush2.msra.mxu0 0.0
    %5536 = vmatprep.subr.mxu0 0.0
    %5537 = vmatpush2.msra.mxu0 0.0
    %5538 = vmatprep.subr.mxu0 0.0
    %5539 = vmatpush2.msra.mxu0 0.0
    %5540 = vmatprep.subr.mxu0 0.0
    %5541 = vmatpush2.msra.mxu0 0.0
    %5542 = vmatprep.subr.mxu0 0.0
    %5543 = vmatpush2.msra.mxu0 0.0
    %5544 = vmatprep.subr.mxu0 0.0
    %5545 = vmatpush2.msra.mxu0 0.0
    %5546 = vmatprep.subr.mxu0 0.0
    %5547 = vmatpush2.msra.mxu0 0.0
    %5548 = vmatprep.subr.mxu0 0.0
    %5549 = vmatpush2.msra.mxu0 0.0
    %5550 = vmatprep.subr.mxu0 0.0
    %5551 = vmatpush2.msra.mxu0 0.0
    %5552 = vmatprep.subr.mxu0 0.0
    %5553 = vmatpush2.msra.mxu0 0.0
    %5554 = vmatprep.subr.mxu0 0.0
    %5555 = vmatpush2.msra.mxu0 0.0
    %5556 = vmatprep.subr.mxu0 0.0
    %5557 = vmatpush2.msra.mxu0 0.0
    %5558 = vmatprep.subr.mxu0 0.0
    %5559 = vmatpush2.msra.mxu0 0.0
    %5560 = vmatprep.subr.mxu0 0.0
    %5561 = vmatpush2.msra.mxu0 0.0
    %5562 = vmatprep.subr.mxu0 0.0
    %5563 = vmatpush2.msra.mxu0 0.0
    %5564 = vmatprep.subr.mxu0 0.0
    %5565 = vmatpush2.msra.mxu0 0.0
    %5566 = vmatprep.mubr.f32.mxu0 0.0
    %5567 = vmatmul.mubr.f32.gmra.mxu0 %v5500
    %v5568 = vpop.f32.mrf.mxu0
    %v5569 = vadd.f32 0.0, %v5568
    %v5570 = vpop.f32.mrf.mxu0
    %5571 = vdwg.mxu0
    %v5573 = vsel %vm67, %v5328, 0
    %5575 = vmatprep.subr.mxu0 0.0
    %5576 = vmatpush1.msra.mxu0 0.0
    %5577 = vmatprep.subr.mxu0 0.0
    %5578 = vmatpush1.msra.mxu0 0.0
    %5579 = vmatprep.subr.mxu0 0.0
    %5580 = vmatpush1.msra.mxu0 0.0
    %5581 = vmatprep.subr.mxu0 0.0
    %5582 = vmatpush1.msra.mxu0 0.0
    %5583 = vmatprep.subr.mxu0 0.0
    %5584 = vmatpush1.msra.mxu0 0.0
    %5585 = vmatprep.subr.mxu0 0.0
    %5586 = vmatpush1.msra.mxu0 0.0
    %5587 = vmatprep.subr.mxu0 0.0
    %5588 = vmatpush1.msra.mxu0 0.0
    %5589 = vmatprep.subr.mxu0 0.0
    %5590 = vmatpush1.msra.mxu0 0.0
    %5591 = vmatprep.subr.mxu0 0.0
    %5592 = vmatpush1.msra.mxu0 0.0
    %5593 = vmatprep.subr.mxu0 0.0
    %5594 = vmatpush1.msra.mxu0 0.0
    %5595 = vmatprep.subr.mxu0 0.0
    %5596 = vmatpush1.msra.mxu0 0.0
    %5597 = vmatprep.subr.mxu0 0.0
    %5598 = vmatpush1.msra.mxu0 0.0
    %5599 = vmatprep.subr.mxu0 0.0
    %5600 = vmatpush1.msra.mxu0 0.0
    %5601 = vmatprep.subr.mxu0 0.0
    %5602 = vmatpush1.msra.mxu0 0.0
    %5603 = vmatprep.subr.mxu0 0.0
    %5604 = vmatpush1.msra.mxu0 %v5161
    %5605 = vmatprep.subr.mxu0 0.0
    %5606 = vmatpush1.msra.mxu0 %v5160
    %5607 = vmatprep.subr.mxu0 0.0
    %5608 = vmatpush2.msra.mxu0 0.0
    %5609 = vmatprep.subr.mxu0 0.0
    %5610 = vmatpush2.msra.mxu0 0.0
    %5611 = vmatprep.subr.mxu0 0.0
    %5612 = vmatpush2.msra.mxu0 0.0
    %5613 = vmatprep.subr.mxu0 0.0
    %5614 = vmatpush2.msra.mxu0 0.0
    %5615 = vmatprep.subr.mxu0 0.0
    %5616 = vmatpush2.msra.mxu0 0.0
    %5617 = vmatprep.subr.mxu0 0.0
    %5618 = vmatpush2.msra.mxu0 0.0
    %5619 = vmatprep.subr.mxu0 0.0
    %5620 = vmatpush2.msra.mxu0 0.0
    %5621 = vmatprep.subr.mxu0 0.0
    %5622 = vmatpush2.msra.mxu0 0.0
    %5623 = vmatprep.subr.mxu0 0.0
    %5624 = vmatpush2.msra.mxu0 0.0
    %5625 = vmatprep.subr.mxu0 0.0
    %5626 = vmatpush2.msra.mxu0 0.0
    %5627 = vmatprep.subr.mxu0 0.0
    %5628 = vmatpush2.msra.mxu0 0.0
    %5629 = vmatprep.subr.mxu0 0.0
    %5630 = vmatpush2.msra.mxu0 0.0
    %5631 = vmatprep.subr.mxu0 0.0
    %5632 = vmatpush2.msra.mxu0 0.0
    %5633 = vmatprep.subr.mxu0 0.0
    %5634 = vmatpush2.msra.mxu0 0.0
    %5635 = vmatprep.subr.mxu0 0.0
    %5636 = vmatpush2.msra.mxu0 0.0
    %5637 = vmatprep.subr.mxu0 0.0
    %5638 = vmatpush2.msra.mxu0 0.0
    %5639 = vmatprep.mubr.f32.mxu0 0.0
    %5640 = vmatmul.mubr.f32.gmra.mxu0 %v5573
    %v5641 = vpop.f32.mrf.mxu0
    %v5642 = vadd.f32 %v5569, %v5641
    %v5643 = vpop.f32.mrf.mxu0
    %5644 = vdwg.mxu0
    %v5645 = vlaneseq
    %v5646 = vshrl.u32 %v5645, 7
    %v5647 = vsub.s32 0, %v5646
    %v5648 = vrot.slane %v5164, %v5647
    %v5649 = vadd.f32 %v5642, %v5648
    %v5650 = vadd.f32 %v1780, %v5649
    %v5651 = vld [vmem:[%s3 + $0x33] sm:$0x1]
    %v5652 = vld [vmem:[%s3 + $0x34] sm:$0x1]
    %v5653 = vsel %vm152, %v5650, 0.0
    %5654 = vadd.xlane.f32.xlu0 %v5653
    %v5655 = vpop.xlane.xlu0 %5654
    %v5656 = vmul.f32 %v5655, %v156
    %v5657 = vsub.f32 %v5650, %v5656
    %v5658 = vmul.f32 %v5657, %v5657
    %v5659 = vsel %vm152, %v5658, 0.0
    %5660 = vadd.xlane.f32.xlu0 %v5659
    %v5661 = vpop.xlane.xlu0 %5660
    %v5662 = vmul.f32 %v5661, %v156
    %v5663 = vadd.f32 %v5662, 1e-05
    %v5664 = vrsqrt.pop %v5663
    %v5665 = vmul.f32 %v5657, %v5664
    %v5666 = vlaneseq
    %v5667 = vshrl.u32 %v5666, 7
    %v5668 = vsub.s32 0, %v5667
    %v5669 = vrot.slane %v5651, %v5668
    %v5670 = vmul.f32 %v5665, %v5669
    %v5671 = vlaneseq
    %v5672 = vshrl.u32 %v5671, 7
    %v5673 = vsub.s32 0, %v5672
    %v5674 = vrot.slane %v5652, %v5673
    %v5675 = vadd.f32 %v5670, %v5674
    %v5676 = vld [vmem:[#allocation2 + $0x378] sm:$0xff]
    %v5677 = vld [vmem:[#allocation2 + $0x380] sm:$0xff]
    %v5678 = vld [vmem:[#allocation2 + $0x388] sm:$0xff]
    %v5679 = vld [vmem:[#allocation2 + $0x390] sm:$0xff]
    %v5680 = vld [vmem:[%s3 + $0x3c] sm:$0x1]
    %v5681 = vlaneseq
    %v5682 = vshrl.u32 %v5681, 7
    %v5683 = vsub.s32 0, %v5682
    %v5684 = vrot.slane %v5680, %v5683
    %v5686 = vsel %vm186, %v5675, 0
    %5688 = vmatprep.subr.mxu0 0.0
    %5689 = vmatpush1.msra.mxu0 0.0
    %5690 = vmatprep.subr.mxu0 0.0
    %5691 = vmatpush1.msra.mxu0 0.0
    %5692 = vmatprep.subr.mxu0 0.0
    %5693 = vmatpush1.msra.mxu0 0.0
    %5694 = vmatprep.subr.mxu0 0.0
    %5695 = vmatpush1.msra.mxu0 0.0
    %5696 = vmatprep.subr.mxu0 0.0
    %5697 = vmatpush1.msra.mxu0 0.0
    %5698 = vmatprep.subr.mxu0 0.0
    %5699 = vmatpush1.msra.mxu0 0.0
    %5700 = vmatprep.subr.mxu0 0.0
    %5701 = vmatpush1.msra.mxu0 0.0
    %5702 = vmatprep.subr.mxu0 0.0
    %5703 = vmatpush1.msra.mxu0 0.0
    %5704 = vmatprep.subr.mxu0 0.0
    %5705 = vmatpush1.msra.mxu0 0.0
    %5706 = vmatprep.subr.mxu0 0.0
    %5707 = vmatpush1.msra.mxu0 0.0
    %5708 = vmatprep.subr.mxu0 0.0
    %5709 = vmatpush1.msra.mxu0 0.0
    %5710 = vmatprep.subr.mxu0 0.0
    %5711 = vmatpush1.msra.mxu0 0.0
    %5712 = vmatprep.subr.mxu0 0.0
    %5713 = vmatpush1.msra.mxu0 %v5679
    %5714 = vmatprep.subr.mxu0 0.0
    %5715 = vmatpush1.msra.mxu0 %v5678
    %5716 = vmatprep.subr.mxu0 0.0
    %5717 = vmatpush1.msra.mxu0 %v5677
    %5718 = vmatprep.subr.mxu0 0.0
    %5719 = vmatpush1.msra.mxu0 %v5676
    %5720 = vmatprep.subr.mxu0 0.0
    %5721 = vmatpush2.msra.mxu0 0.0
    %5722 = vmatprep.subr.mxu0 0.0
    %5723 = vmatpush2.msra.mxu0 0.0
    %5724 = vmatprep.subr.mxu0 0.0
    %5725 = vmatpush2.msra.mxu0 0.0
    %5726 = vmatprep.subr.mxu0 0.0
    %5727 = vmatpush2.msra.mxu0 0.0
    %5728 = vmatprep.subr.mxu0 0.0
    %5729 = vmatpush2.msra.mxu0 0.0
    %5730 = vmatprep.subr.mxu0 0.0
    %5731 = vmatpush2.msra.mxu0 0.0
    %5732 = vmatprep.subr.mxu0 0.0
    %5733 = vmatpush2.msra.mxu0 0.0
    %5734 = vmatprep.subr.mxu0 0.0
    %5735 = vmatpush2.msra.mxu0 0.0
    %5736 = vmatprep.subr.mxu0 0.0
    %5737 = vmatpush2.msra.mxu0 0.0
    %5738 = vmatprep.subr.mxu0 0.0
    %5739 = vmatpush2.msra.mxu0 0.0
    %5740 = vmatprep.subr.mxu0 0.0
    %5741 = vmatpush2.msra.mxu0 0.0
    %5742 = vmatprep.subr.mxu0 0.0
    %5743 = vmatpush2.msra.mxu0 0.0
    %5744 = vmatprep.subr.mxu0 0.0
    %5745 = vmatpush2.msra.mxu0 0.0
    %5746 = vmatprep.subr.mxu0 0.0
    %5747 = vmatpush2.msra.mxu0 0.0
    %5748 = vmatprep.subr.mxu0 0.0
    %5749 = vmatpush2.msra.mxu0 0.0
    %5750 = vmatprep.subr.mxu0 0.0
    %5751 = vmatpush2.msra.mxu0 0.0
    %5752 = vmatprep.mubr.f32.mxu0 0.0
    %5753 = vmatmul.mubr.f32.gmra.mxu0 %v5686
    %v5754 = vpop.f32.mrf.mxu0
    %v5755 = vadd.f32 %v5684, %v5754
    %v5756 = vpop.f32.mrf.mxu0
    %5757 = vdwg.mxu0
    %v5758 = vmul.f32 %v5755, 0.5
    %v5759 = vmul.f32 %v5755, 0.044715
    %v5760 = vmul.f32 %v5759, %v5755
    %v5761 = vmul.f32 %v5760, %v5755
    %v5762 = vadd.f32 %v5755, %v5761
    %v5763 = vmul.f32 %v5762, 0.7978846
    %v5764 = vtanh.pop %v5763
    %v5765 = vadd.f32 %v5764, 1.0
    %v5766 = vmul.f32 %v5758, %v5765
    %v5767 = vld [vmem:[#allocation2 + $0x398] sm:$0xff]
    %v5768 = vld [vmem:[#allocation2 + $0x3a0] sm:$0xff]
    %v5769 = vld [vmem:[#allocation2 + $0x3a8] sm:$0xff]
    %v5770 = vld [vmem:[#allocation2 + $0x3b0] sm:$0xff]
    %v5771 = vld [vmem:[%s3 + $0x3d] sm:$0x1]
    %v5772 = vlaneseq
    %v5773 = vshrl.u32 %v5772, 7
    %v5774 = vsub.s32 0, %v5773
    %v5775 = vrot.slane %v5771, %v5774
    %v5777 = vsel %vm186, %v5766, 0
    %5779 = vmatprep.subr.mxu0 0.0
    %5780 = vmatpush1.msra.mxu0 0.0
    %5781 = vmatprep.subr.mxu0 0.0
    %5782 = vmatpush1.msra.mxu0 0.0
    %5783 = vmatprep.subr.mxu0 0.0
    %5784 = vmatpush1.msra.mxu0 0.0
    %5785 = vmatprep.subr.mxu0 0.0
    %5786 = vmatpush1.msra.mxu0 0.0
    %5787 = vmatprep.subr.mxu0 0.0
    %5788 = vmatpush1.msra.mxu0 0.0
    %5789 = vmatprep.subr.mxu0 0.0
    %5790 = vmatpush1.msra.mxu0 0.0
    %5791 = vmatprep.subr.mxu0 0.0
    %5792 = vmatpush1.msra.mxu0 0.0
    %5793 = vmatprep.subr.mxu0 0.0
    %5794 = vmatpush1.msra.mxu0 0.0
    %5795 = vmatprep.subr.mxu0 0.0
    %5796 = vmatpush1.msra.mxu0 0.0
    %5797 = vmatprep.subr.mxu0 0.0
    %5798 = vmatpush1.msra.mxu0 0.0
    %5799 = vmatprep.subr.mxu0 0.0
    %5800 = vmatpush1.msra.mxu0 0.0
    %5801 = vmatprep.subr.mxu0 0.0
    %5802 = vmatpush1.msra.mxu0 0.0
    %5803 = vmatprep.subr.mxu0 0.0
    %5804 = vmatpush1.msra.mxu0 %v5770
    %5805 = vmatprep.subr.mxu0 0.0
    %5806 = vmatpush1.msra.mxu0 %v5769
    %5807 = vmatprep.subr.mxu0 0.0
    %5808 = vmatpush1.msra.mxu0 %v5768
    %5809 = vmatprep.subr.mxu0 0.0
    %5810 = vmatpush1.msra.mxu0 %v5767
    %5811 = vmatprep.subr.mxu0 0.0
    %5812 = vmatpush2.msra.mxu0 0.0
    %5813 = vmatprep.subr.mxu0 0.0
    %5814 = vmatpush2.msra.mxu0 0.0
    %5815 = vmatprep.subr.mxu0 0.0
    %5816 = vmatpush2.msra.mxu0 0.0
    %5817 = vmatprep.subr.mxu0 0.0
    %5818 = vmatpush2.msra.mxu0 0.0
    %5819 = vmatprep.subr.mxu0 0.0
    %5820 = vmatpush2.msra.mxu0 0.0
    %5821 = vmatprep.subr.mxu0 0.0
    %5822 = vmatpush2.msra.mxu0 0.0
    %5823 = vmatprep.subr.mxu0 0.0
    %5824 = vmatpush2.msra.mxu0 0.0
    %5825 = vmatprep.subr.mxu0 0.0
    %5826 = vmatpush2.msra.mxu0 0.0
    %5827 = vmatprep.subr.mxu0 0.0
    %5828 = vmatpush2.msra.mxu0 0.0
    %5829 = vmatprep.subr.mxu0 0.0
    %5830 = vmatpush2.msra.mxu0 0.0
    %5831 = vmatprep.subr.mxu0 0.0
    %5832 = vmatpush2.msra.mxu0 0.0
    %5833 = vmatprep.subr.mxu0 0.0
    %5834 = vmatpush2.msra.mxu0 0.0
    %5835 = vmatprep.subr.mxu0 0.0
    %5836 = vmatpush2.msra.mxu0 0.0
    %5837 = vmatprep.subr.mxu0 0.0
    %5838 = vmatpush2.msra.mxu0 0.0
    %5839 = vmatprep.subr.mxu0 0.0
    %5840 = vmatpush2.msra.mxu0 0.0
    %5841 = vmatprep.subr.mxu0 0.0
    %5842 = vmatpush2.msra.mxu0 0.0
    %5843 = vmatprep.mubr.f32.mxu0 0.0
    %5844 = vmatmul.mubr.f32.gmra.mxu0 %v5777
    %v5845 = vpop.f32.mrf.mxu0
    %v5846 = vadd.f32 %v5775, %v5845
    %v5847 = vpop.f32.mrf.mxu0
    %5848 = vdwg.mxu0
    %v5849 = vadd.f32 %v5675, %v5846
    %v5850 = vld [vmem:[%s3 + $0x35] sm:$0x1]
    %v5851 = vld [vmem:[%s3 + $0x36] sm:$0x1]
    %v5852 = vsel %vm152, %v5849, 0.0
    %5853 = vadd.xlane.f32.xlu0 %v5852
    %v5854 = vpop.xlane.xlu0 %5853
    %v5855 = vmul.f32 %v5854, %v156
    %v5856 = vsub.f32 %v5849, %v5855
    %v5857 = vmul.f32 %v5856, %v5856
    %v5858 = vsel %vm152, %v5857, 0.0
    %5859 = vadd.xlane.f32.xlu0 %v5858
    %v5860 = vpop.xlane.xlu0 %5859
    %v5861 = vmul.f32 %v5860, %v156
    %v5862 = vadd.f32 %v5861, 1e-05
    %v5863 = vrsqrt.pop %v5862
    %v5864 = vmul.f32 %v5856, %v5863
    %v5865 = vlaneseq
    %v5866 = vshrl.u32 %v5865, 7
    %v5867 = vsub.s32 0, %v5866
    %v5868 = vrot.slane %v5850, %v5867
    %v5869 = vmul.f32 %v5864, %v5868
    %v5870 = vlaneseq
    %v5871 = vshrl.u32 %v5870, 7
    %v5872 = vsub.s32 0, %v5871
    %v5873 = vrot.slane %v5851, %v5872
    %v5874 = vadd.f32 %v5869, %v5873
    %v5875 = vld [vmem:[#allocation2 + $0x3b8] sm:$0xff]
    %v5876 = vld [vmem:[#allocation2 + $0x3c0] sm:$0xff]
    %v5877 = vld [vmem:[#allocation2 + $0x3c8] sm:$0xff]
    %v5878 = vld [vmem:[#allocation2 + $0x3d0] sm:$0xff]
    %v5879 = vld [vmem:[%s3 + $0x3e] sm:$0x1]
    %v5880 = vlaneseq
    %v5881 = vshrl.u32 %v5880, 7
    %v5882 = vsub.s32 0, %v5881
    %v5883 = vrot.slane %v5879, %v5882
    %v5885 = vsel %vm186, %v5874, 0
    %5887 = vmatprep.subr.mxu0 0.0
    %5888 = vmatpush1.msra.mxu0 0.0
    %5889 = vmatprep.subr.mxu0 0.0
    %5890 = vmatpush1.msra.mxu0 0.0
    %5891 = vmatprep.subr.mxu0 0.0
    %5892 = vmatpush1.msra.mxu0 0.0
    %5893 = vmatprep.subr.mxu0 0.0
    %5894 = vmatpush1.msra.mxu0 0.0
    %5895 = vmatprep.subr.mxu0 0.0
    %5896 = vmatpush1.msra.mxu0 0.0
    %5897 = vmatprep.subr.mxu0 0.0
    %5898 = vmatpush1.msra.mxu0 0.0
    %5899 = vmatprep.subr.mxu0 0.0
    %5900 = vmatpush1.msra.mxu0 0.0
    %5901 = vmatprep.subr.mxu0 0.0
    %5902 = vmatpush1.msra.mxu0 0.0
    %5903 = vmatprep.subr.mxu0 0.0
    %5904 = vmatpush1.msra.mxu0 0.0
    %5905 = vmatprep.subr.mxu0 0.0
    %5906 = vmatpush1.msra.mxu0 0.0
    %5907 = vmatprep.subr.mxu0 0.0
    %5908 = vmatpush1.msra.mxu0 0.0
    %5909 = vmatprep.subr.mxu0 0.0
    %5910 = vmatpush1.msra.mxu0 0.0
    %5911 = vmatprep.subr.mxu0 0.0
    %5912 = vmatpush1.msra.mxu0 %v5878
    %5913 = vmatprep.subr.mxu0 0.0
    %5914 = vmatpush1.msra.mxu0 %v5877
    %5915 = vmatprep.subr.mxu0 0.0
    %5916 = vmatpush1.msra.mxu0 %v5876
    %5917 = vmatprep.subr.mxu0 0.0
    %5918 = vmatpush1.msra.mxu0 %v5875
    %5919 = vmatprep.subr.mxu0 0.0
    %5920 = vmatpush2.msra.mxu0 0.0
    %5921 = vmatprep.subr.mxu0 0.0
    %5922 = vmatpush2.msra.mxu0 0.0
    %5923 = vmatprep.subr.mxu0 0.0
    %5924 = vmatpush2.msra.mxu0 0.0
    %5925 = vmatprep.subr.mxu0 0.0
    %5926 = vmatpush2.msra.mxu0 0.0
    %5927 = vmatprep.subr.mxu0 0.0
    %5928 = vmatpush2.msra.mxu0 0.0
    %5929 = vmatprep.subr.mxu0 0.0
    %5930 = vmatpush2.msra.mxu0 0.0
    %5931 = vmatprep.subr.mxu0 0.0
    %5932 = vmatpush2.msra.mxu0 0.0
    %5933 = vmatprep.subr.mxu0 0.0
    %5934 = vmatpush2.msra.mxu0 0.0
    %5935 = vmatprep.subr.mxu0 0.0
    %5936 = vmatpush2.msra.mxu0 0.0
    %5937 = vmatprep.subr.mxu0 0.0
    %5938 = vmatpush2.msra.mxu0 0.0
    %5939 = vmatprep.subr.mxu0 0.0
    %5940 = vmatpush2.msra.mxu0 0.0
    %5941 = vmatprep.subr.mxu0 0.0
    %5942 = vmatpush2.msra.mxu0 0.0
    %5943 = vmatprep.subr.mxu0 0.0
    %5944 = vmatpush2.msra.mxu0 0.0
    %5945 = vmatprep.subr.mxu0 0.0
    %5946 = vmatpush2.msra.mxu0 0.0
    %5947 = vmatprep.subr.mxu0 0.0
    %5948 = vmatpush2.msra.mxu0 0.0
    %5949 = vmatprep.subr.mxu0 0.0
    %5950 = vmatpush2.msra.mxu0 0.0
    %5951 = vmatprep.mubr.f32.mxu0 0.0
    %5952 = vmatmul.mubr.f32.gmra.mxu0 %v5885
    %v5953 = vpop.f32.mrf.mxu0
    %v5954 = vadd.f32 %v5883, %v5953
    %v5955 = vpop.f32.mrf.mxu0
    %5956 = vdwg.mxu0
    %v5957 = vmul.f32 %v5954, 0.5
    %v5958 = vmul.f32 %v5954, 0.044715
    %v5959 = vmul.f32 %v5958, %v5954
    %v5960 = vmul.f32 %v5959, %v5954
    %v5961 = vadd.f32 %v5954, %v5960
    %v5962 = vmul.f32 %v5961, 0.7978846
    %v5963 = vtanh.pop %v5962
    %v5964 = vadd.f32 %v5963, 1.0
    %v5965 = vmul.f32 %v5957, %v5964
    %v5966 = vld [vmem:[%s3 + $0x3f] sm:$0x1]
    %v5967 = vld [vmem:[%s3 + $0x40] sm:$0x1]
    %v5968 = vsel %vm152, %v5965, 0.0
    %5969 = vadd.xlane.f32.xlu0 %v5968
    %v5970 = vpop.xlane.xlu0 %5969
    %v5971 = vmul.f32 %v5970, %v156
    %v5972 = vsub.f32 %v5965, %v5971
    %v5973 = vmul.f32 %v5972, %v5972
    %v5974 = vsel %vm152, %v5973, 0.0
    %5975 = vadd.xlane.f32.xlu0 %v5974
    %v5976 = vpop.xlane.xlu0 %5975
    %v5977 = vmul.f32 %v5976, %v156
    %v5978 = vadd.f32 %v5977, 1e-05
    %v5979 = vrsqrt.pop %v5978
    %v5980 = vmul.f32 %v5972, %v5979
    %v5981 = vlaneseq
    %v5982 = vshrl.u32 %v5981, 7
    %v5983 = vsub.s32 0, %v5982
    %v5984 = vrot.slane %v5966, %v5983
    %v5985 = vmul.f32 %v5980, %v5984
    %v5986 = vlaneseq
    %v5987 = vshrl.u32 %v5986, 7
    %v5988 = vsub.s32 0, %v5987
    %v5989 = vrot.slane %v5967, %v5988
    %v5990 = vadd.f32 %v5985, %v5989
    %v5991 = vld [vmem:[#allocation2 + $0x3d8] sm:$0xff]
    %v5992 = vld [vmem:[#allocation2 + $0x3e0] sm:$0xff]
    %v5993 = vld [vmem:[#allocation2 + $0x3e8] sm:$0xff]
    %v5994 = vld [vmem:[#allocation2 + $0x3f0] sm:$0xff]
    %v5995 = vld [vmem:[%s3 + $0x41] sm:$0x1]
    %v5996 = vlaneseq
    %v5997 = vshrl.u32 %v5996, 7
    %v5998 = vsub.s32 0, %v5997
    %v5999 = vrot.slane %v5995, %v5998
    %v6001 = vsel %vm186, %v5990, 0
    %6003 = vmatprep.subr.mxu0 0.0
    %6004 = vmatpush1.msra.mxu0 0.0
    %6005 = vmatprep.subr.mxu0 0.0
    %6006 = vmatpush1.msra.mxu0 0.0
    %6007 = vmatprep.subr.mxu0 0.0
    %6008 = vmatpush1.msra.mxu0 0.0
    %6009 = vmatprep.subr.mxu0 0.0
    %6010 = vmatpush1.msra.mxu0 0.0
    %6011 = vmatprep.subr.mxu0 0.0
    %6012 = vmatpush1.msra.mxu0 0.0
    %6013 = vmatprep.subr.mxu0 0.0
    %6014 = vmatpush1.msra.mxu0 0.0
    %6015 = vmatprep.subr.mxu0 0.0
    %6016 = vmatpush1.msra.mxu0 0.0
    %6017 = vmatprep.subr.mxu0 0.0
    %6018 = vmatpush1.msra.mxu0 0.0
    %6019 = vmatprep.subr.mxu0 0.0
    %6020 = vmatpush1.msra.mxu0 0.0
    %6021 = vmatprep.subr.mxu0 0.0
    %6022 = vmatpush1.msra.mxu0 0.0
    %6023 = vmatprep.subr.mxu0 0.0
    %6024 = vmatpush1.msra.mxu0 0.0
    %6025 = vmatprep.subr.mxu0 0.0
    %6026 = vmatpush1.msra.mxu0 0.0
    %6027 = vmatprep.subr.mxu0 0.0
    %6028 = vmatpush1.msra.mxu0 %v5994
    %6029 = vmatprep.subr.mxu0 0.0
    %6030 = vmatpush1.msra.mxu0 %v5993
    %6031 = vmatprep.subr.mxu0 0.0
    %6032 = vmatpush1.msra.mxu0 %v5992
    %6033 = vmatprep.subr.mxu0 0.0
    %6034 = vmatpush1.msra.mxu0 %v5991
    %6035 = vmatprep.subr.mxu0 0.0
    %6036 = vmatpush2.msra.mxu0 0.0
    %6037 = vmatprep.subr.mxu0 0.0
    %6038 = vmatpush2.msra.mxu0 0.0
    %6039 = vmatprep.subr.mxu0 0.0
    %6040 = vmatpush2.msra.mxu0 0.0
    %6041 = vmatprep.subr.mxu0 0.0
    %6042 = vmatpush2.msra.mxu0 0.0
    %6043 = vmatprep.subr.mxu0 0.0
    %6044 = vmatpush2.msra.mxu0 0.0
    %6045 = vmatprep.subr.mxu0 0.0
    %6046 = vmatpush2.msra.mxu0 0.0
    %6047 = vmatprep.subr.mxu0 0.0
    %6048 = vmatpush2.msra.mxu0 0.0
    %6049 = vmatprep.subr.mxu0 0.0
    %6050 = vmatpush2.msra.mxu0 0.0
    %6051 = vmatprep.subr.mxu0 0.0
    %6052 = vmatpush2.msra.mxu0 0.0
    %6053 = vmatprep.subr.mxu0 0.0
    %6054 = vmatpush2.msra.mxu0 0.0
    %6055 = vmatprep.subr.mxu0 0.0
    %6056 = vmatpush2.msra.mxu0 0.0
    %6057 = vmatprep.subr.mxu0 0.0
    %6058 = vmatpush2.msra.mxu0 0.0
    %6059 = vmatprep.subr.mxu0 0.0
    %6060 = vmatpush2.msra.mxu0 0.0
    %6061 = vmatprep.subr.mxu0 0.0
    %6062 = vmatpush2.msra.mxu0 0.0
    %6063 = vmatprep.subr.mxu0 0.0
    %6064 = vmatpush2.msra.mxu0 0.0
    %6065 = vmatprep.subr.mxu0 0.0
    %6066 = vmatpush2.msra.mxu0 0.0
    %6067 = vmatprep.mubr.f32.mxu0 0.0
    %6068 = vmatmul.mubr.f32.gmra.mxu0 %v6001
    %v6069 = vpop.f32.mrf.mxu0
    %v6070 = vadd.f32 %v5999, %v6069
    %v6071 = vpop.f32.mrf.mxu0
    %6072 = vdwg.mxu0
    %vm6073 = vcmask 37888
    %v6074 = vsel %vm6073, %v6070, -inf
    %6075 = vmax.xlane.f32.xlu0 %v6074
    %v6076 = vpop.xlane.xlu0 %6075
    %v6077 = vsub.f32 %v6070, %v6076
    %v6078 = vmul.f32 %v6077, 1.442695
    %v6079 = vpow.pop %v6078
    %v6080 = vsel %vm6073, %v6079, 0.0
    %6081 = vadd.xlane.f32.xlu0 %v6080
    %v6082 = vpop.xlane.xlu0 %6081
    %v6083 = vlog2.pop %v6082
    %v6084 = vmul.f32 %v6083, 0.6931472
    %v6085 = vsub.f32 %v6077, %v6084
    %v6086 = vmul.f32 %v6085, 1.442695
    %v6087 = vpow.pop %v6086
    %6089 = vrot.lane.b32.xlu0 %v6085, 16
    %v6090 = vpop.permute.xlu0 %6089
    %v6092 = vmul.f32 %v31, %v6090
    %6094 = vrot.lane.b32.xlu0 %v6092, 112
    %v6095 = vpop.permute.xlu0 %6094
    %v6097 = vsel %vm6073, %v6095, 0.0
    %6098 = vadd.xlane.f32.xlu0 %v6097
    %v6099 = vpop.xlane.xlu0 %6098
    %v6100 = vmul.f32 %v6087, %v6085
    %v6101 = vsel %vm6073, %v6100, 0.0
    %6102 = vadd.xlane.f32.xlu0 %v6101
    %v6103 = vpop.xlane.xlu0 %6102
    %v6104 = vsub.f32 0.0, %v6103
    %6106 = vrot.lane.b32.xlu0 %v2809, 1
    %v6107 = vpop.permute.xlu0 %6106
    %vm6109 = vcmask 7168
    %v6110 = vsel %vm6109, %v1976, %v6107
    %vm6111 = vcmask 15360
    %v6112 = vsel %vm6111, %v6110, %v6099
    %vm6113 = vcmask 23552
    %v6114 = vsel %vm6113, %v6112, %v6104
    %vm6115 = vcmask 31744
    %v6116 = vsel %vm6115, %v6114, 0.0
    %6117 = vst [vmem:[%s4] sm:$0x3f] %v6116
    // Predicated region
    $region22: #{mat_forward.1} parent=1 // pred_check
      _
    $region23: #{mat_forward.1} parent=1 // pred_check_branch
      %6119 = sbr.rel (0) target = $region25
    $region24: #{mat_forward.1} parent=1 // pred_region
      _
    $region25: #{mat_forward.1} parent=1 // pred_fallthru
      _
    // Predicated region
    $region26: #{mat_forward.1} parent=1 // pred_check
      _
    $region27: #{mat_forward.1} parent=1 // pred_check_branch
      %6121 = sbr.rel (0) target = $region29
    $region28: #{mat_forward.1} parent=1 // pred_region
      _
    $region29: #{mat_forward.1} parent=1 // pred_fallthru
      _
    %6122 = vsyncpa [#allocation3], 1

</llo_original>
